<compile_context>
chip_gen: v7x
topology: tpu7x:2x2x1
jax: 0.10.0
libtpu: 0.0.40
codegen_flags: <defaults>
</compile_context>

<pallas_src>
import functools
import math

import jax
import jax.numpy as jnp
from jax.experimental import pallas as pl
from jax.experimental.pallas import tpu as pltpu

EPS = 1e-12  # funasr LayerNorm eps


# ----------------------------- small helpers -----------------------------

def _ln(x, g, b):
    m = jnp.mean(x, axis=-1, keepdims=True)
    v = jnp.mean(jnp.square(x - m), axis=-1, keepdims=True)
    return (x - m) * jax.lax.rsqrt(v + EPS) * g + b


def _bf16(x):
    return x.astype(jnp.bfloat16)


def _total_bytes(*xs):
    return sum(int(x.size) * jnp.dtype(x.dtype).itemsize for x in xs)


def _compiler_params(resident_bytes, dims=None):
    # Explicit scoped-VMEM limit (review): floor at the v6e default 32 MiB so we
    # never go below stock behaviour, raise (with 2x-buffer headroom) when the
    # real weights get large, cap well under physical VMEM.
    limit = int(min(96 << 20, max(32 << 20, 2 * resident_bytes + (8 << 20))))
    return pltpu.CompilerParams(dimension_semantics=dims, vmem_limit_bytes=limit)


def _row_tile(n, target=256):
    """Largest multiple of 8 that divides n and is <= target (else n)."""
    if n <= target:
        return n
    t = (target // 8) * 8
    while t >= 8:
        if n % t == 0:
            return t
        t -= 8
    return n


# --- Buffered(1) support probe (single-buffer constant weight blocks) -------

_BUFFERED_SINGLE = None


def _probe_buffered_single():
    """Check (once, eagerly) whether pipeline_mode=pl.Buffered(1) is supported."""
    global _BUFFERED_SINGLE
    if _BUFFERED_SINGLE is not None:
        return _BUFFERED_SINGLE
    try:
        def _probe(w_ref, x_ref, o_ref):
            o_ref[...] = x_ref[...] + w_ref[...]

        w = jnp.ones((8, 128), jnp.float32)
        x = jnp.zeros((16, 128), jnp.float32)
        out = pl.pallas_call(
            _probe,
            grid=(2,),
            in_specs=[pl.BlockSpec((8, 128), lambda i: (0, 0),
                                   pipeline_mode=pl.Buffered(1)),
                      pl.BlockSpec((8, 128), lambda i: (i, 0))],
            out_specs=pl.BlockSpec((8, 128), lambda i: (i, 0)),
            out_shape=jax.ShapeDtypeStruct((16, 128), jnp.float32),
        )(w, x)
        out = jax.block_until_ready(out)
        _BUFFERED_SINGLE = bool(jnp.allclose(out, 1.0))
    except Exception:  # noqa: BLE001 - any failure => fall back to default spec
        _BUFFERED_SINGLE = False
    return _BUFFERED_SINGLE


def _wspec(block_shape, index_map):
    """BlockSpec for a constant-index weight block: single-buffered when the
    Pallas version supports Buffered(1); otherwise default (double-buffered)."""
    if _BUFFERED_SINGLE is True:
        return pl.BlockSpec(block_shape, index_map, pipeline_mode=pl.Buffered(1))
    return pl.BlockSpec(block_shape, index_map)


# ----------------------------- kernel stages -----------------------------

def _self_stage(x, mask, cache_ref, ncache_ref, xpad_ref, y_ref,
                g1, b1, w1, b1f, gf, bf, w2, g2, b2, fw,
                *, kernel_size, batch, t_dec):
    """x: (B*T, D).  y_ref <- x + FSMN(LN2(FFN(LN1(x))), mask, cache).

    FFN / projections are batched over B*T rows (MXU fill); only the FSMN conv
    runs in a static per-batch loop.  Returns the full y1 value."""
    K, T = kernel_size, t_dec
    t = _ln(x, g1, b1)
    h = jnp.dot(_bf16(t), w1, preferred_element_type=jnp.float32) + b1f
    h = jnp.maximum(h, 0.0)
    h = _ln(h, gf, bf)
    t = jnp.dot(_bf16(h), w2, preferred_element_type=jnp.float32)
    t2 = _ln(t, g2, b2)
    xm = t2 * mask
    for b in range(batch):
        rows = slice(b * T, (b + 1) * T)
        xm_b = xm[rows, :]
        xpad_ref[0:K - 1, :] = cache_ref[b]
        xpad_ref[K - 1:K - 1 + T, :] = xm_b
        acc = xm_b
        # NOTE(perf review #9): taps kept as ref-level sliced loads — unaligned
        # sublane value-slices / rolls are not portable across Mosaic versions;
        # at K=5, T=8 this is a handful of vld's off the critical path.
        for k in range(K):
            acc = acc + xpad_ref[k:k + T, :] * fw[k:k + 1, :]
        # TODO(synk): funasr's exact online cache-slice variant may differ by one
        # frame; here new_cache = last (K-1) frames of cat(cache, masked_input).
        ncache_ref[b] = xpad_ref[T:T + K - 1, :]
        y_ref[rows, :] = x[rows, :] + acc * mask[rows, :]
    return y_ref[...]


def _cross_stage(y1, mmask_ref, kT_ref, v_ref, ctx_ref, y_ref,
                 g3, b3, wq, bq, wo, bo, *, n_heads, d_k, batch, t_dec):
    """y_ref <- y1 + Wo @ Attention(LN3(y1) Wq, K, V).  Q/O projections batched
    over B*T rows; per-head softmax/PV in a static loop (heads are 128-lane
    aligned slices; K is pre-transposed bf16 so QK^T is a plain MXU matmul)."""
    T = t_dec
    t3 = _ln(y1, g3, b3)
    q = jnp.dot(_bf16(t3), wq, preferred_element_type=jnp.float32) + bq
    q = q * (1.0 / math.sqrt(d_k))
    for b in range(batch):
        rows = slice(b * T, (b + 1) * T)
        kb = kT_ref[b]        # (D, Tk) bf16, pre-transposed
        vb = v_ref[b]         # (Tk, D) bf16
        mb = mmask_ref[b]     # (1, Tk) additive mask
        heads = []
        for h in range(n_heads):
            sl = slice(h * d_k, (h + 1) * d_k)
            s = jnp.dot(_bf16(q[rows, sl]), kb[sl, :],
                        preferred_element_type=jnp.float32) + mb
            s = s - jnp.max(s, axis=-1, keepdims=True)
            p = jnp.exp(s)
            p = p * pl.reciprocal(jnp.sum(p, axis=-1, keepdims=True), approx=True)
            heads.append(jnp.dot(_bf16(p), vb[:, sl],
                                 preferred_element_type=jnp.float32))
        ctx_ref[rows, :] = heads[0] if n_heads == 1 else jnp.concatenate(heads, axis=-1)
    out = jnp.dot(_bf16(ctx_ref[...]), wo, preferred_element_type=jnp.float32) + bo
    y_ref[...] = y1 + out


def _layer_a_kernel(x_ref, mask_ref, cache_ref, mmask_ref, kT_ref, v_ref,
                    g1_ref, b1_ref, w1_ref, b1f_ref, gf_ref, bf_ref, w2_ref,
                    g2_ref, b2_ref, fw_ref, g3_ref, b3_ref, wq_ref, bq_ref,
                    wo_ref, bo_ref,
                    y_ref, ncache_ref, xpad_ref, ctx_ref,
                    *, kernel_size, n_heads, d_k, batch, t_dec):
    y1 = _self_stage(x_ref[...], mask_ref[...], cache_ref, ncache_ref, xpad_ref, y_ref,
                     g1_ref[...], b1_ref[...], w1_ref[...], b1f_ref[...],
                     gf_ref[...], bf_ref[...], w2_ref[...],
                     g2_ref[...], b2_ref[...], fw_ref[...],
                     kernel_size=kernel_size, batch=batch, t_dec=t_dec)
    _cross_stage(y1, mmask_ref, kT_ref, v_ref, ctx_ref, y_ref,
                 g3_ref[...], b3_ref[...], wq_ref[...], bq_ref[...],
                 wo_ref[...], bo_ref[...],
                 n_heads=n_heads, d_k=d_k, batch=batch, t_dec=t_dec)


def _layer_b_kernel(x_ref, mask_ref, cache_ref,
                    g1_ref, b1_ref, w1_ref, b1f_ref, gf_ref, bf_ref, w2_ref,
                    g2_ref, b2_ref, fw_ref,
                    y_ref, ncache_ref, xpad_ref,
                    *, kernel_size, batch, t_dec):
    _self_stage(x_ref[...], mask_ref[...], cache_ref, ncache_ref, xpad_ref, y_ref,
                g1_ref[...], b1_ref[...], w1_ref[...], b1f_ref[...],
                gf_ref[...], bf_ref[...], w2_ref[...],
                g2_ref[...], b2_ref[...], fw_ref[...],
                kernel_size=kernel_size, batch=batch, t_dec=t_dec)


def _kv_proj_kernel(mem_ref, wkv_ref, bkv_ref, k_ref, v_ref):
    # Encoder K/V projection, emitted in bf16 (hoisted out of the decode path).
    D = v_ref.shape[-1]
    kv = jnp.dot(_bf16(mem_ref[...]), wkv_ref[...],
                 preferred_element_type=jnp.float32) + bkv_ref[...]
    k_ref[...] = kv[:, :D].astype(jnp.bfloat16)
    v_ref[...] = kv[:, D:].astype(jnp.bfloat16)


def _ln_ffn_kernel(x_ref, g1_ref, b1_ref, w1_ref, b1f_ref, gf_ref, bf_ref, w2_ref, o_ref):
    # decoders3 layer: x = FFN(LN1(x))   (no residual, no attention)
    t = _ln(x_ref[...], g1_ref[...], b1_ref[...])
    h = jnp.dot(_bf16(t), w1_ref[...], preferred_element_type=jnp.float32) + b1f_ref[...]
    h = jnp.maximum(h, 0.0)
    h = _ln(h, gf_ref[...], bf_ref[...])
    o_ref[...] = jnp.dot(_bf16(h), w2_ref[...], preferred_element_type=jnp.float32)


def _final_kernel(x_ref, g_ref, b_ref, w_ref, ob_ref, o_ref):
    # after_norm + output_layer, tiled over the (padded) vocab axis.
    # (LN recomputed per vocab tile: cheap VPU filler under the matmul.)
    t = _ln(x_ref[...], g_ref[...], b_ref[...])
    o_ref[...] = jnp.dot(_bf16(t), w_ref[...],
                         preferred_element_type=jnp.float32) + ob_ref[...]


# ----------------------------- Pallas wrappers -----------------------------

def fused_layer_a(x2d, mask2d, cache_bkd, mmask, kT, v, p, *, n_heads, t_dec):
    # x2d: (B*T, D), cache: (B, K-1, D), mmask: (B, 1, Tk), kT: (B, D, Tk) bf16, v: (B, Tk, D) bf16
    N, D = x2d.shape
    B, Km1, _ = cache_bkd.shape
    K = Km1 + 1
    d_k = D // n_heads
    operands = (x2d, mask2d, cache_bkd, mmask, kT, v,
                p["ln1"][0], p["ln1"][1],
                p["ffn"]["w1"], p["ffn"]["b1"], p["ffn"]["ln_g"], p["ffn"]["ln_b"],
                p["ffn"]["w2"], p["ln2"][0], p["ln2"][1], p["fsmn_w"],
                p["ln3"][0], p["ln3"][1],
                p["attn"]["wq"], p["attn"]["bq"], p["attn"]["wo"], p["attn"]["bo"])
    resident = (_total_bytes(*operands) + (N * D + B * Km1 * D) * 4
                + ((t_dec + Km1) * D + N * D) * 4)
    y, nc = pl.pallas_call(
        functools.partial(_layer_a_kernel, kernel_size=K, n_heads=n_heads,
                          d_k=d_k, batch=B, t_dec=t_dec),
        out_shape=[jax.ShapeDtypeStruct((N, D), jnp.float32),
                   jax.ShapeDtypeStruct((B, Km1, D), jnp.float32)],
        scratch_shapes=[pltpu.VMEM((t_dec + Km1, D), jnp.float32),   # FSMN slab
                        pltpu.VMEM((N, D), jnp.float32)],            # attn context
        compiler_params=_compiler_params(resident),
    )(*operands)
    return y, nc


def fused_layer_b(x2d, mask2d, cache_bkd, p, *, t_dec):
    N, D = x2d.shape
    B, Km1, _ = cache_bkd.shape
    K = Km1 + 1
    operands = (x2d, mask2d, cache_bkd,
                p["ln1"][0], p["ln1"][1],
                p["ffn"]["w1"], p["ffn"]["b1"], p["ffn"]["ln_g"], p["ffn"]["ln_b"],
                p["ffn"]["w2"], p["ln2"][0], p["ln2"][1], p["fsmn_w"])
    resident = (_total_bytes(*operands) + (N * D + B * Km1 * D) * 4
                + (t_dec + Km1) * D * 4)
    y, nc = pl.pallas_call(
        functools.partial(_layer_b_kernel, kernel_size=K, batch=B, t_dec=t_dec),
        out_shape=[jax.ShapeDtypeStruct((N, D), jnp.float32),
                   jax.ShapeDtypeStruct((B, Km1, D), jnp.float32)],
        scratch_shapes=[pltpu.VMEM((t_dec + Km1, D), jnp.float32)],
        compiler_params=_compiler_params(resident),
    )(*operands)
    return y, nc


def kv_projection(memory, attn_p):
    # Per-utterance encoder K/V projection (hoisted; in streaming decoding this
    # is cached across decode steps).  Row-tiled "parallel" grid; bf16 outputs;
    # K pre-transposed once (layout glue outside the decode path).
    B, Tk, D_enc = memory.shape
    D = attn_p["wkv"].shape[1] // 2
    N = B * Tk
    RT = _row_tile(N, 256)
    operands = (memory.reshape(N, D_enc), attn_p["wkv"], attn_p["bkv"])
    k, v = pl.pallas_call(
        _kv_proj_kernel,
        grid=(N // RT,),
        in_specs=[pl.BlockSpec((RT, D_enc), lambda i: (i, 0)),
                  _wspec((D_enc, 2 * D), lambda i: (0, 0)),
                  _wspec((1, 2 * D), lambda i: (0, 0))],
        out_specs=[pl.BlockSpec((RT, D), lambda i: (i, 0)),
                   pl.BlockSpec((RT, D), lambda i: (i, 0))],
        out_shape=[jax.ShapeDtypeStruct((N, D), jnp.bfloat16),
                   jax.ShapeDtypeStruct((N, D), jnp.bfloat16)],
        compiler_params=_compiler_params(_total_bytes(*operands) + 2 * N * D * 2,
                                         dims=("parallel",)),
    )(*operands)
    kT = jnp.swapaxes(k.reshape(B, Tk, D), 1, 2)   # (B, D, Tk)
    return kT, v.reshape(B, Tk, D)


def ln_ffn_block(x2d, p):
    N, D = x2d.shape
    FF = p["ffn"]["w1"].shape[1]
    RT = _row_tile(N, 256)
    operands = (x2d, p["ln1"][0], p["ln1"][1], p["ffn"]["w1"], p["ffn"]["b1"],
                p["ffn"]["ln_g"], p["ffn"]["ln_b"], p["ffn"]["w2"])
    return pl.pallas_call(
        _ln_ffn_kernel,
        grid=(N // RT,),
        in_specs=[pl.BlockSpec((RT, D), lambda i: (i, 0)),
                  _wspec((1, D), lambda i: (0, 0)),
                  _wspec((1, D), lambda i: (0, 0)),
                  _wspec((D, FF), lambda i: (0, 0)),
                  _wspec((1, FF), lambda i: (0, 0)),
                  _wspec((1, FF), lambda i: (0, 0)),
                  _wspec((1, FF), lambda i: (0, 0)),
                  _wspec((FF, D), lambda i: (0, 0))],
        out_specs=pl.BlockSpec((RT, D), lambda i: (i, 0)),
        out_shape=jax.ShapeDtypeStruct((N, D), jnp.float32),
        compiler_params=_compiler_params(_total_bytes(*operands) + N * D * 4,
                                         dims=("parallel",)),
    )(*operands)


def final_norm_output(x2d, g, b, out_w, out_b, *, vocab_tile=512):
    # after_norm + vocab projection.  Vocab padded up to a multiple of the tile
    # (instead of falling back to a single huge block) and streamed over a
    # "parallel" grid; x/LN params are constant blocks (single-buffered).
    N, D = x2d.shape
    V = out_w.shape[1]
    VT = vocab_tile
    Vp = ((V + VT - 1) // VT) * VT
    if Vp != V:
        out_w = jnp.pad(out_w, ((0, 0), (0, Vp - V)))
        out_b = jnp.pad(out_b, ((0, 0), (0, Vp - V)))
    operands = (x2d, g, b, out_w, out_b)
    resident = _total_bytes(x2d, g, b) + 2 * (D * VT * 2 + VT * 4 + N * VT * 4)
    logits = pl.pallas_call(
        _final_kernel,
        grid=(Vp // VT,),
        in_specs=[_wspec((N, D), lambda j: (0, 0)),
                  _wspec((1, D), lambda j: (0, 0)),
                  _wspec((1, D), lambda j: (0, 0)),
                  pl.BlockSpec((D, VT), lambda j: (0, j)),
                  pl.BlockSpec((1, VT), lambda j: (0, j))],
        out_specs=pl.BlockSpec((N, VT), lambda j: (0, j)),
        out_shape=jax.ShapeDtypeStruct((N, Vp), jnp.float32),
        compiler_params=_compiler_params(resident, dims=("parallel",)),
    )(*operands)
    return logits[:, :V] if Vp != V else logits


# ----------------------------- Decoder forward -----------------------------

def decoder_forward(params, hs_pad, hlens, ys_in_pad, ys_in_lens, caches, *, n_heads):
    B, T_dec, D = ys_in_pad.shape
    T_enc = hs_pad.shape[1]

    # make_pad_mask + prepare_mask (trivial XLA glue)
    tgt_mask = (jnp.arange(T_dec)[None, :] < ys_in_lens[:, None]).astype(jnp.float32)
    mask2d = tgt_mask.reshape(B * T_dec, 1)
    memory_mask = (1.0 - (jnp.arange(T_enc)[None, :] < hlens[:, None])
                   .astype(jnp.float32))[:, None, :] * -10000.0          # (B,1,T_enc)

    # Encoder K/V: fixed per utterance -> hoisted out of the per-step path.
    enc_kv = [kv_projection(hs_pad, lp["attn"]) for lp in params["decoders"]]

    x = ys_in_pad.reshape(B * T_dec, D)
    out_caches = []
    ci = 0
    for li, lp in enumerate(params["decoders"]):
        kT, v = enc_kv[li]
        cache_bkd = jnp.swapaxes(caches[ci], 1, 2)
        x, nc = fused_layer_a(x, mask2d, cache_bkd, memory_mask, kT, v, lp,
                              n_heads=n_heads, t_dec=T_dec)
        out_caches.append(jnp.swapaxes(nc, 1, 2))
        ci += 1
    for lp in params["decoders2"]:
        cache_bkd = jnp.swapaxes(caches[ci], 1, 2)
        x, nc = fused_layer_b(x, mask2d, cache_bkd, lp, t_dec=T_dec)
        out_caches.append(jnp.swapaxes(nc, 1, 2))
        ci += 1
    for lp in params["decoders3"]:
        x = ln_ffn_block(x, lp)

    logits = final_norm_output(x, params["after_norm_g"], params["after_norm_b"],
                               params["out_w"], params["out_b"])
    return logits.reshape(B, T_dec, -1), out_caches


# ----------------------------- Parameter init -----------------------------
# Matmul weights are stored in bf16 (MXU operands); biases / LN / FSMN stay f32.

def _init_linear(key, din, dout):
    kw, kb = jax.random.split(key)
    w = (jax.random.normal(kw, (din, dout), jnp.float32) / math.sqrt(din)).astype(jnp.bfloat16)
    b = 0.01 * jax.random.normal(kb, (1, dout), jnp.float32)
    return w, b


def _init_ln(key, d):
    kg, kb = jax.random.split(key)
    return (1.0 + 0.1 * jax.random.normal(kg, (1, d), jnp.float32),
            0.1 * jax.random.normal(kb, (1, d), jnp.float32))


def _init_ffn(key, D, FF):
    ks = jax.random.split(key, 3)
    w1, b1 = _init_linear(ks[0], D, FF)
    w2, _ = _init_linear(ks[1], FF, D)     # w_2 has no bias
    g, be = _init_ln(ks[2], FF)
    return {"w1": w1, "b1": b1, "ln_g": g, "ln_b": be, "w2": w2}


def _init_layer_A(key, D, FF, K, D_enc):
    ks = jax.random.split(key, 8)
    wq, bq = _init_linear(ks[0], D, D)
    wkv, bkv = _init_linear(ks[1], D_enc, 2 * D)
    wo, bo = _init_linear(ks[2], D, D)
    return {
        "ln1": _init_ln(ks[3], D),
        "ln2": _init_ln(ks[4], D),
        "ln3": _init_ln(ks[5], D),
        "ffn": _init_ffn(ks[6], D, FF),
        "fsmn_w": 0.2 * jax.random.normal(ks[7], (K, D), jnp.float32),
        "attn": {"wq": wq, "bq": bq, "wkv": wkv, "bkv": bkv, "wo": wo, "bo": bo},
    }


def _init_layer_B(key, D, FF, K):
    ks = jax.random.split(key, 4)
    return {
        "ln1": _init_ln(ks[0], D),
        "ln2": _init_ln(ks[1], D),
        "ffn": _init_ffn(ks[2], D, FF),
        "fsmn_w": 0.2 * jax.random.normal(ks[3], (K, D), jnp.float32),
    }


def _init_layer_C(key, D, FF):
    ks = jax.random.split(key, 2)
    return {"ln1": _init_ln(ks[0], D), "ffn": _init_ffn(ks[1], D, FF)}


def init_params(key, D, FF, K, V, D_enc, n_dec, n_dec2, n_dec3):
    ks = jax.random.split(key, n_dec + n_dec2 + n_dec3 + 2)
    i = 0
    dec, dec2, dec3 = [], [], []
    for _ in range(n_dec):
        dec.append(_init_layer_A(ks[i], D, FF, K, D_enc)); i += 1
    for _ in range(n_dec2):
        dec2.append(_init_layer_B(ks[i], D, FF, K)); i += 1
    for _ in range(n_dec3):
        dec3.append(_init_layer_C(ks[i], D, FF)); i += 1
    an_g, an_b = _init_ln(ks[i], D); i += 1
    out_w, out_b = _init_linear(ks[i], D, V)
    return {
        "decoders": dec, "decoders2": dec2, "decoders3": dec3,
        "after_norm_g": an_g, "after_norm_b": an_b,
        "out_w": out_w, "out_b": out_b,
    }


# ----------------------------- Pure-JAX reference -----------------------------

def _f32(w):
    return w.astype(jnp.float32)


def _ref_ln(x, g, b):
    m = jnp.mean(x, -1, keepdims=True)
    v = jnp.mean(jnp.square(x - m), -1, keepdims=True)
    return (x - m) * jax.lax.rsqrt(v + EPS) * g + b


def _ref_ffn(x, p):
    h = jnp.maximum(x @ _f32(p["w1"]) + p["b1"], 0.0)
    h = _ref_ln(h, p["ln_g"], p["ln_b"])
    return h @ _f32(p["w2"])


def _ref_fsmn(x, mask, cache, w):
    B, T, D = x.shape
    K = w.shape[0]
    xm = x * mask
    xpad = jnp.concatenate([jnp.transpose(cache, (0, 2, 1)), xm], axis=1)
    new_cache = jnp.transpose(xpad[:, -(K - 1):, :], (0, 2, 1))
    out = xm
    for k in range(K):
        out = out + xpad[:, k:k + T, :] * w[k]
    return out * mask, new_cache


def _ref_xattn(x, mem, mmask, p, n_heads):
    B, Tq, D = x.shape
    Tk = mem.shape[1]
    dk = D // n_heads
    q = x @ _f32(p["wq"]) + p["bq"]
    kv = mem @ _f32(p["wkv"]) + p["bkv"]
    k, v = kv[..., :D], kv[..., D:]
    qh = q.reshape(B, Tq, n_heads, dk).transpose(0, 2, 1, 3)
    kh = k.reshape(B, Tk, n_heads, dk).transpose(0, 2, 1, 3)
    vh = v.reshape(B, Tk, n_heads, dk).transpose(0, 2, 1, 3)
    scores = (qh / math.sqrt(dk)) @ kh.transpose(0, 1, 3, 2) + mmask[:, :, None, :]
    pa = jax.nn.softmax(scores, axis=-1)
    ctx = (pa @ vh).transpose(0, 2, 1, 3).reshape(B, Tq, D)
    return ctx @ _f32(p["wo"]) + p["bo"]


def ref_forward(params, hs_pad, hlens, ys_in_pad, ys_in_lens, caches, *, n_heads):
    B, T_dec, D = ys_in_pad.shape
    T_enc = hs_pad.shape[1]
    tgt_mask = (jnp.arange(T_dec)[None, :] < ys_in_lens[:, None]).astype(jnp.float32)[:, :, None]
    mem_mask = (1.0 - (jnp.arange(T_enc)[None, :] < hlens[:, None]).astype(jnp.float32))[:, None, :] * -10000.0

    x = ys_in_pad
    out_caches = []
    ci = 0
    for lp in params["decoders"]:
        residual = x
        t = _ref_ffn(_ref_ln(x, *lp["ln1"]), lp["ffn"])
        t2 = _ref_ln(t, *lp["ln2"])
        sa, nc = _ref_fsmn(t2, tgt_mask, caches[ci], lp["fsmn_w"])
        x = residual + sa
        residual = x
        x = residual + _ref_xattn(_ref_ln(x, *lp["ln3"]), hs_pad, mem_mask, lp["attn"], n_heads)
        out_caches.append(nc); ci += 1
    for lp in params["decoders2"]:
        residual = x
        t = _ref_ffn(_ref_ln(x, *lp["ln1"]), lp["ffn"])
        t2 = _ref_ln(t, *lp["ln2"])
        sa, nc = _ref_fsmn(t2, tgt_mask, caches[ci], lp["fsmn_w"])
        x = residual + sa
        out_caches.append(nc); ci += 1
    for lp in params["decoders3"]:
        x = _ref_ffn(_ref_ln(x, *lp["ln1"]), lp["ffn"])
    x = _ref_ln(x, params["after_norm_g"], params["after_norm_b"])
    logits = x @ _f32(params["out_w"]) + params["out_b"]
    return logits, out_caches


# ----------------------------- Main -----------------------------

if __name__ == "__main__":
    # Probe Buffered(1) support once, eagerly (before any jit tracing).
    _probe_buffered_single()

    # Small but lane-friendly synthetic config: d_k = D / n_heads = 128 (as in
    # the real Paraformer 512/4), so head slices and all stores are lane-dense.
    B, T_enc, T_dec = 2, 16, 8
    D, n_heads, FF, V, K = 256, 2, 512, 512, 5
    n_dec, n_dec2, n_dec3 = 1, 1, 1

    key = jax.random.PRNGKey(0)
    k_in, k_par = jax.random.split(key)
    ks = jax.random.split(k_in, 3)
    hs_pad = jax.random.normal(ks[0], (B, T_enc, D), jnp.float32)
    ys_in_pad = jax.random.normal(ks[1], (B, T_dec, D), jnp.float32)
    hlens = jnp.array([10, 16], jnp.int32)
    ys_in_lens = jnp.array([5, 8], jnp.int32)

    caches = [jnp.zeros((B, D, K - 1), jnp.float32) for _ in range(n_dec + n_dec2)]
    caches[0] = 0.1 * jax.random.normal(ks[2], (B, D, K - 1), jnp.float32)  # online path

    params = init_params(k_par, D, FF, K, V, D, n_dec, n_dec2, n_dec3)

    fwd = jax.jit(functools.partial(decoder_forward, n_heads=n_heads))
    logits, out_caches = fwd(params, hs_pad, hlens, ys_in_pad, ys_in_lens, caches)
    logits = jax.block_until_ready(logits)
    out_caches = [jax.block_until_ready(c) for c in out_caches]

    # Golden: pure-JAX f32 reference at highest matmul precision (kernel uses
    # bf16 MXU operands with f32 accumulation + approx reciprocal, hence tol).
    with jax.default_matmul_precision("highest"):
        ref_logits, ref_caches = ref_forward(params, hs_pad, hlens, ys_in_pad,
                                             ys_in_lens, caches, n_heads=n_heads)

    assert logits.shape == (B, T_dec, V)
    assert jnp.allclose(logits, ref_logits, atol=5e-2, rtol=5e-2), "logits mismatch"
    assert len(out_caches) == n_dec + n_dec2
    for c, rc in zip(out_caches, ref_caches):
        assert c.shape == (B, D, K - 1)
        assert jnp.allclose(c, rc, atol=2e-2, rtol=2e-2), "cache mismatch"

    print("KERNEL_OK")
</pallas_src>

<mosaic_0001>
module attributes {stable_mosaic.version = 11 : i64} {
  func.func @_probe(%arg0: i32, %arg1: memref<8x128xf32, #tpu.memory_space<vmem>>, %arg2: memref<8x128xf32, #tpu.memory_space<vmem>>, %arg3: memref<8x128xf32, #tpu.memory_space<vmem>>) attributes {dimension_semantics = [#tpu.dimension_semantics<arbitrary>], iteration_bounds = array<i64: 2>, scalar_prefetch = 0 : i64, scratch_operands = 0 : i64, tpu.core_type = #tpu.core_type<tc>, window_params = [{pipeline_mode = #tpu.pipeline_mode<synchronous>, transform_indices = @transform_0, window_bounds = array<i64: 8, 128>}, {transform_indices = @transform_1, window_bounds = array<i64: 8, 128>}, {transform_indices = @transform_2, window_bounds = array<i64: 8, 128>}]} {
    %c0 = arith.constant 0 : index
    %c0_0 = arith.constant 0 : index
    %0 = vector.load %arg2[%c0, %c0_0] : memref<8x128xf32, #tpu.memory_space<vmem>>, vector<8x128xf32>
    %c0_1 = arith.constant 0 : index
    %c0_2 = arith.constant 0 : index
    %1 = vector.load %arg1[%c0_1, %c0_2] : memref<8x128xf32, #tpu.memory_space<vmem>>, vector<8x128xf32>
    %2 = arith.addf %0, %1 : vector<8x128xf32>
    %c0_3 = arith.constant 0 : index
    %c0_4 = arith.constant 0 : index
    %3 = vector.load %arg3[%c0_3, %c0_4] : memref<8x128xf32, #tpu.memory_space<vmem>>, vector<8x128xf32>
    tpu.vector_store %arg3[%c0_3, %c0_4], %2 {strides = array<i32>} : memref<8x128xf32, #tpu.memory_space<vmem>>, vector<8x128xf32>,
    return
  }
  func.func @transform_0(%arg0: i32) -> (i32, i32) {
    %c0_i32 = arith.constant 0 : i32
    %c0_i32_0 = arith.constant 0 : i32
    %c0_i32_1 = arith.constant 0 : i32
    return %c0_i32, %c0_i32_0 : i32, i32
  }
  func.func @transform_1(%arg0: i32) -> (i32, i32) {
    %c0_i32 = arith.constant 0 : i32
    %c0_i32_0 = arith.constant 0 : i32
    return %arg0, %c0_i32 : i32, i32
  }
  func.func @transform_2(%arg0: i32) -> (i32, i32) {
    %c0_i32 = arith.constant 0 : i32
    %c0_i32_0 = arith.constant 0 : i32
    return %arg0, %c0_i32 : i32, i32
  }
}

module attributes {stable_mosaic.version = 11 : i64} {
  func.func @_kv_proj_kernel(%arg0: i32, %arg1: memref<32x256xf32, #tpu.memory_space<vmem>>, %arg2: memref<256x512xbf16, #tpu.memory_space<vmem>>, %arg3: memref<1x512xf32, #tpu.memory_space<vmem>>, %arg4: memref<32x256xbf16, #tpu.memory_space<vmem>>, %arg5: memref<32x256xbf16, #tpu.memory_space<vmem>>) attributes {dimension_semantics = [#tpu.dimension_semantics<parallel>], iteration_bounds = array<i64: 1>, scalar_prefetch = 0 : i64, scratch_operands = 0 : i64, tpu.core_type = #tpu.core_type<tc>, window_params = [{transform_indices = @transform_0, window_bounds = array<i64: 32, 256>}, {pipeline_mode = #tpu.pipeline_mode<synchronous>, transform_indices = @transform_1, window_bounds = array<i64: 256, 512>}, {pipeline_mode = #tpu.pipeline_mode<synchronous>, transform_indices = @transform_2, window_bounds = array<i64: 1, 512>}, {transform_indices = @transform_3, window_bounds = array<i64: 32, 256>}, {transform_indices = @transform_4, window_bounds = array<i64: 32, 256>}]} {
    %c0 = arith.constant 0 : index
    %c0_0 = arith.constant 0 : index
    %0 = vector.load %arg1[%c0, %c0_0] : memref<32x256xf32, #tpu.memory_space<vmem>>, vector<32x256xf32>
    %1 = arith.truncf %0 : vector<32x256xf32> to vector<32x256xbf16>
    %c0_1 = arith.constant 0 : index
    %c0_2 = arith.constant 0 : index
    %2 = vector.load %arg2[%c0_1, %c0_2] : memref<256x512xbf16, #tpu.memory_space<vmem>>, vector<256x512xbf16>
    %cst = arith.constant dense<0.000000e+00> : vector<32x512xf32>
    %3 = tpu.matmul %1, %2, %cst {dimension_numbers = #tpu.dot_dimension_numbers<[1], [0], [0], [1], [0, 0, 1, 1], [], []>} : vector<32x256xbf16>, vector<256x512xbf16>, vector<32x512xf32> -> vector<32x512xf32>
    %c0_3 = arith.constant 0 : index
    %c0_4 = arith.constant 0 : index
    %4 = vector.load %arg3[%c0_3, %c0_4] : memref<1x512xf32, #tpu.memory_space<vmem>>, vector<1x512xf32>
    %5 = vector.broadcast %4 : vector<1x512xf32> to vector<32x512xf32>
    %6 = arith.addf %3, %5 : vector<32x512xf32>
    %7 = vector.extract_strided_slice %6 {offsets = [0, 0], sizes = [32, 256], strides = [1, 1]} : vector<32x512xf32> to vector<32x256xf32>
    %8 = arith.truncf %7 : vector<32x256xf32> to vector<32x256xbf16>
    %c0_5 = arith.constant 0 : index
    %c0_6 = arith.constant 0 : index
    %9 = vector.load %arg4[%c0_5, %c0_6] : memref<32x256xbf16, #tpu.memory_space<vmem>>, vector<32x256xbf16>
    tpu.vector_store %arg4[%c0_5, %c0_6], %8 {strides = array<i32>} : memref<32x256xbf16, #tpu.memory_space<vmem>>, vector<32x256xbf16>,
    %10 = vector.extract_strided_slice %6 {offsets = [0, 256], sizes = [32, 256], strides = [1, 1]} : vector<32x512xf32> to vector<32x256xf32>
    %11 = arith.truncf %10 : vector<32x256xf32> to vector<32x256xbf16>
    %c0_7 = arith.constant 0 : index
    %c0_8 = arith.constant 0 : index
    %12 = vector.load %arg5[%c0_7, %c0_8] : memref<32x256xbf16, #tpu.memory_space<vmem>>, vector<32x256xbf16>
    tpu.vector_store %arg5[%c0_7, %c0_8], %11 {strides = array<i32>} : memref<32x256xbf16, #tpu.memory_space<vmem>>, vector<32x256xbf16>,
    return
  }
  func.func @transform_0(%arg0: i32) -> (i32, i32) {
    %c0_i32 = arith.constant 0 : i32
    %c0_i32_0 = arith.constant 0 : i32
    return %arg0, %c0_i32 : i32, i32
  }
  func.func @transform_1(%arg0: i32) -> (i32, i32) {
    %c0_i32 = arith.constant 0 : i32
    %c0_i32_0 = arith.constant 0 : i32
    %c0_i32_1 = arith.constant 0 : i32
    return %c0_i32, %c0_i32_0 : i32, i32
  }
  func.func @transform_2(%arg0: i32) -> (i32, i32) {
    %c0_i32 = arith.constant 0 : i32
    %c0_i32_0 = arith.constant 0 : i32
    %c0_i32_1 = arith.constant 0 : i32
    return %c0_i32, %c0_i32_0 : i32, i32
  }
  func.func @transform_3(%arg0: i32) -> (i32, i32) {
    %c0_i32 = arith.constant 0 : i32
    %c0_i32_0 = arith.constant 0 : i32
    return %arg0, %c0_i32 : i32, i32
  }
  func.func @transform_4(%arg0: i32) -> (i32, i32) {
    %c0_i32 = arith.constant 0 : i32
    %c0_i32_0 = arith.constant 0 : i32
    return %arg0, %c0_i32 : i32, i32
  }
}

module attributes {stable_mosaic.version = 11 : i64} {
  func.func @_layer_a_kernel(%arg0: memref<16x256xf32, #tpu.memory_space<vmem>>, %arg1: memref<16x1xf32, #tpu.memory_space<vmem>>, %arg2: memref<2x4x256xf32, #tpu.memory_space<vmem>>, %arg3: memref<2x1x16xf32, #tpu.memory_space<vmem>>, %arg4: memref<2x256x16xbf16, #tpu.memory_space<vmem>>, %arg5: memref<2x16x256xbf16, #tpu.memory_space<vmem>>, %arg6: memref<1x256xf32, #tpu.memory_space<vmem>>, %arg7: memref<1x256xf32, #tpu.memory_space<vmem>>, %arg8: memref<256x512xbf16, #tpu.memory_space<vmem>>, %arg9: memref<1x512xf32, #tpu.memory_space<vmem>>, %arg10: memref<1x512xf32, #tpu.memory_space<vmem>>, %arg11: memref<1x512xf32, #tpu.memory_space<vmem>>, %arg12: memref<512x256xbf16, #tpu.memory_space<vmem>>, %arg13: memref<1x256xf32, #tpu.memory_space<vmem>>, %arg14: memref<1x256xf32, #tpu.memory_space<vmem>>, %arg15: memref<5x256xf32, #tpu.memory_space<vmem>>, %arg16: memref<1x256xf32, #tpu.memory_space<vmem>>, %arg17: memref<1x256xf32, #tpu.memory_space<vmem>>, %arg18: memref<256x256xbf16, #tpu.memory_space<vmem>>, %arg19: memref<1x256xf32, #tpu.memory_space<vmem>>, %arg20: memref<256x256xbf16, #tpu.memory_space<vmem>>, %arg21: memref<1x256xf32, #tpu.memory_space<vmem>>, %arg22: memref<16x256xf32, #tpu.memory_space<vmem>>, %arg23: memref<2x4x256xf32, #tpu.memory_space<vmem>>, %arg24: memref<12x256xf32, #tpu.memory_space<vmem>>, %arg25: memref<16x256xf32, #tpu.memory_space<vmem>>) attributes {dimension_semantics = [], scalar_prefetch = 0 : i64, scratch_operands = 2 : i64, tpu.core_type = #tpu.core_type<tc>} {
    %c0 = arith.constant 0 : index
    %c0_0 = arith.constant 0 : index
    %0 = vector.load %arg0[%c0, %c0_0] : memref<16x256xf32, #tpu.memory_space<vmem>>, vector<16x256xf32>
    %c0_1 = arith.constant 0 : index
    %c0_2 = arith.constant 0 : index
    %1 = vector.load %arg1[%c0_1, %c0_2] : memref<16x1xf32, #tpu.memory_space<vmem>>, vector<16x1xf32>
    %c0_3 = arith.constant 0 : index
    %c0_4 = arith.constant 0 : index
    %2 = vector.load %arg6[%c0_3, %c0_4] : memref<1x256xf32, #tpu.memory_space<vmem>>, vector<1x256xf32>
    %c0_5 = arith.constant 0 : index
    %c0_6 = arith.constant 0 : index
    %3 = vector.load %arg7[%c0_5, %c0_6] : memref<1x256xf32, #tpu.memory_space<vmem>>, vector<1x256xf32>
    %c0_7 = arith.constant 0 : index
    %c0_8 = arith.constant 0 : index
    %4 = vector.load %arg8[%c0_7, %c0_8] : memref<256x512xbf16, #tpu.memory_space<vmem>>, vector<256x512xbf16>
    %c0_9 = arith.constant 0 : index
    %c0_10 = arith.constant 0 : index
    %5 = vector.load %arg9[%c0_9, %c0_10] : memref<1x512xf32, #tpu.memory_space<vmem>>, vector<1x512xf32>
    %c0_11 = arith.constant 0 : index
    %c0_12 = arith.constant 0 : index
    %6 = vector.load %arg10[%c0_11, %c0_12] : memref<1x512xf32, #tpu.memory_space<vmem>>, vector<1x512xf32>
    %c0_13 = arith.constant 0 : index
    %c0_14 = arith.constant 0 : index
    %7 = vector.load %arg11[%c0_13, %c0_14] : memref<1x512xf32, #tpu.memory_space<vmem>>, vector<1x512xf32>
    %c0_15 = arith.constant 0 : index
    %c0_16 = arith.constant 0 : index
    %8 = vector.load %arg12[%c0_15, %c0_16] : memref<512x256xbf16, #tpu.memory_space<vmem>>, vector<512x256xbf16>
    %c0_17 = arith.constant 0 : index
    %c0_18 = arith.constant 0 : index
    %9 = vector.load %arg13[%c0_17, %c0_18] : memref<1x256xf32, #tpu.memory_space<vmem>>, vector<1x256xf32>
    %c0_19 = arith.constant 0 : index
    %c0_20 = arith.constant 0 : index
    %10 = vector.load %arg14[%c0_19, %c0_20] : memref<1x256xf32, #tpu.memory_space<vmem>>, vector<1x256xf32>
    %c0_21 = arith.constant 0 : index
    %c0_22 = arith.constant 0 : index
    %11 = vector.load %arg15[%c0_21, %c0_22] : memref<5x256xf32, #tpu.memory_space<vmem>>, vector<5x256xf32>
    %cst = arith.constant dense<0.000000e+00> : vector<16xf32>
    %12 = vector.multi_reduction <add>, %0, %cst [1] : vector<16x256xf32> to vector<16xf32>
    %13 = vector.shape_cast %12 : vector<16xf32> to vector<16x1xf32>
    %cst_23 = arith.constant 2.560000e+02 : f32
    %14 = vector.broadcast %cst_23 : f32 to vector<16x1xf32>
    %15 = arith.divf %13, %14 : vector<16x1xf32>
    %16 = vector.broadcast %15 : vector<16x1xf32> to vector<16x256xf32>
    %17 = arith.subf %0, %16 : vector<16x256xf32>
    %18 = arith.mulf %17, %17 : vector<16x256xf32>
    %cst_24 = arith.constant dense<0.000000e+00> : vector<16xf32>
    %19 = vector.multi_reduction <add>, %18, %cst_24 [1] : vector<16x256xf32> to vector<16xf32>
    %20 = vector.shape_cast %19 : vector<16xf32> to vector<16x1xf32>
    %cst_25 = arith.constant 2.560000e+02 : f32
    %21 = vector.broadcast %cst_25 : f32 to vector<16x1xf32>
    %22 = arith.divf %20, %21 : vector<16x1xf32>
    %23 = vector.broadcast %15 : vector<16x1xf32> to vector<16x256xf32>
    %24 = arith.subf %0, %23 : vector<16x256xf32>
    %cst_26 = arith.constant 9.99999996E-13 : f32
    %25 = vector.broadcast %cst_26 : f32 to vector<16x1xf32>
    %26 = arith.addf %22, %25 : vector<16x1xf32>
    %27 = math.rsqrt %26 : vector<16x1xf32>
    %28 = vector.broadcast %27 : vector<16x1xf32> to vector<16x256xf32>
    %29 = arith.mulf %24, %28 : vector<16x256xf32>
    %30 = vector.broadcast %2 : vector<1x256xf32> to vector<16x256xf32>
    %31 = arith.mulf %29, %30 : vector<16x256xf32>
    %32 = vector.broadcast %3 : vector<1x256xf32> to vector<16x256xf32>
    %33 = arith.addf %31, %32 : vector<16x256xf32>
    %34 = arith.truncf %33 : vector<16x256xf32> to vector<16x256xbf16>
    %cst_27 = arith.constant dense<0.000000e+00> : vector<16x512xf32>
    %35 = tpu.matmul %34, %4, %cst_27 {dimension_numbers = #tpu.dot_dimension_numbers<[1], [0], [0], [1], [0, 0, 1, 1], [], []>} : vector<16x256xbf16>, vector<256x512xbf16>, vector<16x512xf32> -> vector<16x512xf32>
    %36 = vector.broadcast %5 : vector<1x512xf32> to vector<16x512xf32>
    %37 = arith.addf %35, %36 : vector<16x512xf32>
    %cst_28 = arith.constant 0.000000e+00 : f32
    %38 = vector.broadcast %cst_28 : f32 to vector<16x512xf32>
    %39 = arith.maximumf %37, %38 : vector<16x512xf32>
    %cst_29 = arith.constant dense<0.000000e+00> : vector<16xf32>
    %40 = vector.multi_reduction <add>, %39, %cst_29 [1] : vector<16x512xf32> to vector<16xf32>
    %41 = vector.shape_cast %40 : vector<16xf32> to vector<16x1xf32>
    %cst_30 = arith.constant 5.120000e+02 : f32
    %42 = vector.broadcast %cst_30 : f32 to vector<16x1xf32>
    %43 = arith.divf %41, %42 : vector<16x1xf32>
    %44 = vector.broadcast %43 : vector<16x1xf32> to vector<16x512xf32>
    %45 = arith.subf %39, %44 : vector<16x512xf32>
    %46 = arith.mulf %45, %45 : vector<16x512xf32>
    %cst_31 = arith.constant dense<0.000000e+00> : vector<16xf32>
    %47 = vector.multi_reduction <add>, %46, %cst_31 [1] : vector<16x512xf32> to vector<16xf32>
    %48 = vector.shape_cast %47 : vector<16xf32> to vector<16x1xf32>
    %cst_32 = arith.constant 5.120000e+02 : f32
    %49 = vector.broadcast %cst_32 : f32 to vector<16x1xf32>
    %50 = arith.divf %48, %49 : vector<16x1xf32>
    %51 = vector.broadcast %43 : vector<16x1xf32> to vector<16x512xf32>
    %52 = arith.subf %39, %51 : vector<16x512xf32>
    %cst_33 = arith.constant 9.99999996E-13 : f32
    %53 = vector.broadcast %cst_33 : f32 to vector<16x1xf32>
    %54 = arith.addf %50, %53 : vector<16x1xf32>
    %55 = math.rsqrt %54 : vector<16x1xf32>
    %56 = vector.broadcast %55 : vector<16x1xf32> to vector<16x512xf32>
    %57 = arith.mulf %52, %56 : vector<16x512xf32>
    %58 = vector.broadcast %6 : vector<1x512xf32> to vector<16x512xf32>
    %59 = arith.mulf %57, %58 : vector<16x512xf32>
    %60 = vector.broadcast %7 : vector<1x512xf32> to vector<16x512xf32>
    %61 = arith.addf %59, %60 : vector<16x512xf32>
    %62 = arith.truncf %61 : vector<16x512xf32> to vector<16x512xbf16>
    %cst_34 = arith.constant dense<0.000000e+00> : vector<16x256xf32>
    %63 = tpu.matmul %62, %8, %cst_34 {dimension_numbers = #tpu.dot_dimension_numbers<[1], [0], [0], [1], [0, 0, 1, 1], [], []>} : vector<16x512xbf16>, vector<512x256xbf16>, vector<16x256xf32> -> vector<16x256xf32>
    %cst_35 = arith.constant dense<0.000000e+00> : vector<16xf32>
    %64 = vector.multi_reduction <add>, %63, %cst_35 [1] : vector<16x256xf32> to vector<16xf32>
    %65 = vector.shape_cast %64 : vector<16xf32> to vector<16x1xf32>
    %cst_36 = arith.constant 2.560000e+02 : f32
    %66 = vector.broadcast %cst_36 : f32 to vector<16x1xf32>
    %67 = arith.divf %65, %66 : vector<16x1xf32>
    %68 = vector.broadcast %67 : vector<16x1xf32> to vector<16x256xf32>
    %69 = arith.subf %63, %68 : vector<16x256xf32>
    %70 = arith.mulf %69, %69 : vector<16x256xf32>
    %cst_37 = arith.constant dense<0.000000e+00> : vector<16xf32>
    %71 = vector.multi_reduction <add>, %70, %cst_37 [1] : vector<16x256xf32> to vector<16xf32>
    %72 = vector.shape_cast %71 : vector<16xf32> to vector<16x1xf32>
    %cst_38 = arith.constant 2.560000e+02 : f32
    %73 = vector.broadcast %cst_38 : f32 to vector<16x1xf32>
    %74 = arith.divf %72, %73 : vector<16x1xf32>
    %75 = vector.broadcast %67 : vector<16x1xf32> to vector<16x256xf32>
    %76 = arith.subf %63, %75 : vector<16x256xf32>
    %cst_39 = arith.constant 9.99999996E-13 : f32
    %77 = vector.broadcast %cst_39 : f32 to vector<16x1xf32>
    %78 = arith.addf %74, %77 : vector<16x1xf32>
    %79 = math.rsqrt %78 : vector<16x1xf32>
    %80 = vector.broadcast %79 : vector<16x1xf32> to vector<16x256xf32>
    %81 = arith.mulf %76, %80 : vector<16x256xf32>
    %82 = vector.broadcast %9 : vector<1x256xf32> to vector<16x256xf32>
    %83 = arith.mulf %81, %82 : vector<16x256xf32>
    %84 = vector.broadcast %10 : vector<1x256xf32> to vector<16x256xf32>
    %85 = arith.addf %83, %84 : vector<16x256xf32>
    %86 = vector.broadcast %1 : vector<16x1xf32> to vector<16x256xf32>
    %87 = arith.mulf %85, %86 : vector<16x256xf32>
    %88 = vector.extract_strided_slice %87 {offsets = [0, 0], sizes = [8, 256], strides = [1, 1]} : vector<16x256xf32> to vector<8x256xf32>
    %c0_40 = arith.constant 0 : index
    %c0_41 = arith.constant 0 : index
    %c0_42 = arith.constant 0 : index
    %89 = vector.load %arg2[%c0_40, %c0_41, %c0_42] : memref<2x4x256xf32, #tpu.memory_space<vmem>>, vector<1x4x256xf32>
    %90 = vector.shape_cast %89 : vector<1x4x256xf32> to vector<4x256xf32>
    %c0_43 = arith.constant 0 : index
    %c0_44 = arith.constant 0 : index
    %91 = vector.load %arg24[%c0_43, %c0_44] : memref<12x256xf32, #tpu.memory_space<vmem>>, vector<4x256xf32>
    tpu.vector_store %arg24[%c0_43, %c0_44], %90 {strides = array<i32>} : memref<12x256xf32, #tpu.memory_space<vmem>>, vector<4x256xf32>,
    %c4 = arith.constant 4 : index
    %c0_45 = arith.constant 0 : index
    %92 = vector.load %arg24[%c4, %c0_45] : memref<12x256xf32, #tpu.memory_space<vmem>>, vector<8x256xf32>
    tpu.vector_store %arg24[%c4, %c0_45], %88 {strides = array<i32>} : memref<12x256xf32, #tpu.memory_space<vmem>>, vector<8x256xf32>,
    %c0_46 = arith.constant 0 : index
    %c0_47 = arith.constant 0 : index
    %93 = vector.load %arg24[%c0_46, %c0_47] : memref<12x256xf32, #tpu.memory_space<vmem>>, vector<8x256xf32>
    %94 = vector.extract_strided_slice %11 {offsets = [0, 0], sizes = [1, 256], strides = [1, 1]} : vector<5x256xf32> to vector<1x256xf32>
    %95 = vector.broadcast %94 : vector<1x256xf32> to vector<8x256xf32>
    %96 = arith.mulf %93, %95 : vector<8x256xf32>
    %97 = arith.addf %88, %96 : vector<8x256xf32>
    %c1 = arith.constant 1 : index
    %c0_48 = arith.constant 0 : index
    %98 = vector.load %arg24[%c1, %c0_48] : memref<12x256xf32, #tpu.memory_space<vmem>>, vector<8x256xf32>
    %99 = vector.extract_strided_slice %11 {offsets = [1, 0], sizes = [1, 256], strides = [1, 1]} : vector<5x256xf32> to vector<1x256xf32>
    %100 = vector.broadcast %99 : vector<1x256xf32> to vector<8x256xf32>
    %101 = arith.mulf %98, %100 : vector<8x256xf32>
    %102 = arith.addf %97, %101 : vector<8x256xf32>
    %c2 = arith.constant 2 : index
    %c0_49 = arith.constant 0 : index
    %103 = vector.load %arg24[%c2, %c0_49] : memref<12x256xf32, #tpu.memory_space<vmem>>, vector<8x256xf32>
    %104 = vector.extract_strided_slice %11 {offsets = [2, 0], sizes = [1, 256], strides = [1, 1]} : vector<5x256xf32> to vector<1x256xf32>
    %105 = vector.broadcast %104 : vector<1x256xf32> to vector<8x256xf32>
    %106 = arith.mulf %103, %105 : vector<8x256xf32>
    %107 = arith.addf %102, %106 : vector<8x256xf32>
    %c3 = arith.constant 3 : index
    %c0_50 = arith.constant 0 : index
    %108 = vector.load %arg24[%c3, %c0_50] : memref<12x256xf32, #tpu.memory_space<vmem>>, vector<8x256xf32>
    %109 = vector.extract_strided_slice %11 {offsets = [3, 0], sizes = [1, 256], strides = [1, 1]} : vector<5x256xf32> to vector<1x256xf32>
    %110 = vector.broadcast %109 : vector<1x256xf32> to vector<8x256xf32>
    %111 = arith.mulf %108, %110 : vector<8x256xf32>
    %112 = arith.addf %107, %111 : vector<8x256xf32>
    %c4_51 = arith.constant 4 : index
    %c0_52 = arith.constant 0 : index
    %113 = vector.load %arg24[%c4_51, %c0_52] : memref<12x256xf32, #tpu.memory_space<vmem>>, vector<8x256xf32>
    %114 = vector.extract_strided_slice %11 {offsets = [4, 0], sizes = [1, 256], strides = [1, 1]} : vector<5x256xf32> to vector<1x256xf32>
    %115 = vector.broadcast %114 : vector<1x256xf32> to vector<8x256xf32>
    %116 = arith.mulf %113, %115 : vector<8x256xf32>
    %117 = arith.addf %112, %116 : vector<8x256xf32>
    %c8 = arith.constant 8 : index
    %c0_53 = arith.constant 0 : index
    %118 = vector.load %arg24[%c8, %c0_53] : memref<12x256xf32, #tpu.memory_space<vmem>>, vector<4x256xf32>
    %c0_54 = arith.constant 0 : index
    %c0_55 = arith.constant 0 : index
    %c0_56 = arith.constant 0 : index
    %119 = vector.load %arg23[%c0_54, %c0_55, %c0_56] : memref<2x4x256xf32, #tpu.memory_space<vmem>>, vector<1x4x256xf32>
    %120 = vector.shape_cast %119 : vector<1x4x256xf32> to vector<4x256xf32>
    %121 = vector.shape_cast %118 : vector<4x256xf32> to vector<1x4x256xf32>
    tpu.vector_store %arg23[%c0_54, %c0_55, %c0_56], %121 {strides = array<i32>} : memref<2x4x256xf32, #tpu.memory_space<vmem>>, vector<1x4x256xf32>,
    %122 = vector.extract_strided_slice %0 {offsets = [0, 0], sizes = [8, 256], strides = [1, 1]} : vector<16x256xf32> to vector<8x256xf32>
    %123 = vector.extract_strided_slice %1 {offsets = [0, 0], sizes = [8, 1], strides = [1, 1]} : vector<16x1xf32> to vector<8x1xf32>
    %124 = vector.broadcast %123 : vector<8x1xf32> to vector<8x256xf32>
    %125 = arith.mulf %117, %124 : vector<8x256xf32>
    %126 = arith.addf %122, %125 : vector<8x256xf32>
    %c0_57 = arith.constant 0 : index
    %c0_58 = arith.constant 0 : index
    %127 = vector.load %arg22[%c0_57, %c0_58] : memref<16x256xf32, #tpu.memory_space<vmem>>, vector<8x256xf32>
    tpu.vector_store %arg22[%c0_57, %c0_58], %126 {strides = array<i32>} : memref<16x256xf32, #tpu.memory_space<vmem>>, vector<8x256xf32>,
    %128 = vector.extract_strided_slice %87 {offsets = [8, 0], sizes = [8, 256], strides = [1, 1]} : vector<16x256xf32> to vector<8x256xf32>
    %c1_59 = arith.constant 1 : index
    %c0_60 = arith.constant 0 : index
    %c0_61 = arith.constant 0 : index
    %129 = vector.load %arg2[%c1_59, %c0_60, %c0_61] : memref<2x4x256xf32, #tpu.memory_space<vmem>>, vector<1x4x256xf32>
    %130 = vector.shape_cast %129 : vector<1x4x256xf32> to vector<4x256xf32>
    %c0_62 = arith.constant 0 : index
    %c0_63 = arith.constant 0 : index
    %131 = vector.load %arg24[%c0_62, %c0_63] : memref<12x256xf32, #tpu.memory_space<vmem>>, vector<4x256xf32>
    tpu.vector_store %arg24[%c0_62, %c0_63], %130 {strides = array<i32>} : memref<12x256xf32, #tpu.memory_space<vmem>>, vector<4x256xf32>,
    %c4_64 = arith.constant 4 : index
    %c0_65 = arith.constant 0 : index
    %132 = vector.load %arg24[%c4_64, %c0_65] : memref<12x256xf32, #tpu.memory_space<vmem>>, vector<8x256xf32>
    tpu.vector_store %arg24[%c4_64, %c0_65], %128 {strides = array<i32>} : memref<12x256xf32, #tpu.memory_space<vmem>>, vector<8x256xf32>,
    %c0_66 = arith.constant 0 : index
    %c0_67 = arith.constant 0 : index
    %133 = vector.load %arg24[%c0_66, %c0_67] : memref<12x256xf32, #tpu.memory_space<vmem>>, vector<8x256xf32>
    %134 = vector.extract_strided_slice %11 {offsets = [0, 0], sizes = [1, 256], strides = [1, 1]} : vector<5x256xf32> to vector<1x256xf32>
    %135 = vector.broadcast %134 : vector<1x256xf32> to vector<8x256xf32>
    %136 = arith.mulf %133, %135 : vector<8x256xf32>
    %137 = arith.addf %128, %136 : vector<8x256xf32>
    %c1_68 = arith.constant 1 : index
    %c0_69 = arith.constant 0 : index
    %138 = vector.load %arg24[%c1_68, %c0_69] : memref<12x256xf32, #tpu.memory_space<vmem>>, vector<8x256xf32>
    %139 = vector.extract_strided_slice %11 {offsets = [1, 0], sizes = [1, 256], strides = [1, 1]} : vector<5x256xf32> to vector<1x256xf32>
    %140 = vector.broadcast %139 : vector<1x256xf32> to vector<8x256xf32>
    %141 = arith.mulf %138, %140 : vector<8x256xf32>
    %142 = arith.addf %137, %141 : vector<8x256xf32>
    %c2_70 = arith.constant 2 : index
    %c0_71 = arith.constant 0 : index
    %143 = vector.load %arg24[%c2_70, %c0_71] : memref<12x256xf32, #tpu.memory_space<vmem>>, vector<8x256xf32>
    %144 = vector.extract_strided_slice %11 {offsets = [2, 0], sizes = [1, 256], strides = [1, 1]} : vector<5x256xf32> to vector<1x256xf32>
    %145 = vector.broadcast %144 : vector<1x256xf32> to vector<8x256xf32>
    %146 = arith.mulf %143, %145 : vector<8x256xf32>
    %147 = arith.addf %142, %146 : vector<8x256xf32>
    %c3_72 = arith.constant 3 : index
    %c0_73 = arith.constant 0 : index
    %148 = vector.load %arg24[%c3_72, %c0_73] : memref<12x256xf32, #tpu.memory_space<vmem>>, vector<8x256xf32>
    %149 = vector.extract_strided_slice %11 {offsets = [3, 0], sizes = [1, 256], strides = [1, 1]} : vector<5x256xf32> to vector<1x256xf32>
    %150 = vector.broadcast %149 : vector<1x256xf32> to vector<8x256xf32>
    %151 = arith.mulf %148, %150 : vector<8x256xf32>
    %152 = arith.addf %147, %151 : vector<8x256xf32>
    %c4_74 = arith.constant 4 : index
    %c0_75 = arith.constant 0 : index
    %153 = vector.load %arg24[%c4_74, %c0_75] : memref<12x256xf32, #tpu.memory_space<vmem>>, vector<8x256xf32>
    %154 = vector.extract_strided_slice %11 {offsets = [4, 0], sizes = [1, 256], strides = [1, 1]} : vector<5x256xf32> to vector<1x256xf32>
    %155 = vector.broadcast %154 : vector<1x256xf32> to vector<8x256xf32>
    %156 = arith.mulf %153, %155 : vector<8x256xf32>
    %157 = arith.addf %152, %156 : vector<8x256xf32>
    %c8_76 = arith.constant 8 : index
    %c0_77 = arith.constant 0 : index
    %158 = vector.load %arg24[%c8_76, %c0_77] : memref<12x256xf32, #tpu.memory_space<vmem>>, vector<4x256xf32>
    %c1_78 = arith.constant 1 : index
    %c0_79 = arith.constant 0 : index
    %c0_80 = arith.constant 0 : index
    %159 = vector.load %arg23[%c1_78, %c0_79, %c0_80] : memref<2x4x256xf32, #tpu.memory_space<vmem>>, vector<1x4x256xf32>
    %160 = vector.shape_cast %159 : vector<1x4x256xf32> to vector<4x256xf32>
    %161 = vector.shape_cast %158 : vector<4x256xf32> to vector<1x4x256xf32>
    tpu.vector_store %arg23[%c1_78, %c0_79, %c0_80], %161 {strides = array<i32>} : memref<2x4x256xf32, #tpu.memory_space<vmem>>, vector<1x4x256xf32>,
    %162 = vector.extract_strided_slice %0 {offsets = [8, 0], sizes = [8, 256], strides = [1, 1]} : vector<16x256xf32> to vector<8x256xf32>
    %163 = vector.extract_strided_slice %1 {offsets = [8, 0], sizes = [8, 1], strides = [1, 1]} : vector<16x1xf32> to vector<8x1xf32>
    %164 = vector.broadcast %163 : vector<8x1xf32> to vector<8x256xf32>
    %165 = arith.mulf %157, %164 : vector<8x256xf32>
    %166 = arith.addf %162, %165 : vector<8x256xf32>
    %c8_81 = arith.constant 8 : index
    %c0_82 = arith.constant 0 : index
    %167 = vector.load %arg22[%c8_81, %c0_82] : memref<16x256xf32, #tpu.memory_space<vmem>>, vector<8x256xf32>
    tpu.vector_store %arg22[%c8_81, %c0_82], %166 {strides = array<i32>} : memref<16x256xf32, #tpu.memory_space<vmem>>, vector<8x256xf32>,
    %c0_83 = arith.constant 0 : index
    %c0_84 = arith.constant 0 : index
    %168 = vector.load %arg22[%c0_83, %c0_84] : memref<16x256xf32, #tpu.memory_space<vmem>>, vector<16x256xf32>
    %c0_85 = arith.constant 0 : index
    %c0_86 = arith.constant 0 : index
    %169 = vector.load %arg16[%c0_85, %c0_86] : memref<1x256xf32, #tpu.memory_space<vmem>>, vector<1x256xf32>
    %c0_87 = arith.constant 0 : index
    %c0_88 = arith.constant 0 : index
    %170 = vector.load %arg17[%c0_87, %c0_88] : memref<1x256xf32, #tpu.memory_space<vmem>>, vector<1x256xf32>
    %c0_89 = arith.constant 0 : index
    %c0_90 = arith.constant 0 : index
    %171 = vector.load %arg18[%c0_89, %c0_90] : memref<256x256xbf16, #tpu.memory_space<vmem>>, vector<256x256xbf16>
    %c0_91 = arith.constant 0 : index
    %c0_92 = arith.constant 0 : index
    %172 = vector.load %arg19[%c0_91, %c0_92] : memref<1x256xf32, #tpu.memory_space<vmem>>, vector<1x256xf32>
    %c0_93 = arith.constant 0 : index
    %c0_94 = arith.constant 0 : index
    %173 = vector.load %arg20[%c0_93, %c0_94] : memref<256x256xbf16, #tpu.memory_space<vmem>>, vector<256x256xbf16>
    %c0_95 = arith.constant 0 : index
    %c0_96 = arith.constant 0 : index
    %174 = vector.load %arg21[%c0_95, %c0_96] : memref<1x256xf32, #tpu.memory_space<vmem>>, vector<1x256xf32>
    %cst_97 = arith.constant dense<0.000000e+00> : vector<16xf32>
    %175 = vector.multi_reduction <add>, %168, %cst_97 [1] : vector<16x256xf32> to vector<16xf32>
    %176 = vector.shape_cast %175 : vector<16xf32> to vector<16x1xf32>
    %cst_98 = arith.constant 2.560000e+02 : f32
    %177 = vector.broadcast %cst_98 : f32 to vector<16x1xf32>
    %178 = arith.divf %176, %177 : vector<16x1xf32>
    %179 = vector.broadcast %178 : vector<16x1xf32> to vector<16x256xf32>
    %180 = arith.subf %168, %179 : vector<16x256xf32>
    %181 = arith.mulf %180, %180 : vector<16x256xf32>
    %cst_99 = arith.constant dense<0.000000e+00> : vector<16xf32>
    %182 = vector.multi_reduction <add>, %181, %cst_99 [1] : vector<16x256xf32> to vector<16xf32>
    %183 = vector.shape_cast %182 : vector<16xf32> to vector<16x1xf32>
    %cst_100 = arith.constant 2.560000e+02 : f32
    %184 = vector.broadcast %cst_100 : f32 to vector<16x1xf32>
    %185 = arith.divf %183, %184 : vector<16x1xf32>
    %186 = vector.broadcast %178 : vector<16x1xf32> to vector<16x256xf32>
    %187 = arith.subf %168, %186 : vector<16x256xf32>
    %cst_101 = arith.constant 9.99999996E-13 : f32
    %188 = vector.broadcast %cst_101 : f32 to vector<16x1xf32>
    %189 = arith.addf %185, %188 : vector<16x1xf32>
    %190 = math.rsqrt %189 : vector<16x1xf32>
    %191 = vector.broadcast %190 : vector<16x1xf32> to vector<16x256xf32>
    %192 = arith.mulf %187, %191 : vector<16x256xf32>
    %193 = vector.broadcast %169 : vector<1x256xf32> to vector<16x256xf32>
    %194 = arith.mulf %192, %193 : vector<16x256xf32>
    %195 = vector.broadcast %170 : vector<1x256xf32> to vector<16x256xf32>
    %196 = arith.addf %194, %195 : vector<16x256xf32>
    %197 = arith.truncf %196 : vector<16x256xf32> to vector<16x256xbf16>
    %cst_102 = arith.constant dense<0.000000e+00> : vector<16x256xf32>
    %198 = tpu.matmul %197, %171, %cst_102 {dimension_numbers = #tpu.dot_dimension_numbers<[1], [0], [0], [1], [0, 0, 1, 1], [], []>} : vector<16x256xbf16>, vector<256x256xbf16>, vector<16x256xf32> -> vector<16x256xf32>
    %199 = vector.broadcast %172 : vector<1x256xf32> to vector<16x256xf32>
    %200 = arith.addf %198, %199 : vector<16x256xf32>
    %cst_103 = arith.constant 0.0883883461 : f32
    %201 = vector.broadcast %cst_103 : f32 to vector<16x256xf32>
    %202 = arith.mulf %200, %201 : vector<16x256xf32>
    %c0_104 = arith.constant 0 : index
    %c0_105 = arith.constant 0 : index
    %c0_106 = arith.constant 0 : index
    %203 = vector.load %arg4[%c0_104, %c0_105, %c0_106] : memref<2x256x16xbf16, #tpu.memory_space<vmem>>, vector<1x256x16xbf16>
    %204 = vector.shape_cast %203 : vector<1x256x16xbf16> to vector<256x16xbf16>
    %c0_107 = arith.constant 0 : index
    %c0_108 = arith.constant 0 : index
    %c0_109 = arith.constant 0 : index
    %205 = vector.load %arg5[%c0_107, %c0_108, %c0_109] : memref<2x16x256xbf16, #tpu.memory_space<vmem>>, vector<1x16x256xbf16>
    %206 = vector.shape_cast %205 : vector<1x16x256xbf16> to vector<16x256xbf16>
    %c0_110 = arith.constant 0 : index
    %c0_111 = arith.constant 0 : index
    %c0_112 = arith.constant 0 : index
    %207 = vector.load %arg3[%c0_110, %c0_111, %c0_112] : memref<2x1x16xf32, #tpu.memory_space<vmem>>, vector<1x1x16xf32>
    %208 = vector.shape_cast %207 : vector<1x1x16xf32> to vector<1x16xf32>
    %209 = vector.extract_strided_slice %202 {offsets = [0, 0], sizes = [8, 128], strides = [1, 1]} : vector<16x256xf32> to vector<8x128xf32>
    %210 = arith.truncf %209 : vector<8x128xf32> to vector<8x128xbf16>
    %211 = vector.extract_strided_slice %204 {offsets = [0, 0], sizes = [128, 16], strides = [1, 1]} : vector<256x16xbf16> to vector<128x16xbf16>
    %cst_113 = arith.constant dense<0.000000e+00> : vector<8x16xf32>
    %212 = tpu.matmul %210, %211, %cst_113 {dimension_numbers = #tpu.dot_dimension_numbers<[1], [0], [0], [1], [0, 0, 1, 1], [], []>} : vector<8x128xbf16>, vector<128x16xbf16>, vector<8x16xf32> -> vector<8x16xf32>
    %213 = vector.broadcast %208 : vector<1x16xf32> to vector<8x16xf32>
    %214 = arith.addf %212, %213 : vector<8x16xf32>
    %cst_114 = arith.constant dense<0xFF800000> : vector<8xf32>
    %215 = vector.multi_reduction <maximumf>, %214, %cst_114 [1] : vector<8x16xf32> to vector<8xf32>
    %216 = vector.shape_cast %215 : vector<8xf32> to vector<8x1xf32>
    %217 = vector.broadcast %216 : vector<8x1xf32> to vector<8x16xf32>
    %218 = arith.subf %214, %217 : vector<8x16xf32>
    %219 = math.exp %218 : vector<8x16xf32>
    %cst_115 = arith.constant dense<0.000000e+00> : vector<8xf32>
    %220 = vector.multi_reduction <add>, %219, %cst_115 [1] : vector<8x16xf32> to vector<8xf32>
    %221 = vector.shape_cast %220 : vector<8xf32> to vector<8x1xf32>
    %222 = tpu.reciprocal %221 {approx = true} : vector<8x1xf32> -> vector<8x1xf32>
    %223 = vector.broadcast %222 : vector<8x1xf32> to vector<8x16xf32>
    %224 = arith.mulf %219, %223 : vector<8x16xf32>
    %225 = arith.truncf %224 : vector<8x16xf32> to vector<8x16xbf16>
    %226 = vector.extract_strided_slice %206 {offsets = [0, 0], sizes = [16, 128], strides = [1, 1]} : vector<16x256xbf16> to vector<16x128xbf16>
    %cst_116 = arith.constant dense<0.000000e+00> : vector<8x128xf32>
    %227 = tpu.matmul %225, %226, %cst_116 {dimension_numbers = #tpu.dot_dimension_numbers<[1], [0], [0], [1], [0, 0, 1, 1], [], []>} : vector<8x16xbf16>, vector<16x128xbf16>, vector<8x128xf32> -> vector<8x128xf32>
    %228 = vector.extract_strided_slice %202 {offsets = [0, 128], sizes = [8, 128], strides = [1, 1]} : vector<16x256xf32> to vector<8x128xf32>
    %229 = arith.truncf %228 : vector<8x128xf32> to vector<8x128xbf16>
    %230 = vector.extract_strided_slice %204 {offsets = [128, 0], sizes = [128, 16], strides = [1, 1]} : vector<256x16xbf16> to vector<128x16xbf16>
    %cst_117 = arith.constant dense<0.000000e+00> : vector<8x16xf32>
    %231 = tpu.matmul %229, %230, %cst_117 {dimension_numbers = #tpu.dot_dimension_numbers<[1], [0], [0], [1], [0, 0, 1, 1], [], []>} : vector<8x128xbf16>, vector<128x16xbf16>, vector<8x16xf32> -> vector<8x16xf32>
    %232 = vector.broadcast %208 : vector<1x16xf32> to vector<8x16xf32>
    %233 = arith.addf %231, %232 : vector<8x16xf32>
    %cst_118 = arith.constant dense<0xFF800000> : vector<8xf32>
    %234 = vector.multi_reduction <maximumf>, %233, %cst_118 [1] : vector<8x16xf32> to vector<8xf32>
    %235 = vector.shape_cast %234 : vector<8xf32> to vector<8x1xf32>
    %236 = vector.broadcast %235 : vector<8x1xf32> to vector<8x16xf32>
    %237 = arith.subf %233, %236 : vector<8x16xf32>
    %238 = math.exp %237 : vector<8x16xf32>
    %cst_119 = arith.constant dense<0.000000e+00> : vector<8xf32>
    %239 = vector.multi_reduction <add>, %238, %cst_119 [1] : vector<8x16xf32> to vector<8xf32>
    %240 = vector.shape_cast %239 : vector<8xf32> to vector<8x1xf32>
    %241 = tpu.reciprocal %240 {approx = true} : vector<8x1xf32> -> vector<8x1xf32>
    %242 = vector.broadcast %241 : vector<8x1xf32> to vector<8x16xf32>
    %243 = arith.mulf %238, %242 : vector<8x16xf32>
    %244 = arith.truncf %243 : vector<8x16xf32> to vector<8x16xbf16>
    %245 = vector.extract_strided_slice %206 {offsets = [0, 128], sizes = [16, 128], strides = [1, 1]} : vector<16x256xbf16> to vector<16x128xbf16>
    %cst_120 = arith.constant dense<0.000000e+00> : vector<8x128xf32>
    %246 = tpu.matmul %244, %245, %cst_120 {dimension_numbers = #tpu.dot_dimension_numbers<[1], [0], [0], [1], [0, 0, 1, 1], [], []>} : vector<8x16xbf16>, vector<16x128xbf16>, vector<8x128xf32> -> vector<8x128xf32>
    %247 = tpu.concatenate %227, %246 in 1 : vector<8x128xf32>, vector<8x128xf32> -> vector<8x256xf32>
    %c0_121 = arith.constant 0 : index
    %c0_122 = arith.constant 0 : index
    %248 = vector.load %arg25[%c0_121, %c0_122] : memref<16x256xf32, #tpu.memory_space<vmem>>, vector<8x256xf32>
    tpu.vector_store %arg25[%c0_121, %c0_122], %247 {strides = array<i32>} : memref<16x256xf32, #tpu.memory_space<vmem>>, vector<8x256xf32>,
    %c1_123 = arith.constant 1 : index
    %c0_124 = arith.constant 0 : index
    %c0_125 = arith.constant 0 : index
    %249 = vector.load %arg4[%c1_123, %c0_124, %c0_125] : memref<2x256x16xbf16, #tpu.memory_space<vmem>>, vector<1x256x16xbf16>
    %250 = vector.shape_cast %249 : vector<1x256x16xbf16> to vector<256x16xbf16>
    %c1_126 = arith.constant 1 : index
    %c0_127 = arith.constant 0 : index
    %c0_128 = arith.constant 0 : index
    %251 = vector.load %arg5[%c1_126, %c0_127, %c0_128] : memref<2x16x256xbf16, #tpu.memory_space<vmem>>, vector<1x16x256xbf16>
    %252 = vector.shape_cast %251 : vector<1x16x256xbf16> to vector<16x256xbf16>
    %c1_129 = arith.constant 1 : index
    %c0_130 = arith.constant 0 : index
    %c0_131 = arith.constant 0 : index
    %253 = vector.load %arg3[%c1_129, %c0_130, %c0_131] : memref<2x1x16xf32, #tpu.memory_space<vmem>>, vector<1x1x16xf32>
    %254 = vector.shape_cast %253 : vector<1x1x16xf32> to vector<1x16xf32>
    %255 = vector.extract_strided_slice %202 {offsets = [8, 0], sizes = [8, 128], strides = [1, 1]} : vector<16x256xf32> to vector<8x128xf32>
    %256 = arith.truncf %255 : vector<8x128xf32> to vector<8x128xbf16>
    %257 = vector.extract_strided_slice %250 {offsets = [0, 0], sizes = [128, 16], strides = [1, 1]} : vector<256x16xbf16> to vector<128x16xbf16>
    %cst_132 = arith.constant dense<0.000000e+00> : vector<8x16xf32>
    %258 = tpu.matmul %256, %257, %cst_132 {dimension_numbers = #tpu.dot_dimension_numbers<[1], [0], [0], [1], [0, 0, 1, 1], [], []>} : vector<8x128xbf16>, vector<128x16xbf16>, vector<8x16xf32> -> vector<8x16xf32>
    %259 = vector.broadcast %254 : vector<1x16xf32> to vector<8x16xf32>
    %260 = arith.addf %258, %259 : vector<8x16xf32>
    %cst_133 = arith.constant dense<0xFF800000> : vector<8xf32>
    %261 = vector.multi_reduction <maximumf>, %260, %cst_133 [1] : vector<8x16xf32> to vector<8xf32>
    %262 = vector.shape_cast %261 : vector<8xf32> to vector<8x1xf32>
    %263 = vector.broadcast %262 : vector<8x1xf32> to vector<8x16xf32>
    %264 = arith.subf %260, %263 : vector<8x16xf32>
    %265 = math.exp %264 : vector<8x16xf32>
    %cst_134 = arith.constant dense<0.000000e+00> : vector<8xf32>
    %266 = vector.multi_reduction <add>, %265, %cst_134 [1] : vector<8x16xf32> to vector<8xf32>
    %267 = vector.shape_cast %266 : vector<8xf32> to vector<8x1xf32>
    %268 = tpu.reciprocal %267 {approx = true} : vector<8x1xf32> -> vector<8x1xf32>
    %269 = vector.broadcast %268 : vector<8x1xf32> to vector<8x16xf32>
    %270 = arith.mulf %265, %269 : vector<8x16xf32>
    %271 = arith.truncf %270 : vector<8x16xf32> to vector<8x16xbf16>
    %272 = vector.extract_strided_slice %252 {offsets = [0, 0], sizes = [16, 128], strides = [1, 1]} : vector<16x256xbf16> to vector<16x128xbf16>
    %cst_135 = arith.constant dense<0.000000e+00> : vector<8x128xf32>
    %273 = tpu.matmul %271, %272, %cst_135 {dimension_numbers = #tpu.dot_dimension_numbers<[1], [0], [0], [1], [0, 0, 1, 1], [], []>} : vector<8x16xbf16>, vector<16x128xbf16>, vector<8x128xf32> -> vector<8x128xf32>
    %274 = vector.extract_strided_slice %202 {offsets = [8, 128], sizes = [8, 128], strides = [1, 1]} : vector<16x256xf32> to vector<8x128xf32>
    %275 = arith.truncf %274 : vector<8x128xf32> to vector<8x128xbf16>
    %276 = vector.extract_strided_slice %250 {offsets = [128, 0], sizes = [128, 16], strides = [1, 1]} : vector<256x16xbf16> to vector<128x16xbf16>
    %cst_136 = arith.constant dense<0.000000e+00> : vector<8x16xf32>
    %277 = tpu.matmul %275, %276, %cst_136 {dimension_numbers = #tpu.dot_dimension_numbers<[1], [0], [0], [1], [0, 0, 1, 1], [], []>} : vector<8x128xbf16>, vector<128x16xbf16>, vector<8x16xf32> -> vector<8x16xf32>
    %278 = vector.broadcast %254 : vector<1x16xf32> to vector<8x16xf32>
    %279 = arith.addf %277, %278 : vector<8x16xf32>
    %cst_137 = arith.constant dense<0xFF800000> : vector<8xf32>
    %280 = vector.multi_reduction <maximumf>, %279, %cst_137 [1] : vector<8x16xf32> to vector<8xf32>
    %281 = vector.shape_cast %280 : vector<8xf32> to vector<8x1xf32>
    %282 = vector.broadcast %281 : vector<8x1xf32> to vector<8x16xf32>
    %283 = arith.subf %279, %282 : vector<8x16xf32>
    %284 = math.exp %283 : vector<8x16xf32>
    %cst_138 = arith.constant dense<0.000000e+00> : vector<8xf32>
    %285 = vector.multi_reduction <add>, %284, %cst_138 [1] : vector<8x16xf32> to vector<8xf32>
    %286 = vector.shape_cast %285 : vector<8xf32> to vector<8x1xf32>
    %287 = tpu.reciprocal %286 {approx = true} : vector<8x1xf32> -> vector<8x1xf32>
    %288 = vector.broadcast %287 : vector<8x1xf32> to vector<8x16xf32>
    %289 = arith.mulf %284, %288 : vector<8x16xf32>
    %290 = arith.truncf %289 : vector<8x16xf32> to vector<8x16xbf16>
    %291 = vector.extract_strided_slice %252 {offsets = [0, 128], sizes = [16, 128], strides = [1, 1]} : vector<16x256xbf16> to vector<16x128xbf16>
    %cst_139 = arith.constant dense<0.000000e+00> : vector<8x128xf32>
    %292 = tpu.matmul %290, %291, %cst_139 {dimension_numbers = #tpu.dot_dimension_numbers<[1], [0], [0], [1], [0, 0, 1, 1], [], []>} : vector<8x16xbf16>, vector<16x128xbf16>, vector<8x128xf32> -> vector<8x128xf32>
    %293 = tpu.concatenate %273, %292 in 1 : vector<8x128xf32>, vector<8x128xf32> -> vector<8x256xf32>
    %c8_140 = arith.constant 8 : index
    %c0_141 = arith.constant 0 : index
    %294 = vector.load %arg25[%c8_140, %c0_141] : memref<16x256xf32, #tpu.memory_space<vmem>>, vector<8x256xf32>
    tpu.vector_store %arg25[%c8_140, %c0_141], %293 {strides = array<i32>} : memref<16x256xf32, #tpu.memory_space<vmem>>, vector<8x256xf32>,
    %c0_142 = arith.constant 0 : index
    %c0_143 = arith.constant 0 : index
    %295 = vector.load %arg25[%c0_142, %c0_143] : memref<16x256xf32, #tpu.memory_space<vmem>>, vector<16x256xf32>
    %296 = arith.truncf %295 : vector<16x256xf32> to vector<16x256xbf16>
    %cst_144 = arith.constant dense<0.000000e+00> : vector<16x256xf32>
    %297 = tpu.matmul %296, %173, %cst_144 {dimension_numbers = #tpu.dot_dimension_numbers<[1], [0], [0], [1], [0, 0, 1, 1], [], []>} : vector<16x256xbf16>, vector<256x256xbf16>, vector<16x256xf32> -> vector<16x256xf32>
    %298 = vector.broadcast %174 : vector<1x256xf32> to vector<16x256xf32>
    %299 = arith.addf %297, %298 : vector<16x256xf32>
    %300 = arith.addf %168, %299 : vector<16x256xf32>
    %c0_145 = arith.constant 0 : index
    %c0_146 = arith.constant 0 : index
    %301 = vector.load %arg22[%c0_145, %c0_146] : memref<16x256xf32, #tpu.memory_space<vmem>>, vector<16x256xf32>
    tpu.vector_store %arg22[%c0_145, %c0_146], %300 {strides = array<i32>} : memref<16x256xf32, #tpu.memory_space<vmem>>, vector<16x256xf32>,
    return
  }
}

module attributes {stable_mosaic.version = 11 : i64} {
  func.func @_layer_b_kernel(%arg0: memref<16x256xf32, #tpu.memory_space<vmem>>, %arg1: memref<16x1xf32, #tpu.memory_space<vmem>>, %arg2: memref<2x4x256xf32, #tpu.memory_space<vmem>>, %arg3: memref<1x256xf32, #tpu.memory_space<vmem>>, %arg4: memref<1x256xf32, #tpu.memory_space<vmem>>, %arg5: memref<256x512xbf16, #tpu.memory_space<vmem>>, %arg6: memref<1x512xf32, #tpu.memory_space<vmem>>, %arg7: memref<1x512xf32, #tpu.memory_space<vmem>>, %arg8: memref<1x512xf32, #tpu.memory_space<vmem>>, %arg9: memref<512x256xbf16, #tpu.memory_space<vmem>>, %arg10: memref<1x256xf32, #tpu.memory_space<vmem>>, %arg11: memref<1x256xf32, #tpu.memory_space<vmem>>, %arg12: memref<5x256xf32, #tpu.memory_space<vmem>>, %arg13: memref<16x256xf32, #tpu.memory_space<vmem>>, %arg14: memref<2x4x256xf32, #tpu.memory_space<vmem>>, %arg15: memref<12x256xf32, #tpu.memory_space<vmem>>) attributes {dimension_semantics = [], scalar_prefetch = 0 : i64, scratch_operands = 1 : i64, tpu.core_type = #tpu.core_type<tc>} {
    %c0 = arith.constant 0 : index
    %c0_0 = arith.constant 0 : index
    %0 = vector.load %arg0[%c0, %c0_0] : memref<16x256xf32, #tpu.memory_space<vmem>>, vector<16x256xf32>
    %c0_1 = arith.constant 0 : index
    %c0_2 = arith.constant 0 : index
    %1 = vector.load %arg1[%c0_1, %c0_2] : memref<16x1xf32, #tpu.memory_space<vmem>>, vector<16x1xf32>
    %c0_3 = arith.constant 0 : index
    %c0_4 = arith.constant 0 : index
    %2 = vector.load %arg3[%c0_3, %c0_4] : memref<1x256xf32, #tpu.memory_space<vmem>>, vector<1x256xf32>
    %c0_5 = arith.constant 0 : index
    %c0_6 = arith.constant 0 : index
    %3 = vector.load %arg4[%c0_5, %c0_6] : memref<1x256xf32, #tpu.memory_space<vmem>>, vector<1x256xf32>
    %c0_7 = arith.constant 0 : index
    %c0_8 = arith.constant 0 : index
    %4 = vector.load %arg5[%c0_7, %c0_8] : memref<256x512xbf16, #tpu.memory_space<vmem>>, vector<256x512xbf16>
    %c0_9 = arith.constant 0 : index
    %c0_10 = arith.constant 0 : index
    %5 = vector.load %arg6[%c0_9, %c0_10] : memref<1x512xf32, #tpu.memory_space<vmem>>, vector<1x512xf32>
    %c0_11 = arith.constant 0 : index
    %c0_12 = arith.constant 0 : index
    %6 = vector.load %arg7[%c0_11, %c0_12] : memref<1x512xf32, #tpu.memory_space<vmem>>, vector<1x512xf32>
    %c0_13 = arith.constant 0 : index
    %c0_14 = arith.constant 0 : index
    %7 = vector.load %arg8[%c0_13, %c0_14] : memref<1x512xf32, #tpu.memory_space<vmem>>, vector<1x512xf32>
    %c0_15 = arith.constant 0 : index
    %c0_16 = arith.constant 0 : index
    %8 = vector.load %arg9[%c0_15, %c0_16] : memref<512x256xbf16, #tpu.memory_space<vmem>>, vector<512x256xbf16>
    %c0_17 = arith.constant 0 : index
    %c0_18 = arith.constant 0 : index
    %9 = vector.load %arg10[%c0_17, %c0_18] : memref<1x256xf32, #tpu.memory_space<vmem>>, vector<1x256xf32>
    %c0_19 = arith.constant 0 : index
    %c0_20 = arith.constant 0 : index
    %10 = vector.load %arg11[%c0_19, %c0_20] : memref<1x256xf32, #tpu.memory_space<vmem>>, vector<1x256xf32>
    %c0_21 = arith.constant 0 : index
    %c0_22 = arith.constant 0 : index
    %11 = vector.load %arg12[%c0_21, %c0_22] : memref<5x256xf32, #tpu.memory_space<vmem>>, vector<5x256xf32>
    %cst = arith.constant dense<0.000000e+00> : vector<16xf32>
    %12 = vector.multi_reduction <add>, %0, %cst [1] : vector<16x256xf32> to vector<16xf32>
    %13 = vector.shape_cast %12 : vector<16xf32> to vector<16x1xf32>
    %cst_23 = arith.constant 2.560000e+02 : f32
    %14 = vector.broadcast %cst_23 : f32 to vector<16x1xf32>
    %15 = arith.divf %13, %14 : vector<16x1xf32>
    %16 = vector.broadcast %15 : vector<16x1xf32> to vector<16x256xf32>
    %17 = arith.subf %0, %16 : vector<16x256xf32>
    %18 = arith.mulf %17, %17 : vector<16x256xf32>
    %cst_24 = arith.constant dense<0.000000e+00> : vector<16xf32>
    %19 = vector.multi_reduction <add>, %18, %cst_24 [1] : vector<16x256xf32> to vector<16xf32>
    %20 = vector.shape_cast %19 : vector<16xf32> to vector<16x1xf32>
    %cst_25 = arith.constant 2.560000e+02 : f32
    %21 = vector.broadcast %cst_25 : f32 to vector<16x1xf32>
    %22 = arith.divf %20, %21 : vector<16x1xf32>
    %23 = vector.broadcast %15 : vector<16x1xf32> to vector<16x256xf32>
    %24 = arith.subf %0, %23 : vector<16x256xf32>
    %cst_26 = arith.constant 9.99999996E-13 : f32
    %25 = vector.broadcast %cst_26 : f32 to vector<16x1xf32>
    %26 = arith.addf %22, %25 : vector<16x1xf32>
    %27 = math.rsqrt %26 : vector<16x1xf32>
    %28 = vector.broadcast %27 : vector<16x1xf32> to vector<16x256xf32>
    %29 = arith.mulf %24, %28 : vector<16x256xf32>
    %30 = vector.broadcast %2 : vector<1x256xf32> to vector<16x256xf32>
    %31 = arith.mulf %29, %30 : vector<16x256xf32>
    %32 = vector.broadcast %3 : vector<1x256xf32> to vector<16x256xf32>
    %33 = arith.addf %31, %32 : vector<16x256xf32>
    %34 = arith.truncf %33 : vector<16x256xf32> to vector<16x256xbf16>
    %cst_27 = arith.constant dense<0.000000e+00> : vector<16x512xf32>
    %35 = tpu.matmul %34, %4, %cst_27 {dimension_numbers = #tpu.dot_dimension_numbers<[1], [0], [0], [1], [0, 0, 1, 1], [], []>} : vector<16x256xbf16>, vector<256x512xbf16>, vector<16x512xf32> -> vector<16x512xf32>
    %36 = vector.broadcast %5 : vector<1x512xf32> to vector<16x512xf32>
    %37 = arith.addf %35, %36 : vector<16x512xf32>
    %cst_28 = arith.constant 0.000000e+00 : f32
    %38 = vector.broadcast %cst_28 : f32 to vector<16x512xf32>
    %39 = arith.maximumf %37, %38 : vector<16x512xf32>
    %cst_29 = arith.constant dense<0.000000e+00> : vector<16xf32>
    %40 = vector.multi_reduction <add>, %39, %cst_29 [1] : vector<16x512xf32> to vector<16xf32>
    %41 = vector.shape_cast %40 : vector<16xf32> to vector<16x1xf32>
    %cst_30 = arith.constant 5.120000e+02 : f32
    %42 = vector.broadcast %cst_30 : f32 to vector<16x1xf32>
    %43 = arith.divf %41, %42 : vector<16x1xf32>
    %44 = vector.broadcast %43 : vector<16x1xf32> to vector<16x512xf32>
    %45 = arith.subf %39, %44 : vector<16x512xf32>
    %46 = arith.mulf %45, %45 : vector<16x512xf32>
    %cst_31 = arith.constant dense<0.000000e+00> : vector<16xf32>
    %47 = vector.multi_reduction <add>, %46, %cst_31 [1] : vector<16x512xf32> to vector<16xf32>
    %48 = vector.shape_cast %47 : vector<16xf32> to vector<16x1xf32>
    %cst_32 = arith.constant 5.120000e+02 : f32
    %49 = vector.broadcast %cst_32 : f32 to vector<16x1xf32>
    %50 = arith.divf %48, %49 : vector<16x1xf32>
    %51 = vector.broadcast %43 : vector<16x1xf32> to vector<16x512xf32>
    %52 = arith.subf %39, %51 : vector<16x512xf32>
    %cst_33 = arith.constant 9.99999996E-13 : f32
    %53 = vector.broadcast %cst_33 : f32 to vector<16x1xf32>
    %54 = arith.addf %50, %53 : vector<16x1xf32>
    %55 = math.rsqrt %54 : vector<16x1xf32>
    %56 = vector.broadcast %55 : vector<16x1xf32> to vector<16x512xf32>
    %57 = arith.mulf %52, %56 : vector<16x512xf32>
    %58 = vector.broadcast %6 : vector<1x512xf32> to vector<16x512xf32>
    %59 = arith.mulf %57, %58 : vector<16x512xf32>
    %60 = vector.broadcast %7 : vector<1x512xf32> to vector<16x512xf32>
    %61 = arith.addf %59, %60 : vector<16x512xf32>
    %62 = arith.truncf %61 : vector<16x512xf32> to vector<16x512xbf16>
    %cst_34 = arith.constant dense<0.000000e+00> : vector<16x256xf32>
    %63 = tpu.matmul %62, %8, %cst_34 {dimension_numbers = #tpu.dot_dimension_numbers<[1], [0], [0], [1], [0, 0, 1, 1], [], []>} : vector<16x512xbf16>, vector<512x256xbf16>, vector<16x256xf32> -> vector<16x256xf32>
    %cst_35 = arith.constant dense<0.000000e+00> : vector<16xf32>
    %64 = vector.multi_reduction <add>, %63, %cst_35 [1] : vector<16x256xf32> to vector<16xf32>
    %65 = vector.shape_cast %64 : vector<16xf32> to vector<16x1xf32>
    %cst_36 = arith.constant 2.560000e+02 : f32
    %66 = vector.broadcast %cst_36 : f32 to vector<16x1xf32>
    %67 = arith.divf %65, %66 : vector<16x1xf32>
    %68 = vector.broadcast %67 : vector<16x1xf32> to vector<16x256xf32>
    %69 = arith.subf %63, %68 : vector<16x256xf32>
    %70 = arith.mulf %69, %69 : vector<16x256xf32>
    %cst_37 = arith.constant dense<0.000000e+00> : vector<16xf32>
    %71 = vector.multi_reduction <add>, %70, %cst_37 [1] : vector<16x256xf32> to vector<16xf32>
    %72 = vector.shape_cast %71 : vector<16xf32> to vector<16x1xf32>
    %cst_38 = arith.constant 2.560000e+02 : f32
    %73 = vector.broadcast %cst_38 : f32 to vector<16x1xf32>
    %74 = arith.divf %72, %73 : vector<16x1xf32>
    %75 = vector.broadcast %67 : vector<16x1xf32> to vector<16x256xf32>
    %76 = arith.subf %63, %75 : vector<16x256xf32>
    %cst_39 = arith.constant 9.99999996E-13 : f32
    %77 = vector.broadcast %cst_39 : f32 to vector<16x1xf32>
    %78 = arith.addf %74, %77 : vector<16x1xf32>
    %79 = math.rsqrt %78 : vector<16x1xf32>
    %80 = vector.broadcast %79 : vector<16x1xf32> to vector<16x256xf32>
    %81 = arith.mulf %76, %80 : vector<16x256xf32>
    %82 = vector.broadcast %9 : vector<1x256xf32> to vector<16x256xf32>
    %83 = arith.mulf %81, %82 : vector<16x256xf32>
    %84 = vector.broadcast %10 : vector<1x256xf32> to vector<16x256xf32>
    %85 = arith.addf %83, %84 : vector<16x256xf32>
    %86 = vector.broadcast %1 : vector<16x1xf32> to vector<16x256xf32>
    %87 = arith.mulf %85, %86 : vector<16x256xf32>
    %88 = vector.extract_strided_slice %87 {offsets = [0, 0], sizes = [8, 256], strides = [1, 1]} : vector<16x256xf32> to vector<8x256xf32>
    %c0_40 = arith.constant 0 : index
    %c0_41 = arith.constant 0 : index
    %c0_42 = arith.constant 0 : index
    %89 = vector.load %arg2[%c0_40, %c0_41, %c0_42] : memref<2x4x256xf32, #tpu.memory_space<vmem>>, vector<1x4x256xf32>
    %90 = vector.shape_cast %89 : vector<1x4x256xf32> to vector<4x256xf32>
    %c0_43 = arith.constant 0 : index
    %c0_44 = arith.constant 0 : index
    %91 = vector.load %arg15[%c0_43, %c0_44] : memref<12x256xf32, #tpu.memory_space<vmem>>, vector<4x256xf32>
    tpu.vector_store %arg15[%c0_43, %c0_44], %90 {strides = array<i32>} : memref<12x256xf32, #tpu.memory_space<vmem>>, vector<4x256xf32>,
    %c4 = arith.constant 4 : index
    %c0_45 = arith.constant 0 : index
    %92 = vector.load %arg15[%c4, %c0_45] : memref<12x256xf32, #tpu.memory_space<vmem>>, vector<8x256xf32>
    tpu.vector_store %arg15[%c4, %c0_45], %88 {strides = array<i32>} : memref<12x256xf32, #tpu.memory_space<vmem>>, vector<8x256xf32>,
    %c0_46 = arith.constant 0 : index
    %c0_47 = arith.constant 0 : index
    %93 = vector.load %arg15[%c0_46, %c0_47] : memref<12x256xf32, #tpu.memory_space<vmem>>, vector<8x256xf32>
    %94 = vector.extract_strided_slice %11 {offsets = [0, 0], sizes = [1, 256], strides = [1, 1]} : vector<5x256xf32> to vector<1x256xf32>
    %95 = vector.broadcast %94 : vector<1x256xf32> to vector<8x256xf32>
    %96 = arith.mulf %93, %95 : vector<8x256xf32>
    %97 = arith.addf %88, %96 : vector<8x256xf32>
    %c1 = arith.constant 1 : index
    %c0_48 = arith.constant 0 : index
    %98 = vector.load %arg15[%c1, %c0_48] : memref<12x256xf32, #tpu.memory_space<vmem>>, vector<8x256xf32>
    %99 = vector.extract_strided_slice %11 {offsets = [1, 0], sizes = [1, 256], strides = [1, 1]} : vector<5x256xf32> to vector<1x256xf32>
    %100 = vector.broadcast %99 : vector<1x256xf32> to vector<8x256xf32>
    %101 = arith.mulf %98, %100 : vector<8x256xf32>
    %102 = arith.addf %97, %101 : vector<8x256xf32>
    %c2 = arith.constant 2 : index
    %c0_49 = arith.constant 0 : index
    %103 = vector.load %arg15[%c2, %c0_49] : memref<12x256xf32, #tpu.memory_space<vmem>>, vector<8x256xf32>
    %104 = vector.extract_strided_slice %11 {offsets = [2, 0], sizes = [1, 256], strides = [1, 1]} : vector<5x256xf32> to vector<1x256xf32>
    %105 = vector.broadcast %104 : vector<1x256xf32> to vector<8x256xf32>
    %106 = arith.mulf %103, %105 : vector<8x256xf32>
    %107 = arith.addf %102, %106 : vector<8x256xf32>
    %c3 = arith.constant 3 : index
    %c0_50 = arith.constant 0 : index
    %108 = vector.load %arg15[%c3, %c0_50] : memref<12x256xf32, #tpu.memory_space<vmem>>, vector<8x256xf32>
    %109 = vector.extract_strided_slice %11 {offsets = [3, 0], sizes = [1, 256], strides = [1, 1]} : vector<5x256xf32> to vector<1x256xf32>
    %110 = vector.broadcast %109 : vector<1x256xf32> to vector<8x256xf32>
    %111 = arith.mulf %108, %110 : vector<8x256xf32>
    %112 = arith.addf %107, %111 : vector<8x256xf32>
    %c4_51 = arith.constant 4 : index
    %c0_52 = arith.constant 0 : index
    %113 = vector.load %arg15[%c4_51, %c0_52] : memref<12x256xf32, #tpu.memory_space<vmem>>, vector<8x256xf32>
    %114 = vector.extract_strided_slice %11 {offsets = [4, 0], sizes = [1, 256], strides = [1, 1]} : vector<5x256xf32> to vector<1x256xf32>
    %115 = vector.broadcast %114 : vector<1x256xf32> to vector<8x256xf32>
    %116 = arith.mulf %113, %115 : vector<8x256xf32>
    %117 = arith.addf %112, %116 : vector<8x256xf32>
    %c8 = arith.constant 8 : index
    %c0_53 = arith.constant 0 : index
    %118 = vector.load %arg15[%c8, %c0_53] : memref<12x256xf32, #tpu.memory_space<vmem>>, vector<4x256xf32>
    %c0_54 = arith.constant 0 : index
    %c0_55 = arith.constant 0 : index
    %c0_56 = arith.constant 0 : index
    %119 = vector.load %arg14[%c0_54, %c0_55, %c0_56] : memref<2x4x256xf32, #tpu.memory_space<vmem>>, vector<1x4x256xf32>
    %120 = vector.shape_cast %119 : vector<1x4x256xf32> to vector<4x256xf32>
    %121 = vector.shape_cast %118 : vector<4x256xf32> to vector<1x4x256xf32>
    tpu.vector_store %arg14[%c0_54, %c0_55, %c0_56], %121 {strides = array<i32>} : memref<2x4x256xf32, #tpu.memory_space<vmem>>, vector<1x4x256xf32>,
    %122 = vector.extract_strided_slice %0 {offsets = [0, 0], sizes = [8, 256], strides = [1, 1]} : vector<16x256xf32> to vector<8x256xf32>
    %123 = vector.extract_strided_slice %1 {offsets = [0, 0], sizes = [8, 1], strides = [1, 1]} : vector<16x1xf32> to vector<8x1xf32>
    %124 = vector.broadcast %123 : vector<8x1xf32> to vector<8x256xf32>
    %125 = arith.mulf %117, %124 : vector<8x256xf32>
    %126 = arith.addf %122, %125 : vector<8x256xf32>
    %c0_57 = arith.constant 0 : index
    %c0_58 = arith.constant 0 : index
    %127 = vector.load %arg13[%c0_57, %c0_58] : memref<16x256xf32, #tpu.memory_space<vmem>>, vector<8x256xf32>
    tpu.vector_store %arg13[%c0_57, %c0_58], %126 {strides = array<i32>} : memref<16x256xf32, #tpu.memory_space<vmem>>, vector<8x256xf32>,
    %128 = vector.extract_strided_slice %87 {offsets = [8, 0], sizes = [8, 256], strides = [1, 1]} : vector<16x256xf32> to vector<8x256xf32>
    %c1_59 = arith.constant 1 : index
    %c0_60 = arith.constant 0 : index
    %c0_61 = arith.constant 0 : index
    %129 = vector.load %arg2[%c1_59, %c0_60, %c0_61] : memref<2x4x256xf32, #tpu.memory_space<vmem>>, vector<1x4x256xf32>
    %130 = vector.shape_cast %129 : vector<1x4x256xf32> to vector<4x256xf32>
    %c0_62 = arith.constant 0 : index
    %c0_63 = arith.constant 0 : index
    %131 = vector.load %arg15[%c0_62, %c0_63] : memref<12x256xf32, #tpu.memory_space<vmem>>, vector<4x256xf32>
    tpu.vector_store %arg15[%c0_62, %c0_63], %130 {strides = array<i32>} : memref<12x256xf32, #tpu.memory_space<vmem>>, vector<4x256xf32>,
    %c4_64 = arith.constant 4 : index
    %c0_65 = arith.constant 0 : index
    %132 = vector.load %arg15[%c4_64, %c0_65] : memref<12x256xf32, #tpu.memory_space<vmem>>, vector<8x256xf32>
    tpu.vector_store %arg15[%c4_64, %c0_65], %128 {strides = array<i32>} : memref<12x256xf32, #tpu.memory_space<vmem>>, vector<8x256xf32>,
    %c0_66 = arith.constant 0 : index
    %c0_67 = arith.constant 0 : index
    %133 = vector.load %arg15[%c0_66, %c0_67] : memref<12x256xf32, #tpu.memory_space<vmem>>, vector<8x256xf32>
    %134 = vector.extract_strided_slice %11 {offsets = [0, 0], sizes = [1, 256], strides = [1, 1]} : vector<5x256xf32> to vector<1x256xf32>
    %135 = vector.broadcast %134 : vector<1x256xf32> to vector<8x256xf32>
    %136 = arith.mulf %133, %135 : vector<8x256xf32>
    %137 = arith.addf %128, %136 : vector<8x256xf32>
    %c1_68 = arith.constant 1 : index
    %c0_69 = arith.constant 0 : index
    %138 = vector.load %arg15[%c1_68, %c0_69] : memref<12x256xf32, #tpu.memory_space<vmem>>, vector<8x256xf32>
    %139 = vector.extract_strided_slice %11 {offsets = [1, 0], sizes = [1, 256], strides = [1, 1]} : vector<5x256xf32> to vector<1x256xf32>
    %140 = vector.broadcast %139 : vector<1x256xf32> to vector<8x256xf32>
    %141 = arith.mulf %138, %140 : vector<8x256xf32>
    %142 = arith.addf %137, %141 : vector<8x256xf32>
    %c2_70 = arith.constant 2 : index
    %c0_71 = arith.constant 0 : index
    %143 = vector.load %arg15[%c2_70, %c0_71] : memref<12x256xf32, #tpu.memory_space<vmem>>, vector<8x256xf32>
    %144 = vector.extract_strided_slice %11 {offsets = [2, 0], sizes = [1, 256], strides = [1, 1]} : vector<5x256xf32> to vector<1x256xf32>
    %145 = vector.broadcast %144 : vector<1x256xf32> to vector<8x256xf32>
    %146 = arith.mulf %143, %145 : vector<8x256xf32>
    %147 = arith.addf %142, %146 : vector<8x256xf32>
    %c3_72 = arith.constant 3 : index
    %c0_73 = arith.constant 0 : index
    %148 = vector.load %arg15[%c3_72, %c0_73] : memref<12x256xf32, #tpu.memory_space<vmem>>, vector<8x256xf32>
    %149 = vector.extract_strided_slice %11 {offsets = [3, 0], sizes = [1, 256], strides = [1, 1]} : vector<5x256xf32> to vector<1x256xf32>
    %150 = vector.broadcast %149 : vector<1x256xf32> to vector<8x256xf32>
    %151 = arith.mulf %148, %150 : vector<8x256xf32>
    %152 = arith.addf %147, %151 : vector<8x256xf32>
    %c4_74 = arith.constant 4 : index
    %c0_75 = arith.constant 0 : index
    %153 = vector.load %arg15[%c4_74, %c0_75] : memref<12x256xf32, #tpu.memory_space<vmem>>, vector<8x256xf32>
    %154 = vector.extract_strided_slice %11 {offsets = [4, 0], sizes = [1, 256], strides = [1, 1]} : vector<5x256xf32> to vector<1x256xf32>
    %155 = vector.broadcast %154 : vector<1x256xf32> to vector<8x256xf32>
    %156 = arith.mulf %153, %155 : vector<8x256xf32>
    %157 = arith.addf %152, %156 : vector<8x256xf32>
    %c8_76 = arith.constant 8 : index
    %c0_77 = arith.constant 0 : index
    %158 = vector.load %arg15[%c8_76, %c0_77] : memref<12x256xf32, #tpu.memory_space<vmem>>, vector<4x256xf32>
    %c1_78 = arith.constant 1 : index
    %c0_79 = arith.constant 0 : index
    %c0_80 = arith.constant 0 : index
    %159 = vector.load %arg14[%c1_78, %c0_79, %c0_80] : memref<2x4x256xf32, #tpu.memory_space<vmem>>, vector<1x4x256xf32>
    %160 = vector.shape_cast %159 : vector<1x4x256xf32> to vector<4x256xf32>
    %161 = vector.shape_cast %158 : vector<4x256xf32> to vector<1x4x256xf32>
    tpu.vector_store %arg14[%c1_78, %c0_79, %c0_80], %161 {strides = array<i32>} : memref<2x4x256xf32, #tpu.memory_space<vmem>>, vector<1x4x256xf32>,
    %162 = vector.extract_strided_slice %0 {offsets = [8, 0], sizes = [8, 256], strides = [1, 1]} : vector<16x256xf32> to vector<8x256xf32>
    %163 = vector.extract_strided_slice %1 {offsets = [8, 0], sizes = [8, 1], strides = [1, 1]} : vector<16x1xf32> to vector<8x1xf32>
    %164 = vector.broadcast %163 : vector<8x1xf32> to vector<8x256xf32>
    %165 = arith.mulf %157, %164 : vector<8x256xf32>
    %166 = arith.addf %162, %165 : vector<8x256xf32>
    %c8_81 = arith.constant 8 : index
    %c0_82 = arith.constant 0 : index
    %167 = vector.load %arg13[%c8_81, %c0_82] : memref<16x256xf32, #tpu.memory_space<vmem>>, vector<8x256xf32>
    tpu.vector_store %arg13[%c8_81, %c0_82], %166 {strides = array<i32>} : memref<16x256xf32, #tpu.memory_space<vmem>>, vector<8x256xf32>,
    return
  }
}

module attributes {stable_mosaic.version = 11 : i64} {
  func.func @_final_kernel(%arg0: i32, %arg1: memref<16x256xf32, #tpu.memory_space<vmem>>, %arg2: memref<1x256xf32, #tpu.memory_space<vmem>>, %arg3: memref<1x256xf32, #tpu.memory_space<vmem>>, %arg4: memref<256x512xbf16, #tpu.memory_space<vmem>>, %arg5: memref<1x512xf32, #tpu.memory_space<vmem>>, %arg6: memref<16x512xf32, #tpu.memory_space<vmem>>) attributes {dimension_semantics = [#tpu.dimension_semantics<parallel>], iteration_bounds = array<i64: 1>, scalar_prefetch = 0 : i64, scratch_operands = 0 : i64, tpu.core_type = #tpu.core_type<tc>, window_params = [{pipeline_mode = #tpu.pipeline_mode<synchronous>, transform_indices = @transform_0, window_bounds = array<i64: 16, 256>}, {pipeline_mode = #tpu.pipeline_mode<synchronous>, transform_indices = @transform_1, window_bounds = array<i64: 1, 256>}, {pipeline_mode = #tpu.pipeline_mode<synchronous>, transform_indices = @transform_2, window_bounds = array<i64: 1, 256>}, {transform_indices = @transform_3, window_bounds = array<i64: 256, 512>}, {transform_indices = @transform_4, window_bounds = array<i64: 1, 512>}, {transform_indices = @transform_5, window_bounds = array<i64: 16, 512>}]} {
    %c0 = arith.constant 0 : index
    %c0_0 = arith.constant 0 : index
    %0 = vector.load %arg1[%c0, %c0_0] : memref<16x256xf32, #tpu.memory_space<vmem>>, vector<16x256xf32>
    %c0_1 = arith.constant 0 : index
    %c0_2 = arith.constant 0 : index
    %1 = vector.load %arg2[%c0_1, %c0_2] : memref<1x256xf32, #tpu.memory_space<vmem>>, vector<1x256xf32>
    %c0_3 = arith.constant 0 : index
    %c0_4 = arith.constant 0 : index
    %2 = vector.load %arg3[%c0_3, %c0_4] : memref<1x256xf32, #tpu.memory_space<vmem>>, vector<1x256xf32>
    %cst = arith.constant dense<0.000000e+00> : vector<16xf32>
    %3 = vector.multi_reduction <add>, %0, %cst [1] : vector<16x256xf32> to vector<16xf32>
    %4 = vector.shape_cast %3 : vector<16xf32> to vector<16x1xf32>
    %cst_5 = arith.constant 2.560000e+02 : f32
    %5 = vector.broadcast %cst_5 : f32 to vector<16x1xf32>
    %6 = arith.divf %4, %5 : vector<16x1xf32>
    %7 = vector.broadcast %6 : vector<16x1xf32> to vector<16x256xf32>
    %8 = arith.subf %0, %7 : vector<16x256xf32>
    %9 = arith.mulf %8, %8 : vector<16x256xf32>
    %cst_6 = arith.constant dense<0.000000e+00> : vector<16xf32>
    %10 = vector.multi_reduction <add>, %9, %cst_6 [1] : vector<16x256xf32> to vector<16xf32>
    %11 = vector.shape_cast %10 : vector<16xf32> to vector<16x1xf32>
    %cst_7 = arith.constant 2.560000e+02 : f32
    %12 = vector.broadcast %cst_7 : f32 to vector<16x1xf32>
    %13 = arith.divf %11, %12 : vector<16x1xf32>
    %14 = vector.broadcast %6 : vector<16x1xf32> to vector<16x256xf32>
    %15 = arith.subf %0, %14 : vector<16x256xf32>
    %cst_8 = arith.constant 9.99999996E-13 : f32
    %16 = vector.broadcast %cst_8 : f32 to vector<16x1xf32>
    %17 = arith.addf %13, %16 : vector<16x1xf32>
    %18 = math.rsqrt %17 : vector<16x1xf32>
    %19 = vector.broadcast %18 : vector<16x1xf32> to vector<16x256xf32>
    %20 = arith.mulf %15, %19 : vector<16x256xf32>
    %21 = vector.broadcast %1 : vector<1x256xf32> to vector<16x256xf32>
    %22 = arith.mulf %20, %21 : vector<16x256xf32>
    %23 = vector.broadcast %2 : vector<1x256xf32> to vector<16x256xf32>
    %24 = arith.addf %22, %23 : vector<16x256xf32>
    %25 = arith.truncf %24 : vector<16x256xf32> to vector<16x256xbf16>
    %c0_9 = arith.constant 0 : index
    %c0_10 = arith.constant 0 : index
    %26 = vector.load %arg4[%c0_9, %c0_10] : memref<256x512xbf16, #tpu.memory_space<vmem>>, vector<256x512xbf16>
    %cst_11 = arith.constant dense<0.000000e+00> : vector<16x512xf32>
    %27 = tpu.matmul %25, %26, %cst_11 {dimension_numbers = #tpu.dot_dimension_numbers<[1], [0], [0], [1], [0, 0, 1, 1], [], []>} : vector<16x256xbf16>, vector<256x512xbf16>, vector<16x512xf32> -> vector<16x512xf32>
    %c0_12 = arith.constant 0 : index
    %c0_13 = arith.constant 0 : index
    %28 = vector.load %arg5[%c0_12, %c0_13] : memref<1x512xf32, #tpu.memory_space<vmem>>, vector<1x512xf32>
    %29 = vector.broadcast %28 : vector<1x512xf32> to vector<16x512xf32>
    %30 = arith.addf %27, %29 : vector<16x512xf32>
    %c0_14 = arith.constant 0 : index
    %c0_15 = arith.constant 0 : index
    %31 = vector.load %arg6[%c0_14, %c0_15] : memref<16x512xf32, #tpu.memory_space<vmem>>, vector<16x512xf32>
    tpu.vector_store %arg6[%c0_14, %c0_15], %30 {strides = array<i32>} : memref<16x512xf32, #tpu.memory_space<vmem>>, vector<16x512xf32>,
    return
  }
  func.func @transform_0(%arg0: i32) -> (i32, i32) {
    %c0_i32 = arith.constant 0 : i32
    %c0_i32_0 = arith.constant 0 : i32
    %c0_i32_1 = arith.constant 0 : i32
    return %c0_i32, %c0_i32_0 : i32, i32
  }
  func.func @transform_1(%arg0: i32) -> (i32, i32) {
    %c0_i32 = arith.constant 0 : i32
    %c0_i32_0 = arith.constant 0 : i32
    %c0_i32_1 = arith.constant 0 : i32
    return %c0_i32, %c0_i32_0 : i32, i32
  }
  func.func @transform_2(%arg0: i32) -> (i32, i32) {
    %c0_i32 = arith.constant 0 : i32
    %c0_i32_0 = arith.constant 0 : i32
    %c0_i32_1 = arith.constant 0 : i32
    return %c0_i32, %c0_i32_0 : i32, i32
  }
  func.func @transform_3(%arg0: i32) -> (i32, i32) {
    %c0_i32 = arith.constant 0 : i32
    %c0_i32_0 = arith.constant 0 : i32
    return %c0_i32, %arg0 : i32, i32
  }
  func.func @transform_4(%arg0: i32) -> (i32, i32) {
    %c0_i32 = arith.constant 0 : i32
    %c0_i32_0 = arith.constant 0 : i32
    return %c0_i32, %arg0 : i32, i32
  }
  func.func @transform_5(%arg0: i32) -> (i32, i32) {
    %c0_i32 = arith.constant 0 : i32
    %c0_i32_0 = arith.constant 0 : i32
    return %c0_i32, %arg0 : i32, i32
  }
}

module attributes {stable_mosaic.version = 11 : i64} {
  func.func @_ln_ffn_kernel(%arg0: i32, %arg1: memref<16x256xf32, #tpu.memory_space<vmem>>, %arg2: memref<1x256xf32, #tpu.memory_space<vmem>>, %arg3: memref<1x256xf32, #tpu.memory_space<vmem>>, %arg4: memref<256x512xbf16, #tpu.memory_space<vmem>>, %arg5: memref<1x512xf32, #tpu.memory_space<vmem>>, %arg6: memref<1x512xf32, #tpu.memory_space<vmem>>, %arg7: memref<1x512xf32, #tpu.memory_space<vmem>>, %arg8: memref<512x256xbf16, #tpu.memory_space<vmem>>, %arg9: memref<16x256xf32, #tpu.memory_space<vmem>>) attributes {dimension_semantics = [#tpu.dimension_semantics<parallel>], iteration_bounds = array<i64: 1>, scalar_prefetch = 0 : i64, scratch_operands = 0 : i64, tpu.core_type = #tpu.core_type<tc>, window_params = [{transform_indices = @transform_0, window_bounds = array<i64: 16, 256>}, {pipeline_mode = #tpu.pipeline_mode<synchronous>, transform_indices = @transform_1, window_bounds = array<i64: 1, 256>}, {pipeline_mode = #tpu.pipeline_mode<synchronous>, transform_indices = @transform_2, window_bounds = array<i64: 1, 256>}, {pipeline_mode = #tpu.pipeline_mode<synchronous>, transform_indices = @transform_3, window_bounds = array<i64: 256, 512>}, {pipeline_mode = #tpu.pipeline_mode<synchronous>, transform_indices = @transform_4, window_bounds = array<i64: 1, 512>}, {pipeline_mode = #tpu.pipeline_mode<synchronous>, transform_indices = @transform_5, window_bounds = array<i64: 1, 512>}, {pipeline_mode = #tpu.pipeline_mode<synchronous>, transform_indices = @transform_6, window_bounds = array<i64: 1, 512>}, {pipeline_mode = #tpu.pipeline_mode<synchronous>, transform_indices = @transform_7, window_bounds = array<i64: 512, 256>}, {transform_indices = @transform_8, window_bounds = array<i64: 16, 256>}]} {
    %c0 = arith.constant 0 : index
    %c0_0 = arith.constant 0 : index
    %0 = vector.load %arg1[%c0, %c0_0] : memref<16x256xf32, #tpu.memory_space<vmem>>, vector<16x256xf32>
    %c0_1 = arith.constant 0 : index
    %c0_2 = arith.constant 0 : index
    %1 = vector.load %arg2[%c0_1, %c0_2] : memref<1x256xf32, #tpu.memory_space<vmem>>, vector<1x256xf32>
    %c0_3 = arith.constant 0 : index
    %c0_4 = arith.constant 0 : index
    %2 = vector.load %arg3[%c0_3, %c0_4] : memref<1x256xf32, #tpu.memory_space<vmem>>, vector<1x256xf32>
    %cst = arith.constant dense<0.000000e+00> : vector<16xf32>
    %3 = vector.multi_reduction <add>, %0, %cst [1] : vector<16x256xf32> to vector<16xf32>
    %4 = vector.shape_cast %3 : vector<16xf32> to vector<16x1xf32>
    %cst_5 = arith.constant 2.560000e+02 : f32
    %5 = vector.broadcast %cst_5 : f32 to vector<16x1xf32>
    %6 = arith.divf %4, %5 : vector<16x1xf32>
    %7 = vector.broadcast %6 : vector<16x1xf32> to vector<16x256xf32>
    %8 = arith.subf %0, %7 : vector<16x256xf32>
    %9 = arith.mulf %8, %8 : vector<16x256xf32>
    %cst_6 = arith.constant dense<0.000000e+00> : vector<16xf32>
    %10 = vector.multi_reduction <add>, %9, %cst_6 [1] : vector<16x256xf32> to vector<16xf32>
    %11 = vector.shape_cast %10 : vector<16xf32> to vector<16x1xf32>
    %cst_7 = arith.constant 2.560000e+02 : f32
    %12 = vector.broadcast %cst_7 : f32 to vector<16x1xf32>
    %13 = arith.divf %11, %12 : vector<16x1xf32>
    %14 = vector.broadcast %6 : vector<16x1xf32> to vector<16x256xf32>
    %15 = arith.subf %0, %14 : vector<16x256xf32>
    %cst_8 = arith.constant 9.99999996E-13 : f32
    %16 = vector.broadcast %cst_8 : f32 to vector<16x1xf32>
    %17 = arith.addf %13, %16 : vector<16x1xf32>
    %18 = math.rsqrt %17 : vector<16x1xf32>
    %19 = vector.broadcast %18 : vector<16x1xf32> to vector<16x256xf32>
    %20 = arith.mulf %15, %19 : vector<16x256xf32>
    %21 = vector.broadcast %1 : vector<1x256xf32> to vector<16x256xf32>
    %22 = arith.mulf %20, %21 : vector<16x256xf32>
    %23 = vector.broadcast %2 : vector<1x256xf32> to vector<16x256xf32>
    %24 = arith.addf %22, %23 : vector<16x256xf32>
    %25 = arith.truncf %24 : vector<16x256xf32> to vector<16x256xbf16>
    %c0_9 = arith.constant 0 : index
    %c0_10 = arith.constant 0 : index
    %26 = vector.load %arg4[%c0_9, %c0_10] : memref<256x512xbf16, #tpu.memory_space<vmem>>, vector<256x512xbf16>
    %cst_11 = arith.constant dense<0.000000e+00> : vector<16x512xf32>
    %27 = tpu.matmul %25, %26, %cst_11 {dimension_numbers = #tpu.dot_dimension_numbers<[1], [0], [0], [1], [0, 0, 1, 1], [], []>} : vector<16x256xbf16>, vector<256x512xbf16>, vector<16x512xf32> -> vector<16x512xf32>
    %c0_12 = arith.constant 0 : index
    %c0_13 = arith.constant 0 : index
    %28 = vector.load %arg5[%c0_12, %c0_13] : memref<1x512xf32, #tpu.memory_space<vmem>>, vector<1x512xf32>
    %29 = vector.broadcast %28 : vector<1x512xf32> to vector<16x512xf32>
    %30 = arith.addf %27, %29 : vector<16x512xf32>
    %cst_14 = arith.constant 0.000000e+00 : f32
    %31 = vector.broadcast %cst_14 : f32 to vector<16x512xf32>
    %32 = arith.maximumf %30, %31 : vector<16x512xf32>
    %c0_15 = arith.constant 0 : index
    %c0_16 = arith.constant 0 : index
    %33 = vector.load %arg6[%c0_15, %c0_16] : memref<1x512xf32, #tpu.memory_space<vmem>>, vector<1x512xf32>
    %c0_17 = arith.constant 0 : index
    %c0_18 = arith.constant 0 : index
    %34 = vector.load %arg7[%c0_17, %c0_18] : memref<1x512xf32, #tpu.memory_space<vmem>>, vector<1x512xf32>
    %cst_19 = arith.constant dense<0.000000e+00> : vector<16xf32>
    %35 = vector.multi_reduction <add>, %32, %cst_19 [1] : vector<16x512xf32> to vector<16xf32>
    %36 = vector.shape_cast %35 : vector<16xf32> to vector<16x1xf32>
    %cst_20 = arith.constant 5.120000e+02 : f32
    %37 = vector.broadcast %cst_20 : f32 to vector<16x1xf32>
    %38 = arith.divf %36, %37 : vector<16x1xf32>
    %39 = vector.broadcast %38 : vector<16x1xf32> to vector<16x512xf32>
    %40 = arith.subf %32, %39 : vector<16x512xf32>
    %41 = arith.mulf %40, %40 : vector<16x512xf32>
    %cst_21 = arith.constant dense<0.000000e+00> : vector<16xf32>
    %42 = vector.multi_reduction <add>, %41, %cst_21 [1] : vector<16x512xf32> to vector<16xf32>
    %43 = vector.shape_cast %42 : vector<16xf32> to vector<16x1xf32>
    %cst_22 = arith.constant 5.120000e+02 : f32
    %44 = vector.broadcast %cst_22 : f32 to vector<16x1xf32>
    %45 = arith.divf %43, %44 : vector<16x1xf32>
    %46 = vector.broadcast %38 : vector<16x1xf32> to vector<16x512xf32>
    %47 = arith.subf %32, %46 : vector<16x512xf32>
    %cst_23 = arith.constant 9.99999996E-13 : f32
    %48 = vector.broadcast %cst_23 : f32 to vector<16x1xf32>
    %49 = arith.addf %45, %48 : vector<16x1xf32>
    %50 = math.rsqrt %49 : vector<16x1xf32>
    %51 = vector.broadcast %50 : vector<16x1xf32> to vector<16x512xf32>
    %52 = arith.mulf %47, %51 : vector<16x512xf32>
    %53 = vector.broadcast %33 : vector<1x512xf32> to vector<16x512xf32>
    %54 = arith.mulf %52, %53 : vector<16x512xf32>
    %55 = vector.broadcast %34 : vector<1x512xf32> to vector<16x512xf32>
    %56 = arith.addf %54, %55 : vector<16x512xf32>
    %57 = arith.truncf %56 : vector<16x512xf32> to vector<16x512xbf16>
    %c0_24 = arith.constant 0 : index
    %c0_25 = arith.constant 0 : index
    %58 = vector.load %arg8[%c0_24, %c0_25] : memref<512x256xbf16, #tpu.memory_space<vmem>>, vector<512x256xbf16>
    %cst_26 = arith.constant dense<0.000000e+00> : vector<16x256xf32>
    %59 = tpu.matmul %57, %58, %cst_26 {dimension_numbers = #tpu.dot_dimension_numbers<[1], [0], [0], [1], [0, 0, 1, 1], [], []>} : vector<16x512xbf16>, vector<512x256xbf16>, vector<16x256xf32> -> vector<16x256xf32>
    %c0_27 = arith.constant 0 : index
    %c0_28 = arith.constant 0 : index
    %60 = vector.load %arg9[%c0_27, %c0_28] : memref<16x256xf32, #tpu.memory_space<vmem>>, vector<16x256xf32>
    tpu.vector_store %arg9[%c0_27, %c0_28], %59 {strides = array<i32>} : memref<16x256xf32, #tpu.memory_space<vmem>>, vector<16x256xf32>,
    return
  }
  func.func @transform_0(%arg0: i32) -> (i32, i32) {
    %c0_i32 = arith.constant 0 : i32
    %c0_i32_0 = arith.constant 0 : i32
    return %arg0, %c0_i32 : i32, i32
  }
  func.func @transform_1(%arg0: i32) -> (i32, i32) {
    %c0_i32 = arith.constant 0 : i32
    %c0_i32_0 = arith.constant 0 : i32
    %c0_i32_1 = arith.constant 0 : i32
    return %c0_i32, %c0_i32_0 : i32, i32
  }
  func.func @transform_2(%arg0: i32) -> (i32, i32) {
    %c0_i32 = arith.constant 0 : i32
    %c0_i32_0 = arith.constant 0 : i32
    %c0_i32_1 = arith.constant 0 : i32
    return %c0_i32, %c0_i32_0 : i32, i32
  }
  func.func @transform_3(%arg0: i32) -> (i32, i32) {
    %c0_i32 = arith.constant 0 : i32
    %c0_i32_0 = arith.constant 0 : i32
    %c0_i32_1 = arith.constant 0 : i32
    return %c0_i32, %c0_i32_0 : i32, i32
  }
  func.func @transform_4(%arg0: i32) -> (i32, i32) {
    %c0_i32 = arith.constant 0 : i32
    %c0_i32_0 = arith.constant 0 : i32
    %c0_i32_1 = arith.constant 0 : i32
    return %c0_i32, %c0_i32_0 : i32, i32
  }
  func.func @transform_5(%arg0: i32) -> (i32, i32) {
    %c0_i32 = arith.constant 0 : i32
    %c0_i32_0 = arith.constant 0 : i32
    %c0_i32_1 = arith.constant 0 : i32
    return %c0_i32, %c0_i32_0 : i32, i32
  }
  func.func @transform_6(%arg0: i32) -> (i32, i32) {
    %c0_i32 = arith.constant 0 : i32
    %c0_i32_0 = arith.constant 0 : i32
    %c0_i32_1 = arith.constant 0 : i32
    return %c0_i32, %c0_i32_0 : i32, i32
  }
  func.func @transform_7(%arg0: i32) -> (i32, i32) {
    %c0_i32 = arith.constant 0 : i32
    %c0_i32_0 = arith.constant 0 : i32
    %c0_i32_1 = arith.constant 0 : i32
    return %c0_i32, %c0_i32_0 : i32, i32
  }
  func.func @transform_8(%arg0: i32) -> (i32, i32) {
    %c0_i32 = arith.constant 0 : i32
    %c0_i32_0 = arith.constant 0 : i32
    return %arg0, %c0_i32 : i32, i32
  }
}

</mosaic_0001>

<llo_original>
// kernel: tpu_custom_call.1
$region0: #{tpu_custom_call.1}
  #allocation0 [shape = 'u32[]', space=smem, size = 0x4, offset = 0x4, fixed_abs, tag = 'smem constant byte address 0x4 - core index']
  #allocation1 [shape = 'u32[144,128]{1,0:T(1,128)}', space=vmem, size = 0x12000, scoped, tag = 'internal scratch']
  %s0 = inlined_call_operand.hbm [shape: f32[8,128], index: 0, kind: input, shape index: {}]
  %s1 = inlined_call_operand.hbm [shape: f32[16,128], index: 1, kind: input, shape index: {}]
  %s2 = inlined_call_operand.hbm [shape: f32[16,128], index: 2, kind: output, shape index: {}]
  %s3 = sld [smem:[#allocation0]]
  $region49: #{tpu_custom_call.1} parent=0
    _
  %s5 = ssub.s32 1, %s3
  %s6 = scalar_select 0, %s5, %s3
  $region1: #{tpu_custom_call.1} parent=0
    #allocation2 [shape = 'u8[4096]{0}', space=vmem, size = 0x1000, scoped, tag = 'input window, operand 0, single buffered']
    #allocation3 [shape = 's32[2]{0}', space=sflag, size = 0x8, scoped, tag = 'scoped memory for tpu_custom_call.1']
    #allocation4 [shape = 's32[2]{0}', space=sflag, size = 0x8, scoped, tag = 'scoped memory for tpu_custom_call.1']
    #allocation5 [shape = 'u8[8192]{0}', space=vmem, size = 0x2000, scoped, tag = 'input window, operand 1']
    #allocation6 [shape = 's32[2]{0}', space=sflag, size = 0x8, scoped, tag = 'scoped memory for tpu_custom_call.1']
    #allocation7 [shape = 'u8[8192]{0}', space=vmem, size = 0x2000, scoped, tag = 'output window, operand 0']
    %7 = vsyncpa [#allocation3], 0
    %8 = vsyncpa [#allocation6], 0
    %s9 = scalar_lea.sflag [#allocation6], 1
    %10 = vsyncpa %s9, 0
    %11 = vsyncpa [#allocation4], 0
    %s12 = scalar_lea.sflag [#allocation4], 1
    %13 = vsyncpa %s12, 0
    loop: start=0, step=1, limit=4
    $region2: #{tpu_custom_call.1} parent=1 // loop_pre_header
      _
    $region3: #{tpu_custom_call.1} parent=1 // loop_header
      %s15 = sphi 0, %s19
      %p16 = scmp.ge.s32.totalorder %s15, 4
      %s23 = sphi 0, %s23
      %s25 = sphi 0, %s23
      %s26 = sphi 0, %s25
      %s40 = sphi 0, %s26
      %s46 = sphi 0, %s48
      %s49 = sphi 0, %s46
      %s50 = sphi 0, %s49
      %s66 = sphi 0, %s50
      %s72 = sphi 0, %s74
      %s75 = sphi 0, %s72
      %s76 = sphi 0, %s75
      %s92 = sphi 0, %s76
    $region4: #{tpu_custom_call.1} parent=1 // loop_header_branch
      %18 = sbr.rel (%p16) target = $region8
    $region5: #{tpu_custom_call.1} parent=1 // loop_body
      %s20 = ssub.s32 %s15, 1
      %s21 = ssub.s32 %s15, 2
      %s22 = sadd.s32 %s15, 1
      %s24 = sadd.s32 %s23, 1
      %p27 = scmp.eq.s32.totalorder %s15, 1
      %p28 = scmp.ne.s32.totalorder %s23, %s25
      %p29 = scmp.eq.s32.totalorder %s15, 0
      %p30 = por %p28, %p29
      %p31 = scmp.ne.s32.totalorder %s23, %s25
      %p32 = scmp.eq.s32.totalorder %s20, 1
      %p33 = por %p31, %p32
      %p34 = scmp.ne.s32.totalorder %s25, %s26
      %p35 = scmp.eq.s32.totalorder %s20, 0
      %p36 = por %p34, %p35
      %p37 = scmp.ne.s32.totalorder %s25, %s26
      %p38 = scmp.eq.s32.totalorder %s21, 1
      %p39 = por %p37, %p38
      %p41 = scmp.ne.s32.totalorder %s26, %s40
      %p42 = scmp.eq.s32.totalorder %s21, 0
      %p43 = por %p41, %p42
      %s44 = ssub.s32 %s15, %s22
      %p45 = scmp.eq.s32.totalorder %s44, 0
      %s47 = sadd.s32 %s46, 1
      %s48 = scalar_select %p45, %s46, %s47
      %p51 = pneg %p45
      %p52 = scmp.eq.s32.totalorder %s15, 1
      %p53 = por %p51, %p52
      %p54 = scmp.ne.s32.totalorder %s46, %s49
      %p55 = scmp.eq.s32.totalorder %s15, 0
      %p56 = por %p54, %p55
      %p57 = scmp.ne.s32.totalorder %s46, %s49
      %p58 = scmp.eq.s32.totalorder %s20, 1
      %p59 = por %p57, %p58
      %p60 = scmp.ne.s32.totalorder %s49, %s50
      %p61 = scmp.eq.s32.totalorder %s20, 0
      %p62 = por %p60, %p61
      %p63 = scmp.ne.s32.totalorder %s49, %s50
      %p64 = scmp.eq.s32.totalorder %s21, 1
      %p65 = por %p63, %p64
      %p67 = scmp.ne.s32.totalorder %s50, %s66
      %p68 = scmp.eq.s32.totalorder %s21, 0
      %p69 = por %p67, %p68
      %s70 = ssub.s32 %s15, %s22
      %p71 = scmp.eq.s32.totalorder %s70, 0
      %s73 = sadd.s32 %s72, 1
      %s74 = scalar_select %p71, %s72, %s73
      %p77 = pneg %p71
      %p78 = scmp.eq.s32.totalorder %s15, 1
      %p79 = por %p77, %p78
      %p80 = scmp.ne.s32.totalorder %s72, %s75
      %p81 = scmp.eq.s32.totalorder %s15, 0
      %p82 = por %p80, %p81
      %p83 = scmp.ne.s32.totalorder %s72, %s75
      %p84 = scmp.eq.s32.totalorder %s20, 1
      %p85 = por %p83, %p84
      %p86 = scmp.ne.s32.totalorder %s75, %s76
      %p87 = scmp.eq.s32.totalorder %s20, 0
      %p88 = por %p86, %p87
      %p89 = scmp.ne.s32.totalorder %s75, %s76
      %p90 = scmp.eq.s32.totalorder %s21, 1
      %p91 = por %p89, %p90
      %p93 = scmp.ne.s32.totalorder %s76, %s92
      %p94 = scmp.eq.s32.totalorder %s21, 0
      %p95 = por %p93, %p94
      %p96 = scmp.le.s32.totalorder 1, %s15
      %p97 = scmp.lt.s32.totalorder %s15, 3
      %p98 = pnand %p96, %p97
      %p99 = pneg %p98
      // Predicated region
      $region9: #{tpu_custom_call.1} parent=5 // pred_check
        _
      $region10: #{tpu_custom_call.1} parent=5 // pred_check_branch
        %101 = sbr.rel (%p98) target = $region12
      $region11: #{tpu_custom_call.1} parent=5 // pred_region
        %s102 = ssub.s32 %s15, 1
        // Predicated region
        $region13: #{tpu_custom_call.1} parent=11 // pred_check
          %p103 = pneg %p36
        $region14: #{tpu_custom_call.1} parent=11 // pred_check_branch
          %105 = sbr.rel (%p103) target = $region16
        $region15: #{tpu_custom_call.1} parent=11 // pred_region
          %s107 = ssub.s32 128, 128
          %108 = vsyncadd [#allocation3], %s107
          %s110 = sshll.u32 [#allocation2], 4
          %s111 = int_to_ptr.vmem [resolvable:$true] %s110
          %113 = dma.hbm_to_vmem [thread:$0]  %s0, 128, %s111, [#allocation3]
        $region16: #{tpu_custom_call.1} parent=11 // pred_fallthru
          _
      $region12: #{tpu_custom_call.1} parent=5 // pred_fallthru
        _
      %p114 = scmp.lt.s32.totalorder %s15, 2
      // Predicated region
      $region17: #{tpu_custom_call.1} parent=5 // pred_check
        %p115 = pneg %p114
      $region18: #{tpu_custom_call.1} parent=5 // pred_check_branch
        %117 = sbr.rel (%p115) target = $region20
      $region19: #{tpu_custom_call.1} parent=5 // pred_region
        // Predicated region
        $region21: #{tpu_custom_call.1} parent=19 // pred_check
          %p118 = pneg %p56
        $region22: #{tpu_custom_call.1} parent=19 // pred_check_branch
          %120 = sbr.rel (%p118) target = $region24
        $region23: #{tpu_custom_call.1} parent=19 // pred_region
          %s121 = sand.u32 %s46, 1
          %s122 = scalar_lea.sflag [#allocation6], %s121
          %s123 = sand.u32 %s46, 1
          %s124 = smul.addr %s123, 8
          %s125 = scalar_lea.vmem [#allocation5], %s124
          %s127 = ssub.s32 128, 128
          %128 = vsyncadd %s122, %s127
          %s129 = smul.addr %s15, 128
          %s130 = scalar_lea.hbm %s1, %s129
          %s132 = sshll.u32 %s125, 4
          %s133 = int_to_ptr.vmem [resolvable:$true] %s132
          %135 = dma.hbm_to_vmem [thread:$0]  %s130, 128, %s133, %s122
        $region24: #{tpu_custom_call.1} parent=19 // pred_fallthru
          _
      $region20: #{tpu_custom_call.1} parent=5 // pred_fallthru
        _
      %p136 = scmp.le.s32.totalorder 1, %s15
      %p137 = scmp.lt.s32.totalorder %s15, 3
      %p138 = pnand %p136, %p137
      %p139 = pneg %p138
      // Predicated region
      $region25: #{tpu_custom_call.1} parent=5 // pred_check
        _
      $region26: #{tpu_custom_call.1} parent=5 // pred_check_branch
        %141 = sbr.rel (%p138) target = $region28
      $region27: #{tpu_custom_call.1} parent=5 // pred_region
        %s142 = ssub.s32 %s15, 1
        // Predicated region
        $region29: #{tpu_custom_call.1} parent=27 // pred_check
          %p143 = pneg %p36
        $region30: #{tpu_custom_call.1} parent=27 // pred_check_branch
          %145 = sbr.rel (%p143) target = $region32
        $region31: #{tpu_custom_call.1} parent=27 // pred_region
          %146 = dma.done [#allocation3], 128
        $region32: #{tpu_custom_call.1} parent=27 // pred_fallthru
          _
        %s147 = sand.u32 %s49, 1
        %s148 = scalar_lea.sflag [#allocation6], %s147
        %s149 = sand.u32 %s49, 1
        %s150 = smul.addr %s149, 8
        %s151 = scalar_lea.vmem [#allocation5], %s150
        // Predicated region
        $region33: #{tpu_custom_call.1} parent=27 // pred_check
          %p152 = pneg %p62
        $region34: #{tpu_custom_call.1} parent=27 // pred_check_branch
          %154 = sbr.rel (%p152) target = $region36
        $region35: #{tpu_custom_call.1} parent=27 // pred_region
          %155 = dma.done %s148, 128
        $region36: #{tpu_custom_call.1} parent=27 // pred_fallthru
          _
        %p156 = pneg %p36
        %p157 = pneg %p33
        %s158 = sand.u32 %s49, 1
        %s159 = scalar_lea.sflag [#allocation6], %s158
        %s160 = sand.u32 %s49, 1
        %s161 = smul.addr %s160, 8
        %s162 = scalar_lea.vmem [#allocation5], %s161
        %p163 = pneg %p62
        %p164 = pneg %p59
        %p165 = pneg %p88
        %p166 = pneg %p85
        %s167 = sand.u32 %s75, 1
        %s168 = scalar_lea.sflag [#allocation4], %s167
        %s169 = sand.u32 %s75, 1
        %s170 = smul.addr %s169, 8
        %s171 = scalar_lea.vmem [#allocation7], %s170
        %v172 = vld [vmem:[%s151] sm:$0xff]
        %v173 = vld [vmem:[#allocation2] sm:$0xff]
        %v174 = vadd.f32 %v172, %v173
        %175 = vst [vmem:[%s171] sm:$0xff] %v174
        %s176 = sand.u32 %s75, 1
        %s177 = scalar_lea.sflag [#allocation4], %s176
        %s178 = sand.u32 %s75, 1
        %s179 = smul.addr %s178, 8
        %s180 = scalar_lea.vmem [#allocation7], %s179
        // Predicated region
        $region37: #{tpu_custom_call.1} parent=27 // pred_check
          %p181 = pneg %p85
        $region38: #{tpu_custom_call.1} parent=27 // pred_check_branch
          %183 = sbr.rel (%p181) target = $region40
        $region39: #{tpu_custom_call.1} parent=27 // pred_region
          %s185 = ssub.s32 128, 128
          %186 = vsyncadd %s177, %s185
          %s187 = smul.addr %s20, 128
          %s188 = scalar_lea.hbm %s2, %s187
          %s190 = sshll.u32 %s180, 4
          %s191 = int_to_ptr.vmem [resolvable:$true] %s190
          %193 = dma.vmem_to_hbm [thread:$0]  %s191, 128, %s188, %s177
        $region40: #{tpu_custom_call.1} parent=27 // pred_fallthru
          _
      $region28: #{tpu_custom_call.1} parent=5 // pred_fallthru
        _
      %p194 = scmp.le.s32.totalorder 2, %s15
      // Predicated region
      $region41: #{tpu_custom_call.1} parent=5 // pred_check
        %p195 = pneg %p194
      $region42: #{tpu_custom_call.1} parent=5 // pred_check_branch
        %197 = sbr.rel (%p195) target = $region44
      $region43: #{tpu_custom_call.1} parent=5 // pred_region
        %s198 = ssub.s32 %s15, 2
        // Predicated region
        $region45: #{tpu_custom_call.1} parent=43 // pred_check
          %p199 = pneg %p91
        $region46: #{tpu_custom_call.1} parent=43 // pred_check_branch
          %201 = sbr.rel (%p199) target = $region48
        $region47: #{tpu_custom_call.1} parent=43 // pred_region
          %s202 = sand.u32 %s76, 1
          %s203 = scalar_lea.sflag [#allocation4], %s202
          %s204 = sand.u32 %s76, 1
          %s205 = smul.addr %s204, 8
          %s206 = scalar_lea.vmem [#allocation7], %s205
          %207 = dma.done %s203, 128
        $region48: #{tpu_custom_call.1} parent=43 // pred_fallthru
          _
      $region44: #{tpu_custom_call.1} parent=5 // pred_fallthru
        _
    $region6: #{tpu_custom_call.1} parent=1 // loop_footer
      %s19 = sadd.s32 1, %s15
    $region7: #{tpu_custom_call.1} parent=1 // loop_footer_branch
      %14 = sbr.rel target = $region3
    $region8: #{tpu_custom_call.1} parent=1 // loop_exit
      _
    %208 = vsyncpa [#allocation3], 1
    %s209 = scalar_lea.sflag [#allocation3], 1
    %210 = vsyncpa %s209, 1
    %211 = vsyncpa [#allocation6], 1
    %s212 = scalar_lea.sflag [#allocation6], 1
    %213 = vsyncpa %s212, 1
    %214 = vsyncpa [#allocation4], 1
    %s215 = scalar_lea.sflag [#allocation4], 1
    %216 = vsyncpa %s215, 1

// kernel: decoder_forward.5
$region0: #{decoder_forward.5}
  #allocation0 [shape = 'u32[]', space=smem, size = 0x4, offset = 0x4, fixed_abs, tag = 'smem constant byte address 0x4 - core index']
  #allocation1 [shape = 'u32[144,128]{1,0:T(1,128)}', space=vmem, size = 0x12000, scoped, tag = 'internal scratch']
  %s0 = inlined_call_operand.vmem [shape: f32[32,256], index: 0, kind: input, shape index: {}]
  %s1 = inlined_call_operand.hbm [shape: bf16[256,512], index: 1, kind: input, shape index: {}]
  %s2 = inlined_call_operand.hbm [shape: f32[1,512], index: 2, kind: input, shape index: {}]
  %s3 = inlined_call_operand.vmem [shape: bf16[32,256], index: 3, kind: output, shape index: {0}]
  %s4 = inlined_call_operand.vmem [shape: bf16[32,256], index: 4, kind: output, shape index: {1}]
  %5 = xla_tuple %s3, %s4
  %s6 = sld [smem:[#allocation0]]
  $region38: #{decoder_forward.5} parent=0
    _
  %s8 = ssub.s32 1, %s6
  %s9 = scalar_select 0, %s8, %s6
  $region1: #{decoder_forward.5} parent=0
    #allocation2 [shape = 'u8[262144]{0}', space=vmem, size = 0x40000, scoped, tag = 'input window, operand 1, single buffered']
    #allocation3 [shape = 's32[1]{0}', space=sflag, size = 0x4, scoped, tag = 'scoped memory for decoder_forward.5']
    #allocation4 [shape = 'u8[2048]{0}', space=vmem, size = 0x800, scoped, tag = 'input window, operand 2, single buffered']
    #allocation5 [shape = 's32[1]{0}', space=sflag, size = 0x4, scoped, tag = 'scoped memory for decoder_forward.5']
    %10 = vsyncpa [#allocation3], 0
    %11 = vsyncpa [#allocation5], 0
    // Predicated region
    $region2: #{decoder_forward.5} parent=1 // pred_check
      _
    $region3: #{decoder_forward.5} parent=1 // pred_check_branch
      %13 = sbr.rel (0) target = $region5
    $region4: #{decoder_forward.5} parent=1 // pred_region
      _
    $region5: #{decoder_forward.5} parent=1 // pred_fallthru
      _
    // Predicated region
    $region6: #{decoder_forward.5} parent=1 // pred_check
      _
    $region7: #{decoder_forward.5} parent=1 // pred_check_branch
      %15 = sbr.rel (0) target = $region9
    $region8: #{decoder_forward.5} parent=1 // pred_region
      %s17 = ssub.s32 8192, 8192
      %18 = vsyncadd [#allocation3], %s17
      %s19 = sshll.u32 [#allocation2], 4
      %s20 = int_to_ptr.vmem [resolvable:$true] %s19
      %25 = dma.hbm_to_vmem [thread:$0]  %s1, 8192, %s20, [#allocation3], 256, 256, 16
    $region9: #{decoder_forward.5} parent=1 // pred_fallthru
      _
    // Predicated region
    $region10: #{decoder_forward.5} parent=1 // pred_check
      _
    $region11: #{decoder_forward.5} parent=1 // pred_check_branch
      %27 = sbr.rel (0) target = $region13
    $region12: #{decoder_forward.5} parent=1 // pred_region
      %s29 = ssub.s32 64, 64
      %30 = vsyncadd [#allocation5], %s29
      %s32 = sshll.u32 [#allocation4], 4
      %s33 = int_to_ptr.vmem [resolvable:$true] %s32
      %35 = dma.hbm_to_vmem [thread:$0]  %s2, 64, %s33, [#allocation5]
    $region13: #{decoder_forward.5} parent=1 // pred_fallthru
      _
    // Predicated region
    $region14: #{decoder_forward.5} parent=1 // pred_check
      _
    $region15: #{decoder_forward.5} parent=1 // pred_check_branch
      %37 = sbr.rel (0) target = $region17
    $region16: #{decoder_forward.5} parent=1 // pred_region
      %38 = dma.done [#allocation3], 8192
    $region17: #{decoder_forward.5} parent=1 // pred_fallthru
      _
    // Predicated region
    $region18: #{decoder_forward.5} parent=1 // pred_check
      _
    $region19: #{decoder_forward.5} parent=1 // pred_check_branch
      %40 = sbr.rel (0) target = $region21
    $region20: #{decoder_forward.5} parent=1 // pred_region
      %41 = dma.done [#allocation5], 64
    $region21: #{decoder_forward.5} parent=1 // pred_fallthru
      _
    %v42 = vld [vmem:[%s0] sm:$0xff]
    %v43 = vld [vmem:[%s0 + $0x8] sm:$0xff]
    %v44 = vld [vmem:[%s0 + $0x10] sm:$0xff]
    %v45 = vld [vmem:[%s0 + $0x18] sm:$0xff]
    %v46 = vld [vmem:[%s0 + $0x20] sm:$0xff]
    %v47 = vld [vmem:[%s0 + $0x28] sm:$0xff]
    %v48 = vld [vmem:[%s0 + $0x30] sm:$0xff]
    %v49 = vld [vmem:[%s0 + $0x38] sm:$0xff]
    %v50 = vpack.c.bf16 %v44, %v42
    %v51 = vpack.c.bf16 %v45, %v43
    %v52 = vpack.c.bf16 %v48, %v46
    %v53 = vpack.c.bf16 %v49, %v47
    %v54 = vld [vmem:[#allocation2] sm:$0xff]
    %v55 = vld [vmem:[#allocation2 + $0x8] sm:$0xff]
    %v56 = vld [vmem:[#allocation2 + $0x10] sm:$0xff]
    %v57 = vld [vmem:[#allocation2 + $0x18] sm:$0xff]
    %v58 = vld [vmem:[#allocation2 + $0x20] sm:$0xff]
    %v59 = vld [vmem:[#allocation2 + $0x28] sm:$0xff]
    %v60 = vld [vmem:[#allocation2 + $0x30] sm:$0xff]
    %v61 = vld [vmem:[#allocation2 + $0x38] sm:$0xff]
    %v62 = vld [vmem:[#allocation2 + $0x40] sm:$0xff]
    %v63 = vld [vmem:[#allocation2 + $0x48] sm:$0xff]
    %v64 = vld [vmem:[#allocation2 + $0x50] sm:$0xff]
    %v65 = vld [vmem:[#allocation2 + $0x58] sm:$0xff]
    %v66 = vld [vmem:[#allocation2 + $0x60] sm:$0xff]
    %v67 = vld [vmem:[#allocation2 + $0x68] sm:$0xff]
    %v68 = vld [vmem:[#allocation2 + $0x70] sm:$0xff]
    %v69 = vld [vmem:[#allocation2 + $0x78] sm:$0xff]
    %v70 = vld [vmem:[#allocation2 + $0x80] sm:$0xff]
    %v71 = vld [vmem:[#allocation2 + $0x88] sm:$0xff]
    %v72 = vld [vmem:[#allocation2 + $0x90] sm:$0xff]
    %v73 = vld [vmem:[#allocation2 + $0x98] sm:$0xff]
    %v74 = vld [vmem:[#allocation2 + $0xa0] sm:$0xff]
    %v75 = vld [vmem:[#allocation2 + $0xa8] sm:$0xff]
    %v76 = vld [vmem:[#allocation2 + $0xb0] sm:$0xff]
    %v77 = vld [vmem:[#allocation2 + $0xb8] sm:$0xff]
    %v78 = vld [vmem:[#allocation2 + $0xc0] sm:$0xff]
    %v79 = vld [vmem:[#allocation2 + $0xc8] sm:$0xff]
    %v80 = vld [vmem:[#allocation2 + $0xd0] sm:$0xff]
    %v81 = vld [vmem:[#allocation2 + $0xd8] sm:$0xff]
    %v82 = vld [vmem:[#allocation2 + $0xe0] sm:$0xff]
    %v83 = vld [vmem:[#allocation2 + $0xe8] sm:$0xff]
    %v84 = vld [vmem:[#allocation2 + $0xf0] sm:$0xff]
    %v85 = vld [vmem:[#allocation2 + $0xf8] sm:$0xff]
    %v86 = vld [vmem:[#allocation2 + $0x100] sm:$0xff]
    %v87 = vld [vmem:[#allocation2 + $0x108] sm:$0xff]
    %v88 = vld [vmem:[#allocation2 + $0x110] sm:$0xff]
    %v89 = vld [vmem:[#allocation2 + $0x118] sm:$0xff]
    %v90 = vld [vmem:[#allocation2 + $0x120] sm:$0xff]
    %v91 = vld [vmem:[#allocation2 + $0x128] sm:$0xff]
    %v92 = vld [vmem:[#allocation2 + $0x130] sm:$0xff]
    %v93 = vld [vmem:[#allocation2 + $0x138] sm:$0xff]
    %v94 = vld [vmem:[#allocation2 + $0x140] sm:$0xff]
    %v95 = vld [vmem:[#allocation2 + $0x148] sm:$0xff]
    %v96 = vld [vmem:[#allocation2 + $0x150] sm:$0xff]
    %v97 = vld [vmem:[#allocation2 + $0x158] sm:$0xff]
    %v98 = vld [vmem:[#allocation2 + $0x160] sm:$0xff]
    %v99 = vld [vmem:[#allocation2 + $0x168] sm:$0xff]
    %v100 = vld [vmem:[#allocation2 + $0x170] sm:$0xff]
    %v101 = vld [vmem:[#allocation2 + $0x178] sm:$0xff]
    %v102 = vld [vmem:[#allocation2 + $0x180] sm:$0xff]
    %v103 = vld [vmem:[#allocation2 + $0x188] sm:$0xff]
    %v104 = vld [vmem:[#allocation2 + $0x190] sm:$0xff]
    %v105 = vld [vmem:[#allocation2 + $0x198] sm:$0xff]
    %v106 = vld [vmem:[#allocation2 + $0x1a0] sm:$0xff]
    %v107 = vld [vmem:[#allocation2 + $0x1a8] sm:$0xff]
    %v108 = vld [vmem:[#allocation2 + $0x1b0] sm:$0xff]
    %v109 = vld [vmem:[#allocation2 + $0x1b8] sm:$0xff]
    %v110 = vld [vmem:[#allocation2 + $0x1c0] sm:$0xff]
    %v111 = vld [vmem:[#allocation2 + $0x1c8] sm:$0xff]
    %v112 = vld [vmem:[#allocation2 + $0x1d0] sm:$0xff]
    %v113 = vld [vmem:[#allocation2 + $0x1d8] sm:$0xff]
    %v114 = vld [vmem:[#allocation2 + $0x1e0] sm:$0xff]
    %v115 = vld [vmem:[#allocation2 + $0x1e8] sm:$0xff]
    %v116 = vld [vmem:[#allocation2 + $0x1f0] sm:$0xff]
    %v117 = vld [vmem:[#allocation2 + $0x1f8] sm:$0xff]
    %v118 = vld [vmem:[#allocation4] sm:$0xf]
    %v120 = vlaneseq
    %v121 = vshrl.u32 %v120, 7
    %v122 = vsub.s32 0, %v121
    %v123 = vrot.slane %v118, %v122
    %v124 = vlaneseq
    %v125 = vshrl.u32 %v124, 7
    %v126 = vsub.s32 1, %v125
    %v127 = vrot.slane %v118, %v126
    %v128 = vlaneseq
    %v129 = vshrl.u32 %v128, 7
    %v130 = vsub.s32 2, %v129
    %v131 = vrot.slane %v118, %v130
    %v132 = vlaneseq
    %v133 = vshrl.u32 %v132, 7
    %v134 = vsub.s32 3, %v133
    %v135 = vrot.slane %v118, %v134
    %v204 = vunpack.c.l.b16 %v54
    %v205 = vunpack.c.h.b16 %v54
    %v206 = vunpack.c.l.b16 %v55
    %v207 = vunpack.c.h.b16 %v55
    %v208 = vunpack.c.l.b16 %v56
    %v209 = vunpack.c.h.b16 %v56
    %v210 = vunpack.c.l.b16 %v57
    %v211 = vunpack.c.h.b16 %v57
    %v212 = vunpack.c.l.b16 %v58
    %v213 = vunpack.c.h.b16 %v58
    %v214 = vunpack.c.l.b16 %v59
    %v215 = vunpack.c.h.b16 %v59
    %v216 = vunpack.c.l.b16 %v60
    %v217 = vunpack.c.h.b16 %v60
    %v218 = vunpack.c.l.b16 %v61
    %v219 = vunpack.c.h.b16 %v61
    %v220 = vunpack.c.l.b16 %v62
    %v221 = vunpack.c.h.b16 %v62
    %v222 = vunpack.c.l.b16 %v63
    %v223 = vunpack.c.h.b16 %v63
    %v224 = vunpack.c.l.b16 %v64
    %v225 = vunpack.c.h.b16 %v64
    %v226 = vunpack.c.l.b16 %v65
    %v227 = vunpack.c.h.b16 %v65
    %v228 = vunpack.c.l.b16 %v66
    %v229 = vunpack.c.h.b16 %v66
    %v230 = vunpack.c.l.b16 %v67
    %v231 = vunpack.c.h.b16 %v67
    %v232 = vunpack.c.l.b16 %v68
    %v233 = vunpack.c.h.b16 %v68
    %v234 = vunpack.c.l.b16 %v69
    %v235 = vunpack.c.h.b16 %v69
    %v236 = vunpack.c.l.b16 %v70
    %v237 = vunpack.c.h.b16 %v70
    %v238 = vunpack.c.l.b16 %v71
    %v239 = vunpack.c.h.b16 %v71
    %v240 = vunpack.c.l.b16 %v72
    %v241 = vunpack.c.h.b16 %v72
    %v242 = vunpack.c.l.b16 %v73
    %v243 = vunpack.c.h.b16 %v73
    %v244 = vunpack.c.l.b16 %v74
    %v245 = vunpack.c.h.b16 %v74
    %v246 = vunpack.c.l.b16 %v75
    %v247 = vunpack.c.h.b16 %v75
    %v248 = vunpack.c.l.b16 %v76
    %v249 = vunpack.c.h.b16 %v76
    %v250 = vunpack.c.l.b16 %v77
    %v251 = vunpack.c.h.b16 %v77
    %v252 = vunpack.c.l.b16 %v78
    %v253 = vunpack.c.h.b16 %v78
    %v254 = vunpack.c.l.b16 %v79
    %v255 = vunpack.c.h.b16 %v79
    %v256 = vunpack.c.l.b16 %v80
    %v257 = vunpack.c.h.b16 %v80
    %v258 = vunpack.c.l.b16 %v81
    %v259 = vunpack.c.h.b16 %v81
    %v260 = vunpack.c.l.b16 %v82
    %v261 = vunpack.c.h.b16 %v82
    %v262 = vunpack.c.l.b16 %v83
    %v263 = vunpack.c.h.b16 %v83
    %v264 = vunpack.c.l.b16 %v84
    %v265 = vunpack.c.h.b16 %v84
    %v266 = vunpack.c.l.b16 %v85
    %v267 = vunpack.c.h.b16 %v85
    %v268 = vunpack.c.l.b16 %v86
    %v269 = vunpack.c.h.b16 %v86
    %v270 = vunpack.c.l.b16 %v87
    %v271 = vunpack.c.h.b16 %v87
    %v272 = vunpack.c.l.b16 %v88
    %v273 = vunpack.c.h.b16 %v88
    %v274 = vunpack.c.l.b16 %v89
    %v275 = vunpack.c.h.b16 %v89
    %v276 = vunpack.c.l.b16 %v90
    %v277 = vunpack.c.h.b16 %v90
    %v278 = vunpack.c.l.b16 %v91
    %v279 = vunpack.c.h.b16 %v91
    %v280 = vunpack.c.l.b16 %v92
    %v281 = vunpack.c.h.b16 %v92
    %v282 = vunpack.c.l.b16 %v93
    %v283 = vunpack.c.h.b16 %v93
    %v284 = vunpack.c.l.b16 %v94
    %v285 = vunpack.c.h.b16 %v94
    %v286 = vunpack.c.l.b16 %v95
    %v287 = vunpack.c.h.b16 %v95
    %v288 = vunpack.c.l.b16 %v96
    %v289 = vunpack.c.h.b16 %v96
    %v290 = vunpack.c.l.b16 %v97
    %v291 = vunpack.c.h.b16 %v97
    %v292 = vunpack.c.l.b16 %v98
    %v293 = vunpack.c.h.b16 %v98
    %v294 = vunpack.c.l.b16 %v99
    %v295 = vunpack.c.h.b16 %v99
    %v296 = vunpack.c.l.b16 %v100
    %v297 = vunpack.c.h.b16 %v100
    %v298 = vunpack.c.l.b16 %v101
    %v299 = vunpack.c.h.b16 %v101
    %v300 = vunpack.c.l.b16 %v102
    %v301 = vunpack.c.h.b16 %v102
    %v302 = vunpack.c.l.b16 %v103
    %v303 = vunpack.c.h.b16 %v103
    %v304 = vunpack.c.l.b16 %v104
    %v305 = vunpack.c.h.b16 %v104
    %v306 = vunpack.c.l.b16 %v105
    %v307 = vunpack.c.h.b16 %v105
    %v308 = vunpack.c.l.b16 %v106
    %v309 = vunpack.c.h.b16 %v106
    %v310 = vunpack.c.l.b16 %v107
    %v311 = vunpack.c.h.b16 %v107
    %v312 = vunpack.c.l.b16 %v108
    %v313 = vunpack.c.h.b16 %v108
    %v314 = vunpack.c.l.b16 %v109
    %v315 = vunpack.c.h.b16 %v109
    %v316 = vunpack.c.l.b16 %v110
    %v317 = vunpack.c.h.b16 %v110
    %v318 = vunpack.c.l.b16 %v111
    %v319 = vunpack.c.h.b16 %v111
    %v320 = vunpack.c.l.b16 %v112
    %v321 = vunpack.c.h.b16 %v112
    %v322 = vunpack.c.l.b16 %v113
    %v323 = vunpack.c.h.b16 %v113
    %v324 = vunpack.c.l.b16 %v114
    %v325 = vunpack.c.h.b16 %v114
    %v326 = vunpack.c.l.b16 %v115
    %v327 = vunpack.c.h.b16 %v115
    %v328 = vunpack.c.l.b16 %v116
    %v329 = vunpack.c.h.b16 %v116
    %v330 = vunpack.c.l.b16 %v117
    %v331 = vunpack.c.h.b16 %v117
    %v332 = vpack.c.b16 %v208, %v204
    %v333 = vpack.c.b16 %v209, %v205
    %v334 = vpack.c.b16 %v210, %v206
    %v335 = vpack.c.b16 %v211, %v207
    %v336 = vpack.c.b16 %v216, %v212
    %v337 = vpack.c.b16 %v217, %v213
    %v338 = vpack.c.b16 %v218, %v214
    %v339 = vpack.c.b16 %v219, %v215
    %v340 = vpack.c.b16 %v224, %v220
    %v341 = vpack.c.b16 %v225, %v221
    %v342 = vpack.c.b16 %v226, %v222
    %v343 = vpack.c.b16 %v227, %v223
    %v344 = vpack.c.b16 %v232, %v228
    %v345 = vpack.c.b16 %v233, %v229
    %v346 = vpack.c.b16 %v234, %v230
    %v347 = vpack.c.b16 %v235, %v231
    %v348 = vpack.c.b16 %v240, %v236
    %v349 = vpack.c.b16 %v241, %v237
    %v350 = vpack.c.b16 %v242, %v238
    %v351 = vpack.c.b16 %v243, %v239
    %v352 = vpack.c.b16 %v248, %v244
    %v353 = vpack.c.b16 %v249, %v245
    %v354 = vpack.c.b16 %v250, %v246
    %v355 = vpack.c.b16 %v251, %v247
    %v356 = vpack.c.b16 %v256, %v252
    %v357 = vpack.c.b16 %v257, %v253
    %v358 = vpack.c.b16 %v258, %v254
    %v359 = vpack.c.b16 %v259, %v255
    %v360 = vpack.c.b16 %v264, %v260
    %v361 = vpack.c.b16 %v265, %v261
    %v362 = vpack.c.b16 %v266, %v262
    %v363 = vpack.c.b16 %v267, %v263
    %v364 = vpack.c.b16 %v272, %v268
    %v365 = vpack.c.b16 %v273, %v269
    %v366 = vpack.c.b16 %v274, %v270
    %v367 = vpack.c.b16 %v275, %v271
    %v368 = vpack.c.b16 %v280, %v276
    %v369 = vpack.c.b16 %v281, %v277
    %v370 = vpack.c.b16 %v282, %v278
    %v371 = vpack.c.b16 %v283, %v279
    %v372 = vpack.c.b16 %v288, %v284
    %v373 = vpack.c.b16 %v289, %v285
    %v374 = vpack.c.b16 %v290, %v286
    %v375 = vpack.c.b16 %v291, %v287
    %v376 = vpack.c.b16 %v296, %v292
    %v377 = vpack.c.b16 %v297, %v293
    %v378 = vpack.c.b16 %v298, %v294
    %v379 = vpack.c.b16 %v299, %v295
    %v380 = vpack.c.b16 %v304, %v300
    %v381 = vpack.c.b16 %v305, %v301
    %v382 = vpack.c.b16 %v306, %v302
    %v383 = vpack.c.b16 %v307, %v303
    %v384 = vpack.c.b16 %v312, %v308
    %v385 = vpack.c.b16 %v313, %v309
    %v386 = vpack.c.b16 %v314, %v310
    %v387 = vpack.c.b16 %v315, %v311
    %v388 = vpack.c.b16 %v320, %v316
    %v389 = vpack.c.b16 %v321, %v317
    %v390 = vpack.c.b16 %v322, %v318
    %v391 = vpack.c.b16 %v323, %v319
    %v392 = vpack.c.b16 %v328, %v324
    %v393 = vpack.c.b16 %v329, %v325
    %v394 = vpack.c.b16 %v330, %v326
    %v395 = vpack.c.b16 %v331, %v327
    %460 = vmatprep.subr.bf16.mxu0 %v333
    %461 = vmatpush1.bf16.msra.mxu0 %v332
    %462 = vmatprep.subr.bf16.mxu0 %v337
    %463 = vmatpush1.bf16.msra.mxu0 %v336
    %464 = vmatprep.subr.bf16.mxu0 %v341
    %465 = vmatpush1.bf16.msra.mxu0 %v340
    %466 = vmatprep.subr.bf16.mxu0 %v345
    %467 = vmatpush1.bf16.msra.mxu0 %v344
    %468 = vmatprep.subr.bf16.mxu0 %v349
    %469 = vmatpush1.bf16.msra.mxu0 %v348
    %470 = vmatprep.subr.bf16.mxu0 %v353
    %471 = vmatpush1.bf16.msra.mxu0 %v352
    %472 = vmatprep.subr.bf16.mxu0 %v357
    %473 = vmatpush1.bf16.msra.mxu0 %v356
    %474 = vmatprep.subr.bf16.mxu0 %v361
    %475 = vmatpush1.bf16.msra.mxu0 %v360
    %476 = vmatprep.subr.bf16.mxu0 %v365
    %477 = vmatpush1.bf16.msra.mxu0 %v364
    %478 = vmatprep.subr.bf16.mxu0 %v369
    %479 = vmatpush1.bf16.msra.mxu0 %v368
    %480 = vmatprep.subr.bf16.mxu0 %v373
    %481 = vmatpush1.bf16.msra.mxu0 %v372
    %482 = vmatprep.subr.bf16.mxu0 %v377
    %483 = vmatpush1.bf16.msra.mxu0 %v376
    %484 = vmatprep.subr.bf16.mxu0 %v381
    %485 = vmatpush1.bf16.msra.mxu0 %v380
    %486 = vmatprep.subr.bf16.mxu0 %v385
    %487 = vmatpush1.bf16.msra.mxu0 %v384
    %488 = vmatprep.subr.bf16.mxu0 %v389
    %489 = vmatpush1.bf16.msra.mxu0 %v388
    %490 = vmatprep.subr.bf16.mxu0 %v393
    %491 = vmatpush1.bf16.msra.mxu0 %v392
    %492 = vmatprep.mubr.bf16.mxu0 %v51
    %493 = vmatmul.mubr.bf16.gmra.mrb[0].mxu0 %v50
    %v494 = vpop.f32.mrb[0].mxu0
    %v495 = vadd.f32 %v123, %v494
    %v496 = vpop.f32.mrb[0].mxu0
    %v497 = vadd.f32 %v127, %v496
    %v498 = vpop.f32.mrb[0].mxu0
    %v499 = vadd.f32 %v123, %v498
    %v500 = vpop.f32.mrb[0].mxu0
    %v501 = vadd.f32 %v127, %v500
    %502 = vmatprep.mubr.bf16.mxu0 %v53
    %503 = vmatmul.mubr.bf16.gmra.mrb[0].mxu0 %v52
    %v504 = vpop.f32.mrb[0].mxu0
    %v505 = vadd.f32 %v123, %v504
    %v506 = vpop.f32.mrb[0].mxu0
    %v507 = vadd.f32 %v127, %v506
    %v508 = vpop.f32.mrb[0].mxu0
    %v509 = vadd.f32 %v123, %v508
    %v510 = vpop.f32.mrb[0].mxu0
    %v511 = vadd.f32 %v127, %v510
    %512 = vdwg.mxu0
    %513 = vmatprep.subr.bf16.mxu0 %v335
    %514 = vmatpush1.bf16.msra.mxu0 %v334
    %515 = vmatprep.subr.bf16.mxu0 %v339
    %516 = vmatpush1.bf16.msra.mxu0 %v338
    %517 = vmatprep.subr.bf16.mxu0 %v343
    %518 = vmatpush1.bf16.msra.mxu0 %v342
    %519 = vmatprep.subr.bf16.mxu0 %v347
    %520 = vmatpush1.bf16.msra.mxu0 %v346
    %521 = vmatprep.subr.bf16.mxu0 %v351
    %522 = vmatpush1.bf16.msra.mxu0 %v350
    %523 = vmatprep.subr.bf16.mxu0 %v355
    %524 = vmatpush1.bf16.msra.mxu0 %v354
    %525 = vmatprep.subr.bf16.mxu0 %v359
    %526 = vmatpush1.bf16.msra.mxu0 %v358
    %527 = vmatprep.subr.bf16.mxu0 %v363
    %528 = vmatpush1.bf16.msra.mxu0 %v362
    %529 = vmatprep.subr.bf16.mxu0 %v367
    %530 = vmatpush1.bf16.msra.mxu0 %v366
    %531 = vmatprep.subr.bf16.mxu0 %v371
    %532 = vmatpush1.bf16.msra.mxu0 %v370
    %533 = vmatprep.subr.bf16.mxu0 %v375
    %534 = vmatpush1.bf16.msra.mxu0 %v374
    %535 = vmatprep.subr.bf16.mxu0 %v379
    %536 = vmatpush1.bf16.msra.mxu0 %v378
    %537 = vmatprep.subr.bf16.mxu0 %v383
    %538 = vmatpush1.bf16.msra.mxu0 %v382
    %539 = vmatprep.subr.bf16.mxu0 %v387
    %540 = vmatpush1.bf16.msra.mxu0 %v386
    %541 = vmatprep.subr.bf16.mxu0 %v391
    %542 = vmatpush1.bf16.msra.mxu0 %v390
    %543 = vmatprep.subr.bf16.mxu0 %v395
    %544 = vmatpush1.bf16.msra.mxu0 %v394
    %545 = vmatprep.mubr.bf16.mxu0 %v51
    %546 = vmatmul.mubr.bf16.gmra.mrb[0].mxu0 %v50
    %v547 = vpop.f32.mrb[0].mxu0
    %v548 = vadd.f32 %v131, %v547
    %v549 = vpop.f32.mrb[0].mxu0
    %v550 = vadd.f32 %v135, %v549
    %v551 = vpop.f32.mrb[0].mxu0
    %v552 = vadd.f32 %v131, %v551
    %v553 = vpop.f32.mrb[0].mxu0
    %v554 = vadd.f32 %v135, %v553
    %555 = vmatprep.mubr.bf16.mxu0 %v53
    %556 = vmatmul.mubr.bf16.gmra.mrb[0].mxu0 %v52
    %v557 = vpop.f32.mrb[0].mxu0
    %v558 = vadd.f32 %v131, %v557
    %v559 = vpop.f32.mrb[0].mxu0
    %v560 = vadd.f32 %v135, %v559
    %v561 = vpop.f32.mrb[0].mxu0
    %v562 = vadd.f32 %v131, %v561
    %v563 = vpop.f32.mrb[0].mxu0
    %v564 = vadd.f32 %v135, %v563
    %565 = vdwg.mxu0
    %v566 = vpack.c.bf16 %v499, %v495
    %v567 = vpack.c.bf16 %v501, %v497
    %v568 = vpack.c.bf16 %v509, %v505
    %v569 = vpack.c.bf16 %v511, %v507
    %v574 = vunpack.c.l.b16 %v566
    %v575 = vunpack.c.l.b16 %v567
    %v576 = vunpack.c.h.b16 %v566
    %v577 = vunpack.c.h.b16 %v567
    %v578 = vunpack.c.l.b16 %v568
    %v579 = vunpack.c.l.b16 %v569
    %v580 = vunpack.c.h.b16 %v568
    %v581 = vunpack.c.h.b16 %v569
    %v582 = vpack.c.b16 %v575, %v574
    %v583 = vpack.c.b16 %v577, %v576
    %v584 = vpack.c.b16 %v579, %v578
    %v585 = vpack.c.b16 %v581, %v580
    %590 = vst [vmem:[%s3] sm:$0xff] %v582
    %591 = vst [vmem:[%s3 + $0x8] sm:$0xff] %v583
    %592 = vst [vmem:[%s3 + $0x10] sm:$0xff] %v584
    %593 = vst [vmem:[%s3 + $0x18] sm:$0xff] %v585
    %v594 = vpack.c.bf16 %v552, %v548
    %v595 = vpack.c.bf16 %v554, %v550
    %v596 = vpack.c.bf16 %v562, %v558
    %v597 = vpack.c.bf16 %v564, %v560
    %v602 = vunpack.c.l.b16 %v594
    %v603 = vunpack.c.l.b16 %v595
    %v604 = vunpack.c.h.b16 %v594
    %v605 = vunpack.c.h.b16 %v595
    %v606 = vunpack.c.l.b16 %v596
    %v607 = vunpack.c.l.b16 %v597
    %v608 = vunpack.c.h.b16 %v596
    %v609 = vunpack.c.h.b16 %v597
    %v610 = vpack.c.b16 %v603, %v602
    %v611 = vpack.c.b16 %v605, %v604
    %v612 = vpack.c.b16 %v607, %v606
    %v613 = vpack.c.b16 %v609, %v608
    %618 = vst [vmem:[%s4] sm:$0xff] %v610
    %619 = vst [vmem:[%s4 + $0x8] sm:$0xff] %v611
    %620 = vst [vmem:[%s4 + $0x10] sm:$0xff] %v612
    %621 = vst [vmem:[%s4 + $0x18] sm:$0xff] %v613
    // Predicated region
    $region22: #{decoder_forward.5} parent=1 // pred_check
      _
    $region23: #{decoder_forward.5} parent=1 // pred_check_branch
      %623 = sbr.rel (0) target = $region25
    $region24: #{decoder_forward.5} parent=1 // pred_region
      _
    $region25: #{decoder_forward.5} parent=1 // pred_fallthru
      _
    // Predicated region
    $region26: #{decoder_forward.5} parent=1 // pred_check
      _
    $region27: #{decoder_forward.5} parent=1 // pred_check_branch
      %625 = sbr.rel (0) target = $region29
    $region28: #{decoder_forward.5} parent=1 // pred_region
      _
    $region29: #{decoder_forward.5} parent=1 // pred_fallthru
      _
    // Predicated region
    $region30: #{decoder_forward.5} parent=1 // pred_check
      _
    $region31: #{decoder_forward.5} parent=1 // pred_check_branch
      %627 = sbr.rel (0) target = $region33
    $region32: #{decoder_forward.5} parent=1 // pred_region
      _
    $region33: #{decoder_forward.5} parent=1 // pred_fallthru
      _
    // Predicated region
    $region34: #{decoder_forward.5} parent=1 // pred_check
      _
    $region35: #{decoder_forward.5} parent=1 // pred_check_branch
      %629 = sbr.rel (0) target = $region37
    $region36: #{decoder_forward.5} parent=1 // pred_region
      _
    $region37: #{decoder_forward.5} parent=1 // pred_fallthru
      _
    %630 = vsyncpa [#allocation3], 1
    %631 = vsyncpa [#allocation5], 1

// kernel: decoder_forward.9
$region0: #{decoder_forward.9}
  #allocation0 [shape = 'u32[]', space=smem, size = 0x4, offset = 0x4, fixed_abs, tag = 'smem constant byte address 0x4 - core index']
  #allocation1 [shape = 'u32[144,128]{1,0:T(1,128)}', space=vmem, size = 0x12000, scoped, tag = 'internal scratch']
  %s0 = inlined_call_operand.vmem [shape: f32[16,256], index: 0, kind: input, shape index: {}]
  %s1 = inlined_call_operand.vmem [shape: f32[1,256], index: 1, kind: input, shape index: {}]
  %s2 = inlined_call_operand.vmem [shape: f32[1,256], index: 2, kind: input, shape index: {}]
  %s3 = inlined_call_operand.vmem [shape: bf16[256,512], index: 3, kind: input, shape index: {}]
  %s4 = inlined_call_operand.vmem [shape: f32[1,512], index: 4, kind: input, shape index: {}]
  %s5 = inlined_call_operand.hbm [shape: f32[16,512], index: 5, kind: output, shape index: {}]
  %s6 = sld [smem:[#allocation0]]
  $region30: #{decoder_forward.9} parent=0
    _
  %s8 = ssub.s32 1, %s6
  %s9 = scalar_select 0, %s8, %s6
  $region1: #{decoder_forward.9} parent=0
    #allocation2 [shape = 'u8[32768]{0}', space=vmem, size = 0x8000, scoped, tag = 'output window, operand 0, single buffered']
    #allocation3 [shape = 's32[1]{0}', space=sflag, size = 0x4, scoped, tag = 'scoped memory for decoder_forward.9']
    %10 = vsyncpa [#allocation3], 0
    // Predicated region
    $region2: #{decoder_forward.9} parent=1 // pred_check
      _
    $region3: #{decoder_forward.9} parent=1 // pred_check_branch
      %12 = sbr.rel (0) target = $region5
    $region4: #{decoder_forward.9} parent=1 // pred_region
      _
    $region5: #{decoder_forward.9} parent=1 // pred_fallthru
      _
    // Predicated region
    $region6: #{decoder_forward.9} parent=1 // pred_check
      _
    $region7: #{decoder_forward.9} parent=1 // pred_check_branch
      %14 = sbr.rel (0) target = $region9
    $region8: #{decoder_forward.9} parent=1 // pred_region
      _
    $region9: #{decoder_forward.9} parent=1 // pred_fallthru
      _
    // Predicated region
    $region10: #{decoder_forward.9} parent=1 // pred_check
      _
    $region11: #{decoder_forward.9} parent=1 // pred_check_branch
      %16 = sbr.rel (0) target = $region13
    $region12: #{decoder_forward.9} parent=1 // pred_region
      _
    $region13: #{decoder_forward.9} parent=1 // pred_fallthru
      _
    // Predicated region
    $region14: #{decoder_forward.9} parent=1 // pred_check
      _
    $region15: #{decoder_forward.9} parent=1 // pred_check_branch
      %18 = sbr.rel (0) target = $region17
    $region16: #{decoder_forward.9} parent=1 // pred_region
      _
    $region17: #{decoder_forward.9} parent=1 // pred_fallthru
      _
    // Predicated region
    $region18: #{decoder_forward.9} parent=1 // pred_check
      _
    $region19: #{decoder_forward.9} parent=1 // pred_check_branch
      %20 = sbr.rel (0) target = $region21
    $region20: #{decoder_forward.9} parent=1 // pred_region
      _
    $region21: #{decoder_forward.9} parent=1 // pred_fallthru
      _
    %v21 = vld [vmem:[%s0] sm:$0xff]
    %v22 = vld [vmem:[%s0 + $0x8] sm:$0xff]
    %v23 = vld [vmem:[%s0 + $0x10] sm:$0xff]
    %v24 = vld [vmem:[%s0 + $0x18] sm:$0xff]
    %v25 = vld [vmem:[%s1] sm:$0x3]
    %v26 = vld [vmem:[%s2] sm:$0x3]
    %v27 = vadd.f32 %v21, %v22
    %28 = vadd.xlane.f32.xlu0 %v27
    %v29 = vpop.xlane.xlu0 %28
    %v30 = vadd.f32 %v23, %v24
    %31 = vadd.xlane.f32.xlu0 %v30
    %v32 = vpop.xlane.xlu0 %31
    %v33 = vrcp.pop 256.0
    %v34 = vmul.f32 %v29, %v33
    %v35 = vmul.f32 %v32, %v33
    %v36 = vsub.f32 %v21, %v34
    %v37 = vsub.f32 %v22, %v34
    %v38 = vsub.f32 %v23, %v35
    %v39 = vsub.f32 %v24, %v35
    %v40 = vmul.f32 %v36, %v36
    %v41 = vmul.f32 %v37, %v37
    %v42 = vmul.f32 %v38, %v38
    %v43 = vmul.f32 %v39, %v39
    %v44 = vadd.f32 %v40, %v41
    %45 = vadd.xlane.f32.xlu0 %v44
    %v46 = vpop.xlane.xlu0 %45
    %v47 = vadd.f32 %v42, %v43
    %48 = vadd.xlane.f32.xlu0 %v47
    %v49 = vpop.xlane.xlu0 %48
    %v50 = vmul.f32 %v46, %v33
    %v51 = vmul.f32 %v49, %v33
    %v52 = vadd.f32 %v50, 1e-12
    %v53 = vadd.f32 %v51, 1e-12
    %v54 = vrsqrt.pop %v52
    %v55 = vrsqrt.pop %v53
    %v56 = vmul.f32 %v36, %v54
    %v57 = vmul.f32 %v37, %v54
    %v58 = vmul.f32 %v38, %v55
    %v59 = vmul.f32 %v39, %v55
    %v61 = vlaneseq
    %v62 = vshrl.u32 %v61, 7
    %v63 = vsub.s32 0, %v62
    %v64 = vrot.slane %v25, %v63
    %v65 = vlaneseq
    %v66 = vshrl.u32 %v65, 7
    %v67 = vsub.s32 1, %v66
    %v68 = vrot.slane %v25, %v67
    %v71 = vmul.f32 %v56, %v64
    %v72 = vmul.f32 %v57, %v68
    %v73 = vmul.f32 %v58, %v64
    %v74 = vmul.f32 %v59, %v68
    %v76 = vlaneseq
    %v77 = vshrl.u32 %v76, 7
    %v78 = vsub.s32 0, %v77
    %v79 = vrot.slane %v26, %v78
    %v80 = vlaneseq
    %v81 = vshrl.u32 %v80, 7
    %v82 = vsub.s32 1, %v81
    %v83 = vrot.slane %v26, %v82
    %v86 = vadd.f32 %v71, %v79
    %v87 = vadd.f32 %v72, %v83
    %v88 = vadd.f32 %v73, %v79
    %v89 = vadd.f32 %v74, %v83
    %v90 = vpack.c.bf16 %v88, %v86
    %v91 = vpack.c.bf16 %v89, %v87
    %v92 = vld [vmem:[%s3] sm:$0xff]
    %v93 = vld [vmem:[%s3 + $0x8] sm:$0xff]
    %v94 = vld [vmem:[%s3 + $0x10] sm:$0xff]
    %v95 = vld [vmem:[%s3 + $0x18] sm:$0xff]
    %v96 = vld [vmem:[%s3 + $0x20] sm:$0xff]
    %v97 = vld [vmem:[%s3 + $0x28] sm:$0xff]
    %v98 = vld [vmem:[%s3 + $0x30] sm:$0xff]
    %v99 = vld [vmem:[%s3 + $0x38] sm:$0xff]
    %v100 = vld [vmem:[%s3 + $0x40] sm:$0xff]
    %v101 = vld [vmem:[%s3 + $0x48] sm:$0xff]
    %v102 = vld [vmem:[%s3 + $0x50] sm:$0xff]
    %v103 = vld [vmem:[%s3 + $0x58] sm:$0xff]
    %v104 = vld [vmem:[%s3 + $0x60] sm:$0xff]
    %v105 = vld [vmem:[%s3 + $0x68] sm:$0xff]
    %v106 = vld [vmem:[%s3 + $0x70] sm:$0xff]
    %v107 = vld [vmem:[%s3 + $0x78] sm:$0xff]
    %v108 = vld [vmem:[%s3 + $0x80] sm:$0xff]
    %v109 = vld [vmem:[%s3 + $0x88] sm:$0xff]
    %v110 = vld [vmem:[%s3 + $0x90] sm:$0xff]
    %v111 = vld [vmem:[%s3 + $0x98] sm:$0xff]
    %v112 = vld [vmem:[%s3 + $0xa0] sm:$0xff]
    %v113 = vld [vmem:[%s3 + $0xa8] sm:$0xff]
    %v114 = vld [vmem:[%s3 + $0xb0] sm:$0xff]
    %v115 = vld [vmem:[%s3 + $0xb8] sm:$0xff]
    %v116 = vld [vmem:[%s3 + $0xc0] sm:$0xff]
    %v117 = vld [vmem:[%s3 + $0xc8] sm:$0xff]
    %v118 = vld [vmem:[%s3 + $0xd0] sm:$0xff]
    %v119 = vld [vmem:[%s3 + $0xd8] sm:$0xff]
    %v120 = vld [vmem:[%s3 + $0xe0] sm:$0xff]
    %v121 = vld [vmem:[%s3 + $0xe8] sm:$0xff]
    %v122 = vld [vmem:[%s3 + $0xf0] sm:$0xff]
    %v123 = vld [vmem:[%s3 + $0xf8] sm:$0xff]
    %v124 = vld [vmem:[%s3 + $0x100] sm:$0xff]
    %v125 = vld [vmem:[%s3 + $0x108] sm:$0xff]
    %v126 = vld [vmem:[%s3 + $0x110] sm:$0xff]
    %v127 = vld [vmem:[%s3 + $0x118] sm:$0xff]
    %v128 = vld [vmem:[%s3 + $0x120] sm:$0xff]
    %v129 = vld [vmem:[%s3 + $0x128] sm:$0xff]
    %v130 = vld [vmem:[%s3 + $0x130] sm:$0xff]
    %v131 = vld [vmem:[%s3 + $0x138] sm:$0xff]
    %v132 = vld [vmem:[%s3 + $0x140] sm:$0xff]
    %v133 = vld [vmem:[%s3 + $0x148] sm:$0xff]
    %v134 = vld [vmem:[%s3 + $0x150] sm:$0xff]
    %v135 = vld [vmem:[%s3 + $0x158] sm:$0xff]
    %v136 = vld [vmem:[%s3 + $0x160] sm:$0xff]
    %v137 = vld [vmem:[%s3 + $0x168] sm:$0xff]
    %v138 = vld [vmem:[%s3 + $0x170] sm:$0xff]
    %v139 = vld [vmem:[%s3 + $0x178] sm:$0xff]
    %v140 = vld [vmem:[%s3 + $0x180] sm:$0xff]
    %v141 = vld [vmem:[%s3 + $0x188] sm:$0xff]
    %v142 = vld [vmem:[%s3 + $0x190] sm:$0xff]
    %v143 = vld [vmem:[%s3 + $0x198] sm:$0xff]
    %v144 = vld [vmem:[%s3 + $0x1a0] sm:$0xff]
    %v145 = vld [vmem:[%s3 + $0x1a8] sm:$0xff]
    %v146 = vld [vmem:[%s3 + $0x1b0] sm:$0xff]
    %v147 = vld [vmem:[%s3 + $0x1b8] sm:$0xff]
    %v148 = vld [vmem:[%s3 + $0x1c0] sm:$0xff]
    %v149 = vld [vmem:[%s3 + $0x1c8] sm:$0xff]
    %v150 = vld [vmem:[%s3 + $0x1d0] sm:$0xff]
    %v151 = vld [vmem:[%s3 + $0x1d8] sm:$0xff]
    %v152 = vld [vmem:[%s3 + $0x1e0] sm:$0xff]
    %v153 = vld [vmem:[%s3 + $0x1e8] sm:$0xff]
    %v154 = vld [vmem:[%s3 + $0x1f0] sm:$0xff]
    %v155 = vld [vmem:[%s3 + $0x1f8] sm:$0xff]
    %v156 = vld [vmem:[%s4] sm:$0xf]
    %v158 = vlaneseq
    %v159 = vshrl.u32 %v158, 7
    %v160 = vsub.s32 0, %v159
    %v161 = vrot.slane %v156, %v160
    %v162 = vlaneseq
    %v163 = vshrl.u32 %v162, 7
    %v164 = vsub.s32 1, %v163
    %v165 = vrot.slane %v156, %v164
    %v166 = vlaneseq
    %v167 = vshrl.u32 %v166, 7
    %v168 = vsub.s32 2, %v167
    %v169 = vrot.slane %v156, %v168
    %v170 = vlaneseq
    %v171 = vshrl.u32 %v170, 7
    %v172 = vsub.s32 3, %v171
    %v173 = vrot.slane %v156, %v172
    %v242 = vunpack.c.l.b16 %v92
    %v243 = vunpack.c.h.b16 %v92
    %v244 = vunpack.c.l.b16 %v93
    %v245 = vunpack.c.h.b16 %v93
    %v246 = vunpack.c.l.b16 %v94
    %v247 = vunpack.c.h.b16 %v94
    %v248 = vunpack.c.l.b16 %v95
    %v249 = vunpack.c.h.b16 %v95
    %v250 = vunpack.c.l.b16 %v96
    %v251 = vunpack.c.h.b16 %v96
    %v252 = vunpack.c.l.b16 %v97
    %v253 = vunpack.c.h.b16 %v97
    %v254 = vunpack.c.l.b16 %v98
    %v255 = vunpack.c.h.b16 %v98
    %v256 = vunpack.c.l.b16 %v99
    %v257 = vunpack.c.h.b16 %v99
    %v258 = vunpack.c.l.b16 %v100
    %v259 = vunpack.c.h.b16 %v100
    %v260 = vunpack.c.l.b16 %v101
    %v261 = vunpack.c.h.b16 %v101
    %v262 = vunpack.c.l.b16 %v102
    %v263 = vunpack.c.h.b16 %v102
    %v264 = vunpack.c.l.b16 %v103
    %v265 = vunpack.c.h.b16 %v103
    %v266 = vunpack.c.l.b16 %v104
    %v267 = vunpack.c.h.b16 %v104
    %v268 = vunpack.c.l.b16 %v105
    %v269 = vunpack.c.h.b16 %v105
    %v270 = vunpack.c.l.b16 %v106
    %v271 = vunpack.c.h.b16 %v106
    %v272 = vunpack.c.l.b16 %v107
    %v273 = vunpack.c.h.b16 %v107
    %v274 = vunpack.c.l.b16 %v108
    %v275 = vunpack.c.h.b16 %v108
    %v276 = vunpack.c.l.b16 %v109
    %v277 = vunpack.c.h.b16 %v109
    %v278 = vunpack.c.l.b16 %v110
    %v279 = vunpack.c.h.b16 %v110
    %v280 = vunpack.c.l.b16 %v111
    %v281 = vunpack.c.h.b16 %v111
    %v282 = vunpack.c.l.b16 %v112
    %v283 = vunpack.c.h.b16 %v112
    %v284 = vunpack.c.l.b16 %v113
    %v285 = vunpack.c.h.b16 %v113
    %v286 = vunpack.c.l.b16 %v114
    %v287 = vunpack.c.h.b16 %v114
    %v288 = vunpack.c.l.b16 %v115
    %v289 = vunpack.c.h.b16 %v115
    %v290 = vunpack.c.l.b16 %v116
    %v291 = vunpack.c.h.b16 %v116
    %v292 = vunpack.c.l.b16 %v117
    %v293 = vunpack.c.h.b16 %v117
    %v294 = vunpack.c.l.b16 %v118
    %v295 = vunpack.c.h.b16 %v118
    %v296 = vunpack.c.l.b16 %v119
    %v297 = vunpack.c.h.b16 %v119
    %v298 = vunpack.c.l.b16 %v120
    %v299 = vunpack.c.h.b16 %v120
    %v300 = vunpack.c.l.b16 %v121
    %v301 = vunpack.c.h.b16 %v121
    %v302 = vunpack.c.l.b16 %v122
    %v303 = vunpack.c.h.b16 %v122
    %v304 = vunpack.c.l.b16 %v123
    %v305 = vunpack.c.h.b16 %v123
    %v306 = vunpack.c.l.b16 %v124
    %v307 = vunpack.c.h.b16 %v124
    %v308 = vunpack.c.l.b16 %v125
    %v309 = vunpack.c.h.b16 %v125
    %v310 = vunpack.c.l.b16 %v126
    %v311 = vunpack.c.h.b16 %v126
    %v312 = vunpack.c.l.b16 %v127
    %v313 = vunpack.c.h.b16 %v127
    %v314 = vunpack.c.l.b16 %v128
    %v315 = vunpack.c.h.b16 %v128
    %v316 = vunpack.c.l.b16 %v129
    %v317 = vunpack.c.h.b16 %v129
    %v318 = vunpack.c.l.b16 %v130
    %v319 = vunpack.c.h.b16 %v130
    %v320 = vunpack.c.l.b16 %v131
    %v321 = vunpack.c.h.b16 %v131
    %v322 = vunpack.c.l.b16 %v132
    %v323 = vunpack.c.h.b16 %v132
    %v324 = vunpack.c.l.b16 %v133
    %v325 = vunpack.c.h.b16 %v133
    %v326 = vunpack.c.l.b16 %v134
    %v327 = vunpack.c.h.b16 %v134
    %v328 = vunpack.c.l.b16 %v135
    %v329 = vunpack.c.h.b16 %v135
    %v330 = vunpack.c.l.b16 %v136
    %v331 = vunpack.c.h.b16 %v136
    %v332 = vunpack.c.l.b16 %v137
    %v333 = vunpack.c.h.b16 %v137
    %v334 = vunpack.c.l.b16 %v138
    %v335 = vunpack.c.h.b16 %v138
    %v336 = vunpack.c.l.b16 %v139
    %v337 = vunpack.c.h.b16 %v139
    %v338 = vunpack.c.l.b16 %v140
    %v339 = vunpack.c.h.b16 %v140
    %v340 = vunpack.c.l.b16 %v141
    %v341 = vunpack.c.h.b16 %v141
    %v342 = vunpack.c.l.b16 %v142
    %v343 = vunpack.c.h.b16 %v142
    %v344 = vunpack.c.l.b16 %v143
    %v345 = vunpack.c.h.b16 %v143
    %v346 = vunpack.c.l.b16 %v144
    %v347 = vunpack.c.h.b16 %v144
    %v348 = vunpack.c.l.b16 %v145
    %v349 = vunpack.c.h.b16 %v145
    %v350 = vunpack.c.l.b16 %v146
    %v351 = vunpack.c.h.b16 %v146
    %v352 = vunpack.c.l.b16 %v147
    %v353 = vunpack.c.h.b16 %v147
    %v354 = vunpack.c.l.b16 %v148
    %v355 = vunpack.c.h.b16 %v148
    %v356 = vunpack.c.l.b16 %v149
    %v357 = vunpack.c.h.b16 %v149
    %v358 = vunpack.c.l.b16 %v150
    %v359 = vunpack.c.h.b16 %v150
    %v360 = vunpack.c.l.b16 %v151
    %v361 = vunpack.c.h.b16 %v151
    %v362 = vunpack.c.l.b16 %v152
    %v363 = vunpack.c.h.b16 %v152
    %v364 = vunpack.c.l.b16 %v153
    %v365 = vunpack.c.h.b16 %v153
    %v366 = vunpack.c.l.b16 %v154
    %v367 = vunpack.c.h.b16 %v154
    %v368 = vunpack.c.l.b16 %v155
    %v369 = vunpack.c.h.b16 %v155
    %v370 = vpack.c.b16 %v246, %v242
    %v371 = vpack.c.b16 %v247, %v243
    %v372 = vpack.c.b16 %v248, %v244
    %v373 = vpack.c.b16 %v249, %v245
    %v374 = vpack.c.b16 %v254, %v250
    %v375 = vpack.c.b16 %v255, %v251
    %v376 = vpack.c.b16 %v256, %v252
    %v377 = vpack.c.b16 %v257, %v253
    %v378 = vpack.c.b16 %v262, %v258
    %v379 = vpack.c.b16 %v263, %v259
    %v380 = vpack.c.b16 %v264, %v260
    %v381 = vpack.c.b16 %v265, %v261
    %v382 = vpack.c.b16 %v270, %v266
    %v383 = vpack.c.b16 %v271, %v267
    %v384 = vpack.c.b16 %v272, %v268
    %v385 = vpack.c.b16 %v273, %v269
    %v386 = vpack.c.b16 %v278, %v274
    %v387 = vpack.c.b16 %v279, %v275
    %v388 = vpack.c.b16 %v280, %v276
    %v389 = vpack.c.b16 %v281, %v277
    %v390 = vpack.c.b16 %v286, %v282
    %v391 = vpack.c.b16 %v287, %v283
    %v392 = vpack.c.b16 %v288, %v284
    %v393 = vpack.c.b16 %v289, %v285
    %v394 = vpack.c.b16 %v294, %v290
    %v395 = vpack.c.b16 %v295, %v291
    %v396 = vpack.c.b16 %v296, %v292
    %v397 = vpack.c.b16 %v297, %v293
    %v398 = vpack.c.b16 %v302, %v298
    %v399 = vpack.c.b16 %v303, %v299
    %v400 = vpack.c.b16 %v304, %v300
    %v401 = vpack.c.b16 %v305, %v301
    %v402 = vpack.c.b16 %v310, %v306
    %v403 = vpack.c.b16 %v311, %v307
    %v404 = vpack.c.b16 %v312, %v308
    %v405 = vpack.c.b16 %v313, %v309
    %v406 = vpack.c.b16 %v318, %v314
    %v407 = vpack.c.b16 %v319, %v315
    %v408 = vpack.c.b16 %v320, %v316
    %v409 = vpack.c.b16 %v321, %v317
    %v410 = vpack.c.b16 %v326, %v322
    %v411 = vpack.c.b16 %v327, %v323
    %v412 = vpack.c.b16 %v328, %v324
    %v413 = vpack.c.b16 %v329, %v325
    %v414 = vpack.c.b16 %v334, %v330
    %v415 = vpack.c.b16 %v335, %v331
    %v416 = vpack.c.b16 %v336, %v332
    %v417 = vpack.c.b16 %v337, %v333
    %v418 = vpack.c.b16 %v342, %v338
    %v419 = vpack.c.b16 %v343, %v339
    %v420 = vpack.c.b16 %v344, %v340
    %v421 = vpack.c.b16 %v345, %v341
    %v422 = vpack.c.b16 %v350, %v346
    %v423 = vpack.c.b16 %v351, %v347
    %v424 = vpack.c.b16 %v352, %v348
    %v425 = vpack.c.b16 %v353, %v349
    %v426 = vpack.c.b16 %v358, %v354
    %v427 = vpack.c.b16 %v359, %v355
    %v428 = vpack.c.b16 %v360, %v356
    %v429 = vpack.c.b16 %v361, %v357
    %v430 = vpack.c.b16 %v366, %v362
    %v431 = vpack.c.b16 %v367, %v363
    %v432 = vpack.c.b16 %v368, %v364
    %v433 = vpack.c.b16 %v369, %v365
    %498 = vmatprep.subr.bf16.mxu0 %v371
    %499 = vmatpush1.bf16.msra.mxu0 %v370
    %500 = vmatprep.subr.bf16.mxu0 %v375
    %501 = vmatpush1.bf16.msra.mxu0 %v374
    %502 = vmatprep.subr.bf16.mxu0 %v379
    %503 = vmatpush1.bf16.msra.mxu0 %v378
    %504 = vmatprep.subr.bf16.mxu0 %v383
    %505 = vmatpush1.bf16.msra.mxu0 %v382
    %506 = vmatprep.subr.bf16.mxu0 %v387
    %507 = vmatpush1.bf16.msra.mxu0 %v386
    %508 = vmatprep.subr.bf16.mxu0 %v391
    %509 = vmatpush1.bf16.msra.mxu0 %v390
    %510 = vmatprep.subr.bf16.mxu0 %v395
    %511 = vmatpush1.bf16.msra.mxu0 %v394
    %512 = vmatprep.subr.bf16.mxu0 %v399
    %513 = vmatpush1.bf16.msra.mxu0 %v398
    %514 = vmatprep.subr.bf16.mxu0 %v403
    %515 = vmatpush1.bf16.msra.mxu0 %v402
    %516 = vmatprep.subr.bf16.mxu0 %v407
    %517 = vmatpush1.bf16.msra.mxu0 %v406
    %518 = vmatprep.subr.bf16.mxu0 %v411
    %519 = vmatpush1.bf16.msra.mxu0 %v410
    %520 = vmatprep.subr.bf16.mxu0 %v415
    %521 = vmatpush1.bf16.msra.mxu0 %v414
    %522 = vmatprep.subr.bf16.mxu0 %v419
    %523 = vmatpush1.bf16.msra.mxu0 %v418
    %524 = vmatprep.subr.bf16.mxu0 %v423
    %525 = vmatpush1.bf16.msra.mxu0 %v422
    %526 = vmatprep.subr.bf16.mxu0 %v427
    %527 = vmatpush1.bf16.msra.mxu0 %v426
    %528 = vmatprep.subr.bf16.mxu0 %v431
    %529 = vmatpush1.bf16.msra.mxu0 %v430
    %530 = vmatprep.mubr.bf16.mxu0 %v91
    %531 = vmatmul.mubr.bf16.gmra.mrb[0].mxu0 %v90
    %v532 = vpop.f32.mrb[0].mxu0
    %v533 = vadd.f32 %v161, %v532
    %v534 = vpop.f32.mrb[0].mxu0
    %v535 = vadd.f32 %v165, %v534
    %v536 = vpop.f32.mrb[0].mxu0
    %v537 = vadd.f32 %v161, %v536
    %v538 = vpop.f32.mrb[0].mxu0
    %v539 = vadd.f32 %v165, %v538
    %540 = vdwg.mxu0
    %541 = vmatprep.subr.bf16.mxu0 %v373
    %542 = vmatpush1.bf16.msra.mxu0 %v372
    %543 = vmatprep.subr.bf16.mxu0 %v377
    %544 = vmatpush1.bf16.msra.mxu0 %v376
    %545 = vmatprep.subr.bf16.mxu0 %v381
    %546 = vmatpush1.bf16.msra.mxu0 %v380
    %547 = vmatprep.subr.bf16.mxu0 %v385
    %548 = vmatpush1.bf16.msra.mxu0 %v384
    %549 = vmatprep.subr.bf16.mxu0 %v389
    %550 = vmatpush1.bf16.msra.mxu0 %v388
    %551 = vmatprep.subr.bf16.mxu0 %v393
    %552 = vmatpush1.bf16.msra.mxu0 %v392
    %553 = vmatprep.subr.bf16.mxu0 %v397
    %554 = vmatpush1.bf16.msra.mxu0 %v396
    %555 = vmatprep.subr.bf16.mxu0 %v401
    %556 = vmatpush1.bf16.msra.mxu0 %v400
    %557 = vmatprep.subr.bf16.mxu0 %v405
    %558 = vmatpush1.bf16.msra.mxu0 %v404
    %559 = vmatprep.subr.bf16.mxu0 %v409
    %560 = vmatpush1.bf16.msra.mxu0 %v408
    %561 = vmatprep.subr.bf16.mxu0 %v413
    %562 = vmatpush1.bf16.msra.mxu0 %v412
    %563 = vmatprep.subr.bf16.mxu0 %v417
    %564 = vmatpush1.bf16.msra.mxu0 %v416
    %565 = vmatprep.subr.bf16.mxu0 %v421
    %566 = vmatpush1.bf16.msra.mxu0 %v420
    %567 = vmatprep.subr.bf16.mxu0 %v425
    %568 = vmatpush1.bf16.msra.mxu0 %v424
    %569 = vmatprep.subr.bf16.mxu0 %v429
    %570 = vmatpush1.bf16.msra.mxu0 %v428
    %571 = vmatprep.subr.bf16.mxu0 %v433
    %572 = vmatpush1.bf16.msra.mxu0 %v432
    %573 = vmatprep.mubr.bf16.mxu0 %v91
    %574 = vmatmul.mubr.bf16.gmra.mrb[0].mxu0 %v90
    %v575 = vpop.f32.mrb[0].mxu0
    %v576 = vadd.f32 %v169, %v575
    %v577 = vpop.f32.mrb[0].mxu0
    %v578 = vadd.f32 %v173, %v577
    %v579 = vpop.f32.mrb[0].mxu0
    %v580 = vadd.f32 %v169, %v579
    %v581 = vpop.f32.mrb[0].mxu0
    %v582 = vadd.f32 %v173, %v581
    %583 = vdwg.mxu0
    %584 = vst [vmem:[#allocation2] sm:$0xff] %v533
    %585 = vst [vmem:[#allocation2 + $0x8] sm:$0xff] %v535
    %586 = vst [vmem:[#allocation2 + $0x10] sm:$0xff] %v576
    %587 = vst [vmem:[#allocation2 + $0x18] sm:$0xff] %v578
    %588 = vst [vmem:[#allocation2 + $0x20] sm:$0xff] %v537
    %589 = vst [vmem:[#allocation2 + $0x28] sm:$0xff] %v539
    %590 = vst [vmem:[#allocation2 + $0x30] sm:$0xff] %v580
    %591 = vst [vmem:[#allocation2 + $0x38] sm:$0xff] %v582
    // Predicated region
    $region22: #{decoder_forward.9} parent=1 // pred_check
      _
    $region23: #{decoder_forward.9} parent=1 // pred_check_branch
      %593 = sbr.rel (0) target = $region25
    $region24: #{decoder_forward.9} parent=1 // pred_region
      %s595 = ssub.s32 1024, 1024
      %596 = vsyncadd [#allocation3], %s595
      %s597 = sshll.u32 [#allocation2], 4
      %s598 = int_to_ptr.vmem [resolvable:$true] %s597
      %603 = dma.vmem_to_hbm [thread:$0]  %s598, 1024, %s5, [#allocation3], 512, 512, 32
    $region25: #{decoder_forward.9} parent=1 // pred_fallthru
      _
    // Predicated region
    $region26: #{decoder_forward.9} parent=1 // pred_check
      _
    $region27: #{decoder_forward.9} parent=1 // pred_check_branch
      %605 = sbr.rel (0) target = $region29
    $region28: #{decoder_forward.9} parent=1 // pred_region
      %606 = dma.done [#allocation3], 1024
    $region29: #{decoder_forward.9} parent=1 // pred_fallthru
      _
    %607 = vsyncpa [#allocation3], 1

// kernel: decoder_forward.8
$region0: #{decoder_forward.8}
  #allocation0 [shape = 'u32[]', space=smem, size = 0x4, offset = 0x4, fixed_abs, tag = 'smem constant byte address 0x4 - core index']
  #allocation1 [shape = 'u32[144,128]{1,0:T(1,128)}', space=vmem, size = 0x12000, scoped, tag = 'internal scratch']
  %s0 = inlined_call_operand.vmem [shape: f32[16,256], index: 0, kind: input, shape index: {}]
  %s1 = inlined_call_operand.vmem [shape: f32[1,256], index: 1, kind: input, shape index: {}]
  %s2 = inlined_call_operand.vmem [shape: f32[1,256], index: 2, kind: input, shape index: {}]
  %s3 = inlined_call_operand.vmem [shape: bf16[256,512], index: 3, kind: input, shape index: {}]
  %s4 = inlined_call_operand.vmem [shape: f32[1,512], index: 4, kind: input, shape index: {}]
  %s5 = inlined_call_operand.vmem [shape: f32[1,512], index: 5, kind: input, shape index: {}]
  %s6 = inlined_call_operand.vmem [shape: f32[1,512], index: 6, kind: input, shape index: {}]
  %s7 = inlined_call_operand.vmem [shape: bf16[512,256], index: 7, kind: input, shape index: {}]
  %s8 = inlined_call_operand.vmem [shape: f32[16,256], index: 8, kind: output, shape index: {}]
  %s9 = sld [smem:[#allocation0]]
  $region42: #{decoder_forward.8} parent=0
    _
  %s11 = ssub.s32 1, %s9
  %s12 = scalar_select 0, %s11, %s9
  // Predicated region
  $region2: #{decoder_forward.8} parent=0 // pred_check
    _
  $region3: #{decoder_forward.8} parent=0 // pred_check_branch
    %14 = sbr.rel (0) target = $region5
  $region4: #{decoder_forward.8} parent=0 // pred_region
    _
  $region5: #{decoder_forward.8} parent=0 // pred_fallthru
    _
  // Predicated region
  $region6: #{decoder_forward.8} parent=0 // pred_check
    _
  $region7: #{decoder_forward.8} parent=0 // pred_check_branch
    %16 = sbr.rel (0) target = $region9
  $region8: #{decoder_forward.8} parent=0 // pred_region
    _
  $region9: #{decoder_forward.8} parent=0 // pred_fallthru
    _
  // Predicated region
  $region10: #{decoder_forward.8} parent=0 // pred_check
    _
  $region11: #{decoder_forward.8} parent=0 // pred_check_branch
    %18 = sbr.rel (0) target = $region13
  $region12: #{decoder_forward.8} parent=0 // pred_region
    _
  $region13: #{decoder_forward.8} parent=0 // pred_fallthru
    _
  // Predicated region
  $region14: #{decoder_forward.8} parent=0 // pred_check
    _
  $region15: #{decoder_forward.8} parent=0 // pred_check_branch
    %20 = sbr.rel (0) target = $region17
  $region16: #{decoder_forward.8} parent=0 // pred_region
    _
  $region17: #{decoder_forward.8} parent=0 // pred_fallthru
    _
  // Predicated region
  $region18: #{decoder_forward.8} parent=0 // pred_check
    _
  $region19: #{decoder_forward.8} parent=0 // pred_check_branch
    %22 = sbr.rel (0) target = $region21
  $region20: #{decoder_forward.8} parent=0 // pred_region
    _
  $region21: #{decoder_forward.8} parent=0 // pred_fallthru
    _
  // Predicated region
  $region22: #{decoder_forward.8} parent=0 // pred_check
    _
  $region23: #{decoder_forward.8} parent=0 // pred_check_branch
    %24 = sbr.rel (0) target = $region25
  $region24: #{decoder_forward.8} parent=0 // pred_region
    _
  $region25: #{decoder_forward.8} parent=0 // pred_fallthru
    _
  // Predicated region
  $region26: #{decoder_forward.8} parent=0 // pred_check
    _
  $region27: #{decoder_forward.8} parent=0 // pred_check_branch
    %26 = sbr.rel (0) target = $region29
  $region28: #{decoder_forward.8} parent=0 // pred_region
    _
  $region29: #{decoder_forward.8} parent=0 // pred_fallthru
    _
  // Predicated region
  $region30: #{decoder_forward.8} parent=0 // pred_check
    _
  $region31: #{decoder_forward.8} parent=0 // pred_check_branch
    %28 = sbr.rel (0) target = $region33
  $region32: #{decoder_forward.8} parent=0 // pred_region
    _
  $region33: #{decoder_forward.8} parent=0 // pred_fallthru
    _
  %v29 = vld [vmem:[%s0] sm:$0xff]
  %v30 = vld [vmem:[%s0 + $0x8] sm:$0xff]
  %v31 = vld [vmem:[%s0 + $0x10] sm:$0xff]
  %v32 = vld [vmem:[%s0 + $0x18] sm:$0xff]
  %v33 = vld [vmem:[%s1] sm:$0x3]
  %v34 = vld [vmem:[%s2] sm:$0x3]
  %v35 = vadd.f32 %v29, %v30
  %36 = vadd.xlane.f32.xlu0 %v35
  %v37 = vpop.xlane.xlu0 %36
  %v38 = vadd.f32 %v31, %v32
  %39 = vadd.xlane.f32.xlu0 %v38
  %v40 = vpop.xlane.xlu0 %39
  %v41 = vrcp.pop 256.0
  %v42 = vmul.f32 %v37, %v41
  %v43 = vmul.f32 %v40, %v41
  %v44 = vsub.f32 %v29, %v42
  %v45 = vsub.f32 %v30, %v42
  %v46 = vsub.f32 %v31, %v43
  %v47 = vsub.f32 %v32, %v43
  %v48 = vmul.f32 %v44, %v44
  %v49 = vmul.f32 %v45, %v45
  %v50 = vmul.f32 %v46, %v46
  %v51 = vmul.f32 %v47, %v47
  %v52 = vadd.f32 %v48, %v49
  %53 = vadd.xlane.f32.xlu0 %v52
  %v54 = vpop.xlane.xlu0 %53
  %v55 = vadd.f32 %v50, %v51
  %56 = vadd.xlane.f32.xlu0 %v55
  %v57 = vpop.xlane.xlu0 %56
  %v58 = vmul.f32 %v54, %v41
  %v59 = vmul.f32 %v57, %v41
  %v60 = vadd.f32 %v58, 1e-12
  %v61 = vadd.f32 %v59, 1e-12
  %v62 = vrsqrt.pop %v60
  %v63 = vrsqrt.pop %v61
  %v64 = vmul.f32 %v44, %v62
  %v65 = vmul.f32 %v45, %v62
  %v66 = vmul.f32 %v46, %v63
  %v67 = vmul.f32 %v47, %v63
  %v69 = vlaneseq
  %v70 = vshrl.u32 %v69, 7
  %v71 = vsub.s32 0, %v70
  %v72 = vrot.slane %v33, %v71
  %v73 = vlaneseq
  %v74 = vshrl.u32 %v73, 7
  %v75 = vsub.s32 1, %v74
  %v76 = vrot.slane %v33, %v75
  %v79 = vmul.f32 %v64, %v72
  %v80 = vmul.f32 %v65, %v76
  %v81 = vmul.f32 %v66, %v72
  %v82 = vmul.f32 %v67, %v76
  %v84 = vlaneseq
  %v85 = vshrl.u32 %v84, 7
  %v86 = vsub.s32 0, %v85
  %v87 = vrot.slane %v34, %v86
  %v88 = vlaneseq
  %v89 = vshrl.u32 %v88, 7
  %v90 = vsub.s32 1, %v89
  %v91 = vrot.slane %v34, %v90
  %v94 = vadd.f32 %v79, %v87
  %v95 = vadd.f32 %v80, %v91
  %v96 = vadd.f32 %v81, %v87
  %v97 = vadd.f32 %v82, %v91
  %v98 = vpack.c.bf16 %v96, %v94
  %v99 = vpack.c.bf16 %v97, %v95
  %v100 = vld [vmem:[%s3] sm:$0xff]
  %v101 = vld [vmem:[%s3 + $0x8] sm:$0xff]
  %v102 = vld [vmem:[%s3 + $0x10] sm:$0xff]
  %v103 = vld [vmem:[%s3 + $0x18] sm:$0xff]
  %v104 = vld [vmem:[%s3 + $0x20] sm:$0xff]
  %v105 = vld [vmem:[%s3 + $0x28] sm:$0xff]
  %v106 = vld [vmem:[%s3 + $0x30] sm:$0xff]
  %v107 = vld [vmem:[%s3 + $0x38] sm:$0xff]
  %v108 = vld [vmem:[%s3 + $0x40] sm:$0xff]
  %v109 = vld [vmem:[%s3 + $0x48] sm:$0xff]
  %v110 = vld [vmem:[%s3 + $0x50] sm:$0xff]
  %v111 = vld [vmem:[%s3 + $0x58] sm:$0xff]
  %v112 = vld [vmem:[%s3 + $0x60] sm:$0xff]
  %v113 = vld [vmem:[%s3 + $0x68] sm:$0xff]
  %v114 = vld [vmem:[%s3 + $0x70] sm:$0xff]
  %v115 = vld [vmem:[%s3 + $0x78] sm:$0xff]
  %v116 = vld [vmem:[%s3 + $0x80] sm:$0xff]
  %v117 = vld [vmem:[%s3 + $0x88] sm:$0xff]
  %v118 = vld [vmem:[%s3 + $0x90] sm:$0xff]
  %v119 = vld [vmem:[%s3 + $0x98] sm:$0xff]
  %v120 = vld [vmem:[%s3 + $0xa0] sm:$0xff]
  %v121 = vld [vmem:[%s3 + $0xa8] sm:$0xff]
  %v122 = vld [vmem:[%s3 + $0xb0] sm:$0xff]
  %v123 = vld [vmem:[%s3 + $0xb8] sm:$0xff]
  %v124 = vld [vmem:[%s3 + $0xc0] sm:$0xff]
  %v125 = vld [vmem:[%s3 + $0xc8] sm:$0xff]
  %v126 = vld [vmem:[%s3 + $0xd0] sm:$0xff]
  %v127 = vld [vmem:[%s3 + $0xd8] sm:$0xff]
  %v128 = vld [vmem:[%s3 + $0xe0] sm:$0xff]
  %v129 = vld [vmem:[%s3 + $0xe8] sm:$0xff]
  %v130 = vld [vmem:[%s3 + $0xf0] sm:$0xff]
  %v131 = vld [vmem:[%s3 + $0xf8] sm:$0xff]
  %v132 = vld [vmem:[%s3 + $0x100] sm:$0xff]
  %v133 = vld [vmem:[%s3 + $0x108] sm:$0xff]
  %v134 = vld [vmem:[%s3 + $0x110] sm:$0xff]
  %v135 = vld [vmem:[%s3 + $0x118] sm:$0xff]
  %v136 = vld [vmem:[%s3 + $0x120] sm:$0xff]
  %v137 = vld [vmem:[%s3 + $0x128] sm:$0xff]
  %v138 = vld [vmem:[%s3 + $0x130] sm:$0xff]
  %v139 = vld [vmem:[%s3 + $0x138] sm:$0xff]
  %v140 = vld [vmem:[%s3 + $0x140] sm:$0xff]
  %v141 = vld [vmem:[%s3 + $0x148] sm:$0xff]
  %v142 = vld [vmem:[%s3 + $0x150] sm:$0xff]
  %v143 = vld [vmem:[%s3 + $0x158] sm:$0xff]
  %v144 = vld [vmem:[%s3 + $0x160] sm:$0xff]
  %v145 = vld [vmem:[%s3 + $0x168] sm:$0xff]
  %v146 = vld [vmem:[%s3 + $0x170] sm:$0xff]
  %v147 = vld [vmem:[%s3 + $0x178] sm:$0xff]
  %v148 = vld [vmem:[%s3 + $0x180] sm:$0xff]
  %v149 = vld [vmem:[%s3 + $0x188] sm:$0xff]
  %v150 = vld [vmem:[%s3 + $0x190] sm:$0xff]
  %v151 = vld [vmem:[%s3 + $0x198] sm:$0xff]
  %v152 = vld [vmem:[%s3 + $0x1a0] sm:$0xff]
  %v153 = vld [vmem:[%s3 + $0x1a8] sm:$0xff]
  %v154 = vld [vmem:[%s3 + $0x1b0] sm:$0xff]
  %v155 = vld [vmem:[%s3 + $0x1b8] sm:$0xff]
  %v156 = vld [vmem:[%s3 + $0x1c0] sm:$0xff]
  %v157 = vld [vmem:[%s3 + $0x1c8] sm:$0xff]
  %v158 = vld [vmem:[%s3 + $0x1d0] sm:$0xff]
  %v159 = vld [vmem:[%s3 + $0x1d8] sm:$0xff]
  %v160 = vld [vmem:[%s3 + $0x1e0] sm:$0xff]
  %v161 = vld [vmem:[%s3 + $0x1e8] sm:$0xff]
  %v162 = vld [vmem:[%s3 + $0x1f0] sm:$0xff]
  %v163 = vld [vmem:[%s3 + $0x1f8] sm:$0xff]
  %v164 = vld [vmem:[%s4] sm:$0xf]
  %v166 = vlaneseq
  %v167 = vshrl.u32 %v166, 7
  %v168 = vsub.s32 0, %v167
  %v169 = vrot.slane %v164, %v168
  %v170 = vlaneseq
  %v171 = vshrl.u32 %v170, 7
  %v172 = vsub.s32 1, %v171
  %v173 = vrot.slane %v164, %v172
  %v174 = vlaneseq
  %v175 = vshrl.u32 %v174, 7
  %v176 = vsub.s32 2, %v175
  %v177 = vrot.slane %v164, %v176
  %v178 = vlaneseq
  %v179 = vshrl.u32 %v178, 7
  %v180 = vsub.s32 3, %v179
  %v181 = vrot.slane %v164, %v180
  %v250 = vunpack.c.l.b16 %v100
  %v251 = vunpack.c.h.b16 %v100
  %v252 = vunpack.c.l.b16 %v101
  %v253 = vunpack.c.h.b16 %v101
  %v254 = vunpack.c.l.b16 %v102
  %v255 = vunpack.c.h.b16 %v102
  %v256 = vunpack.c.l.b16 %v103
  %v257 = vunpack.c.h.b16 %v103
  %v258 = vunpack.c.l.b16 %v104
  %v259 = vunpack.c.h.b16 %v104
  %v260 = vunpack.c.l.b16 %v105
  %v261 = vunpack.c.h.b16 %v105
  %v262 = vunpack.c.l.b16 %v106
  %v263 = vunpack.c.h.b16 %v106
  %v264 = vunpack.c.l.b16 %v107
  %v265 = vunpack.c.h.b16 %v107
  %v266 = vunpack.c.l.b16 %v108
  %v267 = vunpack.c.h.b16 %v108
  %v268 = vunpack.c.l.b16 %v109
  %v269 = vunpack.c.h.b16 %v109
  %v270 = vunpack.c.l.b16 %v110
  %v271 = vunpack.c.h.b16 %v110
  %v272 = vunpack.c.l.b16 %v111
  %v273 = vunpack.c.h.b16 %v111
  %v274 = vunpack.c.l.b16 %v112
  %v275 = vunpack.c.h.b16 %v112
  %v276 = vunpack.c.l.b16 %v113
  %v277 = vunpack.c.h.b16 %v113
  %v278 = vunpack.c.l.b16 %v114
  %v279 = vunpack.c.h.b16 %v114
  %v280 = vunpack.c.l.b16 %v115
  %v281 = vunpack.c.h.b16 %v115
  %v282 = vunpack.c.l.b16 %v116
  %v283 = vunpack.c.h.b16 %v116
  %v284 = vunpack.c.l.b16 %v117
  %v285 = vunpack.c.h.b16 %v117
  %v286 = vunpack.c.l.b16 %v118
  %v287 = vunpack.c.h.b16 %v118
  %v288 = vunpack.c.l.b16 %v119
  %v289 = vunpack.c.h.b16 %v119
  %v290 = vunpack.c.l.b16 %v120
  %v291 = vunpack.c.h.b16 %v120
  %v292 = vunpack.c.l.b16 %v121
  %v293 = vunpack.c.h.b16 %v121
  %v294 = vunpack.c.l.b16 %v122
  %v295 = vunpack.c.h.b16 %v122
  %v296 = vunpack.c.l.b16 %v123
  %v297 = vunpack.c.h.b16 %v123
  %v298 = vunpack.c.l.b16 %v124
  %v299 = vunpack.c.h.b16 %v124
  %v300 = vunpack.c.l.b16 %v125
  %v301 = vunpack.c.h.b16 %v125
  %v302 = vunpack.c.l.b16 %v126
  %v303 = vunpack.c.h.b16 %v126
  %v304 = vunpack.c.l.b16 %v127
  %v305 = vunpack.c.h.b16 %v127
  %v306 = vunpack.c.l.b16 %v128
  %v307 = vunpack.c.h.b16 %v128
  %v308 = vunpack.c.l.b16 %v129
  %v309 = vunpack.c.h.b16 %v129
  %v310 = vunpack.c.l.b16 %v130
  %v311 = vunpack.c.h.b16 %v130
  %v312 = vunpack.c.l.b16 %v131
  %v313 = vunpack.c.h.b16 %v131
  %v314 = vunpack.c.l.b16 %v132
  %v315 = vunpack.c.h.b16 %v132
  %v316 = vunpack.c.l.b16 %v133
  %v317 = vunpack.c.h.b16 %v133
  %v318 = vunpack.c.l.b16 %v134
  %v319 = vunpack.c.h.b16 %v134
  %v320 = vunpack.c.l.b16 %v135
  %v321 = vunpack.c.h.b16 %v135
  %v322 = vunpack.c.l.b16 %v136
  %v323 = vunpack.c.h.b16 %v136
  %v324 = vunpack.c.l.b16 %v137
  %v325 = vunpack.c.h.b16 %v137
  %v326 = vunpack.c.l.b16 %v138
  %v327 = vunpack.c.h.b16 %v138
  %v328 = vunpack.c.l.b16 %v139
  %v329 = vunpack.c.h.b16 %v139
  %v330 = vunpack.c.l.b16 %v140
  %v331 = vunpack.c.h.b16 %v140
  %v332 = vunpack.c.l.b16 %v141
  %v333 = vunpack.c.h.b16 %v141
  %v334 = vunpack.c.l.b16 %v142
  %v335 = vunpack.c.h.b16 %v142
  %v336 = vunpack.c.l.b16 %v143
  %v337 = vunpack.c.h.b16 %v143
  %v338 = vunpack.c.l.b16 %v144
  %v339 = vunpack.c.h.b16 %v144
  %v340 = vunpack.c.l.b16 %v145
  %v341 = vunpack.c.h.b16 %v145
  %v342 = vunpack.c.l.b16 %v146
  %v343 = vunpack.c.h.b16 %v146
  %v344 = vunpack.c.l.b16 %v147
  %v345 = vunpack.c.h.b16 %v147
  %v346 = vunpack.c.l.b16 %v148
  %v347 = vunpack.c.h.b16 %v148
  %v348 = vunpack.c.l.b16 %v149
  %v349 = vunpack.c.h.b16 %v149
  %v350 = vunpack.c.l.b16 %v150
  %v351 = vunpack.c.h.b16 %v150
  %v352 = vunpack.c.l.b16 %v151
  %v353 = vunpack.c.h.b16 %v151
  %v354 = vunpack.c.l.b16 %v152
  %v355 = vunpack.c.h.b16 %v152
  %v356 = vunpack.c.l.b16 %v153
  %v357 = vunpack.c.h.b16 %v153
  %v358 = vunpack.c.l.b16 %v154
  %v359 = vunpack.c.h.b16 %v154
  %v360 = vunpack.c.l.b16 %v155
  %v361 = vunpack.c.h.b16 %v155
  %v362 = vunpack.c.l.b16 %v156
  %v363 = vunpack.c.h.b16 %v156
  %v364 = vunpack.c.l.b16 %v157
  %v365 = vunpack.c.h.b16 %v157
  %v366 = vunpack.c.l.b16 %v158
  %v367 = vunpack.c.h.b16 %v158
  %v368 = vunpack.c.l.b16 %v159
  %v369 = vunpack.c.h.b16 %v159
  %v370 = vunpack.c.l.b16 %v160
  %v371 = vunpack.c.h.b16 %v160
  %v372 = vunpack.c.l.b16 %v161
  %v373 = vunpack.c.h.b16 %v161
  %v374 = vunpack.c.l.b16 %v162
  %v375 = vunpack.c.h.b16 %v162
  %v376 = vunpack.c.l.b16 %v163
  %v377 = vunpack.c.h.b16 %v163
  %v378 = vpack.c.b16 %v254, %v250
  %v379 = vpack.c.b16 %v255, %v251
  %v380 = vpack.c.b16 %v256, %v252
  %v381 = vpack.c.b16 %v257, %v253
  %v382 = vpack.c.b16 %v262, %v258
  %v383 = vpack.c.b16 %v263, %v259
  %v384 = vpack.c.b16 %v264, %v260
  %v385 = vpack.c.b16 %v265, %v261
  %v386 = vpack.c.b16 %v270, %v266
  %v387 = vpack.c.b16 %v271, %v267
  %v388 = vpack.c.b16 %v272, %v268
  %v389 = vpack.c.b16 %v273, %v269
  %v390 = vpack.c.b16 %v278, %v274
  %v391 = vpack.c.b16 %v279, %v275
  %v392 = vpack.c.b16 %v280, %v276
  %v393 = vpack.c.b16 %v281, %v277
  %v394 = vpack.c.b16 %v286, %v282
  %v395 = vpack.c.b16 %v287, %v283
  %v396 = vpack.c.b16 %v288, %v284
  %v397 = vpack.c.b16 %v289, %v285
  %v398 = vpack.c.b16 %v294, %v290
  %v399 = vpack.c.b16 %v295, %v291
  %v400 = vpack.c.b16 %v296, %v292
  %v401 = vpack.c.b16 %v297, %v293
  %v402 = vpack.c.b16 %v302, %v298
  %v403 = vpack.c.b16 %v303, %v299
  %v404 = vpack.c.b16 %v304, %v300
  %v405 = vpack.c.b16 %v305, %v301
  %v406 = vpack.c.b16 %v310, %v306
  %v407 = vpack.c.b16 %v311, %v307
  %v408 = vpack.c.b16 %v312, %v308
  %v409 = vpack.c.b16 %v313, %v309
  %v410 = vpack.c.b16 %v318, %v314
  %v411 = vpack.c.b16 %v319, %v315
  %v412 = vpack.c.b16 %v320, %v316
  %v413 = vpack.c.b16 %v321, %v317
  %v414 = vpack.c.b16 %v326, %v322
  %v415 = vpack.c.b16 %v327, %v323
  %v416 = vpack.c.b16 %v328, %v324
  %v417 = vpack.c.b16 %v329, %v325
  %v418 = vpack.c.b16 %v334, %v330
  %v419 = vpack.c.b16 %v335, %v331
  %v420 = vpack.c.b16 %v336, %v332
  %v421 = vpack.c.b16 %v337, %v333
  %v422 = vpack.c.b16 %v342, %v338
  %v423 = vpack.c.b16 %v343, %v339
  %v424 = vpack.c.b16 %v344, %v340
  %v425 = vpack.c.b16 %v345, %v341
  %v426 = vpack.c.b16 %v350, %v346
  %v427 = vpack.c.b16 %v351, %v347
  %v428 = vpack.c.b16 %v352, %v348
  %v429 = vpack.c.b16 %v353, %v349
  %v430 = vpack.c.b16 %v358, %v354
  %v431 = vpack.c.b16 %v359, %v355
  %v432 = vpack.c.b16 %v360, %v356
  %v433 = vpack.c.b16 %v361, %v357
  %v434 = vpack.c.b16 %v366, %v362
  %v435 = vpack.c.b16 %v367, %v363
  %v436 = vpack.c.b16 %v368, %v364
  %v437 = vpack.c.b16 %v369, %v365
  %v438 = vpack.c.b16 %v374, %v370
  %v439 = vpack.c.b16 %v375, %v371
  %v440 = vpack.c.b16 %v376, %v372
  %v441 = vpack.c.b16 %v377, %v373
  %506 = vmatprep.subr.bf16.mxu0 %v379
  %507 = vmatpush1.bf16.msra.mxu0 %v378
  %508 = vmatprep.subr.bf16.mxu0 %v383
  %509 = vmatpush1.bf16.msra.mxu0 %v382
  %510 = vmatprep.subr.bf16.mxu0 %v387
  %511 = vmatpush1.bf16.msra.mxu0 %v386
  %512 = vmatprep.subr.bf16.mxu0 %v391
  %513 = vmatpush1.bf16.msra.mxu0 %v390
  %514 = vmatprep.subr.bf16.mxu0 %v395
  %515 = vmatpush1.bf16.msra.mxu0 %v394
  %516 = vmatprep.subr.bf16.mxu0 %v399
  %517 = vmatpush1.bf16.msra.mxu0 %v398
  %518 = vmatprep.subr.bf16.mxu0 %v403
  %519 = vmatpush1.bf16.msra.mxu0 %v402
  %520 = vmatprep.subr.bf16.mxu0 %v407
  %521 = vmatpush1.bf16.msra.mxu0 %v406
  %522 = vmatprep.subr.bf16.mxu0 %v411
  %523 = vmatpush1.bf16.msra.mxu0 %v410
  %524 = vmatprep.subr.bf16.mxu0 %v415
  %525 = vmatpush1.bf16.msra.mxu0 %v414
  %526 = vmatprep.subr.bf16.mxu0 %v419
  %527 = vmatpush1.bf16.msra.mxu0 %v418
  %528 = vmatprep.subr.bf16.mxu0 %v423
  %529 = vmatpush1.bf16.msra.mxu0 %v422
  %530 = vmatprep.subr.bf16.mxu0 %v427
  %531 = vmatpush1.bf16.msra.mxu0 %v426
  %532 = vmatprep.subr.bf16.mxu0 %v431
  %533 = vmatpush1.bf16.msra.mxu0 %v430
  %534 = vmatprep.subr.bf16.mxu0 %v435
  %535 = vmatpush1.bf16.msra.mxu0 %v434
  %536 = vmatprep.subr.bf16.mxu0 %v439
  %537 = vmatpush1.bf16.msra.mxu0 %v438
  %538 = vmatprep.mubr.bf16.mxu0 %v99
  %539 = vmatmul.mubr.bf16.gmra.mrb[0].mxu0 %v98
  %v540 = vpop.f32.mrb[0].mxu0
  %v541 = vadd.f32 %v169, %v540
  %v542 = vpop.f32.mrb[0].mxu0
  %v543 = vadd.f32 %v173, %v542
  %v544 = vpop.f32.mrb[0].mxu0
  %v545 = vadd.f32 %v169, %v544
  %v546 = vpop.f32.mrb[0].mxu0
  %v547 = vadd.f32 %v173, %v546
  %548 = vdwg.mxu0
  %549 = vmatprep.subr.bf16.mxu0 %v381
  %550 = vmatpush1.bf16.msra.mxu0 %v380
  %551 = vmatprep.subr.bf16.mxu0 %v385
  %552 = vmatpush1.bf16.msra.mxu0 %v384
  %553 = vmatprep.subr.bf16.mxu0 %v389
  %554 = vmatpush1.bf16.msra.mxu0 %v388
  %555 = vmatprep.subr.bf16.mxu0 %v393
  %556 = vmatpush1.bf16.msra.mxu0 %v392
  %557 = vmatprep.subr.bf16.mxu0 %v397
  %558 = vmatpush1.bf16.msra.mxu0 %v396
  %559 = vmatprep.subr.bf16.mxu0 %v401
  %560 = vmatpush1.bf16.msra.mxu0 %v400
  %561 = vmatprep.subr.bf16.mxu0 %v405
  %562 = vmatpush1.bf16.msra.mxu0 %v404
  %563 = vmatprep.subr.bf16.mxu0 %v409
  %564 = vmatpush1.bf16.msra.mxu0 %v408
  %565 = vmatprep.subr.bf16.mxu0 %v413
  %566 = vmatpush1.bf16.msra.mxu0 %v412
  %567 = vmatprep.subr.bf16.mxu0 %v417
  %568 = vmatpush1.bf16.msra.mxu0 %v416
  %569 = vmatprep.subr.bf16.mxu0 %v421
  %570 = vmatpush1.bf16.msra.mxu0 %v420
  %571 = vmatprep.subr.bf16.mxu0 %v425
  %572 = vmatpush1.bf16.msra.mxu0 %v424
  %573 = vmatprep.subr.bf16.mxu0 %v429
  %574 = vmatpush1.bf16.msra.mxu0 %v428
  %575 = vmatprep.subr.bf16.mxu0 %v433
  %576 = vmatpush1.bf16.msra.mxu0 %v432
  %577 = vmatprep.subr.bf16.mxu0 %v437
  %578 = vmatpush1.bf16.msra.mxu0 %v436
  %579 = vmatprep.subr.bf16.mxu0 %v441
  %580 = vmatpush1.bf16.msra.mxu0 %v440
  %581 = vmatprep.mubr.bf16.mxu0 %v99
  %582 = vmatmul.mubr.bf16.gmra.mrb[0].mxu0 %v98
  %v583 = vpop.f32.mrb[0].mxu0
  %v584 = vadd.f32 %v177, %v583
  %v585 = vpop.f32.mrb[0].mxu0
  %v586 = vadd.f32 %v181, %v585
  %v587 = vpop.f32.mrb[0].mxu0
  %v588 = vadd.f32 %v177, %v587
  %v589 = vpop.f32.mrb[0].mxu0
  %v590 = vadd.f32 %v181, %v589
  %591 = vdwg.mxu0
  %v592 = vmax.f32 %v541, 0.0
  %v593 = vmax.f32 %v543, 0.0
  %v594 = vmax.f32 %v584, 0.0
  %v595 = vmax.f32 %v586, 0.0
  %v596 = vmax.f32 %v545, 0.0
  %v597 = vmax.f32 %v547, 0.0
  %v598 = vmax.f32 %v588, 0.0
  %v599 = vmax.f32 %v590, 0.0
  %v600 = vld [vmem:[%s5] sm:$0xf]
  %v601 = vld [vmem:[%s6] sm:$0xf]
  %v602 = vadd.f32 %v592, %v593
  %v603 = vadd.f32 %v602, %v594
  %v604 = vadd.f32 %v603, %v595
  %605 = vadd.xlane.f32.xlu0 %v604
  %v606 = vpop.xlane.xlu0 %605
  %v607 = vadd.f32 %v596, %v597
  %v608 = vadd.f32 %v607, %v598
  %v609 = vadd.f32 %v608, %v599
  %610 = vadd.xlane.f32.xlu0 %v609
  %v611 = vpop.xlane.xlu0 %610
  %v612 = vrcp.pop 512.0
  %v613 = vmul.f32 %v606, %v612
  %v614 = vmul.f32 %v611, %v612
  %v615 = vsub.f32 %v592, %v613
  %v616 = vsub.f32 %v593, %v613
  %v617 = vsub.f32 %v594, %v613
  %v618 = vsub.f32 %v595, %v613
  %v619 = vsub.f32 %v596, %v614
  %v620 = vsub.f32 %v597, %v614
  %v621 = vsub.f32 %v598, %v614
  %v622 = vsub.f32 %v599, %v614
  %v623 = vmul.f32 %v615, %v615
  %v624 = vmul.f32 %v616, %v616
  %v625 = vmul.f32 %v617, %v617
  %v626 = vmul.f32 %v618, %v618
  %v627 = vmul.f32 %v619, %v619
  %v628 = vmul.f32 %v620, %v620
  %v629 = vmul.f32 %v621, %v621
  %v630 = vmul.f32 %v622, %v622
  %v631 = vadd.f32 %v623, %v624
  %v632 = vadd.f32 %v631, %v625
  %v633 = vadd.f32 %v632, %v626
  %634 = vadd.xlane.f32.xlu0 %v633
  %v635 = vpop.xlane.xlu0 %634
  %v636 = vadd.f32 %v627, %v628
  %v637 = vadd.f32 %v636, %v629
  %v638 = vadd.f32 %v637, %v630
  %639 = vadd.xlane.f32.xlu0 %v638
  %v640 = vpop.xlane.xlu0 %639
  %v641 = vmul.f32 %v635, %v612
  %v642 = vmul.f32 %v640, %v612
  %v643 = vadd.f32 %v641, 1e-12
  %v644 = vadd.f32 %v642, 1e-12
  %v645 = vrsqrt.pop %v643
  %v646 = vrsqrt.pop %v644
  %v647 = vmul.f32 %v615, %v645
  %v648 = vmul.f32 %v616, %v645
  %v649 = vmul.f32 %v617, %v645
  %v650 = vmul.f32 %v618, %v645
  %v651 = vmul.f32 %v619, %v646
  %v652 = vmul.f32 %v620, %v646
  %v653 = vmul.f32 %v621, %v646
  %v654 = vmul.f32 %v622, %v646
  %v656 = vlaneseq
  %v657 = vshrl.u32 %v656, 7
  %v658 = vsub.s32 0, %v657
  %v659 = vrot.slane %v600, %v658
  %v660 = vlaneseq
  %v661 = vshrl.u32 %v660, 7
  %v662 = vsub.s32 1, %v661
  %v663 = vrot.slane %v600, %v662
  %v664 = vlaneseq
  %v665 = vshrl.u32 %v664, 7
  %v666 = vsub.s32 2, %v665
  %v667 = vrot.slane %v600, %v666
  %v668 = vlaneseq
  %v669 = vshrl.u32 %v668, 7
  %v670 = vsub.s32 3, %v669
  %v671 = vrot.slane %v600, %v670
  %v676 = vmul.f32 %v647, %v659
  %v677 = vmul.f32 %v648, %v663
  %v678 = vmul.f32 %v649, %v667
  %v679 = vmul.f32 %v650, %v671
  %v680 = vmul.f32 %v651, %v659
  %v681 = vmul.f32 %v652, %v663
  %v682 = vmul.f32 %v653, %v667
  %v683 = vmul.f32 %v654, %v671
  %v685 = vlaneseq
  %v686 = vshrl.u32 %v685, 7
  %v687 = vsub.s32 0, %v686
  %v688 = vrot.slane %v601, %v687
  %v689 = vlaneseq
  %v690 = vshrl.u32 %v689, 7
  %v691 = vsub.s32 1, %v690
  %v692 = vrot.slane %v601, %v691
  %v693 = vlaneseq
  %v694 = vshrl.u32 %v693, 7
  %v695 = vsub.s32 2, %v694
  %v696 = vrot.slane %v601, %v695
  %v697 = vlaneseq
  %v698 = vshrl.u32 %v697, 7
  %v699 = vsub.s32 3, %v698
  %v700 = vrot.slane %v601, %v699
  %v705 = vadd.f32 %v676, %v688
  %v706 = vadd.f32 %v677, %v692
  %v707 = vadd.f32 %v678, %v696
  %v708 = vadd.f32 %v679, %v700
  %v709 = vadd.f32 %v680, %v688
  %v710 = vadd.f32 %v681, %v692
  %v711 = vadd.f32 %v682, %v696
  %v712 = vadd.f32 %v683, %v700
  %v713 = vpack.c.bf16 %v709, %v705
  %v714 = vpack.c.bf16 %v710, %v706
  %v715 = vpack.c.bf16 %v711, %v707
  %v716 = vpack.c.bf16 %v712, %v708
  %v717 = vld [vmem:[%s7] sm:$0xff]
  %v718 = vld [vmem:[%s7 + $0x8] sm:$0xff]
  %v719 = vld [vmem:[%s7 + $0x10] sm:$0xff]
  %v720 = vld [vmem:[%s7 + $0x18] sm:$0xff]
  %v721 = vld [vmem:[%s7 + $0x20] sm:$0xff]
  %v722 = vld [vmem:[%s7 + $0x28] sm:$0xff]
  %v723 = vld [vmem:[%s7 + $0x30] sm:$0xff]
  %v724 = vld [vmem:[%s7 + $0x38] sm:$0xff]
  %v725 = vld [vmem:[%s7 + $0x40] sm:$0xff]
  %v726 = vld [vmem:[%s7 + $0x48] sm:$0xff]
  %v727 = vld [vmem:[%s7 + $0x50] sm:$0xff]
  %v728 = vld [vmem:[%s7 + $0x58] sm:$0xff]
  %v729 = vld [vmem:[%s7 + $0x60] sm:$0xff]
  %v730 = vld [vmem:[%s7 + $0x68] sm:$0xff]
  %v731 = vld [vmem:[%s7 + $0x70] sm:$0xff]
  %v732 = vld [vmem:[%s7 + $0x78] sm:$0xff]
  %v733 = vld [vmem:[%s7 + $0x80] sm:$0xff]
  %v734 = vld [vmem:[%s7 + $0x88] sm:$0xff]
  %v735 = vld [vmem:[%s7 + $0x90] sm:$0xff]
  %v736 = vld [vmem:[%s7 + $0x98] sm:$0xff]
  %v737 = vld [vmem:[%s7 + $0xa0] sm:$0xff]
  %v738 = vld [vmem:[%s7 + $0xa8] sm:$0xff]
  %v739 = vld [vmem:[%s7 + $0xb0] sm:$0xff]
  %v740 = vld [vmem:[%s7 + $0xb8] sm:$0xff]
  %v741 = vld [vmem:[%s7 + $0xc0] sm:$0xff]
  %v742 = vld [vmem:[%s7 + $0xc8] sm:$0xff]
  %v743 = vld [vmem:[%s7 + $0xd0] sm:$0xff]
  %v744 = vld [vmem:[%s7 + $0xd8] sm:$0xff]
  %v745 = vld [vmem:[%s7 + $0xe0] sm:$0xff]
  %v746 = vld [vmem:[%s7 + $0xe8] sm:$0xff]
  %v747 = vld [vmem:[%s7 + $0xf0] sm:$0xff]
  %v748 = vld [vmem:[%s7 + $0xf8] sm:$0xff]
  %v749 = vld [vmem:[%s7 + $0x100] sm:$0xff]
  %v750 = vld [vmem:[%s7 + $0x108] sm:$0xff]
  %v751 = vld [vmem:[%s7 + $0x110] sm:$0xff]
  %v752 = vld [vmem:[%s7 + $0x118] sm:$0xff]
  %v753 = vld [vmem:[%s7 + $0x120] sm:$0xff]
  %v754 = vld [vmem:[%s7 + $0x128] sm:$0xff]
  %v755 = vld [vmem:[%s7 + $0x130] sm:$0xff]
  %v756 = vld [vmem:[%s7 + $0x138] sm:$0xff]
  %v757 = vld [vmem:[%s7 + $0x140] sm:$0xff]
  %v758 = vld [vmem:[%s7 + $0x148] sm:$0xff]
  %v759 = vld [vmem:[%s7 + $0x150] sm:$0xff]
  %v760 = vld [vmem:[%s7 + $0x158] sm:$0xff]
  %v761 = vld [vmem:[%s7 + $0x160] sm:$0xff]
  %v762 = vld [vmem:[%s7 + $0x168] sm:$0xff]
  %v763 = vld [vmem:[%s7 + $0x170] sm:$0xff]
  %v764 = vld [vmem:[%s7 + $0x178] sm:$0xff]
  %v765 = vld [vmem:[%s7 + $0x180] sm:$0xff]
  %v766 = vld [vmem:[%s7 + $0x188] sm:$0xff]
  %v767 = vld [vmem:[%s7 + $0x190] sm:$0xff]
  %v768 = vld [vmem:[%s7 + $0x198] sm:$0xff]
  %v769 = vld [vmem:[%s7 + $0x1a0] sm:$0xff]
  %v770 = vld [vmem:[%s7 + $0x1a8] sm:$0xff]
  %v771 = vld [vmem:[%s7 + $0x1b0] sm:$0xff]
  %v772 = vld [vmem:[%s7 + $0x1b8] sm:$0xff]
  %v773 = vld [vmem:[%s7 + $0x1c0] sm:$0xff]
  %v774 = vld [vmem:[%s7 + $0x1c8] sm:$0xff]
  %v775 = vld [vmem:[%s7 + $0x1d0] sm:$0xff]
  %v776 = vld [vmem:[%s7 + $0x1d8] sm:$0xff]
  %v777 = vld [vmem:[%s7 + $0x1e0] sm:$0xff]
  %v778 = vld [vmem:[%s7 + $0x1e8] sm:$0xff]
  %v779 = vld [vmem:[%s7 + $0x1f0] sm:$0xff]
  %v780 = vld [vmem:[%s7 + $0x1f8] sm:$0xff]
  %v845 = vunpack.c.l.b16 %v717
  %v846 = vunpack.c.h.b16 %v717
  %v847 = vunpack.c.l.b16 %v718
  %v848 = vunpack.c.h.b16 %v718
  %v849 = vunpack.c.l.b16 %v719
  %v850 = vunpack.c.h.b16 %v719
  %v851 = vunpack.c.l.b16 %v720
  %v852 = vunpack.c.h.b16 %v720
  %v853 = vunpack.c.l.b16 %v721
  %v854 = vunpack.c.h.b16 %v721
  %v855 = vunpack.c.l.b16 %v722
  %v856 = vunpack.c.h.b16 %v722
  %v857 = vunpack.c.l.b16 %v723
  %v858 = vunpack.c.h.b16 %v723
  %v859 = vunpack.c.l.b16 %v724
  %v860 = vunpack.c.h.b16 %v724
  %v861 = vunpack.c.l.b16 %v725
  %v862 = vunpack.c.h.b16 %v725
  %v863 = vunpack.c.l.b16 %v726
  %v864 = vunpack.c.h.b16 %v726
  %v865 = vunpack.c.l.b16 %v727
  %v866 = vunpack.c.h.b16 %v727
  %v867 = vunpack.c.l.b16 %v728
  %v868 = vunpack.c.h.b16 %v728
  %v869 = vunpack.c.l.b16 %v729
  %v870 = vunpack.c.h.b16 %v729
  %v871 = vunpack.c.l.b16 %v730
  %v872 = vunpack.c.h.b16 %v730
  %v873 = vunpack.c.l.b16 %v731
  %v874 = vunpack.c.h.b16 %v731
  %v875 = vunpack.c.l.b16 %v732
  %v876 = vunpack.c.h.b16 %v732
  %v877 = vunpack.c.l.b16 %v733
  %v878 = vunpack.c.h.b16 %v733
  %v879 = vunpack.c.l.b16 %v734
  %v880 = vunpack.c.h.b16 %v734
  %v881 = vunpack.c.l.b16 %v735
  %v882 = vunpack.c.h.b16 %v735
  %v883 = vunpack.c.l.b16 %v736
  %v884 = vunpack.c.h.b16 %v736
  %v885 = vunpack.c.l.b16 %v737
  %v886 = vunpack.c.h.b16 %v737
  %v887 = vunpack.c.l.b16 %v738
  %v888 = vunpack.c.h.b16 %v738
  %v889 = vunpack.c.l.b16 %v739
  %v890 = vunpack.c.h.b16 %v739
  %v891 = vunpack.c.l.b16 %v740
  %v892 = vunpack.c.h.b16 %v740
  %v893 = vunpack.c.l.b16 %v741
  %v894 = vunpack.c.h.b16 %v741
  %v895 = vunpack.c.l.b16 %v742
  %v896 = vunpack.c.h.b16 %v742
  %v897 = vunpack.c.l.b16 %v743
  %v898 = vunpack.c.h.b16 %v743
  %v899 = vunpack.c.l.b16 %v744
  %v900 = vunpack.c.h.b16 %v744
  %v901 = vunpack.c.l.b16 %v745
  %v902 = vunpack.c.h.b16 %v745
  %v903 = vunpack.c.l.b16 %v746
  %v904 = vunpack.c.h.b16 %v746
  %v905 = vunpack.c.l.b16 %v747
  %v906 = vunpack.c.h.b16 %v747
  %v907 = vunpack.c.l.b16 %v748
  %v908 = vunpack.c.h.b16 %v748
  %v909 = vunpack.c.l.b16 %v749
  %v910 = vunpack.c.h.b16 %v749
  %v911 = vunpack.c.l.b16 %v750
  %v912 = vunpack.c.h.b16 %v750
  %v913 = vunpack.c.l.b16 %v751
  %v914 = vunpack.c.h.b16 %v751
  %v915 = vunpack.c.l.b16 %v752
  %v916 = vunpack.c.h.b16 %v752
  %v917 = vunpack.c.l.b16 %v753
  %v918 = vunpack.c.h.b16 %v753
  %v919 = vunpack.c.l.b16 %v754
  %v920 = vunpack.c.h.b16 %v754
  %v921 = vunpack.c.l.b16 %v755
  %v922 = vunpack.c.h.b16 %v755
  %v923 = vunpack.c.l.b16 %v756
  %v924 = vunpack.c.h.b16 %v756
  %v925 = vunpack.c.l.b16 %v757
  %v926 = vunpack.c.h.b16 %v757
  %v927 = vunpack.c.l.b16 %v758
  %v928 = vunpack.c.h.b16 %v758
  %v929 = vunpack.c.l.b16 %v759
  %v930 = vunpack.c.h.b16 %v759
  %v931 = vunpack.c.l.b16 %v760
  %v932 = vunpack.c.h.b16 %v760
  %v933 = vunpack.c.l.b16 %v761
  %v934 = vunpack.c.h.b16 %v761
  %v935 = vunpack.c.l.b16 %v762
  %v936 = vunpack.c.h.b16 %v762
  %v937 = vunpack.c.l.b16 %v763
  %v938 = vunpack.c.h.b16 %v763
  %v939 = vunpack.c.l.b16 %v764
  %v940 = vunpack.c.h.b16 %v764
  %v941 = vunpack.c.l.b16 %v765
  %v942 = vunpack.c.h.b16 %v765
  %v943 = vunpack.c.l.b16 %v766
  %v944 = vunpack.c.h.b16 %v766
  %v945 = vunpack.c.l.b16 %v767
  %v946 = vunpack.c.h.b16 %v767
  %v947 = vunpack.c.l.b16 %v768
  %v948 = vunpack.c.h.b16 %v768
  %v949 = vunpack.c.l.b16 %v769
  %v950 = vunpack.c.h.b16 %v769
  %v951 = vunpack.c.l.b16 %v770
  %v952 = vunpack.c.h.b16 %v770
  %v953 = vunpack.c.l.b16 %v771
  %v954 = vunpack.c.h.b16 %v771
  %v955 = vunpack.c.l.b16 %v772
  %v956 = vunpack.c.h.b16 %v772
  %v957 = vunpack.c.l.b16 %v773
  %v958 = vunpack.c.h.b16 %v773
  %v959 = vunpack.c.l.b16 %v774
  %v960 = vunpack.c.h.b16 %v774
  %v961 = vunpack.c.l.b16 %v775
  %v962 = vunpack.c.h.b16 %v775
  %v963 = vunpack.c.l.b16 %v776
  %v964 = vunpack.c.h.b16 %v776
  %v965 = vunpack.c.l.b16 %v777
  %v966 = vunpack.c.h.b16 %v777
  %v967 = vunpack.c.l.b16 %v778
  %v968 = vunpack.c.h.b16 %v778
  %v969 = vunpack.c.l.b16 %v779
  %v970 = vunpack.c.h.b16 %v779
  %v971 = vunpack.c.l.b16 %v780
  %v972 = vunpack.c.h.b16 %v780
  %v973 = vpack.c.b16 %v847, %v845
  %v974 = vpack.c.b16 %v848, %v846
  %v975 = vpack.c.b16 %v851, %v849
  %v976 = vpack.c.b16 %v852, %v850
  %v977 = vpack.c.b16 %v855, %v853
  %v978 = vpack.c.b16 %v856, %v854
  %v979 = vpack.c.b16 %v859, %v857
  %v980 = vpack.c.b16 %v860, %v858
  %v981 = vpack.c.b16 %v863, %v861
  %v982 = vpack.c.b16 %v864, %v862
  %v983 = vpack.c.b16 %v867, %v865
  %v984 = vpack.c.b16 %v868, %v866
  %v985 = vpack.c.b16 %v871, %v869
  %v986 = vpack.c.b16 %v872, %v870
  %v987 = vpack.c.b16 %v875, %v873
  %v988 = vpack.c.b16 %v876, %v874
  %v989 = vpack.c.b16 %v879, %v877
  %v990 = vpack.c.b16 %v880, %v878
  %v991 = vpack.c.b16 %v883, %v881
  %v992 = vpack.c.b16 %v884, %v882
  %v993 = vpack.c.b16 %v887, %v885
  %v994 = vpack.c.b16 %v888, %v886
  %v995 = vpack.c.b16 %v891, %v889
  %v996 = vpack.c.b16 %v892, %v890
  %v997 = vpack.c.b16 %v895, %v893
  %v998 = vpack.c.b16 %v896, %v894
  %v999 = vpack.c.b16 %v899, %v897
  %v1000 = vpack.c.b16 %v900, %v898
  %v1001 = vpack.c.b16 %v903, %v901
  %v1002 = vpack.c.b16 %v904, %v902
  %v1003 = vpack.c.b16 %v907, %v905
  %v1004 = vpack.c.b16 %v908, %v906
  %v1005 = vpack.c.b16 %v911, %v909
  %v1006 = vpack.c.b16 %v912, %v910
  %v1007 = vpack.c.b16 %v915, %v913
  %v1008 = vpack.c.b16 %v916, %v914
  %v1009 = vpack.c.b16 %v919, %v917
  %v1010 = vpack.c.b16 %v920, %v918
  %v1011 = vpack.c.b16 %v923, %v921
  %v1012 = vpack.c.b16 %v924, %v922
  %v1013 = vpack.c.b16 %v927, %v925
  %v1014 = vpack.c.b16 %v928, %v926
  %v1015 = vpack.c.b16 %v931, %v929
  %v1016 = vpack.c.b16 %v932, %v930
  %v1017 = vpack.c.b16 %v935, %v933
  %v1018 = vpack.c.b16 %v936, %v934
  %v1019 = vpack.c.b16 %v939, %v937
  %v1020 = vpack.c.b16 %v940, %v938
  %v1021 = vpack.c.b16 %v943, %v941
  %v1022 = vpack.c.b16 %v944, %v942
  %v1023 = vpack.c.b16 %v947, %v945
  %v1024 = vpack.c.b16 %v948, %v946
  %v1025 = vpack.c.b16 %v951, %v949
  %v1026 = vpack.c.b16 %v952, %v950
  %v1027 = vpack.c.b16 %v955, %v953
  %v1028 = vpack.c.b16 %v956, %v954
  %v1029 = vpack.c.b16 %v959, %v957
  %v1030 = vpack.c.b16 %v960, %v958
  %v1031 = vpack.c.b16 %v963, %v961
  %v1032 = vpack.c.b16 %v964, %v962
  %v1033 = vpack.c.b16 %v967, %v965
  %v1034 = vpack.c.b16 %v968, %v966
  %v1035 = vpack.c.b16 %v971, %v969
  %v1036 = vpack.c.b16 %v972, %v970
  %1101 = vmatprep.subr.bf16.mxu0 %v974
  %1102 = vmatpush1.bf16.msra.mxu0 %v973
  %1103 = vmatprep.subr.bf16.mxu0 %v976
  %1104 = vmatpush1.bf16.msra.mxu0 %v975
  %1105 = vmatprep.subr.bf16.mxu0 %v978
  %1106 = vmatpush1.bf16.msra.mxu0 %v977
  %1107 = vmatprep.subr.bf16.mxu0 %v980
  %1108 = vmatpush1.bf16.msra.mxu0 %v979
  %1109 = vmatprep.subr.bf16.mxu0 %v982
  %1110 = vmatpush1.bf16.msra.mxu0 %v981
  %1111 = vmatprep.subr.bf16.mxu0 %v984
  %1112 = vmatpush1.bf16.msra.mxu0 %v983
  %1113 = vmatprep.subr.bf16.mxu0 %v986
  %1114 = vmatpush1.bf16.msra.mxu0 %v985
  %1115 = vmatprep.subr.bf16.mxu0 %v988
  %1116 = vmatpush1.bf16.msra.mxu0 %v987
  %1117 = vmatprep.subr.bf16.mxu0 %v990
  %1118 = vmatpush1.bf16.msra.mxu0 %v989
  %1119 = vmatprep.subr.bf16.mxu0 %v992
  %1120 = vmatpush1.bf16.msra.mxu0 %v991
  %1121 = vmatprep.subr.bf16.mxu0 %v994
  %1122 = vmatpush1.bf16.msra.mxu0 %v993
  %1123 = vmatprep.subr.bf16.mxu0 %v996
  %1124 = vmatpush1.bf16.msra.mxu0 %v995
  %1125 = vmatprep.subr.bf16.mxu0 %v998
  %1126 = vmatpush1.bf16.msra.mxu0 %v997
  %1127 = vmatprep.subr.bf16.mxu0 %v1000
  %1128 = vmatpush1.bf16.msra.mxu0 %v999
  %1129 = vmatprep.subr.bf16.mxu0 %v1002
  %1130 = vmatpush1.bf16.msra.mxu0 %v1001
  %1131 = vmatprep.subr.bf16.mxu0 %v1004
  %1132 = vmatpush1.bf16.msra.mxu0 %v1003
  %1133 = vmatprep.mubr.bf16.mxu0 %v714
  %1134 = vmatmul.mubr.bf16.gmra.mrb[0].mxu0 %v713
  %v1135 = vpop.f32.mrb[0].mxu0
  %v1136 = vadd.f32 0.0, %v1135
  %v1137 = vpop.f32.mrb[0].mxu0
  %v1138 = vadd.f32 0.0, %v1137
  %v1139 = vpop.f32.mrb[0].mxu0
  %v1140 = vadd.f32 0.0, %v1139
  %v1141 = vpop.f32.mrb[0].mxu0
  %v1142 = vadd.f32 0.0, %v1141
  %1143 = vdwg.mxu0
  %1144 = vmatprep.subr.bf16.mxu0 %v1006
  %1145 = vmatpush1.bf16.msra.mxu0 %v1005
  %1146 = vmatprep.subr.bf16.mxu0 %v1008
  %1147 = vmatpush1.bf16.msra.mxu0 %v1007
  %1148 = vmatprep.subr.bf16.mxu0 %v1010
  %1149 = vmatpush1.bf16.msra.mxu0 %v1009
  %1150 = vmatprep.subr.bf16.mxu0 %v1012
  %1151 = vmatpush1.bf16.msra.mxu0 %v1011
  %1152 = vmatprep.subr.bf16.mxu0 %v1014
  %1153 = vmatpush1.bf16.msra.mxu0 %v1013
  %1154 = vmatprep.subr.bf16.mxu0 %v1016
  %1155 = vmatpush1.bf16.msra.mxu0 %v1015
  %1156 = vmatprep.subr.bf16.mxu0 %v1018
  %1157 = vmatpush1.bf16.msra.mxu0 %v1017
  %1158 = vmatprep.subr.bf16.mxu0 %v1020
  %1159 = vmatpush1.bf16.msra.mxu0 %v1019
  %1160 = vmatprep.subr.bf16.mxu0 %v1022
  %1161 = vmatpush1.bf16.msra.mxu0 %v1021
  %1162 = vmatprep.subr.bf16.mxu0 %v1024
  %1163 = vmatpush1.bf16.msra.mxu0 %v1023
  %1164 = vmatprep.subr.bf16.mxu0 %v1026
  %1165 = vmatpush1.bf16.msra.mxu0 %v1025
  %1166 = vmatprep.subr.bf16.mxu0 %v1028
  %1167 = vmatpush1.bf16.msra.mxu0 %v1027
  %1168 = vmatprep.subr.bf16.mxu0 %v1030
  %1169 = vmatpush1.bf16.msra.mxu0 %v1029
  %1170 = vmatprep.subr.bf16.mxu0 %v1032
  %1171 = vmatpush1.bf16.msra.mxu0 %v1031
  %1172 = vmatprep.subr.bf16.mxu0 %v1034
  %1173 = vmatpush1.bf16.msra.mxu0 %v1033
  %1174 = vmatprep.subr.bf16.mxu0 %v1036
  %1175 = vmatpush1.bf16.msra.mxu0 %v1035
  %1176 = vmatprep.mubr.bf16.mxu0 %v716
  %1177 = vmatmul.mubr.bf16.gmra.mrb[0].mxu0 %v715
  %v1178 = vpop.f32.mrb[0].mxu0
  %v1179 = vadd.f32 %v1136, %v1178
  %v1180 = vpop.f32.mrb[0].mxu0
  %v1181 = vadd.f32 %v1138, %v1180
  %v1182 = vpop.f32.mrb[0].mxu0
  %v1183 = vadd.f32 %v1140, %v1182
  %v1184 = vpop.f32.mrb[0].mxu0
  %v1185 = vadd.f32 %v1142, %v1184
  %1186 = vdwg.mxu0
  %1187 = vst [vmem:[%s8] sm:$0xff] %v1179
  %1188 = vst [vmem:[%s8 + $0x8] sm:$0xff] %v1181
  %1189 = vst [vmem:[%s8 + $0x10] sm:$0xff] %v1183
  %1190 = vst [vmem:[%s8 + $0x18] sm:$0xff] %v1185
  // Predicated region
  $region34: #{decoder_forward.8} parent=0 // pred_check
    _
  $region35: #{decoder_forward.8} parent=0 // pred_check_branch
    %1192 = sbr.rel (0) target = $region37
  $region36: #{decoder_forward.8} parent=0 // pred_region
    _
  $region37: #{decoder_forward.8} parent=0 // pred_fallthru
    _
  // Predicated region
  $region38: #{decoder_forward.8} parent=0 // pred_check
    _
  $region39: #{decoder_forward.8} parent=0 // pred_check_branch
    %1194 = sbr.rel (0) target = $region41
  $region40: #{decoder_forward.8} parent=0 // pred_region
    _
  $region41: #{decoder_forward.8} parent=0 // pred_fallthru
    _

// kernel: decoder_forward.7
$region0: #{decoder_forward.7}
  #allocation0 [shape = 'u32[]', space=smem, size = 0x4, offset = 0x4, fixed_abs, tag = 'smem constant byte address 0x4 - core index']
  #allocation1 [shape = 'u32[144,128]{1,0:T(1,128)}', space=vmem, size = 0x12000, scoped, tag = 'internal scratch']
  #allocation2 [shape = 'f32[12,256]{1,0:T(8,128)}', space=vmem, size = 0x4000, scoped, tag = 'scratch operand']
  %s0 = inlined_call_operand.vmem [shape: f32[16,256], index: 0, kind: input, shape index: {}]
  %s1 = inlined_call_operand.vmem [shape: f32[16,1], index: 1, kind: input, shape index: {}]
  %s2 = inlined_call_operand.vmem [shape: f32[2,4,256], index: 2, kind: input, shape index: {}]
  %s3 = inlined_call_operand.vmem [shape: f32[1,256], index: 3, kind: input, shape index: {}]
  %s4 = inlined_call_operand.vmem [shape: f32[1,256], index: 4, kind: input, shape index: {}]
  %s5 = inlined_call_operand.vmem [shape: bf16[256,512], index: 5, kind: input, shape index: {}]
  %s6 = inlined_call_operand.vmem [shape: f32[1,512], index: 6, kind: input, shape index: {}]
  %s7 = inlined_call_operand.vmem [shape: f32[1,512], index: 7, kind: input, shape index: {}]
  %s8 = inlined_call_operand.vmem [shape: f32[1,512], index: 8, kind: input, shape index: {}]
  %s9 = inlined_call_operand.vmem [shape: bf16[512,256], index: 9, kind: input, shape index: {}]
  %s10 = inlined_call_operand.vmem [shape: f32[1,256], index: 10, kind: input, shape index: {}]
  %s11 = inlined_call_operand.vmem [shape: f32[1,256], index: 11, kind: input, shape index: {}]
  %s12 = inlined_call_operand.vmem [shape: f32[5,256], index: 12, kind: input, shape index: {}]
  %s13 = inlined_call_operand.vmem [shape: f32[16,256], index: 13, kind: output, shape index: {0}]
  %s14 = inlined_call_operand.hbm [shape: f32[2,4,256], index: 14, kind: output, shape index: {1}]
  %15 = xla_tuple %s13, %s14
  %s16 = sld [smem:[#allocation0]]
  $region70: #{decoder_forward.7} parent=0
    _
  %s18 = ssub.s32 1, %s16
  %s19 = scalar_select 0, %s18, %s16
  $region1: #{decoder_forward.7} parent=0
    #allocation3 [shape = 'u8[8192]{0}', space=vmem, size = 0x2000, scoped, tag = 'output window, operand 1, single buffered']
    #allocation4 [shape = 's32[1]{0}', space=sflag, size = 0x4, scoped, tag = 'scoped memory for decoder_forward.7']
    %20 = vsyncpa [#allocation4], 0
    // Predicated region
    $region2: #{decoder_forward.7} parent=1 // pred_check
      _
    $region3: #{decoder_forward.7} parent=1 // pred_check_branch
      %22 = sbr.rel (0) target = $region5
    $region4: #{decoder_forward.7} parent=1 // pred_region
      _
    $region5: #{decoder_forward.7} parent=1 // pred_fallthru
      _
    // Predicated region
    $region6: #{decoder_forward.7} parent=1 // pred_check
      _
    $region7: #{decoder_forward.7} parent=1 // pred_check_branch
      %24 = sbr.rel (0) target = $region9
    $region8: #{decoder_forward.7} parent=1 // pred_region
      _
    $region9: #{decoder_forward.7} parent=1 // pred_fallthru
      _
    // Predicated region
    $region10: #{decoder_forward.7} parent=1 // pred_check
      _
    $region11: #{decoder_forward.7} parent=1 // pred_check_branch
      %26 = sbr.rel (0) target = $region13
    $region12: #{decoder_forward.7} parent=1 // pred_region
      _
    $region13: #{decoder_forward.7} parent=1 // pred_fallthru
      _
    // Predicated region
    $region14: #{decoder_forward.7} parent=1 // pred_check
      _
    $region15: #{decoder_forward.7} parent=1 // pred_check_branch
      %28 = sbr.rel (0) target = $region17
    $region16: #{decoder_forward.7} parent=1 // pred_region
      _
    $region17: #{decoder_forward.7} parent=1 // pred_fallthru
      _
    // Predicated region
    $region18: #{decoder_forward.7} parent=1 // pred_check
      _
    $region19: #{decoder_forward.7} parent=1 // pred_check_branch
      %30 = sbr.rel (0) target = $region21
    $region20: #{decoder_forward.7} parent=1 // pred_region
      _
    $region21: #{decoder_forward.7} parent=1 // pred_fallthru
      _
    // Predicated region
    $region22: #{decoder_forward.7} parent=1 // pred_check
      _
    $region23: #{decoder_forward.7} parent=1 // pred_check_branch
      %32 = sbr.rel (0) target = $region25
    $region24: #{decoder_forward.7} parent=1 // pred_region
      _
    $region25: #{decoder_forward.7} parent=1 // pred_fallthru
      _
    // Predicated region
    $region26: #{decoder_forward.7} parent=1 // pred_check
      _
    $region27: #{decoder_forward.7} parent=1 // pred_check_branch
      %34 = sbr.rel (0) target = $region29
    $region28: #{decoder_forward.7} parent=1 // pred_region
      _
    $region29: #{decoder_forward.7} parent=1 // pred_fallthru
      _
    // Predicated region
    $region30: #{decoder_forward.7} parent=1 // pred_check
      _
    $region31: #{decoder_forward.7} parent=1 // pred_check_branch
      %36 = sbr.rel (0) target = $region33
    $region32: #{decoder_forward.7} parent=1 // pred_region
      _
    $region33: #{decoder_forward.7} parent=1 // pred_fallthru
      _
    // Predicated region
    $region34: #{decoder_forward.7} parent=1 // pred_check
      _
    $region35: #{decoder_forward.7} parent=1 // pred_check_branch
      %38 = sbr.rel (0) target = $region37
    $region36: #{decoder_forward.7} parent=1 // pred_region
      _
    $region37: #{decoder_forward.7} parent=1 // pred_fallthru
      _
    // Predicated region
    $region38: #{decoder_forward.7} parent=1 // pred_check
      _
    $region39: #{decoder_forward.7} parent=1 // pred_check_branch
      %40 = sbr.rel (0) target = $region41
    $region40: #{decoder_forward.7} parent=1 // pred_region
      _
    $region41: #{decoder_forward.7} parent=1 // pred_fallthru
      _
    // Predicated region
    $region42: #{decoder_forward.7} parent=1 // pred_check
      _
    $region43: #{decoder_forward.7} parent=1 // pred_check_branch
      %42 = sbr.rel (0) target = $region45
    $region44: #{decoder_forward.7} parent=1 // pred_region
      _
    $region45: #{decoder_forward.7} parent=1 // pred_fallthru
      _
    // Predicated region
    $region46: #{decoder_forward.7} parent=1 // pred_check
      _
    $region47: #{decoder_forward.7} parent=1 // pred_check_branch
      %44 = sbr.rel (0) target = $region49
    $region48: #{decoder_forward.7} parent=1 // pred_region
      _
    $region49: #{decoder_forward.7} parent=1 // pred_fallthru
      _
    // Predicated region
    $region50: #{decoder_forward.7} parent=1 // pred_check
      _
    $region51: #{decoder_forward.7} parent=1 // pred_check_branch
      %46 = sbr.rel (0) target = $region53
    $region52: #{decoder_forward.7} parent=1 // pred_region
      _
    $region53: #{decoder_forward.7} parent=1 // pred_fallthru
      _
    %v47 = vld [vmem:[%s0] sm:$0xff]
    %v48 = vld [vmem:[%s0 + $0x8] sm:$0xff]
    %v49 = vld [vmem:[%s0 + $0x10] sm:$0xff]
    %v50 = vld [vmem:[%s0 + $0x18] sm:$0xff]
    %v51 = vld [vmem:[%s1] sm:$0xff]
    %v52 = vld [vmem:[%s1 + $0x8] sm:$0xff]
    %v53 = vld [vmem:[%s3] sm:$0x3]
    %v54 = vld [vmem:[%s4] sm:$0x3]
    %v55 = vld [vmem:[%s5] sm:$0xff]
    %v56 = vld [vmem:[%s5 + $0x8] sm:$0xff]
    %v57 = vld [vmem:[%s5 + $0x10] sm:$0xff]
    %v58 = vld [vmem:[%s5 + $0x18] sm:$0xff]
    %v59 = vld [vmem:[%s5 + $0x20] sm:$0xff]
    %v60 = vld [vmem:[%s5 + $0x28] sm:$0xff]
    %v61 = vld [vmem:[%s5 + $0x30] sm:$0xff]
    %v62 = vld [vmem:[%s5 + $0x38] sm:$0xff]
    %v63 = vld [vmem:[%s5 + $0x40] sm:$0xff]
    %v64 = vld [vmem:[%s5 + $0x48] sm:$0xff]
    %v65 = vld [vmem:[%s5 + $0x50] sm:$0xff]
    %v66 = vld [vmem:[%s5 + $0x58] sm:$0xff]
    %v67 = vld [vmem:[%s5 + $0x60] sm:$0xff]
    %v68 = vld [vmem:[%s5 + $0x68] sm:$0xff]
    %v69 = vld [vmem:[%s5 + $0x70] sm:$0xff]
    %v70 = vld [vmem:[%s5 + $0x78] sm:$0xff]
    %v71 = vld [vmem:[%s5 + $0x80] sm:$0xff]
    %v72 = vld [vmem:[%s5 + $0x88] sm:$0xff]
    %v73 = vld [vmem:[%s5 + $0x90] sm:$0xff]
    %v74 = vld [vmem:[%s5 + $0x98] sm:$0xff]
    %v75 = vld [vmem:[%s5 + $0xa0] sm:$0xff]
    %v76 = vld [vmem:[%s5 + $0xa8] sm:$0xff]
    %v77 = vld [vmem:[%s5 + $0xb0] sm:$0xff]
    %v78 = vld [vmem:[%s5 + $0xb8] sm:$0xff]
    %v79 = vld [vmem:[%s5 + $0xc0] sm:$0xff]
    %v80 = vld [vmem:[%s5 + $0xc8] sm:$0xff]
    %v81 = vld [vmem:[%s5 + $0xd0] sm:$0xff]
    %v82 = vld [vmem:[%s5 + $0xd8] sm:$0xff]
    %v83 = vld [vmem:[%s5 + $0xe0] sm:$0xff]
    %v84 = vld [vmem:[%s5 + $0xe8] sm:$0xff]
    %v85 = vld [vmem:[%s5 + $0xf0] sm:$0xff]
    %v86 = vld [vmem:[%s5 + $0xf8] sm:$0xff]
    %v87 = vld [vmem:[%s5 + $0x100] sm:$0xff]
    %v88 = vld [vmem:[%s5 + $0x108] sm:$0xff]
    %v89 = vld [vmem:[%s5 + $0x110] sm:$0xff]
    %v90 = vld [vmem:[%s5 + $0x118] sm:$0xff]
    %v91 = vld [vmem:[%s5 + $0x120] sm:$0xff]
    %v92 = vld [vmem:[%s5 + $0x128] sm:$0xff]
    %v93 = vld [vmem:[%s5 + $0x130] sm:$0xff]
    %v94 = vld [vmem:[%s5 + $0x138] sm:$0xff]
    %v95 = vld [vmem:[%s5 + $0x140] sm:$0xff]
    %v96 = vld [vmem:[%s5 + $0x148] sm:$0xff]
    %v97 = vld [vmem:[%s5 + $0x150] sm:$0xff]
    %v98 = vld [vmem:[%s5 + $0x158] sm:$0xff]
    %v99 = vld [vmem:[%s5 + $0x160] sm:$0xff]
    %v100 = vld [vmem:[%s5 + $0x168] sm:$0xff]
    %v101 = vld [vmem:[%s5 + $0x170] sm:$0xff]
    %v102 = vld [vmem:[%s5 + $0x178] sm:$0xff]
    %v103 = vld [vmem:[%s5 + $0x180] sm:$0xff]
    %v104 = vld [vmem:[%s5 + $0x188] sm:$0xff]
    %v105 = vld [vmem:[%s5 + $0x190] sm:$0xff]
    %v106 = vld [vmem:[%s5 + $0x198] sm:$0xff]
    %v107 = vld [vmem:[%s5 + $0x1a0] sm:$0xff]
    %v108 = vld [vmem:[%s5 + $0x1a8] sm:$0xff]
    %v109 = vld [vmem:[%s5 + $0x1b0] sm:$0xff]
    %v110 = vld [vmem:[%s5 + $0x1b8] sm:$0xff]
    %v111 = vld [vmem:[%s5 + $0x1c0] sm:$0xff]
    %v112 = vld [vmem:[%s5 + $0x1c8] sm:$0xff]
    %v113 = vld [vmem:[%s5 + $0x1d0] sm:$0xff]
    %v114 = vld [vmem:[%s5 + $0x1d8] sm:$0xff]
    %v115 = vld [vmem:[%s5 + $0x1e0] sm:$0xff]
    %v116 = vld [vmem:[%s5 + $0x1e8] sm:$0xff]
    %v117 = vld [vmem:[%s5 + $0x1f0] sm:$0xff]
    %v118 = vld [vmem:[%s5 + $0x1f8] sm:$0xff]
    %v119 = vld [vmem:[%s6] sm:$0xf]
    %v120 = vld [vmem:[%s7] sm:$0xf]
    %v121 = vld [vmem:[%s8] sm:$0xf]
    %v122 = vld [vmem:[%s9] sm:$0xff]
    %v123 = vld [vmem:[%s9 + $0x8] sm:$0xff]
    %v124 = vld [vmem:[%s9 + $0x10] sm:$0xff]
    %v125 = vld [vmem:[%s9 + $0x18] sm:$0xff]
    %v126 = vld [vmem:[%s9 + $0x20] sm:$0xff]
    %v127 = vld [vmem:[%s9 + $0x28] sm:$0xff]
    %v128 = vld [vmem:[%s9 + $0x30] sm:$0xff]
    %v129 = vld [vmem:[%s9 + $0x38] sm:$0xff]
    %v130 = vld [vmem:[%s9 + $0x40] sm:$0xff]
    %v131 = vld [vmem:[%s9 + $0x48] sm:$0xff]
    %v132 = vld [vmem:[%s9 + $0x50] sm:$0xff]
    %v133 = vld [vmem:[%s9 + $0x58] sm:$0xff]
    %v134 = vld [vmem:[%s9 + $0x60] sm:$0xff]
    %v135 = vld [vmem:[%s9 + $0x68] sm:$0xff]
    %v136 = vld [vmem:[%s9 + $0x70] sm:$0xff]
    %v137 = vld [vmem:[%s9 + $0x78] sm:$0xff]
    %v138 = vld [vmem:[%s9 + $0x80] sm:$0xff]
    %v139 = vld [vmem:[%s9 + $0x88] sm:$0xff]
    %v140 = vld [vmem:[%s9 + $0x90] sm:$0xff]
    %v141 = vld [vmem:[%s9 + $0x98] sm:$0xff]
    %v142 = vld [vmem:[%s9 + $0xa0] sm:$0xff]
    %v143 = vld [vmem:[%s9 + $0xa8] sm:$0xff]
    %v144 = vld [vmem:[%s9 + $0xb0] sm:$0xff]
    %v145 = vld [vmem:[%s9 + $0xb8] sm:$0xff]
    %v146 = vld [vmem:[%s9 + $0xc0] sm:$0xff]
    %v147 = vld [vmem:[%s9 + $0xc8] sm:$0xff]
    %v148 = vld [vmem:[%s9 + $0xd0] sm:$0xff]
    %v149 = vld [vmem:[%s9 + $0xd8] sm:$0xff]
    %v150 = vld [vmem:[%s9 + $0xe0] sm:$0xff]
    %v151 = vld [vmem:[%s9 + $0xe8] sm:$0xff]
    %v152 = vld [vmem:[%s9 + $0xf0] sm:$0xff]
    %v153 = vld [vmem:[%s9 + $0xf8] sm:$0xff]
    %v154 = vld [vmem:[%s9 + $0x100] sm:$0xff]
    %v155 = vld [vmem:[%s9 + $0x108] sm:$0xff]
    %v156 = vld [vmem:[%s9 + $0x110] sm:$0xff]
    %v157 = vld [vmem:[%s9 + $0x118] sm:$0xff]
    %v158 = vld [vmem:[%s9 + $0x120] sm:$0xff]
    %v159 = vld [vmem:[%s9 + $0x128] sm:$0xff]
    %v160 = vld [vmem:[%s9 + $0x130] sm:$0xff]
    %v161 = vld [vmem:[%s9 + $0x138] sm:$0xff]
    %v162 = vld [vmem:[%s9 + $0x140] sm:$0xff]
    %v163 = vld [vmem:[%s9 + $0x148] sm:$0xff]
    %v164 = vld [vmem:[%s9 + $0x150] sm:$0xff]
    %v165 = vld [vmem:[%s9 + $0x158] sm:$0xff]
    %v166 = vld [vmem:[%s9 + $0x160] sm:$0xff]
    %v167 = vld [vmem:[%s9 + $0x168] sm:$0xff]
    %v168 = vld [vmem:[%s9 + $0x170] sm:$0xff]
    %v169 = vld [vmem:[%s9 + $0x178] sm:$0xff]
    %v170 = vld [vmem:[%s9 + $0x180] sm:$0xff]
    %v171 = vld [vmem:[%s9 + $0x188] sm:$0xff]
    %v172 = vld [vmem:[%s9 + $0x190] sm:$0xff]
    %v173 = vld [vmem:[%s9 + $0x198] sm:$0xff]
    %v174 = vld [vmem:[%s9 + $0x1a0] sm:$0xff]
    %v175 = vld [vmem:[%s9 + $0x1a8] sm:$0xff]
    %v176 = vld [vmem:[%s9 + $0x1b0] sm:$0xff]
    %v177 = vld [vmem:[%s9 + $0x1b8] sm:$0xff]
    %v178 = vld [vmem:[%s9 + $0x1c0] sm:$0xff]
    %v179 = vld [vmem:[%s9 + $0x1c8] sm:$0xff]
    %v180 = vld [vmem:[%s9 + $0x1d0] sm:$0xff]
    %v181 = vld [vmem:[%s9 + $0x1d8] sm:$0xff]
    %v182 = vld [vmem:[%s9 + $0x1e0] sm:$0xff]
    %v183 = vld [vmem:[%s9 + $0x1e8] sm:$0xff]
    %v184 = vld [vmem:[%s9 + $0x1f0] sm:$0xff]
    %v185 = vld [vmem:[%s9 + $0x1f8] sm:$0xff]
    %v186 = vld [vmem:[%s10] sm:$0x3]
    %v187 = vld [vmem:[%s11] sm:$0x3]
    %v188 = vld [vmem:[%s12] sm:$0x1f]
    %v189 = vld [vmem:[%s12 + $0x8] sm:$0x1f]
    %v190 = vadd.f32 %v47, %v48
    %191 = vadd.xlane.f32.xlu0 %v190
    %v192 = vpop.xlane.xlu0 %191
    %v193 = vadd.f32 %v49, %v50
    %194 = vadd.xlane.f32.xlu0 %v193
    %v195 = vpop.xlane.xlu0 %194
    %v196 = vrcp.pop 256.0
    %v197 = vmul.f32 %v192, %v196
    %v198 = vmul.f32 %v195, %v196
    %v199 = vsub.f32 %v47, %v197
    %v200 = vsub.f32 %v48, %v197
    %v201 = vsub.f32 %v49, %v198
    %v202 = vsub.f32 %v50, %v198
    %v203 = vmul.f32 %v199, %v199
    %v204 = vmul.f32 %v200, %v200
    %v205 = vmul.f32 %v201, %v201
    %v206 = vmul.f32 %v202, %v202
    %v207 = vadd.f32 %v203, %v204
    %208 = vadd.xlane.f32.xlu0 %v207
    %v209 = vpop.xlane.xlu0 %208
    %v210 = vadd.f32 %v205, %v206
    %211 = vadd.xlane.f32.xlu0 %v210
    %v212 = vpop.xlane.xlu0 %211
    %v213 = vmul.f32 %v209, %v196
    %v214 = vmul.f32 %v212, %v196
    %v215 = vadd.f32 %v213, 1e-12
    %v216 = vadd.f32 %v214, 1e-12
    %v217 = vrsqrt.pop %v215
    %v218 = vrsqrt.pop %v216
    %v219 = vmul.f32 %v199, %v217
    %v220 = vmul.f32 %v200, %v217
    %v221 = vmul.f32 %v201, %v218
    %v222 = vmul.f32 %v202, %v218
    %v224 = vlaneseq
    %v225 = vshrl.u32 %v224, 7
    %v226 = vsub.s32 0, %v225
    %v227 = vrot.slane %v53, %v226
    %v228 = vlaneseq
    %v229 = vshrl.u32 %v228, 7
    %v230 = vsub.s32 1, %v229
    %v231 = vrot.slane %v53, %v230
    %v234 = vmul.f32 %v219, %v227
    %v235 = vmul.f32 %v220, %v231
    %v236 = vmul.f32 %v221, %v227
    %v237 = vmul.f32 %v222, %v231
    %v239 = vlaneseq
    %v240 = vshrl.u32 %v239, 7
    %v241 = vsub.s32 0, %v240
    %v242 = vrot.slane %v54, %v241
    %v243 = vlaneseq
    %v244 = vshrl.u32 %v243, 7
    %v245 = vsub.s32 1, %v244
    %v246 = vrot.slane %v54, %v245
    %v249 = vadd.f32 %v234, %v242
    %v250 = vadd.f32 %v235, %v246
    %v251 = vadd.f32 %v236, %v242
    %v252 = vadd.f32 %v237, %v246
    %v253 = vpack.c.bf16 %v251, %v249
    %v254 = vpack.c.bf16 %v252, %v250
    %v256 = vlaneseq
    %v257 = vshrl.u32 %v256, 7
    %v258 = vsub.s32 0, %v257
    %v259 = vrot.slane %v119, %v258
    %v260 = vlaneseq
    %v261 = vshrl.u32 %v260, 7
    %v262 = vsub.s32 1, %v261
    %v263 = vrot.slane %v119, %v262
    %v264 = vlaneseq
    %v265 = vshrl.u32 %v264, 7
    %v266 = vsub.s32 2, %v265
    %v267 = vrot.slane %v119, %v266
    %v268 = vlaneseq
    %v269 = vshrl.u32 %v268, 7
    %v270 = vsub.s32 3, %v269
    %v271 = vrot.slane %v119, %v270
    %v340 = vunpack.c.l.b16 %v55
    %v341 = vunpack.c.h.b16 %v55
    %v342 = vunpack.c.l.b16 %v56
    %v343 = vunpack.c.h.b16 %v56
    %v344 = vunpack.c.l.b16 %v57
    %v345 = vunpack.c.h.b16 %v57
    %v346 = vunpack.c.l.b16 %v58
    %v347 = vunpack.c.h.b16 %v58
    %v348 = vunpack.c.l.b16 %v59
    %v349 = vunpack.c.h.b16 %v59
    %v350 = vunpack.c.l.b16 %v60
    %v351 = vunpack.c.h.b16 %v60
    %v352 = vunpack.c.l.b16 %v61
    %v353 = vunpack.c.h.b16 %v61
    %v354 = vunpack.c.l.b16 %v62
    %v355 = vunpack.c.h.b16 %v62
    %v356 = vunpack.c.l.b16 %v63
    %v357 = vunpack.c.h.b16 %v63
    %v358 = vunpack.c.l.b16 %v64
    %v359 = vunpack.c.h.b16 %v64
    %v360 = vunpack.c.l.b16 %v65
    %v361 = vunpack.c.h.b16 %v65
    %v362 = vunpack.c.l.b16 %v66
    %v363 = vunpack.c.h.b16 %v66
    %v364 = vunpack.c.l.b16 %v67
    %v365 = vunpack.c.h.b16 %v67
    %v366 = vunpack.c.l.b16 %v68
    %v367 = vunpack.c.h.b16 %v68
    %v368 = vunpack.c.l.b16 %v69
    %v369 = vunpack.c.h.b16 %v69
    %v370 = vunpack.c.l.b16 %v70
    %v371 = vunpack.c.h.b16 %v70
    %v372 = vunpack.c.l.b16 %v71
    %v373 = vunpack.c.h.b16 %v71
    %v374 = vunpack.c.l.b16 %v72
    %v375 = vunpack.c.h.b16 %v72
    %v376 = vunpack.c.l.b16 %v73
    %v377 = vunpack.c.h.b16 %v73
    %v378 = vunpack.c.l.b16 %v74
    %v379 = vunpack.c.h.b16 %v74
    %v380 = vunpack.c.l.b16 %v75
    %v381 = vunpack.c.h.b16 %v75
    %v382 = vunpack.c.l.b16 %v76
    %v383 = vunpack.c.h.b16 %v76
    %v384 = vunpack.c.l.b16 %v77
    %v385 = vunpack.c.h.b16 %v77
    %v386 = vunpack.c.l.b16 %v78
    %v387 = vunpack.c.h.b16 %v78
    %v388 = vunpack.c.l.b16 %v79
    %v389 = vunpack.c.h.b16 %v79
    %v390 = vunpack.c.l.b16 %v80
    %v391 = vunpack.c.h.b16 %v80
    %v392 = vunpack.c.l.b16 %v81
    %v393 = vunpack.c.h.b16 %v81
    %v394 = vunpack.c.l.b16 %v82
    %v395 = vunpack.c.h.b16 %v82
    %v396 = vunpack.c.l.b16 %v83
    %v397 = vunpack.c.h.b16 %v83
    %v398 = vunpack.c.l.b16 %v84
    %v399 = vunpack.c.h.b16 %v84
    %v400 = vunpack.c.l.b16 %v85
    %v401 = vunpack.c.h.b16 %v85
    %v402 = vunpack.c.l.b16 %v86
    %v403 = vunpack.c.h.b16 %v86
    %v404 = vunpack.c.l.b16 %v87
    %v405 = vunpack.c.h.b16 %v87
    %v406 = vunpack.c.l.b16 %v88
    %v407 = vunpack.c.h.b16 %v88
    %v408 = vunpack.c.l.b16 %v89
    %v409 = vunpack.c.h.b16 %v89
    %v410 = vunpack.c.l.b16 %v90
    %v411 = vunpack.c.h.b16 %v90
    %v412 = vunpack.c.l.b16 %v91
    %v413 = vunpack.c.h.b16 %v91
    %v414 = vunpack.c.l.b16 %v92
    %v415 = vunpack.c.h.b16 %v92
    %v416 = vunpack.c.l.b16 %v93
    %v417 = vunpack.c.h.b16 %v93
    %v418 = vunpack.c.l.b16 %v94
    %v419 = vunpack.c.h.b16 %v94
    %v420 = vunpack.c.l.b16 %v95
    %v421 = vunpack.c.h.b16 %v95
    %v422 = vunpack.c.l.b16 %v96
    %v423 = vunpack.c.h.b16 %v96
    %v424 = vunpack.c.l.b16 %v97
    %v425 = vunpack.c.h.b16 %v97
    %v426 = vunpack.c.l.b16 %v98
    %v427 = vunpack.c.h.b16 %v98
    %v428 = vunpack.c.l.b16 %v99
    %v429 = vunpack.c.h.b16 %v99
    %v430 = vunpack.c.l.b16 %v100
    %v431 = vunpack.c.h.b16 %v100
    %v432 = vunpack.c.l.b16 %v101
    %v433 = vunpack.c.h.b16 %v101
    %v434 = vunpack.c.l.b16 %v102
    %v435 = vunpack.c.h.b16 %v102
    %v436 = vunpack.c.l.b16 %v103
    %v437 = vunpack.c.h.b16 %v103
    %v438 = vunpack.c.l.b16 %v104
    %v439 = vunpack.c.h.b16 %v104
    %v440 = vunpack.c.l.b16 %v105
    %v441 = vunpack.c.h.b16 %v105
    %v442 = vunpack.c.l.b16 %v106
    %v443 = vunpack.c.h.b16 %v106
    %v444 = vunpack.c.l.b16 %v107
    %v445 = vunpack.c.h.b16 %v107
    %v446 = vunpack.c.l.b16 %v108
    %v447 = vunpack.c.h.b16 %v108
    %v448 = vunpack.c.l.b16 %v109
    %v449 = vunpack.c.h.b16 %v109
    %v450 = vunpack.c.l.b16 %v110
    %v451 = vunpack.c.h.b16 %v110
    %v452 = vunpack.c.l.b16 %v111
    %v453 = vunpack.c.h.b16 %v111
    %v454 = vunpack.c.l.b16 %v112
    %v455 = vunpack.c.h.b16 %v112
    %v456 = vunpack.c.l.b16 %v113
    %v457 = vunpack.c.h.b16 %v113
    %v458 = vunpack.c.l.b16 %v114
    %v459 = vunpack.c.h.b16 %v114
    %v460 = vunpack.c.l.b16 %v115
    %v461 = vunpack.c.h.b16 %v115
    %v462 = vunpack.c.l.b16 %v116
    %v463 = vunpack.c.h.b16 %v116
    %v464 = vunpack.c.l.b16 %v117
    %v465 = vunpack.c.h.b16 %v117
    %v466 = vunpack.c.l.b16 %v118
    %v467 = vunpack.c.h.b16 %v118
    %v468 = vpack.c.b16 %v344, %v340
    %v469 = vpack.c.b16 %v345, %v341
    %v470 = vpack.c.b16 %v346, %v342
    %v471 = vpack.c.b16 %v347, %v343
    %v472 = vpack.c.b16 %v352, %v348
    %v473 = vpack.c.b16 %v353, %v349
    %v474 = vpack.c.b16 %v354, %v350
    %v475 = vpack.c.b16 %v355, %v351
    %v476 = vpack.c.b16 %v360, %v356
    %v477 = vpack.c.b16 %v361, %v357
    %v478 = vpack.c.b16 %v362, %v358
    %v479 = vpack.c.b16 %v363, %v359
    %v480 = vpack.c.b16 %v368, %v364
    %v481 = vpack.c.b16 %v369, %v365
    %v482 = vpack.c.b16 %v370, %v366
    %v483 = vpack.c.b16 %v371, %v367
    %v484 = vpack.c.b16 %v376, %v372
    %v485 = vpack.c.b16 %v377, %v373
    %v486 = vpack.c.b16 %v378, %v374
    %v487 = vpack.c.b16 %v379, %v375
    %v488 = vpack.c.b16 %v384, %v380
    %v489 = vpack.c.b16 %v385, %v381
    %v490 = vpack.c.b16 %v386, %v382
    %v491 = vpack.c.b16 %v387, %v383
    %v492 = vpack.c.b16 %v392, %v388
    %v493 = vpack.c.b16 %v393, %v389
    %v494 = vpack.c.b16 %v394, %v390
    %v495 = vpack.c.b16 %v395, %v391
    %v496 = vpack.c.b16 %v400, %v396
    %v497 = vpack.c.b16 %v401, %v397
    %v498 = vpack.c.b16 %v402, %v398
    %v499 = vpack.c.b16 %v403, %v399
    %v500 = vpack.c.b16 %v408, %v404
    %v501 = vpack.c.b16 %v409, %v405
    %v502 = vpack.c.b16 %v410, %v406
    %v503 = vpack.c.b16 %v411, %v407
    %v504 = vpack.c.b16 %v416, %v412
    %v505 = vpack.c.b16 %v417, %v413
    %v506 = vpack.c.b16 %v418, %v414
    %v507 = vpack.c.b16 %v419, %v415
    %v508 = vpack.c.b16 %v424, %v420
    %v509 = vpack.c.b16 %v425, %v421
    %v510 = vpack.c.b16 %v426, %v422
    %v511 = vpack.c.b16 %v427, %v423
    %v512 = vpack.c.b16 %v432, %v428
    %v513 = vpack.c.b16 %v433, %v429
    %v514 = vpack.c.b16 %v434, %v430
    %v515 = vpack.c.b16 %v435, %v431
    %v516 = vpack.c.b16 %v440, %v436
    %v517 = vpack.c.b16 %v441, %v437
    %v518 = vpack.c.b16 %v442, %v438
    %v519 = vpack.c.b16 %v443, %v439
    %v520 = vpack.c.b16 %v448, %v444
    %v521 = vpack.c.b16 %v449, %v445
    %v522 = vpack.c.b16 %v450, %v446
    %v523 = vpack.c.b16 %v451, %v447
    %v524 = vpack.c.b16 %v456, %v452
    %v525 = vpack.c.b16 %v457, %v453
    %v526 = vpack.c.b16 %v458, %v454
    %v527 = vpack.c.b16 %v459, %v455
    %v528 = vpack.c.b16 %v464, %v460
    %v529 = vpack.c.b16 %v465, %v461
    %v530 = vpack.c.b16 %v466, %v462
    %v531 = vpack.c.b16 %v467, %v463
    %596 = vmatprep.subr.bf16.mxu0 %v469
    %597 = vmatpush1.bf16.msra.mxu0 %v468
    %598 = vmatprep.subr.bf16.mxu0 %v473
    %599 = vmatpush1.bf16.msra.mxu0 %v472
    %600 = vmatprep.subr.bf16.mxu0 %v477
    %601 = vmatpush1.bf16.msra.mxu0 %v476
    %602 = vmatprep.subr.bf16.mxu0 %v481
    %603 = vmatpush1.bf16.msra.mxu0 %v480
    %604 = vmatprep.subr.bf16.mxu0 %v485
    %605 = vmatpush1.bf16.msra.mxu0 %v484
    %606 = vmatprep.subr.bf16.mxu0 %v489
    %607 = vmatpush1.bf16.msra.mxu0 %v488
    %608 = vmatprep.subr.bf16.mxu0 %v493
    %609 = vmatpush1.bf16.msra.mxu0 %v492
    %610 = vmatprep.subr.bf16.mxu0 %v497
    %611 = vmatpush1.bf16.msra.mxu0 %v496
    %612 = vmatprep.subr.bf16.mxu0 %v501
    %613 = vmatpush1.bf16.msra.mxu0 %v500
    %614 = vmatprep.subr.bf16.mxu0 %v505
    %615 = vmatpush1.bf16.msra.mxu0 %v504
    %616 = vmatprep.subr.bf16.mxu0 %v509
    %617 = vmatpush1.bf16.msra.mxu0 %v508
    %618 = vmatprep.subr.bf16.mxu0 %v513
    %619 = vmatpush1.bf16.msra.mxu0 %v512
    %620 = vmatprep.subr.bf16.mxu0 %v517
    %621 = vmatpush1.bf16.msra.mxu0 %v516
    %622 = vmatprep.subr.bf16.mxu0 %v521
    %623 = vmatpush1.bf16.msra.mxu0 %v520
    %624 = vmatprep.subr.bf16.mxu0 %v525
    %625 = vmatpush1.bf16.msra.mxu0 %v524
    %626 = vmatprep.subr.bf16.mxu0 %v529
    %627 = vmatpush1.bf16.msra.mxu0 %v528
    %628 = vmatprep.mubr.bf16.mxu0 %v254
    %629 = vmatmul.mubr.bf16.gmra.mrb[0].mxu0 %v253
    %v630 = vpop.f32.mrb[0].mxu0
    %v631 = vadd.f32 %v259, %v630
    %v632 = vpop.f32.mrb[0].mxu0
    %v633 = vadd.f32 %v263, %v632
    %v634 = vpop.f32.mrb[0].mxu0
    %v635 = vadd.f32 %v259, %v634
    %v636 = vpop.f32.mrb[0].mxu0
    %v637 = vadd.f32 %v263, %v636
    %638 = vdwg.mxu0
    %639 = vmatprep.subr.bf16.mxu0 %v471
    %640 = vmatpush1.bf16.msra.mxu0 %v470
    %641 = vmatprep.subr.bf16.mxu0 %v475
    %642 = vmatpush1.bf16.msra.mxu0 %v474
    %643 = vmatprep.subr.bf16.mxu0 %v479
    %644 = vmatpush1.bf16.msra.mxu0 %v478
    %645 = vmatprep.subr.bf16.mxu0 %v483
    %646 = vmatpush1.bf16.msra.mxu0 %v482
    %647 = vmatprep.subr.bf16.mxu0 %v487
    %648 = vmatpush1.bf16.msra.mxu0 %v486
    %649 = vmatprep.subr.bf16.mxu0 %v491
    %650 = vmatpush1.bf16.msra.mxu0 %v490
    %651 = vmatprep.subr.bf16.mxu0 %v495
    %652 = vmatpush1.bf16.msra.mxu0 %v494
    %653 = vmatprep.subr.bf16.mxu0 %v499
    %654 = vmatpush1.bf16.msra.mxu0 %v498
    %655 = vmatprep.subr.bf16.mxu0 %v503
    %656 = vmatpush1.bf16.msra.mxu0 %v502
    %657 = vmatprep.subr.bf16.mxu0 %v507
    %658 = vmatpush1.bf16.msra.mxu0 %v506
    %659 = vmatprep.subr.bf16.mxu0 %v511
    %660 = vmatpush1.bf16.msra.mxu0 %v510
    %661 = vmatprep.subr.bf16.mxu0 %v515
    %662 = vmatpush1.bf16.msra.mxu0 %v514
    %663 = vmatprep.subr.bf16.mxu0 %v519
    %664 = vmatpush1.bf16.msra.mxu0 %v518
    %665 = vmatprep.subr.bf16.mxu0 %v523
    %666 = vmatpush1.bf16.msra.mxu0 %v522
    %667 = vmatprep.subr.bf16.mxu0 %v527
    %668 = vmatpush1.bf16.msra.mxu0 %v526
    %669 = vmatprep.subr.bf16.mxu0 %v531
    %670 = vmatpush1.bf16.msra.mxu0 %v530
    %671 = vmatprep.mubr.bf16.mxu0 %v254
    %672 = vmatmul.mubr.bf16.gmra.mrb[0].mxu0 %v253
    %v673 = vpop.f32.mrb[0].mxu0
    %v674 = vadd.f32 %v267, %v673
    %v675 = vpop.f32.mrb[0].mxu0
    %v676 = vadd.f32 %v271, %v675
    %v677 = vpop.f32.mrb[0].mxu0
    %v678 = vadd.f32 %v267, %v677
    %v679 = vpop.f32.mrb[0].mxu0
    %v680 = vadd.f32 %v271, %v679
    %681 = vdwg.mxu0
    %v682 = vmax.f32 %v631, 0.0
    %v683 = vmax.f32 %v633, 0.0
    %v684 = vmax.f32 %v674, 0.0
    %v685 = vmax.f32 %v676, 0.0
    %v686 = vmax.f32 %v635, 0.0
    %v687 = vmax.f32 %v637, 0.0
    %v688 = vmax.f32 %v678, 0.0
    %v689 = vmax.f32 %v680, 0.0
    %v690 = vadd.f32 %v682, %v683
    %v691 = vadd.f32 %v690, %v684
    %v692 = vadd.f32 %v691, %v685
    %693 = vadd.xlane.f32.xlu0 %v692
    %v694 = vpop.xlane.xlu0 %693
    %v695 = vadd.f32 %v686, %v687
    %v696 = vadd.f32 %v695, %v688
    %v697 = vadd.f32 %v696, %v689
    %698 = vadd.xlane.f32.xlu0 %v697
    %v699 = vpop.xlane.xlu0 %698
    %v700 = vrcp.pop 512.0
    %v701 = vmul.f32 %v694, %v700
    %v702 = vmul.f32 %v699, %v700
    %v703 = vsub.f32 %v682, %v701
    %v704 = vsub.f32 %v683, %v701
    %v705 = vsub.f32 %v684, %v701
    %v706 = vsub.f32 %v685, %v701
    %v707 = vsub.f32 %v686, %v702
    %v708 = vsub.f32 %v687, %v702
    %v709 = vsub.f32 %v688, %v702
    %v710 = vsub.f32 %v689, %v702
    %v711 = vmul.f32 %v703, %v703
    %v712 = vmul.f32 %v704, %v704
    %v713 = vmul.f32 %v705, %v705
    %v714 = vmul.f32 %v706, %v706
    %v715 = vmul.f32 %v707, %v707
    %v716 = vmul.f32 %v708, %v708
    %v717 = vmul.f32 %v709, %v709
    %v718 = vmul.f32 %v710, %v710
    %v719 = vadd.f32 %v711, %v712
    %v720 = vadd.f32 %v719, %v713
    %v721 = vadd.f32 %v720, %v714
    %722 = vadd.xlane.f32.xlu0 %v721
    %v723 = vpop.xlane.xlu0 %722
    %v724 = vadd.f32 %v715, %v716
    %v725 = vadd.f32 %v724, %v717
    %v726 = vadd.f32 %v725, %v718
    %727 = vadd.xlane.f32.xlu0 %v726
    %v728 = vpop.xlane.xlu0 %727
    %v729 = vmul.f32 %v723, %v700
    %v730 = vmul.f32 %v728, %v700
    %v731 = vadd.f32 %v729, 1e-12
    %v732 = vadd.f32 %v730, 1e-12
    %v733 = vrsqrt.pop %v731
    %v734 = vrsqrt.pop %v732
    %v735 = vmul.f32 %v703, %v733
    %v736 = vmul.f32 %v704, %v733
    %v737 = vmul.f32 %v705, %v733
    %v738 = vmul.f32 %v706, %v733
    %v739 = vmul.f32 %v707, %v734
    %v740 = vmul.f32 %v708, %v734
    %v741 = vmul.f32 %v709, %v734
    %v742 = vmul.f32 %v710, %v734
    %v744 = vlaneseq
    %v745 = vshrl.u32 %v744, 7
    %v746 = vsub.s32 0, %v745
    %v747 = vrot.slane %v120, %v746
    %v748 = vlaneseq
    %v749 = vshrl.u32 %v748, 7
    %v750 = vsub.s32 1, %v749
    %v751 = vrot.slane %v120, %v750
    %v752 = vlaneseq
    %v753 = vshrl.u32 %v752, 7
    %v754 = vsub.s32 2, %v753
    %v755 = vrot.slane %v120, %v754
    %v756 = vlaneseq
    %v757 = vshrl.u32 %v756, 7
    %v758 = vsub.s32 3, %v757
    %v759 = vrot.slane %v120, %v758
    %v764 = vmul.f32 %v735, %v747
    %v765 = vmul.f32 %v736, %v751
    %v766 = vmul.f32 %v737, %v755
    %v767 = vmul.f32 %v738, %v759
    %v768 = vmul.f32 %v739, %v747
    %v769 = vmul.f32 %v740, %v751
    %v770 = vmul.f32 %v741, %v755
    %v771 = vmul.f32 %v742, %v759
    %v773 = vlaneseq
    %v774 = vshrl.u32 %v773, 7
    %v775 = vsub.s32 0, %v774
    %v776 = vrot.slane %v121, %v775
    %v777 = vlaneseq
    %v778 = vshrl.u32 %v777, 7
    %v779 = vsub.s32 1, %v778
    %v780 = vrot.slane %v121, %v779
    %v781 = vlaneseq
    %v782 = vshrl.u32 %v781, 7
    %v783 = vsub.s32 2, %v782
    %v784 = vrot.slane %v121, %v783
    %v785 = vlaneseq
    %v786 = vshrl.u32 %v785, 7
    %v787 = vsub.s32 3, %v786
    %v788 = vrot.slane %v121, %v787
    %v793 = vadd.f32 %v764, %v776
    %v794 = vadd.f32 %v765, %v780
    %v795 = vadd.f32 %v766, %v784
    %v796 = vadd.f32 %v767, %v788
    %v797 = vadd.f32 %v768, %v776
    %v798 = vadd.f32 %v769, %v780
    %v799 = vadd.f32 %v770, %v784
    %v800 = vadd.f32 %v771, %v788
    %v801 = vpack.c.bf16 %v797, %v793
    %v802 = vpack.c.bf16 %v798, %v794
    %v803 = vpack.c.bf16 %v799, %v795
    %v804 = vpack.c.bf16 %v800, %v796
    %v869 = vunpack.c.l.b16 %v122
    %v870 = vunpack.c.h.b16 %v122
    %v871 = vunpack.c.l.b16 %v123
    %v872 = vunpack.c.h.b16 %v123
    %v873 = vunpack.c.l.b16 %v124
    %v874 = vunpack.c.h.b16 %v124
    %v875 = vunpack.c.l.b16 %v125
    %v876 = vunpack.c.h.b16 %v125
    %v877 = vunpack.c.l.b16 %v126
    %v878 = vunpack.c.h.b16 %v126
    %v879 = vunpack.c.l.b16 %v127
    %v880 = vunpack.c.h.b16 %v127
    %v881 = vunpack.c.l.b16 %v128
    %v882 = vunpack.c.h.b16 %v128
    %v883 = vunpack.c.l.b16 %v129
    %v884 = vunpack.c.h.b16 %v129
    %v885 = vunpack.c.l.b16 %v130
    %v886 = vunpack.c.h.b16 %v130
    %v887 = vunpack.c.l.b16 %v131
    %v888 = vunpack.c.h.b16 %v131
    %v889 = vunpack.c.l.b16 %v132
    %v890 = vunpack.c.h.b16 %v132
    %v891 = vunpack.c.l.b16 %v133
    %v892 = vunpack.c.h.b16 %v133
    %v893 = vunpack.c.l.b16 %v134
    %v894 = vunpack.c.h.b16 %v134
    %v895 = vunpack.c.l.b16 %v135
    %v896 = vunpack.c.h.b16 %v135
    %v897 = vunpack.c.l.b16 %v136
    %v898 = vunpack.c.h.b16 %v136
    %v899 = vunpack.c.l.b16 %v137
    %v900 = vunpack.c.h.b16 %v137
    %v901 = vunpack.c.l.b16 %v138
    %v902 = vunpack.c.h.b16 %v138
    %v903 = vunpack.c.l.b16 %v139
    %v904 = vunpack.c.h.b16 %v139
    %v905 = vunpack.c.l.b16 %v140
    %v906 = vunpack.c.h.b16 %v140
    %v907 = vunpack.c.l.b16 %v141
    %v908 = vunpack.c.h.b16 %v141
    %v909 = vunpack.c.l.b16 %v142
    %v910 = vunpack.c.h.b16 %v142
    %v911 = vunpack.c.l.b16 %v143
    %v912 = vunpack.c.h.b16 %v143
    %v913 = vunpack.c.l.b16 %v144
    %v914 = vunpack.c.h.b16 %v144
    %v915 = vunpack.c.l.b16 %v145
    %v916 = vunpack.c.h.b16 %v145
    %v917 = vunpack.c.l.b16 %v146
    %v918 = vunpack.c.h.b16 %v146
    %v919 = vunpack.c.l.b16 %v147
    %v920 = vunpack.c.h.b16 %v147
    %v921 = vunpack.c.l.b16 %v148
    %v922 = vunpack.c.h.b16 %v148
    %v923 = vunpack.c.l.b16 %v149
    %v924 = vunpack.c.h.b16 %v149
    %v925 = vunpack.c.l.b16 %v150
    %v926 = vunpack.c.h.b16 %v150
    %v927 = vunpack.c.l.b16 %v151
    %v928 = vunpack.c.h.b16 %v151
    %v929 = vunpack.c.l.b16 %v152
    %v930 = vunpack.c.h.b16 %v152
    %v931 = vunpack.c.l.b16 %v153
    %v932 = vunpack.c.h.b16 %v153
    %v933 = vunpack.c.l.b16 %v154
    %v934 = vunpack.c.h.b16 %v154
    %v935 = vunpack.c.l.b16 %v155
    %v936 = vunpack.c.h.b16 %v155
    %v937 = vunpack.c.l.b16 %v156
    %v938 = vunpack.c.h.b16 %v156
    %v939 = vunpack.c.l.b16 %v157
    %v940 = vunpack.c.h.b16 %v157
    %v941 = vunpack.c.l.b16 %v158
    %v942 = vunpack.c.h.b16 %v158
    %v943 = vunpack.c.l.b16 %v159
    %v944 = vunpack.c.h.b16 %v159
    %v945 = vunpack.c.l.b16 %v160
    %v946 = vunpack.c.h.b16 %v160
    %v947 = vunpack.c.l.b16 %v161
    %v948 = vunpack.c.h.b16 %v161
    %v949 = vunpack.c.l.b16 %v162
    %v950 = vunpack.c.h.b16 %v162
    %v951 = vunpack.c.l.b16 %v163
    %v952 = vunpack.c.h.b16 %v163
    %v953 = vunpack.c.l.b16 %v164
    %v954 = vunpack.c.h.b16 %v164
    %v955 = vunpack.c.l.b16 %v165
    %v956 = vunpack.c.h.b16 %v165
    %v957 = vunpack.c.l.b16 %v166
    %v958 = vunpack.c.h.b16 %v166
    %v959 = vunpack.c.l.b16 %v167
    %v960 = vunpack.c.h.b16 %v167
    %v961 = vunpack.c.l.b16 %v168
    %v962 = vunpack.c.h.b16 %v168
    %v963 = vunpack.c.l.b16 %v169
    %v964 = vunpack.c.h.b16 %v169
    %v965 = vunpack.c.l.b16 %v170
    %v966 = vunpack.c.h.b16 %v170
    %v967 = vunpack.c.l.b16 %v171
    %v968 = vunpack.c.h.b16 %v171
    %v969 = vunpack.c.l.b16 %v172
    %v970 = vunpack.c.h.b16 %v172
    %v971 = vunpack.c.l.b16 %v173
    %v972 = vunpack.c.h.b16 %v173
    %v973 = vunpack.c.l.b16 %v174
    %v974 = vunpack.c.h.b16 %v174
    %v975 = vunpack.c.l.b16 %v175
    %v976 = vunpack.c.h.b16 %v175
    %v977 = vunpack.c.l.b16 %v176
    %v978 = vunpack.c.h.b16 %v176
    %v979 = vunpack.c.l.b16 %v177
    %v980 = vunpack.c.h.b16 %v177
    %v981 = vunpack.c.l.b16 %v178
    %v982 = vunpack.c.h.b16 %v178
    %v983 = vunpack.c.l.b16 %v179
    %v984 = vunpack.c.h.b16 %v179
    %v985 = vunpack.c.l.b16 %v180
    %v986 = vunpack.c.h.b16 %v180
    %v987 = vunpack.c.l.b16 %v181
    %v988 = vunpack.c.h.b16 %v181
    %v989 = vunpack.c.l.b16 %v182
    %v990 = vunpack.c.h.b16 %v182
    %v991 = vunpack.c.l.b16 %v183
    %v992 = vunpack.c.h.b16 %v183
    %v993 = vunpack.c.l.b16 %v184
    %v994 = vunpack.c.h.b16 %v184
    %v995 = vunpack.c.l.b16 %v185
    %v996 = vunpack.c.h.b16 %v185
    %v997 = vpack.c.b16 %v871, %v869
    %v998 = vpack.c.b16 %v872, %v870
    %v999 = vpack.c.b16 %v875, %v873
    %v1000 = vpack.c.b16 %v876, %v874
    %v1001 = vpack.c.b16 %v879, %v877
    %v1002 = vpack.c.b16 %v880, %v878
    %v1003 = vpack.c.b16 %v883, %v881
    %v1004 = vpack.c.b16 %v884, %v882
    %v1005 = vpack.c.b16 %v887, %v885
    %v1006 = vpack.c.b16 %v888, %v886
    %v1007 = vpack.c.b16 %v891, %v889
    %v1008 = vpack.c.b16 %v892, %v890
    %v1009 = vpack.c.b16 %v895, %v893
    %v1010 = vpack.c.b16 %v896, %v894
    %v1011 = vpack.c.b16 %v899, %v897
    %v1012 = vpack.c.b16 %v900, %v898
    %v1013 = vpack.c.b16 %v903, %v901
    %v1014 = vpack.c.b16 %v904, %v902
    %v1015 = vpack.c.b16 %v907, %v905
    %v1016 = vpack.c.b16 %v908, %v906
    %v1017 = vpack.c.b16 %v911, %v909
    %v1018 = vpack.c.b16 %v912, %v910
    %v1019 = vpack.c.b16 %v915, %v913
    %v1020 = vpack.c.b16 %v916, %v914
    %v1021 = vpack.c.b16 %v919, %v917
    %v1022 = vpack.c.b16 %v920, %v918
    %v1023 = vpack.c.b16 %v923, %v921
    %v1024 = vpack.c.b16 %v924, %v922
    %v1025 = vpack.c.b16 %v927, %v925
    %v1026 = vpack.c.b16 %v928, %v926
    %v1027 = vpack.c.b16 %v931, %v929
    %v1028 = vpack.c.b16 %v932, %v930
    %v1029 = vpack.c.b16 %v935, %v933
    %v1030 = vpack.c.b16 %v936, %v934
    %v1031 = vpack.c.b16 %v939, %v937
    %v1032 = vpack.c.b16 %v940, %v938
    %v1033 = vpack.c.b16 %v943, %v941
    %v1034 = vpack.c.b16 %v944, %v942
    %v1035 = vpack.c.b16 %v947, %v945
    %v1036 = vpack.c.b16 %v948, %v946
    %v1037 = vpack.c.b16 %v951, %v949
    %v1038 = vpack.c.b16 %v952, %v950
    %v1039 = vpack.c.b16 %v955, %v953
    %v1040 = vpack.c.b16 %v956, %v954
    %v1041 = vpack.c.b16 %v959, %v957
    %v1042 = vpack.c.b16 %v960, %v958
    %v1043 = vpack.c.b16 %v963, %v961
    %v1044 = vpack.c.b16 %v964, %v962
    %v1045 = vpack.c.b16 %v967, %v965
    %v1046 = vpack.c.b16 %v968, %v966
    %v1047 = vpack.c.b16 %v971, %v969
    %v1048 = vpack.c.b16 %v972, %v970
    %v1049 = vpack.c.b16 %v975, %v973
    %v1050 = vpack.c.b16 %v976, %v974
    %v1051 = vpack.c.b16 %v979, %v977
    %v1052 = vpack.c.b16 %v980, %v978
    %v1053 = vpack.c.b16 %v983, %v981
    %v1054 = vpack.c.b16 %v984, %v982
    %v1055 = vpack.c.b16 %v987, %v985
    %v1056 = vpack.c.b16 %v988, %v986
    %v1057 = vpack.c.b16 %v991, %v989
    %v1058 = vpack.c.b16 %v992, %v990
    %v1059 = vpack.c.b16 %v995, %v993
    %v1060 = vpack.c.b16 %v996, %v994
    %1125 = vmatprep.subr.bf16.mxu0 %v998
    %1126 = vmatpush1.bf16.msra.mxu0 %v997
    %1127 = vmatprep.subr.bf16.mxu0 %v1000
    %1128 = vmatpush1.bf16.msra.mxu0 %v999
    %1129 = vmatprep.subr.bf16.mxu0 %v1002
    %1130 = vmatpush1.bf16.msra.mxu0 %v1001
    %1131 = vmatprep.subr.bf16.mxu0 %v1004
    %1132 = vmatpush1.bf16.msra.mxu0 %v1003
    %1133 = vmatprep.subr.bf16.mxu0 %v1006
    %1134 = vmatpush1.bf16.msra.mxu0 %v1005
    %1135 = vmatprep.subr.bf16.mxu0 %v1008
    %1136 = vmatpush1.bf16.msra.mxu0 %v1007
    %1137 = vmatprep.subr.bf16.mxu0 %v1010
    %1138 = vmatpush1.bf16.msra.mxu0 %v1009
    %1139 = vmatprep.subr.bf16.mxu0 %v1012
    %1140 = vmatpush1.bf16.msra.mxu0 %v1011
    %1141 = vmatprep.subr.bf16.mxu0 %v1014
    %1142 = vmatpush1.bf16.msra.mxu0 %v1013
    %1143 = vmatprep.subr.bf16.mxu0 %v1016
    %1144 = vmatpush1.bf16.msra.mxu0 %v1015
    %1145 = vmatprep.subr.bf16.mxu0 %v1018
    %1146 = vmatpush1.bf16.msra.mxu0 %v1017
    %1147 = vmatprep.subr.bf16.mxu0 %v1020
    %1148 = vmatpush1.bf16.msra.mxu0 %v1019
    %1149 = vmatprep.subr.bf16.mxu0 %v1022
    %1150 = vmatpush1.bf16.msra.mxu0 %v1021
    %1151 = vmatprep.subr.bf16.mxu0 %v1024
    %1152 = vmatpush1.bf16.msra.mxu0 %v1023
    %1153 = vmatprep.subr.bf16.mxu0 %v1026
    %1154 = vmatpush1.bf16.msra.mxu0 %v1025
    %1155 = vmatprep.subr.bf16.mxu0 %v1028
    %1156 = vmatpush1.bf16.msra.mxu0 %v1027
    %1157 = vmatprep.mubr.bf16.mxu0 %v802
    %1158 = vmatmul.mubr.bf16.gmra.mrb[0].mxu0 %v801
    %v1159 = vpop.f32.mrb[0].mxu0
    %v1160 = vadd.f32 0.0, %v1159
    %v1161 = vpop.f32.mrb[0].mxu0
    %v1162 = vadd.f32 0.0, %v1161
    %v1163 = vpop.f32.mrb[0].mxu0
    %v1164 = vadd.f32 0.0, %v1163
    %v1165 = vpop.f32.mrb[0].mxu0
    %v1166 = vadd.f32 0.0, %v1165
    %1167 = vdwg.mxu0
    %1168 = vmatprep.subr.bf16.mxu0 %v1030
    %1169 = vmatpush1.bf16.msra.mxu0 %v1029
    %1170 = vmatprep.subr.bf16.mxu0 %v1032
    %1171 = vmatpush1.bf16.msra.mxu0 %v1031
    %1172 = vmatprep.subr.bf16.mxu0 %v1034
    %1173 = vmatpush1.bf16.msra.mxu0 %v1033
    %1174 = vmatprep.subr.bf16.mxu0 %v1036
    %1175 = vmatpush1.bf16.msra.mxu0 %v1035
    %1176 = vmatprep.subr.bf16.mxu0 %v1038
    %1177 = vmatpush1.bf16.msra.mxu0 %v1037
    %1178 = vmatprep.subr.bf16.mxu0 %v1040
    %1179 = vmatpush1.bf16.msra.mxu0 %v1039
    %1180 = vmatprep.subr.bf16.mxu0 %v1042
    %1181 = vmatpush1.bf16.msra.mxu0 %v1041
    %1182 = vmatprep.subr.bf16.mxu0 %v1044
    %1183 = vmatpush1.bf16.msra.mxu0 %v1043
    %1184 = vmatprep.subr.bf16.mxu0 %v1046
    %1185 = vmatpush1.bf16.msra.mxu0 %v1045
    %1186 = vmatprep.subr.bf16.mxu0 %v1048
    %1187 = vmatpush1.bf16.msra.mxu0 %v1047
    %1188 = vmatprep.subr.bf16.mxu0 %v1050
    %1189 = vmatpush1.bf16.msra.mxu0 %v1049
    %1190 = vmatprep.subr.bf16.mxu0 %v1052
    %1191 = vmatpush1.bf16.msra.mxu0 %v1051
    %1192 = vmatprep.subr.bf16.mxu0 %v1054
    %1193 = vmatpush1.bf16.msra.mxu0 %v1053
    %1194 = vmatprep.subr.bf16.mxu0 %v1056
    %1195 = vmatpush1.bf16.msra.mxu0 %v1055
    %1196 = vmatprep.subr.bf16.mxu0 %v1058
    %1197 = vmatpush1.bf16.msra.mxu0 %v1057
    %1198 = vmatprep.subr.bf16.mxu0 %v1060
    %1199 = vmatpush1.bf16.msra.mxu0 %v1059
    %1200 = vmatprep.mubr.bf16.mxu0 %v804
    %1201 = vmatmul.mubr.bf16.gmra.mrb[0].mxu0 %v803
    %v1202 = vpop.f32.mrb[0].mxu0
    %v1203 = vadd.f32 %v1160, %v1202
    %v1204 = vpop.f32.mrb[0].mxu0
    %v1205 = vadd.f32 %v1162, %v1204
    %v1206 = vpop.f32.mrb[0].mxu0
    %v1207 = vadd.f32 %v1164, %v1206
    %v1208 = vpop.f32.mrb[0].mxu0
    %v1209 = vadd.f32 %v1166, %v1208
    %1210 = vdwg.mxu0
    %v1211 = vadd.f32 %v1203, %v1205
    %1212 = vadd.xlane.f32.xlu0 %v1211
    %v1213 = vpop.xlane.xlu0 %1212
    %v1214 = vadd.f32 %v1207, %v1209
    %1215 = vadd.xlane.f32.xlu0 %v1214
    %v1216 = vpop.xlane.xlu0 %1215
    %v1217 = vmul.f32 %v1213, %v196
    %v1218 = vmul.f32 %v1216, %v196
    %v1219 = vsub.f32 %v1203, %v1217
    %v1220 = vsub.f32 %v1205, %v1217
    %v1221 = vsub.f32 %v1207, %v1218
    %v1222 = vsub.f32 %v1209, %v1218
    %v1223 = vmul.f32 %v1219, %v1219
    %v1224 = vmul.f32 %v1220, %v1220
    %v1225 = vmul.f32 %v1221, %v1221
    %v1226 = vmul.f32 %v1222, %v1222
    %v1227 = vadd.f32 %v1223, %v1224
    %1228 = vadd.xlane.f32.xlu0 %v1227
    %v1229 = vpop.xlane.xlu0 %1228
    %v1230 = vadd.f32 %v1225, %v1226
    %1231 = vadd.xlane.f32.xlu0 %v1230
    %v1232 = vpop.xlane.xlu0 %1231
    %v1233 = vmul.f32 %v1229, %v196
    %v1234 = vmul.f32 %v1232, %v196
    %v1235 = vadd.f32 %v1233, 1e-12
    %v1236 = vadd.f32 %v1234, 1e-12
    %v1237 = vrsqrt.pop %v1235
    %v1238 = vrsqrt.pop %v1236
    %v1239 = vmul.f32 %v1219, %v1237
    %v1240 = vmul.f32 %v1220, %v1237
    %v1241 = vmul.f32 %v1221, %v1238
    %v1242 = vmul.f32 %v1222, %v1238
    %v1244 = vlaneseq
    %v1245 = vshrl.u32 %v1244, 7
    %v1246 = vsub.s32 0, %v1245
    %v1247 = vrot.slane %v186, %v1246
    %v1248 = vlaneseq
    %v1249 = vshrl.u32 %v1248, 7
    %v1250 = vsub.s32 1, %v1249
    %v1251 = vrot.slane %v186, %v1250
    %v1254 = vmul.f32 %v1239, %v1247
    %v1255 = vmul.f32 %v1240, %v1251
    %v1256 = vmul.f32 %v1241, %v1247
    %v1257 = vmul.f32 %v1242, %v1251
    %v1259 = vlaneseq
    %v1260 = vshrl.u32 %v1259, 7
    %v1261 = vsub.s32 0, %v1260
    %v1262 = vrot.slane %v187, %v1261
    %v1263 = vlaneseq
    %v1264 = vshrl.u32 %v1263, 7
    %v1265 = vsub.s32 1, %v1264
    %v1266 = vrot.slane %v187, %v1265
    %v1269 = vadd.f32 %v1254, %v1262
    %v1270 = vadd.f32 %v1255, %v1266
    %v1271 = vadd.f32 %v1256, %v1262
    %v1272 = vadd.f32 %v1257, %v1266
    %1274 = vset.pattern.permute.xlu0 0
    %1275 = vperm.xlu0 %1274, %v51
    %v1276 = vpop.permute.xlu0 %1275
    %1279 = vset.pattern.permute.xlu0 0
    %1280 = vperm.xlu0 %1279, %v52
    %v1281 = vpop.permute.xlu0 %1280
    %v1283 = vmul.f32 %v1269, %v1276
    %v1284 = vmul.f32 %v1270, %v1276
    %v1285 = vmul.f32 %v1271, %v1281
    %v1286 = vmul.f32 %v1272, %v1281
    %v1287 = vld [vmem:[%s2] sm:$0xff]
    %v1289 = vcombine.high %v1287, %v1287
    %1291 = vst [vmem:[#allocation2] sm:$0xf] %v1287
    %1292 = vst [vmem:[#allocation2 + $0x8] sm:$0xf] %v1289
    %v1295 = vrot.slane %v1283, 4
    %v1296 = vrot.slane %v1284, 4
    %1299 = vst [vmem:[#allocation2] sm:$0xf0] %v1295
    %1300 = vst [vmem:[#allocation2 + $0x8] sm:$0xf0] %v1296
    %1301 = vst [vmem:[#allocation2 + $0x10] sm:$0xf] %v1295
    %1302 = vst [vmem:[#allocation2 + $0x18] sm:$0xf] %v1296
    %v1303 = vld [vmem:[#allocation2] sm:$0xff]
    %v1304 = vld [vmem:[#allocation2 + $0x8] sm:$0xff]
    %v1305 = vlaneseq
    %v1306 = vshrl.u32 %v1305, 7
    %v1307 = vsub.s32 0, %v1306
    %v1308 = vrot.slane %v188, %v1307
    %v1309 = vlaneseq
    %v1310 = vshrl.u32 %v1309, 7
    %v1311 = vsub.s32 0, %v1310
    %v1312 = vrot.slane %v189, %v1311
    %v1313 = vmul.f32 %v1303, %v1308
    %v1314 = vmul.f32 %v1304, %v1312
    %v1315 = vadd.f32 %v1283, %v1313
    %v1316 = vadd.f32 %v1284, %v1314
    %v1317 = vld [vmem:[#allocation2] sm:$0xfe]
    %v1318 = vld [vmem:[#allocation2 + $0x8] sm:$0xfe]
    %v1319 = vld [vmem:[#allocation2 + $0x10] sm:$0x1]
    %v1320 = vld [vmem:[#allocation2 + $0x18] sm:$0x1]
    %v1321 = vlaneseq
    %v1322 = vshrl.u32 %v1321, 7
    %v1323 = vsub.s32 1, %v1322
    %v1324 = vrot.slane %v188, %v1323
    %v1325 = vlaneseq
    %v1326 = vshrl.u32 %v1325, 7
    %v1327 = vsub.s32 1, %v1326
    %v1328 = vrot.slane %v189, %v1327
    %v1329 = vmul.f32 %v1317, %v1324
    %v1330 = vmul.f32 %v1318, %v1328
    %v1331 = vmul.f32 %v1319, %v1324
    %v1332 = vmul.f32 %v1320, %v1328
    %vm1337 = vcmask 1046528
    %v1338 = vrot.slane %v1329, 1
    %v1339 = vrot.slane %v1331, 1
    %v1340 = vsel %vm1337, %v1338, %v1339
    %v1341 = vrot.slane %v1330, 1
    %v1342 = vrot.slane %v1332, 1
    %v1343 = vsel %vm1337, %v1341, %v1342
    %v1346 = vadd.f32 %v1315, %v1340
    %v1347 = vadd.f32 %v1316, %v1343
    %v1348 = vld [vmem:[#allocation2] sm:$0xfc]
    %v1349 = vld [vmem:[#allocation2 + $0x8] sm:$0xfc]
    %v1350 = vld [vmem:[#allocation2 + $0x10] sm:$0x3]
    %v1351 = vld [vmem:[#allocation2 + $0x18] sm:$0x3]
    %v1352 = vlaneseq
    %v1353 = vshrl.u32 %v1352, 7
    %v1354 = vsub.s32 2, %v1353
    %v1355 = vrot.slane %v188, %v1354
    %v1356 = vlaneseq
    %v1357 = vshrl.u32 %v1356, 7
    %v1358 = vsub.s32 2, %v1357
    %v1359 = vrot.slane %v189, %v1358
    %v1360 = vmul.f32 %v1348, %v1355
    %v1361 = vmul.f32 %v1349, %v1359
    %v1362 = vmul.f32 %v1350, %v1355
    %v1363 = vmul.f32 %v1351, %v1359
    %vm1368 = vcmask 1045504
    %v1369 = vrot.slane %v1360, 2
    %v1370 = vrot.slane %v1362, 2
    %v1371 = vsel %vm1368, %v1369, %v1370
    %v1372 = vrot.slane %v1361, 2
    %v1373 = vrot.slane %v1363, 2
    %v1374 = vsel %vm1368, %v1372, %v1373
    %v1377 = vadd.f32 %v1346, %v1371
    %v1378 = vadd.f32 %v1347, %v1374
    %v1379 = vld [vmem:[#allocation2] sm:$0xf8]
    %v1380 = vld [vmem:[#allocation2 + $0x8] sm:$0xf8]
    %v1381 = vld [vmem:[#allocation2 + $0x10] sm:$0x7]
    %v1382 = vld [vmem:[#allocation2 + $0x18] sm:$0x7]
    %v1383 = vlaneseq
    %v1384 = vshrl.u32 %v1383, 7
    %v1385 = vsub.s32 3, %v1384
    %v1386 = vrot.slane %v188, %v1385
    %v1387 = vlaneseq
    %v1388 = vshrl.u32 %v1387, 7
    %v1389 = vsub.s32 3, %v1388
    %v1390 = vrot.slane %v189, %v1389
    %v1391 = vmul.f32 %v1379, %v1386
    %v1392 = vmul.f32 %v1380, %v1390
    %v1393 = vmul.f32 %v1381, %v1386
    %v1394 = vmul.f32 %v1382, %v1390
    %vm1399 = vcmask 1044480
    %v1400 = vrot.slane %v1391, 3
    %v1401 = vrot.slane %v1393, 3
    %v1402 = vsel %vm1399, %v1400, %v1401
    %v1403 = vrot.slane %v1392, 3
    %v1404 = vrot.slane %v1394, 3
    %v1405 = vsel %vm1399, %v1403, %v1404
    %v1408 = vadd.f32 %v1377, %v1402
    %v1409 = vadd.f32 %v1378, %v1405
    %v1410 = vld [vmem:[#allocation2] sm:$0xf0]
    %v1411 = vld [vmem:[#allocation2 + $0x8] sm:$0xf0]
    %v1412 = vld [vmem:[#allocation2 + $0x10] sm:$0xf]
    %v1413 = vld [vmem:[#allocation2 + $0x18] sm:$0xf]
    %v1414 = vlaneseq
    %v1415 = vshrl.u32 %v1414, 7
    %v1416 = vsub.s32 4, %v1415
    %v1417 = vrot.slane %v188, %v1416
    %v1418 = vlaneseq
    %v1419 = vshrl.u32 %v1418, 7
    %v1420 = vsub.s32 4, %v1419
    %v1421 = vrot.slane %v189, %v1420
    %v1422 = vmul.f32 %v1410, %v1417
    %v1423 = vmul.f32 %v1411, %v1421
    %v1424 = vmul.f32 %v1412, %v1417
    %v1425 = vmul.f32 %v1413, %v1421
    %vm1430 = vcmask 1043456
    %v1431 = vrot.slane %v1422, 4
    %v1432 = vrot.slane %v1424, 4
    %v1433 = vsel %vm1430, %v1431, %v1432
    %v1434 = vrot.slane %v1423, 4
    %v1435 = vrot.slane %v1425, 4
    %v1436 = vsel %vm1430, %v1434, %v1435
    %v1439 = vadd.f32 %v1408, %v1433
    %v1440 = vadd.f32 %v1409, %v1436
    %v1443 = vcombine.low %v1412, %v1413
    %1445 = vst [vmem:[#allocation3] sm:$0xff] %v1443
    %v1446 = vmul.f32 %v1439, %v1276
    %v1447 = vmul.f32 %v1440, %v1276
    %v1448 = vadd.f32 %v47, %v1446
    %v1449 = vadd.f32 %v48, %v1447
    %1450 = vst [vmem:[%s13] sm:$0xff] %v1448
    %1451 = vst [vmem:[%s13 + $0x8] sm:$0xff] %v1449
    %s1452 = scalar_lea.vmem %s2, 8
    %v1453 = vld [vmem:[%s1452] sm:$0xff]
    %v1455 = vcombine.high %v1453, %v1453
    %1457 = vst [vmem:[#allocation2] sm:$0xf] %v1453
    %1458 = vst [vmem:[#allocation2 + $0x8] sm:$0xf] %v1455
    %v1461 = vrot.slane %v1285, 4
    %v1462 = vrot.slane %v1286, 4
    %1465 = vst [vmem:[#allocation2] sm:$0xf0] %v1461
    %1466 = vst [vmem:[#allocation2 + $0x8] sm:$0xf0] %v1462
    %1467 = vst [vmem:[#allocation2 + $0x10] sm:$0xf] %v1461
    %1468 = vst [vmem:[#allocation2 + $0x18] sm:$0xf] %v1462
    %v1469 = vld [vmem:[#allocation2] sm:$0xff]
    %v1470 = vld [vmem:[#allocation2 + $0x8] sm:$0xff]
    %v1471 = vmul.f32 %v1469, %v1308
    %v1472 = vmul.f32 %v1470, %v1312
    %v1473 = vadd.f32 %v1285, %v1471
    %v1474 = vadd.f32 %v1286, %v1472
    %v1475 = vld [vmem:[#allocation2] sm:$0xfe]
    %v1476 = vld [vmem:[#allocation2 + $0x8] sm:$0xfe]
    %v1477 = vld [vmem:[#allocation2 + $0x10] sm:$0x1]
    %v1478 = vld [vmem:[#allocation2 + $0x18] sm:$0x1]
    %v1479 = vmul.f32 %v1475, %v1324
    %v1480 = vmul.f32 %v1476, %v1328
    %v1481 = vmul.f32 %v1477, %v1324
    %v1482 = vmul.f32 %v1478, %v1328
    %v1487 = vrot.slane %v1479, 1
    %v1488 = vrot.slane %v1481, 1
    %v1489 = vsel %vm1337, %v1487, %v1488
    %v1490 = vrot.slane %v1480, 1
    %v1491 = vrot.slane %v1482, 1
    %v1492 = vsel %vm1337, %v1490, %v1491
    %v1495 = vadd.f32 %v1473, %v1489
    %v1496 = vadd.f32 %v1474, %v1492
    %v1497 = vld [vmem:[#allocation2] sm:$0xfc]
    %v1498 = vld [vmem:[#allocation2 + $0x8] sm:$0xfc]
    %v1499 = vld [vmem:[#allocation2 + $0x10] sm:$0x3]
    %v1500 = vld [vmem:[#allocation2 + $0x18] sm:$0x3]
    %v1501 = vmul.f32 %v1497, %v1355
    %v1502 = vmul.f32 %v1498, %v1359
    %v1503 = vmul.f32 %v1499, %v1355
    %v1504 = vmul.f32 %v1500, %v1359
    %v1509 = vrot.slane %v1501, 2
    %v1510 = vrot.slane %v1503, 2
    %v1511 = vsel %vm1368, %v1509, %v1510
    %v1512 = vrot.slane %v1502, 2
    %v1513 = vrot.slane %v1504, 2
    %v1514 = vsel %vm1368, %v1512, %v1513
    %v1517 = vadd.f32 %v1495, %v1511
    %v1518 = vadd.f32 %v1496, %v1514
    %v1519 = vld [vmem:[#allocation2] sm:$0xf8]
    %v1520 = vld [vmem:[#allocation2 + $0x8] sm:$0xf8]
    %v1521 = vld [vmem:[#allocation2 + $0x10] sm:$0x7]
    %v1522 = vld [vmem:[#allocation2 + $0x18] sm:$0x7]
    %v1523 = vmul.f32 %v1519, %v1386
    %v1524 = vmul.f32 %v1520, %v1390
    %v1525 = vmul.f32 %v1521, %v1386
    %v1526 = vmul.f32 %v1522, %v1390
    %v1531 = vrot.slane %v1523, 3
    %v1532 = vrot.slane %v1525, 3
    %v1533 = vsel %vm1399, %v1531, %v1532
    %v1534 = vrot.slane %v1524, 3
    %v1535 = vrot.slane %v1526, 3
    %v1536 = vsel %vm1399, %v1534, %v1535
    %v1539 = vadd.f32 %v1517, %v1533
    %v1540 = vadd.f32 %v1518, %v1536
    %v1541 = vld [vmem:[#allocation2] sm:$0xf0]
    %v1542 = vld [vmem:[#allocation2 + $0x8] sm:$0xf0]
    %v1543 = vld [vmem:[#allocation2 + $0x10] sm:$0xf]
    %v1544 = vld [vmem:[#allocation2 + $0x18] sm:$0xf]
    %v1545 = vmul.f32 %v1541, %v1417
    %v1546 = vmul.f32 %v1542, %v1421
    %v1547 = vmul.f32 %v1543, %v1417
    %v1548 = vmul.f32 %v1544, %v1421
    %v1553 = vrot.slane %v1545, 4
    %v1554 = vrot.slane %v1547, 4
    %v1555 = vsel %vm1430, %v1553, %v1554
    %v1556 = vrot.slane %v1546, 4
    %v1557 = vrot.slane %v1548, 4
    %v1558 = vsel %vm1430, %v1556, %v1557
    %v1561 = vadd.f32 %v1539, %v1555
    %v1562 = vadd.f32 %v1540, %v1558
    %v1565 = vcombine.low %v1543, %v1544
    %s1567 = scalar_lea.vmem [#allocation3], 8
    %1568 = vst [vmem:[%s1567] sm:$0xff] %v1565
    %v1569 = vmul.f32 %v1561, %v1281
    %v1570 = vmul.f32 %v1562, %v1281
    %v1571 = vadd.f32 %v49, %v1569
    %v1572 = vadd.f32 %v50, %v1570
    %1573 = vst [vmem:[%s13 + $0x10] sm:$0xff] %v1571
    %1574 = vst [vmem:[%s13 + $0x18] sm:$0xff] %v1572
    // Predicated region
    $region54: #{decoder_forward.7} parent=1 // pred_check
      _
    $region55: #{decoder_forward.7} parent=1 // pred_check_branch
      %1576 = sbr.rel (0) target = $region57
    $region56: #{decoder_forward.7} parent=1 // pred_region
      _
    $region57: #{decoder_forward.7} parent=1 // pred_fallthru
      _
    // Predicated region
    $region58: #{decoder_forward.7} parent=1 // pred_check
      _
    $region59: #{decoder_forward.7} parent=1 // pred_check_branch
      %1578 = sbr.rel (0) target = $region61
    $region60: #{decoder_forward.7} parent=1 // pred_region
      %s1580 = ssub.s32 256, 256
      %1581 = vsyncadd [#allocation4], %s1580
      %s1582 = sshll.u32 [#allocation3], 4
      %s1583 = int_to_ptr.vmem [resolvable:$true] %s1582
      %1588 = dma.vmem_to_hbm [thread:$0]  %s1583, 256, %s14, [#allocation4], 128, 128, 8
    $region61: #{decoder_forward.7} parent=1 // pred_fallthru
      _
    // Predicated region
    $region62: #{decoder_forward.7} parent=1 // pred_check
      _
    $region63: #{decoder_forward.7} parent=1 // pred_check_branch
      %1590 = sbr.rel (0) target = $region65
    $region64: #{decoder_forward.7} parent=1 // pred_region
      _
    $region65: #{decoder_forward.7} parent=1 // pred_fallthru
      _
    // Predicated region
    $region66: #{decoder_forward.7} parent=1 // pred_check
      _
    $region67: #{decoder_forward.7} parent=1 // pred_check_branch
      %1592 = sbr.rel (0) target = $region69
    $region68: #{decoder_forward.7} parent=1 // pred_region
      %1593 = dma.done [#allocation4], 256
    $region69: #{decoder_forward.7} parent=1 // pred_fallthru
      _
    %1594 = vsyncpa [#allocation4], 1

// kernel: decoder_forward.6
$region0: #{decoder_forward.6}
  #allocation0 [shape = 'u32[]', space=smem, size = 0x4, offset = 0x4, fixed_abs, tag = 'smem constant byte address 0x4 - core index']
  #allocation1 [shape = 'u32[144,128]{1,0:T(1,128)}', space=vmem, size = 0x12000, scoped, tag = 'internal scratch']
  #allocation2 [shape = 'f32[12,256]{1,0:T(8,128)}', space=vmem, size = 0x4000, scoped, tag = 'scratch operand']
  #allocation3 [shape = 'f32[16,256]{1,0:T(8,128)}', space=vmem, size = 0x4000, scoped, tag = 'scratch operand']
  %s0 = inlined_call_operand.vmem [shape: f32[16,256], index: 0, kind: input, shape index: {}]
  %s1 = inlined_call_operand.vmem [shape: f32[16,1], index: 1, kind: input, shape index: {}]
  %s2 = inlined_call_operand.vmem [shape: f32[2,4,256], index: 2, kind: input, shape index: {}]
  %s3 = inlined_call_operand.vmem [shape: f32[2,1,16], index: 3, kind: input, shape index: {}]
  %s4 = inlined_call_operand.vmem [shape: bf16[2,256,16], index: 4, kind: input, shape index: {}]
  %s5 = inlined_call_operand.vmem [shape: bf16[2,16,256], index: 5, kind: input, shape index: {}]
  %s6 = inlined_call_operand.vmem [shape: f32[1,256], index: 6, kind: input, shape index: {}]
  %s7 = inlined_call_operand.vmem [shape: f32[1,256], index: 7, kind: input, shape index: {}]
  %s8 = inlined_call_operand.vmem [shape: bf16[256,512], index: 8, kind: input, shape index: {}]
  %s9 = inlined_call_operand.vmem [shape: f32[1,512], index: 9, kind: input, shape index: {}]
  %s10 = inlined_call_operand.vmem [shape: f32[1,512], index: 10, kind: input, shape index: {}]
  %s11 = inlined_call_operand.vmem [shape: f32[1,512], index: 11, kind: input, shape index: {}]
  %s12 = inlined_call_operand.hbm [shape: bf16[512,256], index: 12, kind: input, shape index: {}]
  %s13 = inlined_call_operand.vmem [shape: f32[1,256], index: 13, kind: input, shape index: {}]
  %s14 = inlined_call_operand.vmem [shape: f32[1,256], index: 14, kind: input, shape index: {}]
  %s15 = inlined_call_operand.vmem [shape: f32[5,256], index: 15, kind: input, shape index: {}]
  %s16 = inlined_call_operand.vmem [shape: f32[1,256], index: 16, kind: input, shape index: {}]
  %s17 = inlined_call_operand.vmem [shape: f32[1,256], index: 17, kind: input, shape index: {}]
  %s18 = inlined_call_operand.vmem [shape: bf16[256,256], index: 18, kind: input, shape index: {}]
  %s19 = inlined_call_operand.vmem [shape: f32[1,256], index: 19, kind: input, shape index: {}]
  %s20 = inlined_call_operand.hbm [shape: bf16[256,256], index: 20, kind: input, shape index: {}]
  %s21 = inlined_call_operand.vmem [shape: f32[1,256], index: 21, kind: input, shape index: {}]
  %s22 = inlined_call_operand.vmem [shape: f32[16,256], index: 22, kind: output, shape index: {0}]
  %s23 = inlined_call_operand.hbm [shape: f32[2,4,256], index: 23, kind: output, shape index: {1}]
  %24 = xla_tuple %s22, %s23
  %s25 = sld [smem:[#allocation0]]
  $region114: #{decoder_forward.6} parent=0
    _
  %s27 = ssub.s32 1, %s25
  %s28 = scalar_select 0, %s27, %s25
  $region1: #{decoder_forward.6} parent=0
    #allocation4 [shape = 'u8[262144]{0}', space=vmem, size = 0x40000, scoped, tag = 'input window, operand 12, single buffered']
    #allocation5 [shape = 's32[1]{0}', space=sflag, size = 0x4, scoped, tag = 'scoped memory for decoder_forward.6']
    #allocation6 [shape = 's32[1]{0}', space=sflag, size = 0x4, scoped, tag = 'scoped memory for decoder_forward.6']
    #allocation7 [shape = 'u8[131072]{0}', space=vmem, size = 0x20000, scoped, tag = 'input window, operand 20, single buffered']
    #allocation8 [shape = 's32[1]{0}', space=sflag, size = 0x4, scoped, tag = 'scoped memory for decoder_forward.6']
    #allocation9 [shape = 'u8[8192]{0}', space=vmem, size = 0x2000, scoped, tag = 'output window, operand 1, single buffered']
    %29 = vsyncpa [#allocation5], 0
    %30 = vsyncpa [#allocation8], 0
    %31 = vsyncpa [#allocation6], 0
    // Predicated region
    $region2: #{decoder_forward.6} parent=1 // pred_check
      _
    $region3: #{decoder_forward.6} parent=1 // pred_check_branch
      %33 = sbr.rel (0) target = $region5
    $region4: #{decoder_forward.6} parent=1 // pred_region
      _
    $region5: #{decoder_forward.6} parent=1 // pred_fallthru
      _
    // Predicated region
    $region6: #{decoder_forward.6} parent=1 // pred_check
      _
    $region7: #{decoder_forward.6} parent=1 // pred_check_branch
      %35 = sbr.rel (0) target = $region9
    $region8: #{decoder_forward.6} parent=1 // pred_region
      _
    $region9: #{decoder_forward.6} parent=1 // pred_fallthru
      _
    // Predicated region
    $region10: #{decoder_forward.6} parent=1 // pred_check
      _
    $region11: #{decoder_forward.6} parent=1 // pred_check_branch
      %37 = sbr.rel (0) target = $region13
    $region12: #{decoder_forward.6} parent=1 // pred_region
      _
    $region13: #{decoder_forward.6} parent=1 // pred_fallthru
      _
    // Predicated region
    $region14: #{decoder_forward.6} parent=1 // pred_check
      _
    $region15: #{decoder_forward.6} parent=1 // pred_check_branch
      %39 = sbr.rel (0) target = $region17
    $region16: #{decoder_forward.6} parent=1 // pred_region
      _
    $region17: #{decoder_forward.6} parent=1 // pred_fallthru
      _
    // Predicated region
    $region18: #{decoder_forward.6} parent=1 // pred_check
      _
    $region19: #{decoder_forward.6} parent=1 // pred_check_branch
      %41 = sbr.rel (0) target = $region21
    $region20: #{decoder_forward.6} parent=1 // pred_region
      _
    $region21: #{decoder_forward.6} parent=1 // pred_fallthru
      _
    // Predicated region
    $region22: #{decoder_forward.6} parent=1 // pred_check
      _
    $region23: #{decoder_forward.6} parent=1 // pred_check_branch
      %43 = sbr.rel (0) target = $region25
    $region24: #{decoder_forward.6} parent=1 // pred_region
      _
    $region25: #{decoder_forward.6} parent=1 // pred_fallthru
      _
    // Predicated region
    $region26: #{decoder_forward.6} parent=1 // pred_check
      _
    $region27: #{decoder_forward.6} parent=1 // pred_check_branch
      %45 = sbr.rel (0) target = $region29
    $region28: #{decoder_forward.6} parent=1 // pred_region
      _
    $region29: #{decoder_forward.6} parent=1 // pred_fallthru
      _
    // Predicated region
    $region30: #{decoder_forward.6} parent=1 // pred_check
      _
    $region31: #{decoder_forward.6} parent=1 // pred_check_branch
      %47 = sbr.rel (0) target = $region33
    $region32: #{decoder_forward.6} parent=1 // pred_region
      _
    $region33: #{decoder_forward.6} parent=1 // pred_fallthru
      _
    // Predicated region
    $region34: #{decoder_forward.6} parent=1 // pred_check
      _
    $region35: #{decoder_forward.6} parent=1 // pred_check_branch
      %49 = sbr.rel (0) target = $region37
    $region36: #{decoder_forward.6} parent=1 // pred_region
      _
    $region37: #{decoder_forward.6} parent=1 // pred_fallthru
      _
    // Predicated region
    $region38: #{decoder_forward.6} parent=1 // pred_check
      _
    $region39: #{decoder_forward.6} parent=1 // pred_check_branch
      %51 = sbr.rel (0) target = $region41
    $region40: #{decoder_forward.6} parent=1 // pred_region
      _
    $region41: #{decoder_forward.6} parent=1 // pred_fallthru
      _
    // Predicated region
    $region42: #{decoder_forward.6} parent=1 // pred_check
      _
    $region43: #{decoder_forward.6} parent=1 // pred_check_branch
      %53 = sbr.rel (0) target = $region45
    $region44: #{decoder_forward.6} parent=1 // pred_region
      _
    $region45: #{decoder_forward.6} parent=1 // pred_fallthru
      _
    // Predicated region
    $region46: #{decoder_forward.6} parent=1 // pred_check
      _
    $region47: #{decoder_forward.6} parent=1 // pred_check_branch
      %55 = sbr.rel (0) target = $region49
    $region48: #{decoder_forward.6} parent=1 // pred_region
      _
    $region49: #{decoder_forward.6} parent=1 // pred_fallthru
      _
    // Predicated region
    $region50: #{decoder_forward.6} parent=1 // pred_check
      _
    $region51: #{decoder_forward.6} parent=1 // pred_check_branch
      %57 = sbr.rel (0) target = $region53
    $region52: #{decoder_forward.6} parent=1 // pred_region
      %s59 = ssub.s32 8192, 8192
      %60 = vsyncadd [#allocation5], %s59
      %s61 = sshll.u32 [#allocation4], 4
      %s62 = int_to_ptr.vmem [resolvable:$true] %s61
      %67 = dma.hbm_to_vmem [thread:$0]  %s12, 8192, %s62, [#allocation5], 128, 128, 8
    $region53: #{decoder_forward.6} parent=1 // pred_fallthru
      _
    // Predicated region
    $region54: #{decoder_forward.6} parent=1 // pred_check
      _
    $region55: #{decoder_forward.6} parent=1 // pred_check_branch
      %69 = sbr.rel (0) target = $region57
    $region56: #{decoder_forward.6} parent=1 // pred_region
      _
    $region57: #{decoder_forward.6} parent=1 // pred_fallthru
      _
    // Predicated region
    $region58: #{decoder_forward.6} parent=1 // pred_check
      _
    $region59: #{decoder_forward.6} parent=1 // pred_check_branch
      %71 = sbr.rel (0) target = $region61
    $region60: #{decoder_forward.6} parent=1 // pred_region
      _
    $region61: #{decoder_forward.6} parent=1 // pred_fallthru
      _
    // Predicated region
    $region62: #{decoder_forward.6} parent=1 // pred_check
      _
    $region63: #{decoder_forward.6} parent=1 // pred_check_branch
      %73 = sbr.rel (0) target = $region65
    $region64: #{decoder_forward.6} parent=1 // pred_region
      _
    $region65: #{decoder_forward.6} parent=1 // pred_fallthru
      _
    // Predicated region
    $region66: #{decoder_forward.6} parent=1 // pred_check
      _
    $region67: #{decoder_forward.6} parent=1 // pred_check_branch
      %75 = sbr.rel (0) target = $region69
    $region68: #{decoder_forward.6} parent=1 // pred_region
      _
    $region69: #{decoder_forward.6} parent=1 // pred_fallthru
      _
    // Predicated region
    $region70: #{decoder_forward.6} parent=1 // pred_check
      _
    $region71: #{decoder_forward.6} parent=1 // pred_check_branch
      %77 = sbr.rel (0) target = $region73
    $region72: #{decoder_forward.6} parent=1 // pred_region
      _
    $region73: #{decoder_forward.6} parent=1 // pred_fallthru
      _
    // Predicated region
    $region74: #{decoder_forward.6} parent=1 // pred_check
      _
    $region75: #{decoder_forward.6} parent=1 // pred_check_branch
      %79 = sbr.rel (0) target = $region77
    $region76: #{decoder_forward.6} parent=1 // pred_region
      _
    $region77: #{decoder_forward.6} parent=1 // pred_fallthru
      _
    // Predicated region
    $region78: #{decoder_forward.6} parent=1 // pred_check
      _
    $region79: #{decoder_forward.6} parent=1 // pred_check_branch
      %81 = sbr.rel (0) target = $region81
    $region80: #{decoder_forward.6} parent=1 // pred_region
      _
    $region81: #{decoder_forward.6} parent=1 // pred_fallthru
      _
    // Predicated region
    $region82: #{decoder_forward.6} parent=1 // pred_check
      _
    $region83: #{decoder_forward.6} parent=1 // pred_check_branch
      %83 = sbr.rel (0) target = $region85
    $region84: #{decoder_forward.6} parent=1 // pred_region
      %s85 = ssub.s32 4096, 4096
      %86 = vsyncadd [#allocation8], %s85
      %s87 = sshll.u32 [#allocation7], 4
      %s88 = int_to_ptr.vmem [resolvable:$true] %s87
      %93 = dma.hbm_to_vmem [thread:$0]  %s20, 4096, %s88, [#allocation8], 128, 128, 8
    $region85: #{decoder_forward.6} parent=1 // pred_fallthru
      _
    // Predicated region
    $region86: #{decoder_forward.6} parent=1 // pred_check
      _
    $region87: #{decoder_forward.6} parent=1 // pred_check_branch
      %95 = sbr.rel (0) target = $region89
    $region88: #{decoder_forward.6} parent=1 // pred_region
      _
    $region89: #{decoder_forward.6} parent=1 // pred_fallthru
      _
    // Predicated region
    $region90: #{decoder_forward.6} parent=1 // pred_check
      _
    $region91: #{decoder_forward.6} parent=1 // pred_check_branch
      %97 = sbr.rel (0) target = $region93
    $region92: #{decoder_forward.6} parent=1 // pred_region
      %98 = dma.done [#allocation5], 8192
    $region93: #{decoder_forward.6} parent=1 // pred_fallthru
      _
    // Predicated region
    $region94: #{decoder_forward.6} parent=1 // pred_check
      _
    $region95: #{decoder_forward.6} parent=1 // pred_check_branch
      %100 = sbr.rel (0) target = $region97
    $region96: #{decoder_forward.6} parent=1 // pred_region
      %101 = dma.done [#allocation8], 4096
    $region97: #{decoder_forward.6} parent=1 // pred_fallthru
      _
    %v103 = vld [vmem:[%s0] sm:$0xff]
    %v104 = vld [vmem:[%s0 + $0x8] sm:$0xff]
    %v105 = vld [vmem:[%s0 + $0x10] sm:$0xff]
    %v106 = vld [vmem:[%s0 + $0x18] sm:$0xff]
    %v107 = vld [vmem:[%s1] sm:$0xff]
    %v108 = vld [vmem:[%s1 + $0x8] sm:$0xff]
    %v109 = vld [vmem:[%s6] sm:$0x3]
    %v110 = vld [vmem:[%s7] sm:$0x3]
    %v111 = vld [vmem:[%s8] sm:$0xff]
    %v112 = vld [vmem:[%s8 + $0x8] sm:$0xff]
    %v113 = vld [vmem:[%s8 + $0x10] sm:$0xff]
    %v114 = vld [vmem:[%s8 + $0x18] sm:$0xff]
    %v115 = vld [vmem:[%s8 + $0x20] sm:$0xff]
    %v116 = vld [vmem:[%s8 + $0x28] sm:$0xff]
    %v117 = vld [vmem:[%s8 + $0x30] sm:$0xff]
    %v118 = vld [vmem:[%s8 + $0x38] sm:$0xff]
    %v119 = vld [vmem:[%s8 + $0x40] sm:$0xff]
    %v120 = vld [vmem:[%s8 + $0x48] sm:$0xff]
    %v121 = vld [vmem:[%s8 + $0x50] sm:$0xff]
    %v122 = vld [vmem:[%s8 + $0x58] sm:$0xff]
    %v123 = vld [vmem:[%s8 + $0x60] sm:$0xff]
    %v124 = vld [vmem:[%s8 + $0x68] sm:$0xff]
    %v125 = vld [vmem:[%s8 + $0x70] sm:$0xff]
    %v126 = vld [vmem:[%s8 + $0x78] sm:$0xff]
    %v127 = vld [vmem:[%s8 + $0x80] sm:$0xff]
    %v128 = vld [vmem:[%s8 + $0x88] sm:$0xff]
    %v129 = vld [vmem:[%s8 + $0x90] sm:$0xff]
    %v130 = vld [vmem:[%s8 + $0x98] sm:$0xff]
    %v131 = vld [vmem:[%s8 + $0xa0] sm:$0xff]
    %v132 = vld [vmem:[%s8 + $0xa8] sm:$0xff]
    %v133 = vld [vmem:[%s8 + $0xb0] sm:$0xff]
    %v134 = vld [vmem:[%s8 + $0xb8] sm:$0xff]
    %v135 = vld [vmem:[%s8 + $0xc0] sm:$0xff]
    %v136 = vld [vmem:[%s8 + $0xc8] sm:$0xff]
    %v137 = vld [vmem:[%s8 + $0xd0] sm:$0xff]
    %v138 = vld [vmem:[%s8 + $0xd8] sm:$0xff]
    %v139 = vld [vmem:[%s8 + $0xe0] sm:$0xff]
    %v140 = vld [vmem:[%s8 + $0xe8] sm:$0xff]
    %v141 = vld [vmem:[%s8 + $0xf0] sm:$0xff]
    %v142 = vld [vmem:[%s8 + $0xf8] sm:$0xff]
    %v143 = vld [vmem:[%s8 + $0x100] sm:$0xff]
    %v144 = vld [vmem:[%s8 + $0x108] sm:$0xff]
    %v145 = vld [vmem:[%s8 + $0x110] sm:$0xff]
    %v146 = vld [vmem:[%s8 + $0x118] sm:$0xff]
    %v147 = vld [vmem:[%s8 + $0x120] sm:$0xff]
    %v148 = vld [vmem:[%s8 + $0x128] sm:$0xff]
    %v149 = vld [vmem:[%s8 + $0x130] sm:$0xff]
    %v150 = vld [vmem:[%s8 + $0x138] sm:$0xff]
    %v151 = vld [vmem:[%s8 + $0x140] sm:$0xff]
    %v152 = vld [vmem:[%s8 + $0x148] sm:$0xff]
    %v153 = vld [vmem:[%s8 + $0x150] sm:$0xff]
    %v154 = vld [vmem:[%s8 + $0x158] sm:$0xff]
    %v155 = vld [vmem:[%s8 + $0x160] sm:$0xff]
    %v156 = vld [vmem:[%s8 + $0x168] sm:$0xff]
    %v157 = vld [vmem:[%s8 + $0x170] sm:$0xff]
    %v158 = vld [vmem:[%s8 + $0x178] sm:$0xff]
    %v159 = vld [vmem:[%s8 + $0x180] sm:$0xff]
    %v160 = vld [vmem:[%s8 + $0x188] sm:$0xff]
    %v161 = vld [vmem:[%s8 + $0x190] sm:$0xff]
    %v162 = vld [vmem:[%s8 + $0x198] sm:$0xff]
    %v163 = vld [vmem:[%s8 + $0x1a0] sm:$0xff]
    %v164 = vld [vmem:[%s8 + $0x1a8] sm:$0xff]
    %v165 = vld [vmem:[%s8 + $0x1b0] sm:$0xff]
    %v166 = vld [vmem:[%s8 + $0x1b8] sm:$0xff]
    %v167 = vld [vmem:[%s8 + $0x1c0] sm:$0xff]
    %v168 = vld [vmem:[%s8 + $0x1c8] sm:$0xff]
    %v169 = vld [vmem:[%s8 + $0x1d0] sm:$0xff]
    %v170 = vld [vmem:[%s8 + $0x1d8] sm:$0xff]
    %v171 = vld [vmem:[%s8 + $0x1e0] sm:$0xff]
    %v172 = vld [vmem:[%s8 + $0x1e8] sm:$0xff]
    %v173 = vld [vmem:[%s8 + $0x1f0] sm:$0xff]
    %v174 = vld [vmem:[%s8 + $0x1f8] sm:$0xff]
    %v175 = vld [vmem:[%s9] sm:$0xf]
    %v176 = vld [vmem:[%s10] sm:$0xf]
    %v177 = vld [vmem:[%s11] sm:$0xf]
    %v178 = vld [vmem:[#allocation4] sm:$0xff]
    %v179 = vld [vmem:[#allocation4 + $0x8] sm:$0xff]
    %v180 = vld [vmem:[#allocation4 + $0x10] sm:$0xff]
    %v181 = vld [vmem:[#allocation4 + $0x18] sm:$0xff]
    %v182 = vld [vmem:[#allocation4 + $0x20] sm:$0xff]
    %v183 = vld [vmem:[#allocation4 + $0x28] sm:$0xff]
    %v184 = vld [vmem:[#allocation4 + $0x30] sm:$0xff]
    %v185 = vld [vmem:[#allocation4 + $0x38] sm:$0xff]
    %v186 = vld [vmem:[#allocation4 + $0x40] sm:$0xff]
    %v187 = vld [vmem:[#allocation4 + $0x48] sm:$0xff]
    %v188 = vld [vmem:[#allocation4 + $0x50] sm:$0xff]
    %v189 = vld [vmem:[#allocation4 + $0x58] sm:$0xff]
    %v190 = vld [vmem:[#allocation4 + $0x60] sm:$0xff]
    %v191 = vld [vmem:[#allocation4 + $0x68] sm:$0xff]
    %v192 = vld [vmem:[#allocation4 + $0x70] sm:$0xff]
    %v193 = vld [vmem:[#allocation4 + $0x78] sm:$0xff]
    %v194 = vld [vmem:[#allocation4 + $0x80] sm:$0xff]
    %v195 = vld [vmem:[#allocation4 + $0x88] sm:$0xff]
    %v196 = vld [vmem:[#allocation4 + $0x90] sm:$0xff]
    %v197 = vld [vmem:[#allocation4 + $0x98] sm:$0xff]
    %v198 = vld [vmem:[#allocation4 + $0xa0] sm:$0xff]
    %v199 = vld [vmem:[#allocation4 + $0xa8] sm:$0xff]
    %v200 = vld [vmem:[#allocation4 + $0xb0] sm:$0xff]
    %v201 = vld [vmem:[#allocation4 + $0xb8] sm:$0xff]
    %v202 = vld [vmem:[#allocation4 + $0xc0] sm:$0xff]
    %v203 = vld [vmem:[#allocation4 + $0xc8] sm:$0xff]
    %v204 = vld [vmem:[#allocation4 + $0xd0] sm:$0xff]
    %v205 = vld [vmem:[#allocation4 + $0xd8] sm:$0xff]
    %v206 = vld [vmem:[#allocation4 + $0xe0] sm:$0xff]
    %v207 = vld [vmem:[#allocation4 + $0xe8] sm:$0xff]
    %v208 = vld [vmem:[#allocation4 + $0xf0] sm:$0xff]
    %v209 = vld [vmem:[#allocation4 + $0xf8] sm:$0xff]
    %v210 = vld [vmem:[#allocation4 + $0x100] sm:$0xff]
    %v211 = vld [vmem:[#allocation4 + $0x108] sm:$0xff]
    %v212 = vld [vmem:[#allocation4 + $0x110] sm:$0xff]
    %v213 = vld [vmem:[#allocation4 + $0x118] sm:$0xff]
    %v214 = vld [vmem:[#allocation4 + $0x120] sm:$0xff]
    %v215 = vld [vmem:[#allocation4 + $0x128] sm:$0xff]
    %v216 = vld [vmem:[#allocation4 + $0x130] sm:$0xff]
    %v217 = vld [vmem:[#allocation4 + $0x138] sm:$0xff]
    %v218 = vld [vmem:[#allocation4 + $0x140] sm:$0xff]
    %v219 = vld [vmem:[#allocation4 + $0x148] sm:$0xff]
    %v220 = vld [vmem:[#allocation4 + $0x150] sm:$0xff]
    %v221 = vld [vmem:[#allocation4 + $0x158] sm:$0xff]
    %v222 = vld [vmem:[#allocation4 + $0x160] sm:$0xff]
    %v223 = vld [vmem:[#allocation4 + $0x168] sm:$0xff]
    %v224 = vld [vmem:[#allocation4 + $0x170] sm:$0xff]
    %v225 = vld [vmem:[#allocation4 + $0x178] sm:$0xff]
    %v226 = vld [vmem:[#allocation4 + $0x180] sm:$0xff]
    %v227 = vld [vmem:[#allocation4 + $0x188] sm:$0xff]
    %v228 = vld [vmem:[#allocation4 + $0x190] sm:$0xff]
    %v229 = vld [vmem:[#allocation4 + $0x198] sm:$0xff]
    %v230 = vld [vmem:[#allocation4 + $0x1a0] sm:$0xff]
    %v231 = vld [vmem:[#allocation4 + $0x1a8] sm:$0xff]
    %v232 = vld [vmem:[#allocation4 + $0x1b0] sm:$0xff]
    %v233 = vld [vmem:[#allocation4 + $0x1b8] sm:$0xff]
    %v234 = vld [vmem:[#allocation4 + $0x1c0] sm:$0xff]
    %v235 = vld [vmem:[#allocation4 + $0x1c8] sm:$0xff]
    %v236 = vld [vmem:[#allocation4 + $0x1d0] sm:$0xff]
    %v237 = vld [vmem:[#allocation4 + $0x1d8] sm:$0xff]
    %v238 = vld [vmem:[#allocation4 + $0x1e0] sm:$0xff]
    %v239 = vld [vmem:[#allocation4 + $0x1e8] sm:$0xff]
    %v240 = vld [vmem:[#allocation4 + $0x1f0] sm:$0xff]
    %v241 = vld [vmem:[#allocation4 + $0x1f8] sm:$0xff]
    %v242 = vld [vmem:[%s13] sm:$0x3]
    %v243 = vld [vmem:[%s14] sm:$0x3]
    %v244 = vld [vmem:[%s15] sm:$0x1f]
    %v245 = vld [vmem:[%s15 + $0x8] sm:$0x1f]
    %v246 = vadd.f32 %v103, %v104
    %247 = vadd.xlane.f32.xlu0 %v246
    %v248 = vpop.xlane.xlu0 %247
    %v249 = vadd.f32 %v105, %v106
    %250 = vadd.xlane.f32.xlu0 %v249
    %v251 = vpop.xlane.xlu0 %250
    %v252 = vrcp.pop 256.0
    %v253 = vmul.f32 %v248, %v252
    %v254 = vmul.f32 %v251, %v252
    %v255 = vsub.f32 %v103, %v253
    %v256 = vsub.f32 %v104, %v253
    %v257 = vsub.f32 %v105, %v254
    %v258 = vsub.f32 %v106, %v254
    %v259 = vmul.f32 %v255, %v255
    %v260 = vmul.f32 %v256, %v256
    %v261 = vmul.f32 %v257, %v257
    %v262 = vmul.f32 %v258, %v258
    %v263 = vadd.f32 %v259, %v260
    %264 = vadd.xlane.f32.xlu0 %v263
    %v265 = vpop.xlane.xlu0 %264
    %v266 = vadd.f32 %v261, %v262
    %267 = vadd.xlane.f32.xlu0 %v266
    %v268 = vpop.xlane.xlu0 %267
    %v269 = vmul.f32 %v265, %v252
    %v270 = vmul.f32 %v268, %v252
    %v271 = vadd.f32 %v269, 1e-12
    %v272 = vadd.f32 %v270, 1e-12
    %v273 = vrsqrt.pop %v271
    %v274 = vrsqrt.pop %v272
    %v275 = vmul.f32 %v255, %v273
    %v276 = vmul.f32 %v256, %v273
    %v277 = vmul.f32 %v257, %v274
    %v278 = vmul.f32 %v258, %v274
    %v280 = vlaneseq
    %v281 = vshrl.u32 %v280, 7
    %v282 = vsub.s32 0, %v281
    %v283 = vrot.slane %v109, %v282
    %v284 = vlaneseq
    %v285 = vshrl.u32 %v284, 7
    %v286 = vsub.s32 1, %v285
    %v287 = vrot.slane %v109, %v286
    %v290 = vmul.f32 %v275, %v283
    %v291 = vmul.f32 %v276, %v287
    %v292 = vmul.f32 %v277, %v283
    %v293 = vmul.f32 %v278, %v287
    %v295 = vlaneseq
    %v296 = vshrl.u32 %v295, 7
    %v297 = vsub.s32 0, %v296
    %v298 = vrot.slane %v110, %v297
    %v299 = vlaneseq
    %v300 = vshrl.u32 %v299, 7
    %v301 = vsub.s32 1, %v300
    %v302 = vrot.slane %v110, %v301
    %v305 = vadd.f32 %v290, %v298
    %v306 = vadd.f32 %v291, %v302
    %v307 = vadd.f32 %v292, %v298
    %v308 = vadd.f32 %v293, %v302
    %v309 = vpack.c.bf16 %v307, %v305
    %v310 = vpack.c.bf16 %v308, %v306
    %v312 = vlaneseq
    %v313 = vshrl.u32 %v312, 7
    %v314 = vsub.s32 0, %v313
    %v315 = vrot.slane %v175, %v314
    %v316 = vlaneseq
    %v317 = vshrl.u32 %v316, 7
    %v318 = vsub.s32 1, %v317
    %v319 = vrot.slane %v175, %v318
    %v320 = vlaneseq
    %v321 = vshrl.u32 %v320, 7
    %v322 = vsub.s32 2, %v321
    %v323 = vrot.slane %v175, %v322
    %v324 = vlaneseq
    %v325 = vshrl.u32 %v324, 7
    %v326 = vsub.s32 3, %v325
    %v327 = vrot.slane %v175, %v326
    %v396 = vunpack.c.l.b16 %v111
    %v397 = vunpack.c.h.b16 %v111
    %v398 = vunpack.c.l.b16 %v112
    %v399 = vunpack.c.h.b16 %v112
    %v400 = vunpack.c.l.b16 %v113
    %v401 = vunpack.c.h.b16 %v113
    %v402 = vunpack.c.l.b16 %v114
    %v403 = vunpack.c.h.b16 %v114
    %v404 = vunpack.c.l.b16 %v115
    %v405 = vunpack.c.h.b16 %v115
    %v406 = vunpack.c.l.b16 %v116
    %v407 = vunpack.c.h.b16 %v116
    %v408 = vunpack.c.l.b16 %v117
    %v409 = vunpack.c.h.b16 %v117
    %v410 = vunpack.c.l.b16 %v118
    %v411 = vunpack.c.h.b16 %v118
    %v412 = vunpack.c.l.b16 %v119
    %v413 = vunpack.c.h.b16 %v119
    %v414 = vunpack.c.l.b16 %v120
    %v415 = vunpack.c.h.b16 %v120
    %v416 = vunpack.c.l.b16 %v121
    %v417 = vunpack.c.h.b16 %v121
    %v418 = vunpack.c.l.b16 %v122
    %v419 = vunpack.c.h.b16 %v122
    %v420 = vunpack.c.l.b16 %v123
    %v421 = vunpack.c.h.b16 %v123
    %v422 = vunpack.c.l.b16 %v124
    %v423 = vunpack.c.h.b16 %v124
    %v424 = vunpack.c.l.b16 %v125
    %v425 = vunpack.c.h.b16 %v125
    %v426 = vunpack.c.l.b16 %v126
    %v427 = vunpack.c.h.b16 %v126
    %v428 = vunpack.c.l.b16 %v127
    %v429 = vunpack.c.h.b16 %v127
    %v430 = vunpack.c.l.b16 %v128
    %v431 = vunpack.c.h.b16 %v128
    %v432 = vunpack.c.l.b16 %v129
    %v433 = vunpack.c.h.b16 %v129
    %v434 = vunpack.c.l.b16 %v130
    %v435 = vunpack.c.h.b16 %v130
    %v436 = vunpack.c.l.b16 %v131
    %v437 = vunpack.c.h.b16 %v131
    %v438 = vunpack.c.l.b16 %v132
    %v439 = vunpack.c.h.b16 %v132
    %v440 = vunpack.c.l.b16 %v133
    %v441 = vunpack.c.h.b16 %v133
    %v442 = vunpack.c.l.b16 %v134
    %v443 = vunpack.c.h.b16 %v134
    %v444 = vunpack.c.l.b16 %v135
    %v445 = vunpack.c.h.b16 %v135
    %v446 = vunpack.c.l.b16 %v136
    %v447 = vunpack.c.h.b16 %v136
    %v448 = vunpack.c.l.b16 %v137
    %v449 = vunpack.c.h.b16 %v137
    %v450 = vunpack.c.l.b16 %v138
    %v451 = vunpack.c.h.b16 %v138
    %v452 = vunpack.c.l.b16 %v139
    %v453 = vunpack.c.h.b16 %v139
    %v454 = vunpack.c.l.b16 %v140
    %v455 = vunpack.c.h.b16 %v140
    %v456 = vunpack.c.l.b16 %v141
    %v457 = vunpack.c.h.b16 %v141
    %v458 = vunpack.c.l.b16 %v142
    %v459 = vunpack.c.h.b16 %v142
    %v460 = vunpack.c.l.b16 %v143
    %v461 = vunpack.c.h.b16 %v143
    %v462 = vunpack.c.l.b16 %v144
    %v463 = vunpack.c.h.b16 %v144
    %v464 = vunpack.c.l.b16 %v145
    %v465 = vunpack.c.h.b16 %v145
    %v466 = vunpack.c.l.b16 %v146
    %v467 = vunpack.c.h.b16 %v146
    %v468 = vunpack.c.l.b16 %v147
    %v469 = vunpack.c.h.b16 %v147
    %v470 = vunpack.c.l.b16 %v148
    %v471 = vunpack.c.h.b16 %v148
    %v472 = vunpack.c.l.b16 %v149
    %v473 = vunpack.c.h.b16 %v149
    %v474 = vunpack.c.l.b16 %v150
    %v475 = vunpack.c.h.b16 %v150
    %v476 = vunpack.c.l.b16 %v151
    %v477 = vunpack.c.h.b16 %v151
    %v478 = vunpack.c.l.b16 %v152
    %v479 = vunpack.c.h.b16 %v152
    %v480 = vunpack.c.l.b16 %v153
    %v481 = vunpack.c.h.b16 %v153
    %v482 = vunpack.c.l.b16 %v154
    %v483 = vunpack.c.h.b16 %v154
    %v484 = vunpack.c.l.b16 %v155
    %v485 = vunpack.c.h.b16 %v155
    %v486 = vunpack.c.l.b16 %v156
    %v487 = vunpack.c.h.b16 %v156
    %v488 = vunpack.c.l.b16 %v157
    %v489 = vunpack.c.h.b16 %v157
    %v490 = vunpack.c.l.b16 %v158
    %v491 = vunpack.c.h.b16 %v158
    %v492 = vunpack.c.l.b16 %v159
    %v493 = vunpack.c.h.b16 %v159
    %v494 = vunpack.c.l.b16 %v160
    %v495 = vunpack.c.h.b16 %v160
    %v496 = vunpack.c.l.b16 %v161
    %v497 = vunpack.c.h.b16 %v161
    %v498 = vunpack.c.l.b16 %v162
    %v499 = vunpack.c.h.b16 %v162
    %v500 = vunpack.c.l.b16 %v163
    %v501 = vunpack.c.h.b16 %v163
    %v502 = vunpack.c.l.b16 %v164
    %v503 = vunpack.c.h.b16 %v164
    %v504 = vunpack.c.l.b16 %v165
    %v505 = vunpack.c.h.b16 %v165
    %v506 = vunpack.c.l.b16 %v166
    %v507 = vunpack.c.h.b16 %v166
    %v508 = vunpack.c.l.b16 %v167
    %v509 = vunpack.c.h.b16 %v167
    %v510 = vunpack.c.l.b16 %v168
    %v511 = vunpack.c.h.b16 %v168
    %v512 = vunpack.c.l.b16 %v169
    %v513 = vunpack.c.h.b16 %v169
    %v514 = vunpack.c.l.b16 %v170
    %v515 = vunpack.c.h.b16 %v170
    %v516 = vunpack.c.l.b16 %v171
    %v517 = vunpack.c.h.b16 %v171
    %v518 = vunpack.c.l.b16 %v172
    %v519 = vunpack.c.h.b16 %v172
    %v520 = vunpack.c.l.b16 %v173
    %v521 = vunpack.c.h.b16 %v173
    %v522 = vunpack.c.l.b16 %v174
    %v523 = vunpack.c.h.b16 %v174
    %v524 = vpack.c.b16 %v400, %v396
    %v525 = vpack.c.b16 %v401, %v397
    %v526 = vpack.c.b16 %v402, %v398
    %v527 = vpack.c.b16 %v403, %v399
    %v528 = vpack.c.b16 %v408, %v404
    %v529 = vpack.c.b16 %v409, %v405
    %v530 = vpack.c.b16 %v410, %v406
    %v531 = vpack.c.b16 %v411, %v407
    %v532 = vpack.c.b16 %v416, %v412
    %v533 = vpack.c.b16 %v417, %v413
    %v534 = vpack.c.b16 %v418, %v414
    %v535 = vpack.c.b16 %v419, %v415
    %v536 = vpack.c.b16 %v424, %v420
    %v537 = vpack.c.b16 %v425, %v421
    %v538 = vpack.c.b16 %v426, %v422
    %v539 = vpack.c.b16 %v427, %v423
    %v540 = vpack.c.b16 %v432, %v428
    %v541 = vpack.c.b16 %v433, %v429
    %v542 = vpack.c.b16 %v434, %v430
    %v543 = vpack.c.b16 %v435, %v431
    %v544 = vpack.c.b16 %v440, %v436
    %v545 = vpack.c.b16 %v441, %v437
    %v546 = vpack.c.b16 %v442, %v438
    %v547 = vpack.c.b16 %v443, %v439
    %v548 = vpack.c.b16 %v448, %v444
    %v549 = vpack.c.b16 %v449, %v445
    %v550 = vpack.c.b16 %v450, %v446
    %v551 = vpack.c.b16 %v451, %v447
    %v552 = vpack.c.b16 %v456, %v452
    %v553 = vpack.c.b16 %v457, %v453
    %v554 = vpack.c.b16 %v458, %v454
    %v555 = vpack.c.b16 %v459, %v455
    %v556 = vpack.c.b16 %v464, %v460
    %v557 = vpack.c.b16 %v465, %v461
    %v558 = vpack.c.b16 %v466, %v462
    %v559 = vpack.c.b16 %v467, %v463
    %v560 = vpack.c.b16 %v472, %v468
    %v561 = vpack.c.b16 %v473, %v469
    %v562 = vpack.c.b16 %v474, %v470
    %v563 = vpack.c.b16 %v475, %v471
    %v564 = vpack.c.b16 %v480, %v476
    %v565 = vpack.c.b16 %v481, %v477
    %v566 = vpack.c.b16 %v482, %v478
    %v567 = vpack.c.b16 %v483, %v479
    %v568 = vpack.c.b16 %v488, %v484
    %v569 = vpack.c.b16 %v489, %v485
    %v570 = vpack.c.b16 %v490, %v486
    %v571 = vpack.c.b16 %v491, %v487
    %v572 = vpack.c.b16 %v496, %v492
    %v573 = vpack.c.b16 %v497, %v493
    %v574 = vpack.c.b16 %v498, %v494
    %v575 = vpack.c.b16 %v499, %v495
    %v576 = vpack.c.b16 %v504, %v500
    %v577 = vpack.c.b16 %v505, %v501
    %v578 = vpack.c.b16 %v506, %v502
    %v579 = vpack.c.b16 %v507, %v503
    %v580 = vpack.c.b16 %v512, %v508
    %v581 = vpack.c.b16 %v513, %v509
    %v582 = vpack.c.b16 %v514, %v510
    %v583 = vpack.c.b16 %v515, %v511
    %v584 = vpack.c.b16 %v520, %v516
    %v585 = vpack.c.b16 %v521, %v517
    %v586 = vpack.c.b16 %v522, %v518
    %v587 = vpack.c.b16 %v523, %v519
    %652 = vmatprep.subr.bf16.mxu0 %v525
    %653 = vmatpush1.bf16.msra.mxu0 %v524
    %654 = vmatprep.subr.bf16.mxu0 %v529
    %655 = vmatpush1.bf16.msra.mxu0 %v528
    %656 = vmatprep.subr.bf16.mxu0 %v533
    %657 = vmatpush1.bf16.msra.mxu0 %v532
    %658 = vmatprep.subr.bf16.mxu0 %v537
    %659 = vmatpush1.bf16.msra.mxu0 %v536
    %660 = vmatprep.subr.bf16.mxu0 %v541
    %661 = vmatpush1.bf16.msra.mxu0 %v540
    %662 = vmatprep.subr.bf16.mxu0 %v545
    %663 = vmatpush1.bf16.msra.mxu0 %v544
    %664 = vmatprep.subr.bf16.mxu0 %v549
    %665 = vmatpush1.bf16.msra.mxu0 %v548
    %666 = vmatprep.subr.bf16.mxu0 %v553
    %667 = vmatpush1.bf16.msra.mxu0 %v552
    %668 = vmatprep.subr.bf16.mxu0 %v557
    %669 = vmatpush1.bf16.msra.mxu0 %v556
    %670 = vmatprep.subr.bf16.mxu0 %v561
    %671 = vmatpush1.bf16.msra.mxu0 %v560
    %672 = vmatprep.subr.bf16.mxu0 %v565
    %673 = vmatpush1.bf16.msra.mxu0 %v564
    %674 = vmatprep.subr.bf16.mxu0 %v569
    %675 = vmatpush1.bf16.msra.mxu0 %v568
    %676 = vmatprep.subr.bf16.mxu0 %v573
    %677 = vmatpush1.bf16.msra.mxu0 %v572
    %678 = vmatprep.subr.bf16.mxu0 %v577
    %679 = vmatpush1.bf16.msra.mxu0 %v576
    %680 = vmatprep.subr.bf16.mxu0 %v581
    %681 = vmatpush1.bf16.msra.mxu0 %v580
    %682 = vmatprep.subr.bf16.mxu0 %v585
    %683 = vmatpush1.bf16.msra.mxu0 %v584
    %684 = vmatprep.mubr.bf16.mxu0 %v310
    %685 = vmatmul.mubr.bf16.gmra.mrb[0].mxu0 %v309
    %v686 = vpop.f32.mrb[0].mxu0
    %v687 = vadd.f32 %v315, %v686
    %v688 = vpop.f32.mrb[0].mxu0
    %v689 = vadd.f32 %v319, %v688
    %v690 = vpop.f32.mrb[0].mxu0
    %v691 = vadd.f32 %v315, %v690
    %v692 = vpop.f32.mrb[0].mxu0
    %v693 = vadd.f32 %v319, %v692
    %694 = vdwg.mxu0
    %695 = vmatprep.subr.bf16.mxu0 %v527
    %696 = vmatpush1.bf16.msra.mxu0 %v526
    %697 = vmatprep.subr.bf16.mxu0 %v531
    %698 = vmatpush1.bf16.msra.mxu0 %v530
    %699 = vmatprep.subr.bf16.mxu0 %v535
    %700 = vmatpush1.bf16.msra.mxu0 %v534
    %701 = vmatprep.subr.bf16.mxu0 %v539
    %702 = vmatpush1.bf16.msra.mxu0 %v538
    %703 = vmatprep.subr.bf16.mxu0 %v543
    %704 = vmatpush1.bf16.msra.mxu0 %v542
    %705 = vmatprep.subr.bf16.mxu0 %v547
    %706 = vmatpush1.bf16.msra.mxu0 %v546
    %707 = vmatprep.subr.bf16.mxu0 %v551
    %708 = vmatpush1.bf16.msra.mxu0 %v550
    %709 = vmatprep.subr.bf16.mxu0 %v555
    %710 = vmatpush1.bf16.msra.mxu0 %v554
    %711 = vmatprep.subr.bf16.mxu0 %v559
    %712 = vmatpush1.bf16.msra.mxu0 %v558
    %713 = vmatprep.subr.bf16.mxu0 %v563
    %714 = vmatpush1.bf16.msra.mxu0 %v562
    %715 = vmatprep.subr.bf16.mxu0 %v567
    %716 = vmatpush1.bf16.msra.mxu0 %v566
    %717 = vmatprep.subr.bf16.mxu0 %v571
    %718 = vmatpush1.bf16.msra.mxu0 %v570
    %719 = vmatprep.subr.bf16.mxu0 %v575
    %720 = vmatpush1.bf16.msra.mxu0 %v574
    %721 = vmatprep.subr.bf16.mxu0 %v579
    %722 = vmatpush1.bf16.msra.mxu0 %v578
    %723 = vmatprep.subr.bf16.mxu0 %v583
    %724 = vmatpush1.bf16.msra.mxu0 %v582
    %725 = vmatprep.subr.bf16.mxu0 %v587
    %726 = vmatpush1.bf16.msra.mxu0 %v586
    %727 = vmatprep.mubr.bf16.mxu0 %v310
    %728 = vmatmul.mubr.bf16.gmra.mrb[0].mxu0 %v309
    %v729 = vpop.f32.mrb[0].mxu0
    %v730 = vadd.f32 %v323, %v729
    %v731 = vpop.f32.mrb[0].mxu0
    %v732 = vadd.f32 %v327, %v731
    %v733 = vpop.f32.mrb[0].mxu0
    %v734 = vadd.f32 %v323, %v733
    %v735 = vpop.f32.mrb[0].mxu0
    %v736 = vadd.f32 %v327, %v735
    %737 = vdwg.mxu0
    %v738 = vmax.f32 %v687, 0.0
    %v739 = vmax.f32 %v689, 0.0
    %v740 = vmax.f32 %v730, 0.0
    %v741 = vmax.f32 %v732, 0.0
    %v742 = vmax.f32 %v691, 0.0
    %v743 = vmax.f32 %v693, 0.0
    %v744 = vmax.f32 %v734, 0.0
    %v745 = vmax.f32 %v736, 0.0
    %v746 = vadd.f32 %v738, %v739
    %v747 = vadd.f32 %v746, %v740
    %v748 = vadd.f32 %v747, %v741
    %749 = vadd.xlane.f32.xlu0 %v748
    %v750 = vpop.xlane.xlu0 %749
    %v751 = vadd.f32 %v742, %v743
    %v752 = vadd.f32 %v751, %v744
    %v753 = vadd.f32 %v752, %v745
    %754 = vadd.xlane.f32.xlu0 %v753
    %v755 = vpop.xlane.xlu0 %754
    %v756 = vrcp.pop 512.0
    %v757 = vmul.f32 %v750, %v756
    %v758 = vmul.f32 %v755, %v756
    %v759 = vsub.f32 %v738, %v757
    %v760 = vsub.f32 %v739, %v757
    %v761 = vsub.f32 %v740, %v757
    %v762 = vsub.f32 %v741, %v757
    %v763 = vsub.f32 %v742, %v758
    %v764 = vsub.f32 %v743, %v758
    %v765 = vsub.f32 %v744, %v758
    %v766 = vsub.f32 %v745, %v758
    %v767 = vmul.f32 %v759, %v759
    %v768 = vmul.f32 %v760, %v760
    %v769 = vmul.f32 %v761, %v761
    %v770 = vmul.f32 %v762, %v762
    %v771 = vmul.f32 %v763, %v763
    %v772 = vmul.f32 %v764, %v764
    %v773 = vmul.f32 %v765, %v765
    %v774 = vmul.f32 %v766, %v766
    %v775 = vadd.f32 %v767, %v768
    %v776 = vadd.f32 %v775, %v769
    %v777 = vadd.f32 %v776, %v770
    %778 = vadd.xlane.f32.xlu0 %v777
    %v779 = vpop.xlane.xlu0 %778
    %v780 = vadd.f32 %v771, %v772
    %v781 = vadd.f32 %v780, %v773
    %v782 = vadd.f32 %v781, %v774
    %783 = vadd.xlane.f32.xlu0 %v782
    %v784 = vpop.xlane.xlu0 %783
    %v785 = vmul.f32 %v779, %v756
    %v786 = vmul.f32 %v784, %v756
    %v787 = vadd.f32 %v785, 1e-12
    %v788 = vadd.f32 %v786, 1e-12
    %v789 = vrsqrt.pop %v787
    %v790 = vrsqrt.pop %v788
    %v791 = vmul.f32 %v759, %v789
    %v792 = vmul.f32 %v760, %v789
    %v793 = vmul.f32 %v761, %v789
    %v794 = vmul.f32 %v762, %v789
    %v795 = vmul.f32 %v763, %v790
    %v796 = vmul.f32 %v764, %v790
    %v797 = vmul.f32 %v765, %v790
    %v798 = vmul.f32 %v766, %v790
    %v800 = vlaneseq
    %v801 = vshrl.u32 %v800, 7
    %v802 = vsub.s32 0, %v801
    %v803 = vrot.slane %v176, %v802
    %v804 = vlaneseq
    %v805 = vshrl.u32 %v804, 7
    %v806 = vsub.s32 1, %v805
    %v807 = vrot.slane %v176, %v806
    %v808 = vlaneseq
    %v809 = vshrl.u32 %v808, 7
    %v810 = vsub.s32 2, %v809
    %v811 = vrot.slane %v176, %v810
    %v812 = vlaneseq
    %v813 = vshrl.u32 %v812, 7
    %v814 = vsub.s32 3, %v813
    %v815 = vrot.slane %v176, %v814
    %v820 = vmul.f32 %v791, %v803
    %v821 = vmul.f32 %v792, %v807
    %v822 = vmul.f32 %v793, %v811
    %v823 = vmul.f32 %v794, %v815
    %v824 = vmul.f32 %v795, %v803
    %v825 = vmul.f32 %v796, %v807
    %v826 = vmul.f32 %v797, %v811
    %v827 = vmul.f32 %v798, %v815
    %v829 = vlaneseq
    %v830 = vshrl.u32 %v829, 7
    %v831 = vsub.s32 0, %v830
    %v832 = vrot.slane %v177, %v831
    %v833 = vlaneseq
    %v834 = vshrl.u32 %v833, 7
    %v835 = vsub.s32 1, %v834
    %v836 = vrot.slane %v177, %v835
    %v837 = vlaneseq
    %v838 = vshrl.u32 %v837, 7
    %v839 = vsub.s32 2, %v838
    %v840 = vrot.slane %v177, %v839
    %v841 = vlaneseq
    %v842 = vshrl.u32 %v841, 7
    %v843 = vsub.s32 3, %v842
    %v844 = vrot.slane %v177, %v843
    %v849 = vadd.f32 %v820, %v832
    %v850 = vadd.f32 %v821, %v836
    %v851 = vadd.f32 %v822, %v840
    %v852 = vadd.f32 %v823, %v844
    %v853 = vadd.f32 %v824, %v832
    %v854 = vadd.f32 %v825, %v836
    %v855 = vadd.f32 %v826, %v840
    %v856 = vadd.f32 %v827, %v844
    %v857 = vpack.c.bf16 %v853, %v849
    %v858 = vpack.c.bf16 %v854, %v850
    %v859 = vpack.c.bf16 %v855, %v851
    %v860 = vpack.c.bf16 %v856, %v852
    %v925 = vunpack.c.l.b16 %v178
    %v926 = vunpack.c.h.b16 %v178
    %v927 = vunpack.c.l.b16 %v179
    %v928 = vunpack.c.h.b16 %v179
    %v929 = vunpack.c.l.b16 %v180
    %v930 = vunpack.c.h.b16 %v180
    %v931 = vunpack.c.l.b16 %v181
    %v932 = vunpack.c.h.b16 %v181
    %v933 = vunpack.c.l.b16 %v182
    %v934 = vunpack.c.h.b16 %v182
    %v935 = vunpack.c.l.b16 %v183
    %v936 = vunpack.c.h.b16 %v183
    %v937 = vunpack.c.l.b16 %v184
    %v938 = vunpack.c.h.b16 %v184
    %v939 = vunpack.c.l.b16 %v185
    %v940 = vunpack.c.h.b16 %v185
    %v941 = vunpack.c.l.b16 %v186
    %v942 = vunpack.c.h.b16 %v186
    %v943 = vunpack.c.l.b16 %v187
    %v944 = vunpack.c.h.b16 %v187
    %v945 = vunpack.c.l.b16 %v188
    %v946 = vunpack.c.h.b16 %v188
    %v947 = vunpack.c.l.b16 %v189
    %v948 = vunpack.c.h.b16 %v189
    %v949 = vunpack.c.l.b16 %v190
    %v950 = vunpack.c.h.b16 %v190
    %v951 = vunpack.c.l.b16 %v191
    %v952 = vunpack.c.h.b16 %v191
    %v953 = vunpack.c.l.b16 %v192
    %v954 = vunpack.c.h.b16 %v192
    %v955 = vunpack.c.l.b16 %v193
    %v956 = vunpack.c.h.b16 %v193
    %v957 = vunpack.c.l.b16 %v194
    %v958 = vunpack.c.h.b16 %v194
    %v959 = vunpack.c.l.b16 %v195
    %v960 = vunpack.c.h.b16 %v195
    %v961 = vunpack.c.l.b16 %v196
    %v962 = vunpack.c.h.b16 %v196
    %v963 = vunpack.c.l.b16 %v197
    %v964 = vunpack.c.h.b16 %v197
    %v965 = vunpack.c.l.b16 %v198
    %v966 = vunpack.c.h.b16 %v198
    %v967 = vunpack.c.l.b16 %v199
    %v968 = vunpack.c.h.b16 %v199
    %v969 = vunpack.c.l.b16 %v200
    %v970 = vunpack.c.h.b16 %v200
    %v971 = vunpack.c.l.b16 %v201
    %v972 = vunpack.c.h.b16 %v201
    %v973 = vunpack.c.l.b16 %v202
    %v974 = vunpack.c.h.b16 %v202
    %v975 = vunpack.c.l.b16 %v203
    %v976 = vunpack.c.h.b16 %v203
    %v977 = vunpack.c.l.b16 %v204
    %v978 = vunpack.c.h.b16 %v204
    %v979 = vunpack.c.l.b16 %v205
    %v980 = vunpack.c.h.b16 %v205
    %v981 = vunpack.c.l.b16 %v206
    %v982 = vunpack.c.h.b16 %v206
    %v983 = vunpack.c.l.b16 %v207
    %v984 = vunpack.c.h.b16 %v207
    %v985 = vunpack.c.l.b16 %v208
    %v986 = vunpack.c.h.b16 %v208
    %v987 = vunpack.c.l.b16 %v209
    %v988 = vunpack.c.h.b16 %v209
    %v989 = vunpack.c.l.b16 %v210
    %v990 = vunpack.c.h.b16 %v210
    %v991 = vunpack.c.l.b16 %v211
    %v992 = vunpack.c.h.b16 %v211
    %v993 = vunpack.c.l.b16 %v212
    %v994 = vunpack.c.h.b16 %v212
    %v995 = vunpack.c.l.b16 %v213
    %v996 = vunpack.c.h.b16 %v213
    %v997 = vunpack.c.l.b16 %v214
    %v998 = vunpack.c.h.b16 %v214
    %v999 = vunpack.c.l.b16 %v215
    %v1000 = vunpack.c.h.b16 %v215
    %v1001 = vunpack.c.l.b16 %v216
    %v1002 = vunpack.c.h.b16 %v216
    %v1003 = vunpack.c.l.b16 %v217
    %v1004 = vunpack.c.h.b16 %v217
    %v1005 = vunpack.c.l.b16 %v218
    %v1006 = vunpack.c.h.b16 %v218
    %v1007 = vunpack.c.l.b16 %v219
    %v1008 = vunpack.c.h.b16 %v219
    %v1009 = vunpack.c.l.b16 %v220
    %v1010 = vunpack.c.h.b16 %v220
    %v1011 = vunpack.c.l.b16 %v221
    %v1012 = vunpack.c.h.b16 %v221
    %v1013 = vunpack.c.l.b16 %v222
    %v1014 = vunpack.c.h.b16 %v222
    %v1015 = vunpack.c.l.b16 %v223
    %v1016 = vunpack.c.h.b16 %v223
    %v1017 = vunpack.c.l.b16 %v224
    %v1018 = vunpack.c.h.b16 %v224
    %v1019 = vunpack.c.l.b16 %v225
    %v1020 = vunpack.c.h.b16 %v225
    %v1021 = vunpack.c.l.b16 %v226
    %v1022 = vunpack.c.h.b16 %v226
    %v1023 = vunpack.c.l.b16 %v227
    %v1024 = vunpack.c.h.b16 %v227
    %v1025 = vunpack.c.l.b16 %v228
    %v1026 = vunpack.c.h.b16 %v228
    %v1027 = vunpack.c.l.b16 %v229
    %v1028 = vunpack.c.h.b16 %v229
    %v1029 = vunpack.c.l.b16 %v230
    %v1030 = vunpack.c.h.b16 %v230
    %v1031 = vunpack.c.l.b16 %v231
    %v1032 = vunpack.c.h.b16 %v231
    %v1033 = vunpack.c.l.b16 %v232
    %v1034 = vunpack.c.h.b16 %v232
    %v1035 = vunpack.c.l.b16 %v233
    %v1036 = vunpack.c.h.b16 %v233
    %v1037 = vunpack.c.l.b16 %v234
    %v1038 = vunpack.c.h.b16 %v234
    %v1039 = vunpack.c.l.b16 %v235
    %v1040 = vunpack.c.h.b16 %v235
    %v1041 = vunpack.c.l.b16 %v236
    %v1042 = vunpack.c.h.b16 %v236
    %v1043 = vunpack.c.l.b16 %v237
    %v1044 = vunpack.c.h.b16 %v237
    %v1045 = vunpack.c.l.b16 %v238
    %v1046 = vunpack.c.h.b16 %v238
    %v1047 = vunpack.c.l.b16 %v239
    %v1048 = vunpack.c.h.b16 %v239
    %v1049 = vunpack.c.l.b16 %v240
    %v1050 = vunpack.c.h.b16 %v240
    %v1051 = vunpack.c.l.b16 %v241
    %v1052 = vunpack.c.h.b16 %v241
    %v1053 = vpack.c.b16 %v927, %v925
    %v1054 = vpack.c.b16 %v928, %v926
    %v1055 = vpack.c.b16 %v931, %v929
    %v1056 = vpack.c.b16 %v932, %v930
    %v1057 = vpack.c.b16 %v935, %v933
    %v1058 = vpack.c.b16 %v936, %v934
    %v1059 = vpack.c.b16 %v939, %v937
    %v1060 = vpack.c.b16 %v940, %v938
    %v1061 = vpack.c.b16 %v943, %v941
    %v1062 = vpack.c.b16 %v944, %v942
    %v1063 = vpack.c.b16 %v947, %v945
    %v1064 = vpack.c.b16 %v948, %v946
    %v1065 = vpack.c.b16 %v951, %v949
    %v1066 = vpack.c.b16 %v952, %v950
    %v1067 = vpack.c.b16 %v955, %v953
    %v1068 = vpack.c.b16 %v956, %v954
    %v1069 = vpack.c.b16 %v959, %v957
    %v1070 = vpack.c.b16 %v960, %v958
    %v1071 = vpack.c.b16 %v963, %v961
    %v1072 = vpack.c.b16 %v964, %v962
    %v1073 = vpack.c.b16 %v967, %v965
    %v1074 = vpack.c.b16 %v968, %v966
    %v1075 = vpack.c.b16 %v971, %v969
    %v1076 = vpack.c.b16 %v972, %v970
    %v1077 = vpack.c.b16 %v975, %v973
    %v1078 = vpack.c.b16 %v976, %v974
    %v1079 = vpack.c.b16 %v979, %v977
    %v1080 = vpack.c.b16 %v980, %v978
    %v1081 = vpack.c.b16 %v983, %v981
    %v1082 = vpack.c.b16 %v984, %v982
    %v1083 = vpack.c.b16 %v987, %v985
    %v1084 = vpack.c.b16 %v988, %v986
    %v1085 = vpack.c.b16 %v991, %v989
    %v1086 = vpack.c.b16 %v992, %v990
    %v1087 = vpack.c.b16 %v995, %v993
    %v1088 = vpack.c.b16 %v996, %v994
    %v1089 = vpack.c.b16 %v999, %v997
    %v1090 = vpack.c.b16 %v1000, %v998
    %v1091 = vpack.c.b16 %v1003, %v1001
    %v1092 = vpack.c.b16 %v1004, %v1002
    %v1093 = vpack.c.b16 %v1007, %v1005
    %v1094 = vpack.c.b16 %v1008, %v1006
    %v1095 = vpack.c.b16 %v1011, %v1009
    %v1096 = vpack.c.b16 %v1012, %v1010
    %v1097 = vpack.c.b16 %v1015, %v1013
    %v1098 = vpack.c.b16 %v1016, %v1014
    %v1099 = vpack.c.b16 %v1019, %v1017
    %v1100 = vpack.c.b16 %v1020, %v1018
    %v1101 = vpack.c.b16 %v1023, %v1021
    %v1102 = vpack.c.b16 %v1024, %v1022
    %v1103 = vpack.c.b16 %v1027, %v1025
    %v1104 = vpack.c.b16 %v1028, %v1026
    %v1105 = vpack.c.b16 %v1031, %v1029
    %v1106 = vpack.c.b16 %v1032, %v1030
    %v1107 = vpack.c.b16 %v1035, %v1033
    %v1108 = vpack.c.b16 %v1036, %v1034
    %v1109 = vpack.c.b16 %v1039, %v1037
    %v1110 = vpack.c.b16 %v1040, %v1038
    %v1111 = vpack.c.b16 %v1043, %v1041
    %v1112 = vpack.c.b16 %v1044, %v1042
    %v1113 = vpack.c.b16 %v1047, %v1045
    %v1114 = vpack.c.b16 %v1048, %v1046
    %v1115 = vpack.c.b16 %v1051, %v1049
    %v1116 = vpack.c.b16 %v1052, %v1050
    %1181 = vmatprep.subr.bf16.mxu0 %v1054
    %1182 = vmatpush1.bf16.msra.mxu0 %v1053
    %1183 = vmatprep.subr.bf16.mxu0 %v1056
    %1184 = vmatpush1.bf16.msra.mxu0 %v1055
    %1185 = vmatprep.subr.bf16.mxu0 %v1058
    %1186 = vmatpush1.bf16.msra.mxu0 %v1057
    %1187 = vmatprep.subr.bf16.mxu0 %v1060
    %1188 = vmatpush1.bf16.msra.mxu0 %v1059
    %1189 = vmatprep.subr.bf16.mxu0 %v1062
    %1190 = vmatpush1.bf16.msra.mxu0 %v1061
    %1191 = vmatprep.subr.bf16.mxu0 %v1064
    %1192 = vmatpush1.bf16.msra.mxu0 %v1063
    %1193 = vmatprep.subr.bf16.mxu0 %v1066
    %1194 = vmatpush1.bf16.msra.mxu0 %v1065
    %1195 = vmatprep.subr.bf16.mxu0 %v1068
    %1196 = vmatpush1.bf16.msra.mxu0 %v1067
    %1197 = vmatprep.subr.bf16.mxu0 %v1070
    %1198 = vmatpush1.bf16.msra.mxu0 %v1069
    %1199 = vmatprep.subr.bf16.mxu0 %v1072
    %1200 = vmatpush1.bf16.msra.mxu0 %v1071
    %1201 = vmatprep.subr.bf16.mxu0 %v1074
    %1202 = vmatpush1.bf16.msra.mxu0 %v1073
    %1203 = vmatprep.subr.bf16.mxu0 %v1076
    %1204 = vmatpush1.bf16.msra.mxu0 %v1075
    %1205 = vmatprep.subr.bf16.mxu0 %v1078
    %1206 = vmatpush1.bf16.msra.mxu0 %v1077
    %1207 = vmatprep.subr.bf16.mxu0 %v1080
    %1208 = vmatpush1.bf16.msra.mxu0 %v1079
    %1209 = vmatprep.subr.bf16.mxu0 %v1082
    %1210 = vmatpush1.bf16.msra.mxu0 %v1081
    %1211 = vmatprep.subr.bf16.mxu0 %v1084
    %1212 = vmatpush1.bf16.msra.mxu0 %v1083
    %1213 = vmatprep.mubr.bf16.mxu0 %v858
    %1214 = vmatmul.mubr.bf16.gmra.mrb[0].mxu0 %v857
    %v1215 = vpop.f32.mrb[0].mxu0
    %v1216 = vadd.f32 0.0, %v1215
    %v1217 = vpop.f32.mrb[0].mxu0
    %v1218 = vadd.f32 0.0, %v1217
    %v1219 = vpop.f32.mrb[0].mxu0
    %v1220 = vadd.f32 0.0, %v1219
    %v1221 = vpop.f32.mrb[0].mxu0
    %v1222 = vadd.f32 0.0, %v1221
    %1223 = vdwg.mxu0
    %1224 = vmatprep.subr.bf16.mxu0 %v1086
    %1225 = vmatpush1.bf16.msra.mxu0 %v1085
    %1226 = vmatprep.subr.bf16.mxu0 %v1088
    %1227 = vmatpush1.bf16.msra.mxu0 %v1087
    %1228 = vmatprep.subr.bf16.mxu0 %v1090
    %1229 = vmatpush1.bf16.msra.mxu0 %v1089
    %1230 = vmatprep.subr.bf16.mxu0 %v1092
    %1231 = vmatpush1.bf16.msra.mxu0 %v1091
    %1232 = vmatprep.subr.bf16.mxu0 %v1094
    %1233 = vmatpush1.bf16.msra.mxu0 %v1093
    %1234 = vmatprep.subr.bf16.mxu0 %v1096
    %1235 = vmatpush1.bf16.msra.mxu0 %v1095
    %1236 = vmatprep.subr.bf16.mxu0 %v1098
    %1237 = vmatpush1.bf16.msra.mxu0 %v1097
    %1238 = vmatprep.subr.bf16.mxu0 %v1100
    %1239 = vmatpush1.bf16.msra.mxu0 %v1099
    %1240 = vmatprep.subr.bf16.mxu0 %v1102
    %1241 = vmatpush1.bf16.msra.mxu0 %v1101
    %1242 = vmatprep.subr.bf16.mxu0 %v1104
    %1243 = vmatpush1.bf16.msra.mxu0 %v1103
    %1244 = vmatprep.subr.bf16.mxu0 %v1106
    %1245 = vmatpush1.bf16.msra.mxu0 %v1105
    %1246 = vmatprep.subr.bf16.mxu0 %v1108
    %1247 = vmatpush1.bf16.msra.mxu0 %v1107
    %1248 = vmatprep.subr.bf16.mxu0 %v1110
    %1249 = vmatpush1.bf16.msra.mxu0 %v1109
    %1250 = vmatprep.subr.bf16.mxu0 %v1112
    %1251 = vmatpush1.bf16.msra.mxu0 %v1111
    %1252 = vmatprep.subr.bf16.mxu0 %v1114
    %1253 = vmatpush1.bf16.msra.mxu0 %v1113
    %1254 = vmatprep.subr.bf16.mxu0 %v1116
    %1255 = vmatpush1.bf16.msra.mxu0 %v1115
    %1256 = vmatprep.mubr.bf16.mxu0 %v860
    %1257 = vmatmul.mubr.bf16.gmra.mrb[0].mxu0 %v859
    %v1258 = vpop.f32.mrb[0].mxu0
    %v1259 = vadd.f32 %v1216, %v1258
    %v1260 = vpop.f32.mrb[0].mxu0
    %v1261 = vadd.f32 %v1218, %v1260
    %v1262 = vpop.f32.mrb[0].mxu0
    %v1263 = vadd.f32 %v1220, %v1262
    %v1264 = vpop.f32.mrb[0].mxu0
    %v1265 = vadd.f32 %v1222, %v1264
    %1266 = vdwg.mxu0
    %v1267 = vadd.f32 %v1259, %v1261
    %1268 = vadd.xlane.f32.xlu0 %v1267
    %v1269 = vpop.xlane.xlu0 %1268
    %v1270 = vadd.f32 %v1263, %v1265
    %1271 = vadd.xlane.f32.xlu0 %v1270
    %v1272 = vpop.xlane.xlu0 %1271
    %v1273 = vmul.f32 %v1269, %v252
    %v1274 = vmul.f32 %v1272, %v252
    %v1275 = vsub.f32 %v1259, %v1273
    %v1276 = vsub.f32 %v1261, %v1273
    %v1277 = vsub.f32 %v1263, %v1274
    %v1278 = vsub.f32 %v1265, %v1274
    %v1279 = vmul.f32 %v1275, %v1275
    %v1280 = vmul.f32 %v1276, %v1276
    %v1281 = vmul.f32 %v1277, %v1277
    %v1282 = vmul.f32 %v1278, %v1278
    %v1283 = vadd.f32 %v1279, %v1280
    %1284 = vadd.xlane.f32.xlu0 %v1283
    %v1285 = vpop.xlane.xlu0 %1284
    %v1286 = vadd.f32 %v1281, %v1282
    %1287 = vadd.xlane.f32.xlu0 %v1286
    %v1288 = vpop.xlane.xlu0 %1287
    %v1289 = vmul.f32 %v1285, %v252
    %v1290 = vmul.f32 %v1288, %v252
    %v1291 = vadd.f32 %v1289, 1e-12
    %v1292 = vadd.f32 %v1290, 1e-12
    %v1293 = vrsqrt.pop %v1291
    %v1294 = vrsqrt.pop %v1292
    %v1295 = vmul.f32 %v1275, %v1293
    %v1296 = vmul.f32 %v1276, %v1293
    %v1297 = vmul.f32 %v1277, %v1294
    %v1298 = vmul.f32 %v1278, %v1294
    %v1300 = vlaneseq
    %v1301 = vshrl.u32 %v1300, 7
    %v1302 = vsub.s32 0, %v1301
    %v1303 = vrot.slane %v242, %v1302
    %v1304 = vlaneseq
    %v1305 = vshrl.u32 %v1304, 7
    %v1306 = vsub.s32 1, %v1305
    %v1307 = vrot.slane %v242, %v1306
    %v1310 = vmul.f32 %v1295, %v1303
    %v1311 = vmul.f32 %v1296, %v1307
    %v1312 = vmul.f32 %v1297, %v1303
    %v1313 = vmul.f32 %v1298, %v1307
    %v1315 = vlaneseq
    %v1316 = vshrl.u32 %v1315, 7
    %v1317 = vsub.s32 0, %v1316
    %v1318 = vrot.slane %v243, %v1317
    %v1319 = vlaneseq
    %v1320 = vshrl.u32 %v1319, 7
    %v1321 = vsub.s32 1, %v1320
    %v1322 = vrot.slane %v243, %v1321
    %v1325 = vadd.f32 %v1310, %v1318
    %v1326 = vadd.f32 %v1311, %v1322
    %v1327 = vadd.f32 %v1312, %v1318
    %v1328 = vadd.f32 %v1313, %v1322
    %1330 = vset.pattern.permute.xlu0 0
    %1331 = vperm.xlu0 %1330, %v107
    %v1332 = vpop.permute.xlu0 %1331
    %1335 = vset.pattern.permute.xlu0 0
    %1336 = vperm.xlu0 %1335, %v108
    %v1337 = vpop.permute.xlu0 %1336
    %v1339 = vmul.f32 %v1325, %v1332
    %v1340 = vmul.f32 %v1326, %v1332
    %v1341 = vmul.f32 %v1327, %v1337
    %v1342 = vmul.f32 %v1328, %v1337
    %v1343 = vld [vmem:[%s2] sm:$0xff]
    %v1345 = vcombine.high %v1343, %v1343
    %1347 = vst [vmem:[#allocation2] sm:$0xf] %v1343
    %1348 = vst [vmem:[#allocation2 + $0x8] sm:$0xf] %v1345
    %v1351 = vrot.slane %v1339, 4
    %v1352 = vrot.slane %v1340, 4
    %1355 = vst [vmem:[#allocation2] sm:$0xf0] %v1351
    %1356 = vst [vmem:[#allocation2 + $0x8] sm:$0xf0] %v1352
    %1357 = vst [vmem:[#allocation2 + $0x10] sm:$0xf] %v1351
    %1358 = vst [vmem:[#allocation2 + $0x18] sm:$0xf] %v1352
    %v1359 = vld [vmem:[#allocation2] sm:$0xff]
    %v1360 = vld [vmem:[#allocation2 + $0x8] sm:$0xff]
    %v1361 = vlaneseq
    %v1362 = vshrl.u32 %v1361, 7
    %v1363 = vsub.s32 0, %v1362
    %v1364 = vrot.slane %v244, %v1363
    %v1365 = vlaneseq
    %v1366 = vshrl.u32 %v1365, 7
    %v1367 = vsub.s32 0, %v1366
    %v1368 = vrot.slane %v245, %v1367
    %v1369 = vmul.f32 %v1359, %v1364
    %v1370 = vmul.f32 %v1360, %v1368
    %v1371 = vadd.f32 %v1339, %v1369
    %v1372 = vadd.f32 %v1340, %v1370
    %v1373 = vld [vmem:[#allocation2] sm:$0xfe]
    %v1374 = vld [vmem:[#allocation2 + $0x8] sm:$0xfe]
    %v1375 = vld [vmem:[#allocation2 + $0x10] sm:$0x1]
    %v1376 = vld [vmem:[#allocation2 + $0x18] sm:$0x1]
    %v1377 = vlaneseq
    %v1378 = vshrl.u32 %v1377, 7
    %v1379 = vsub.s32 1, %v1378
    %v1380 = vrot.slane %v244, %v1379
    %v1381 = vlaneseq
    %v1382 = vshrl.u32 %v1381, 7
    %v1383 = vsub.s32 1, %v1382
    %v1384 = vrot.slane %v245, %v1383
    %v1385 = vmul.f32 %v1373, %v1380
    %v1386 = vmul.f32 %v1374, %v1384
    %v1387 = vmul.f32 %v1375, %v1380
    %v1388 = vmul.f32 %v1376, %v1384
    %vm1393 = vcmask 1046528
    %v1394 = vrot.slane %v1385, 1
    %v1395 = vrot.slane %v1387, 1
    %v1396 = vsel %vm1393, %v1394, %v1395
    %v1397 = vrot.slane %v1386, 1
    %v1398 = vrot.slane %v1388, 1
    %v1399 = vsel %vm1393, %v1397, %v1398
    %v1402 = vadd.f32 %v1371, %v1396
    %v1403 = vadd.f32 %v1372, %v1399
    %v1404 = vld [vmem:[#allocation2] sm:$0xfc]
    %v1405 = vld [vmem:[#allocation2 + $0x8] sm:$0xfc]
    %v1406 = vld [vmem:[#allocation2 + $0x10] sm:$0x3]
    %v1407 = vld [vmem:[#allocation2 + $0x18] sm:$0x3]
    %v1408 = vlaneseq
    %v1409 = vshrl.u32 %v1408, 7
    %v1410 = vsub.s32 2, %v1409
    %v1411 = vrot.slane %v244, %v1410
    %v1412 = vlaneseq
    %v1413 = vshrl.u32 %v1412, 7
    %v1414 = vsub.s32 2, %v1413
    %v1415 = vrot.slane %v245, %v1414
    %v1416 = vmul.f32 %v1404, %v1411
    %v1417 = vmul.f32 %v1405, %v1415
    %v1418 = vmul.f32 %v1406, %v1411
    %v1419 = vmul.f32 %v1407, %v1415
    %vm1424 = vcmask 1045504
    %v1425 = vrot.slane %v1416, 2
    %v1426 = vrot.slane %v1418, 2
    %v1427 = vsel %vm1424, %v1425, %v1426
    %v1428 = vrot.slane %v1417, 2
    %v1429 = vrot.slane %v1419, 2
    %v1430 = vsel %vm1424, %v1428, %v1429
    %v1433 = vadd.f32 %v1402, %v1427
    %v1434 = vadd.f32 %v1403, %v1430
    %v1435 = vld [vmem:[#allocation2] sm:$0xf8]
    %v1436 = vld [vmem:[#allocation2 + $0x8] sm:$0xf8]
    %v1437 = vld [vmem:[#allocation2 + $0x10] sm:$0x7]
    %v1438 = vld [vmem:[#allocation2 + $0x18] sm:$0x7]
    %v1439 = vlaneseq
    %v1440 = vshrl.u32 %v1439, 7
    %v1441 = vsub.s32 3, %v1440
    %v1442 = vrot.slane %v244, %v1441
    %v1443 = vlaneseq
    %v1444 = vshrl.u32 %v1443, 7
    %v1445 = vsub.s32 3, %v1444
    %v1446 = vrot.slane %v245, %v1445
    %v1447 = vmul.f32 %v1435, %v1442
    %v1448 = vmul.f32 %v1436, %v1446
    %v1449 = vmul.f32 %v1437, %v1442
    %v1450 = vmul.f32 %v1438, %v1446
    %vm1455 = vcmask 1044480
    %v1456 = vrot.slane %v1447, 3
    %v1457 = vrot.slane %v1449, 3
    %v1458 = vsel %vm1455, %v1456, %v1457
    %v1459 = vrot.slane %v1448, 3
    %v1460 = vrot.slane %v1450, 3
    %v1461 = vsel %vm1455, %v1459, %v1460
    %v1464 = vadd.f32 %v1433, %v1458
    %v1465 = vadd.f32 %v1434, %v1461
    %v1466 = vld [vmem:[#allocation2] sm:$0xf0]
    %v1467 = vld [vmem:[#allocation2 + $0x8] sm:$0xf0]
    %v1468 = vld [vmem:[#allocation2 + $0x10] sm:$0xf]
    %v1469 = vld [vmem:[#allocation2 + $0x18] sm:$0xf]
    %v1470 = vlaneseq
    %v1471 = vshrl.u32 %v1470, 7
    %v1472 = vsub.s32 4, %v1471
    %v1473 = vrot.slane %v244, %v1472
    %v1474 = vlaneseq
    %v1475 = vshrl.u32 %v1474, 7
    %v1476 = vsub.s32 4, %v1475
    %v1477 = vrot.slane %v245, %v1476
    %v1478 = vmul.f32 %v1466, %v1473
    %v1479 = vmul.f32 %v1467, %v1477
    %v1480 = vmul.f32 %v1468, %v1473
    %v1481 = vmul.f32 %v1469, %v1477
    %vm1486 = vcmask 1043456
    %v1487 = vrot.slane %v1478, 4
    %v1488 = vrot.slane %v1480, 4
    %v1489 = vsel %vm1486, %v1487, %v1488
    %v1490 = vrot.slane %v1479, 4
    %v1491 = vrot.slane %v1481, 4
    %v1492 = vsel %vm1486, %v1490, %v1491
    %v1495 = vadd.f32 %v1464, %v1489
    %v1496 = vadd.f32 %v1465, %v1492
    %v1499 = vcombine.low %v1468, %v1469
    %1501 = vst [vmem:[#allocation9] sm:$0xff] %v1499
    %v1502 = vmul.f32 %v1495, %v1332
    %v1503 = vmul.f32 %v1496, %v1332
    %v1504 = vadd.f32 %v103, %v1502
    %v1505 = vadd.f32 %v104, %v1503
    %1506 = vst [vmem:[%s22] sm:$0xff] %v1504
    %1507 = vst [vmem:[%s22 + $0x8] sm:$0xff] %v1505
    %s1508 = scalar_lea.vmem %s2, 8
    %v1509 = vld [vmem:[%s1508] sm:$0xff]
    %v1511 = vcombine.high %v1509, %v1509
    %1513 = vst [vmem:[#allocation2] sm:$0xf] %v1509
    %1514 = vst [vmem:[#allocation2 + $0x8] sm:$0xf] %v1511
    %v1517 = vrot.slane %v1341, 4
    %v1518 = vrot.slane %v1342, 4
    %1521 = vst [vmem:[#allocation2] sm:$0xf0] %v1517
    %1522 = vst [vmem:[#allocation2 + $0x8] sm:$0xf0] %v1518
    %1523 = vst [vmem:[#allocation2 + $0x10] sm:$0xf] %v1517
    %1524 = vst [vmem:[#allocation2 + $0x18] sm:$0xf] %v1518
    %v1525 = vld [vmem:[#allocation2] sm:$0xff]
    %v1526 = vld [vmem:[#allocation2 + $0x8] sm:$0xff]
    %v1527 = vmul.f32 %v1525, %v1364
    %v1528 = vmul.f32 %v1526, %v1368
    %v1529 = vadd.f32 %v1341, %v1527
    %v1530 = vadd.f32 %v1342, %v1528
    %v1531 = vld [vmem:[#allocation2] sm:$0xfe]
    %v1532 = vld [vmem:[#allocation2 + $0x8] sm:$0xfe]
    %v1533 = vld [vmem:[#allocation2 + $0x10] sm:$0x1]
    %v1534 = vld [vmem:[#allocation2 + $0x18] sm:$0x1]
    %v1535 = vmul.f32 %v1531, %v1380
    %v1536 = vmul.f32 %v1532, %v1384
    %v1537 = vmul.f32 %v1533, %v1380
    %v1538 = vmul.f32 %v1534, %v1384
    %v1543 = vrot.slane %v1535, 1
    %v1544 = vrot.slane %v1537, 1
    %v1545 = vsel %vm1393, %v1543, %v1544
    %v1546 = vrot.slane %v1536, 1
    %v1547 = vrot.slane %v1538, 1
    %v1548 = vsel %vm1393, %v1546, %v1547
    %v1551 = vadd.f32 %v1529, %v1545
    %v1552 = vadd.f32 %v1530, %v1548
    %v1553 = vld [vmem:[#allocation2] sm:$0xfc]
    %v1554 = vld [vmem:[#allocation2 + $0x8] sm:$0xfc]
    %v1555 = vld [vmem:[#allocation2 + $0x10] sm:$0x3]
    %v1556 = vld [vmem:[#allocation2 + $0x18] sm:$0x3]
    %v1557 = vmul.f32 %v1553, %v1411
    %v1558 = vmul.f32 %v1554, %v1415
    %v1559 = vmul.f32 %v1555, %v1411
    %v1560 = vmul.f32 %v1556, %v1415
    %v1565 = vrot.slane %v1557, 2
    %v1566 = vrot.slane %v1559, 2
    %v1567 = vsel %vm1424, %v1565, %v1566
    %v1568 = vrot.slane %v1558, 2
    %v1569 = vrot.slane %v1560, 2
    %v1570 = vsel %vm1424, %v1568, %v1569
    %v1573 = vadd.f32 %v1551, %v1567
    %v1574 = vadd.f32 %v1552, %v1570
    %v1575 = vld [vmem:[#allocation2] sm:$0xf8]
    %v1576 = vld [vmem:[#allocation2 + $0x8] sm:$0xf8]
    %v1577 = vld [vmem:[#allocation2 + $0x10] sm:$0x7]
    %v1578 = vld [vmem:[#allocation2 + $0x18] sm:$0x7]
    %v1579 = vmul.f32 %v1575, %v1442
    %v1580 = vmul.f32 %v1576, %v1446
    %v1581 = vmul.f32 %v1577, %v1442
    %v1582 = vmul.f32 %v1578, %v1446
    %v1587 = vrot.slane %v1579, 3
    %v1588 = vrot.slane %v1581, 3
    %v1589 = vsel %vm1455, %v1587, %v1588
    %v1590 = vrot.slane %v1580, 3
    %v1591 = vrot.slane %v1582, 3
    %v1592 = vsel %vm1455, %v1590, %v1591
    %v1595 = vadd.f32 %v1573, %v1589
    %v1596 = vadd.f32 %v1574, %v1592
    %v1597 = vld [vmem:[#allocation2] sm:$0xf0]
    %v1598 = vld [vmem:[#allocation2 + $0x8] sm:$0xf0]
    %v1599 = vld [vmem:[#allocation2 + $0x10] sm:$0xf]
    %v1600 = vld [vmem:[#allocation2 + $0x18] sm:$0xf]
    %v1601 = vmul.f32 %v1597, %v1473
    %v1602 = vmul.f32 %v1598, %v1477
    %v1603 = vmul.f32 %v1599, %v1473
    %v1604 = vmul.f32 %v1600, %v1477
    %v1609 = vrot.slane %v1601, 4
    %v1610 = vrot.slane %v1603, 4
    %v1611 = vsel %vm1486, %v1609, %v1610
    %v1612 = vrot.slane %v1602, 4
    %v1613 = vrot.slane %v1604, 4
    %v1614 = vsel %vm1486, %v1612, %v1613
    %v1617 = vadd.f32 %v1595, %v1611
    %v1618 = vadd.f32 %v1596, %v1614
    %v1621 = vcombine.low %v1599, %v1600
    %s1623 = scalar_lea.vmem [#allocation9], 8
    %1624 = vst [vmem:[%s1623] sm:$0xff] %v1621
    %v1625 = vmul.f32 %v1617, %v1337
    %v1626 = vmul.f32 %v1618, %v1337
    %v1627 = vadd.f32 %v105, %v1625
    %v1628 = vadd.f32 %v106, %v1626
    %1629 = vst [vmem:[%s22 + $0x10] sm:$0xff] %v1627
    %1630 = vst [vmem:[%s22 + $0x18] sm:$0xff] %v1628
    %v1631 = vld [vmem:[%s22] sm:$0xff]
    %v1632 = vld [vmem:[%s22 + $0x8] sm:$0xff]
    %v1633 = vld [vmem:[%s22 + $0x10] sm:$0xff]
    %v1634 = vld [vmem:[%s22 + $0x18] sm:$0xff]
    %v1635 = vld [vmem:[%s16] sm:$0x3]
    %v1636 = vld [vmem:[%s17] sm:$0x3]
    %v1637 = vld [vmem:[%s18] sm:$0xff]
    %v1638 = vld [vmem:[%s18 + $0x8] sm:$0xff]
    %v1639 = vld [vmem:[%s18 + $0x10] sm:$0xff]
    %v1640 = vld [vmem:[%s18 + $0x18] sm:$0xff]
    %v1641 = vld [vmem:[%s18 + $0x20] sm:$0xff]
    %v1642 = vld [vmem:[%s18 + $0x28] sm:$0xff]
    %v1643 = vld [vmem:[%s18 + $0x30] sm:$0xff]
    %v1644 = vld [vmem:[%s18 + $0x38] sm:$0xff]
    %v1645 = vld [vmem:[%s18 + $0x40] sm:$0xff]
    %v1646 = vld [vmem:[%s18 + $0x48] sm:$0xff]
    %v1647 = vld [vmem:[%s18 + $0x50] sm:$0xff]
    %v1648 = vld [vmem:[%s18 + $0x58] sm:$0xff]
    %v1649 = vld [vmem:[%s18 + $0x60] sm:$0xff]
    %v1650 = vld [vmem:[%s18 + $0x68] sm:$0xff]
    %v1651 = vld [vmem:[%s18 + $0x70] sm:$0xff]
    %v1652 = vld [vmem:[%s18 + $0x78] sm:$0xff]
    %v1653 = vld [vmem:[%s18 + $0x80] sm:$0xff]
    %v1654 = vld [vmem:[%s18 + $0x88] sm:$0xff]
    %v1655 = vld [vmem:[%s18 + $0x90] sm:$0xff]
    %v1656 = vld [vmem:[%s18 + $0x98] sm:$0xff]
    %v1657 = vld [vmem:[%s18 + $0xa0] sm:$0xff]
    %v1658 = vld [vmem:[%s18 + $0xa8] sm:$0xff]
    %v1659 = vld [vmem:[%s18 + $0xb0] sm:$0xff]
    %v1660 = vld [vmem:[%s18 + $0xb8] sm:$0xff]
    %v1661 = vld [vmem:[%s18 + $0xc0] sm:$0xff]
    %v1662 = vld [vmem:[%s18 + $0xc8] sm:$0xff]
    %v1663 = vld [vmem:[%s18 + $0xd0] sm:$0xff]
    %v1664 = vld [vmem:[%s18 + $0xd8] sm:$0xff]
    %v1665 = vld [vmem:[%s18 + $0xe0] sm:$0xff]
    %v1666 = vld [vmem:[%s18 + $0xe8] sm:$0xff]
    %v1667 = vld [vmem:[%s18 + $0xf0] sm:$0xff]
    %v1668 = vld [vmem:[%s18 + $0xf8] sm:$0xff]
    %v1669 = vld [vmem:[%s19] sm:$0x3]
    %v1670 = vld [vmem:[#allocation7] sm:$0xff]
    %v1671 = vld [vmem:[#allocation7 + $0x8] sm:$0xff]
    %v1672 = vld [vmem:[#allocation7 + $0x10] sm:$0xff]
    %v1673 = vld [vmem:[#allocation7 + $0x18] sm:$0xff]
    %v1674 = vld [vmem:[#allocation7 + $0x20] sm:$0xff]
    %v1675 = vld [vmem:[#allocation7 + $0x28] sm:$0xff]
    %v1676 = vld [vmem:[#allocation7 + $0x30] sm:$0xff]
    %v1677 = vld [vmem:[#allocation7 + $0x38] sm:$0xff]
    %v1678 = vld [vmem:[#allocation7 + $0x40] sm:$0xff]
    %v1679 = vld [vmem:[#allocation7 + $0x48] sm:$0xff]
    %v1680 = vld [vmem:[#allocation7 + $0x50] sm:$0xff]
    %v1681 = vld [vmem:[#allocation7 + $0x58] sm:$0xff]
    %v1682 = vld [vmem:[#allocation7 + $0x60] sm:$0xff]
    %v1683 = vld [vmem:[#allocation7 + $0x68] sm:$0xff]
    %v1684 = vld [vmem:[#allocation7 + $0x70] sm:$0xff]
    %v1685 = vld [vmem:[#allocation7 + $0x78] sm:$0xff]
    %v1686 = vld [vmem:[#allocation7 + $0x80] sm:$0xff]
    %v1687 = vld [vmem:[#allocation7 + $0x88] sm:$0xff]
    %v1688 = vld [vmem:[#allocation7 + $0x90] sm:$0xff]
    %v1689 = vld [vmem:[#allocation7 + $0x98] sm:$0xff]
    %v1690 = vld [vmem:[#allocation7 + $0xa0] sm:$0xff]
    %v1691 = vld [vmem:[#allocation7 + $0xa8] sm:$0xff]
    %v1692 = vld [vmem:[#allocation7 + $0xb0] sm:$0xff]
    %v1693 = vld [vmem:[#allocation7 + $0xb8] sm:$0xff]
    %v1694 = vld [vmem:[#allocation7 + $0xc0] sm:$0xff]
    %v1695 = vld [vmem:[#allocation7 + $0xc8] sm:$0xff]
    %v1696 = vld [vmem:[#allocation7 + $0xd0] sm:$0xff]
    %v1697 = vld [vmem:[#allocation7 + $0xd8] sm:$0xff]
    %v1698 = vld [vmem:[#allocation7 + $0xe0] sm:$0xff]
    %v1699 = vld [vmem:[#allocation7 + $0xe8] sm:$0xff]
    %v1700 = vld [vmem:[#allocation7 + $0xf0] sm:$0xff]
    %v1701 = vld [vmem:[#allocation7 + $0xf8] sm:$0xff]
    %v1702 = vld [vmem:[%s21] sm:$0x3]
    %v1703 = vadd.f32 %v1631, %v1632
    %1704 = vadd.xlane.f32.xlu0 %v1703
    %v1705 = vpop.xlane.xlu0 %1704
    %v1706 = vadd.f32 %v1633, %v1634
    %1707 = vadd.xlane.f32.xlu0 %v1706
    %v1708 = vpop.xlane.xlu0 %1707
    %v1709 = vmul.f32 %v1705, %v252
    %v1710 = vmul.f32 %v1708, %v252
    %v1711 = vsub.f32 %v1631, %v1709
    %v1712 = vsub.f32 %v1632, %v1709
    %v1713 = vsub.f32 %v1633, %v1710
    %v1714 = vsub.f32 %v1634, %v1710
    %v1715 = vmul.f32 %v1711, %v1711
    %v1716 = vmul.f32 %v1712, %v1712
    %v1717 = vmul.f32 %v1713, %v1713
    %v1718 = vmul.f32 %v1714, %v1714
    %v1719 = vadd.f32 %v1715, %v1716
    %1720 = vadd.xlane.f32.xlu0 %v1719
    %v1721 = vpop.xlane.xlu0 %1720
    %v1722 = vadd.f32 %v1717, %v1718
    %1723 = vadd.xlane.f32.xlu0 %v1722
    %v1724 = vpop.xlane.xlu0 %1723
    %v1725 = vmul.f32 %v1721, %v252
    %v1726 = vmul.f32 %v1724, %v252
    %v1727 = vadd.f32 %v1725, 1e-12
    %v1728 = vadd.f32 %v1726, 1e-12
    %v1729 = vrsqrt.pop %v1727
    %v1730 = vrsqrt.pop %v1728
    %v1731 = vmul.f32 %v1711, %v1729
    %v1732 = vmul.f32 %v1712, %v1729
    %v1733 = vmul.f32 %v1713, %v1730
    %v1734 = vmul.f32 %v1714, %v1730
    %v1736 = vlaneseq
    %v1737 = vshrl.u32 %v1736, 7
    %v1738 = vsub.s32 0, %v1737
    %v1739 = vrot.slane %v1635, %v1738
    %v1740 = vlaneseq
    %v1741 = vshrl.u32 %v1740, 7
    %v1742 = vsub.s32 1, %v1741
    %v1743 = vrot.slane %v1635, %v1742
    %v1746 = vmul.f32 %v1731, %v1739
    %v1747 = vmul.f32 %v1732, %v1743
    %v1748 = vmul.f32 %v1733, %v1739
    %v1749 = vmul.f32 %v1734, %v1743
    %v1751 = vlaneseq
    %v1752 = vshrl.u32 %v1751, 7
    %v1753 = vsub.s32 0, %v1752
    %v1754 = vrot.slane %v1636, %v1753
    %v1755 = vlaneseq
    %v1756 = vshrl.u32 %v1755, 7
    %v1757 = vsub.s32 1, %v1756
    %v1758 = vrot.slane %v1636, %v1757
    %v1761 = vadd.f32 %v1746, %v1754
    %v1762 = vadd.f32 %v1747, %v1758
    %v1763 = vadd.f32 %v1748, %v1754
    %v1764 = vadd.f32 %v1749, %v1758
    %v1765 = vpack.c.bf16 %v1763, %v1761
    %v1766 = vpack.c.bf16 %v1764, %v1762
    %v1768 = vlaneseq
    %v1769 = vshrl.u32 %v1768, 7
    %v1770 = vsub.s32 0, %v1769
    %v1771 = vrot.slane %v1669, %v1770
    %v1772 = vlaneseq
    %v1773 = vshrl.u32 %v1772, 7
    %v1774 = vsub.s32 1, %v1773
    %v1775 = vrot.slane %v1669, %v1774
    %v1810 = vunpack.c.l.b16 %v1637
    %v1811 = vunpack.c.h.b16 %v1637
    %v1812 = vunpack.c.l.b16 %v1638
    %v1813 = vunpack.c.h.b16 %v1638
    %v1814 = vunpack.c.l.b16 %v1639
    %v1815 = vunpack.c.h.b16 %v1639
    %v1816 = vunpack.c.l.b16 %v1640
    %v1817 = vunpack.c.h.b16 %v1640
    %v1818 = vunpack.c.l.b16 %v1641
    %v1819 = vunpack.c.h.b16 %v1641
    %v1820 = vunpack.c.l.b16 %v1642
    %v1821 = vunpack.c.h.b16 %v1642
    %v1822 = vunpack.c.l.b16 %v1643
    %v1823 = vunpack.c.h.b16 %v1643
    %v1824 = vunpack.c.l.b16 %v1644
    %v1825 = vunpack.c.h.b16 %v1644
    %v1826 = vunpack.c.l.b16 %v1645
    %v1827 = vunpack.c.h.b16 %v1645
    %v1828 = vunpack.c.l.b16 %v1646
    %v1829 = vunpack.c.h.b16 %v1646
    %v1830 = vunpack.c.l.b16 %v1647
    %v1831 = vunpack.c.h.b16 %v1647
    %v1832 = vunpack.c.l.b16 %v1648
    %v1833 = vunpack.c.h.b16 %v1648
    %v1834 = vunpack.c.l.b16 %v1649
    %v1835 = vunpack.c.h.b16 %v1649
    %v1836 = vunpack.c.l.b16 %v1650
    %v1837 = vunpack.c.h.b16 %v1650
    %v1838 = vunpack.c.l.b16 %v1651
    %v1839 = vunpack.c.h.b16 %v1651
    %v1840 = vunpack.c.l.b16 %v1652
    %v1841 = vunpack.c.h.b16 %v1652
    %v1842 = vunpack.c.l.b16 %v1653
    %v1843 = vunpack.c.h.b16 %v1653
    %v1844 = vunpack.c.l.b16 %v1654
    %v1845 = vunpack.c.h.b16 %v1654
    %v1846 = vunpack.c.l.b16 %v1655
    %v1847 = vunpack.c.h.b16 %v1655
    %v1848 = vunpack.c.l.b16 %v1656
    %v1849 = vunpack.c.h.b16 %v1656
    %v1850 = vunpack.c.l.b16 %v1657
    %v1851 = vunpack.c.h.b16 %v1657
    %v1852 = vunpack.c.l.b16 %v1658
    %v1853 = vunpack.c.h.b16 %v1658
    %v1854 = vunpack.c.l.b16 %v1659
    %v1855 = vunpack.c.h.b16 %v1659
    %v1856 = vunpack.c.l.b16 %v1660
    %v1857 = vunpack.c.h.b16 %v1660
    %v1858 = vunpack.c.l.b16 %v1661
    %v1859 = vunpack.c.h.b16 %v1661
    %v1860 = vunpack.c.l.b16 %v1662
    %v1861 = vunpack.c.h.b16 %v1662
    %v1862 = vunpack.c.l.b16 %v1663
    %v1863 = vunpack.c.h.b16 %v1663
    %v1864 = vunpack.c.l.b16 %v1664
    %v1865 = vunpack.c.h.b16 %v1664
    %v1866 = vunpack.c.l.b16 %v1665
    %v1867 = vunpack.c.h.b16 %v1665
    %v1868 = vunpack.c.l.b16 %v1666
    %v1869 = vunpack.c.h.b16 %v1666
    %v1870 = vunpack.c.l.b16 %v1667
    %v1871 = vunpack.c.h.b16 %v1667
    %v1872 = vunpack.c.l.b16 %v1668
    %v1873 = vunpack.c.h.b16 %v1668
    %v1874 = vpack.c.b16 %v1812, %v1810
    %v1875 = vpack.c.b16 %v1813, %v1811
    %v1876 = vpack.c.b16 %v1816, %v1814
    %v1877 = vpack.c.b16 %v1817, %v1815
    %v1878 = vpack.c.b16 %v1820, %v1818
    %v1879 = vpack.c.b16 %v1821, %v1819
    %v1880 = vpack.c.b16 %v1824, %v1822
    %v1881 = vpack.c.b16 %v1825, %v1823
    %v1882 = vpack.c.b16 %v1828, %v1826
    %v1883 = vpack.c.b16 %v1829, %v1827
    %v1884 = vpack.c.b16 %v1832, %v1830
    %v1885 = vpack.c.b16 %v1833, %v1831
    %v1886 = vpack.c.b16 %v1836, %v1834
    %v1887 = vpack.c.b16 %v1837, %v1835
    %v1888 = vpack.c.b16 %v1840, %v1838
    %v1889 = vpack.c.b16 %v1841, %v1839
    %v1890 = vpack.c.b16 %v1844, %v1842
    %v1891 = vpack.c.b16 %v1845, %v1843
    %v1892 = vpack.c.b16 %v1848, %v1846
    %v1893 = vpack.c.b16 %v1849, %v1847
    %v1894 = vpack.c.b16 %v1852, %v1850
    %v1895 = vpack.c.b16 %v1853, %v1851
    %v1896 = vpack.c.b16 %v1856, %v1854
    %v1897 = vpack.c.b16 %v1857, %v1855
    %v1898 = vpack.c.b16 %v1860, %v1858
    %v1899 = vpack.c.b16 %v1861, %v1859
    %v1900 = vpack.c.b16 %v1864, %v1862
    %v1901 = vpack.c.b16 %v1865, %v1863
    %v1902 = vpack.c.b16 %v1868, %v1866
    %v1903 = vpack.c.b16 %v1869, %v1867
    %v1904 = vpack.c.b16 %v1872, %v1870
    %v1905 = vpack.c.b16 %v1873, %v1871
    %1938 = vmatprep.subr.bf16.mxu0 %v1875
    %1939 = vmatpush1.bf16.msra.mxu0 %v1874
    %1940 = vmatprep.subr.bf16.mxu0 %v1877
    %1941 = vmatpush1.bf16.msra.mxu0 %v1876
    %1942 = vmatprep.subr.bf16.mxu0 %v1879
    %1943 = vmatpush1.bf16.msra.mxu0 %v1878
    %1944 = vmatprep.subr.bf16.mxu0 %v1881
    %1945 = vmatpush1.bf16.msra.mxu0 %v1880
    %1946 = vmatprep.subr.bf16.mxu0 %v1883
    %1947 = vmatpush1.bf16.msra.mxu0 %v1882
    %1948 = vmatprep.subr.bf16.mxu0 %v1885
    %1949 = vmatpush1.bf16.msra.mxu0 %v1884
    %1950 = vmatprep.subr.bf16.mxu0 %v1887
    %1951 = vmatpush1.bf16.msra.mxu0 %v1886
    %1952 = vmatprep.subr.bf16.mxu0 %v1889
    %1953 = vmatpush1.bf16.msra.mxu0 %v1888
    %1954 = vmatprep.subr.bf16.mxu0 %v1891
    %1955 = vmatpush1.bf16.msra.mxu0 %v1890
    %1956 = vmatprep.subr.bf16.mxu0 %v1893
    %1957 = vmatpush1.bf16.msra.mxu0 %v1892
    %1958 = vmatprep.subr.bf16.mxu0 %v1895
    %1959 = vmatpush1.bf16.msra.mxu0 %v1894
    %1960 = vmatprep.subr.bf16.mxu0 %v1897
    %1961 = vmatpush1.bf16.msra.mxu0 %v1896
    %1962 = vmatprep.subr.bf16.mxu0 %v1899
    %1963 = vmatpush1.bf16.msra.mxu0 %v1898
    %1964 = vmatprep.subr.bf16.mxu0 %v1901
    %1965 = vmatpush1.bf16.msra.mxu0 %v1900
    %1966 = vmatprep.subr.bf16.mxu0 %v1903
    %1967 = vmatpush1.bf16.msra.mxu0 %v1902
    %1968 = vmatprep.subr.bf16.mxu0 %v1905
    %1969 = vmatpush1.bf16.msra.mxu0 %v1904
    %1970 = vmatprep.mubr.bf16.mxu0 %v1766
    %1971 = vmatmul.mubr.bf16.gmra.mrb[0].mxu0 %v1765
    %v1972 = vpop.f32.mrb[0].mxu0
    %v1973 = vadd.f32 %v1771, %v1972
    %v1974 = vpop.f32.mrb[0].mxu0
    %v1975 = vadd.f32 %v1775, %v1974
    %v1976 = vpop.f32.mrb[0].mxu0
    %v1977 = vadd.f32 %v1771, %v1976
    %v1978 = vpop.f32.mrb[0].mxu0
    %v1979 = vadd.f32 %v1775, %v1978
    %1980 = vdwg.mxu0
    %v1981 = vmul.f32 %v1973, 0.088388346
    %v1982 = vmul.f32 %v1975, 0.088388346
    %v1983 = vmul.f32 %v1977, 0.088388346
    %v1984 = vmul.f32 %v1979, 0.088388346
    %v1985 = vld [vmem:[%s4] sm:$0xf]
    %v1986 = vld [vmem:[%s4 + $0x4] sm:$0xf]
    %v1987 = vld [vmem:[%s4 + $0x8] sm:$0xf]
    %v1988 = vld [vmem:[%s4 + $0xc] sm:$0xf]
    %v1989 = vld [vmem:[%s4 + $0x10] sm:$0xf]
    %v1990 = vld [vmem:[%s4 + $0x14] sm:$0xf]
    %v1991 = vld [vmem:[%s4 + $0x18] sm:$0xf]
    %v1992 = vld [vmem:[%s4 + $0x1c] sm:$0xf]
    %v1993 = vld [vmem:[%s4 + $0x20] sm:$0xf]
    %v1994 = vld [vmem:[%s4 + $0x24] sm:$0xf]
    %v1995 = vld [vmem:[%s4 + $0x28] sm:$0xf]
    %v1996 = vld [vmem:[%s4 + $0x2c] sm:$0xf]
    %v1997 = vld [vmem:[%s4 + $0x30] sm:$0xf]
    %v1998 = vld [vmem:[%s4 + $0x34] sm:$0xf]
    %v1999 = vld [vmem:[%s4 + $0x38] sm:$0xf]
    %v2000 = vld [vmem:[%s4 + $0x3c] sm:$0xf]
    %v2001 = vld [vmem:[%s4 + $0x40] sm:$0xf]
    %v2002 = vld [vmem:[%s4 + $0x44] sm:$0xf]
    %v2003 = vld [vmem:[%s4 + $0x48] sm:$0xf]
    %v2004 = vld [vmem:[%s4 + $0x4c] sm:$0xf]
    %v2005 = vld [vmem:[%s4 + $0x50] sm:$0xf]
    %v2006 = vld [vmem:[%s4 + $0x54] sm:$0xf]
    %v2007 = vld [vmem:[%s4 + $0x58] sm:$0xf]
    %v2008 = vld [vmem:[%s4 + $0x5c] sm:$0xf]
    %v2009 = vld [vmem:[%s4 + $0x60] sm:$0xf]
    %v2010 = vld [vmem:[%s4 + $0x64] sm:$0xf]
    %v2011 = vld [vmem:[%s4 + $0x68] sm:$0xf]
    %v2012 = vld [vmem:[%s4 + $0x6c] sm:$0xf]
    %v2013 = vld [vmem:[%s4 + $0x70] sm:$0xf]
    %v2014 = vld [vmem:[%s4 + $0x74] sm:$0xf]
    %v2015 = vld [vmem:[%s4 + $0x78] sm:$0xf]
    %v2016 = vld [vmem:[%s4 + $0x7c] sm:$0xf]
    %v2017 = vld [vmem:[%s5] sm:$0xff]
    %v2018 = vld [vmem:[%s5 + $0x8] sm:$0xff]
    %v2019 = vld [vmem:[%s3] sm:$0x1]
    %v2020 = vpack.c.bf16 %v1981, %v1981
    %v2022 = vlaneseq
    %v2023 = vshrl.u32 %v2022, 7
    %v2024 = vsub.s32 0, %v2023
    %v2025 = vrot.slane %v2019, %v2024
    %v2043 = vunpack.c.l.b16 %v1985
    %v2044 = vunpack.c.l.b16 %v1986
    %v2045 = vunpack.c.l.b16 %v1987
    %v2046 = vunpack.c.l.b16 %v1988
    %v2047 = vunpack.c.l.b16 %v1989
    %v2048 = vunpack.c.l.b16 %v1990
    %v2049 = vunpack.c.l.b16 %v1991
    %v2050 = vunpack.c.l.b16 %v1992
    %v2051 = vunpack.c.l.b16 %v1993
    %v2052 = vunpack.c.l.b16 %v1994
    %v2053 = vunpack.c.l.b16 %v1995
    %v2054 = vunpack.c.l.b16 %v1996
    %v2055 = vunpack.c.l.b16 %v1997
    %v2056 = vunpack.c.l.b16 %v1998
    %v2057 = vunpack.c.l.b16 %v1999
    %v2058 = vunpack.c.l.b16 %v2000
    %v2059 = vpack.c.b16 %v2044, %v2043
    %v2060 = vpack.c.b16 %v2046, %v2045
    %v2061 = vpack.c.b16 %v2048, %v2047
    %v2062 = vpack.c.b16 %v2050, %v2049
    %v2063 = vpack.c.b16 %v2052, %v2051
    %v2064 = vpack.c.b16 %v2054, %v2053
    %v2065 = vpack.c.b16 %v2056, %v2055
    %v2066 = vpack.c.b16 %v2058, %v2057
    %2075 = vmatprep.subr.bf16.mxu0 0
    %2076 = vmatpush1.bf16.msra.mxu0 %v2059
    %2077 = vmatprep.subr.bf16.mxu0 0
    %2078 = vmatpush1.bf16.msra.mxu0 %v2060
    %2079 = vmatprep.subr.bf16.mxu0 0
    %2080 = vmatpush1.bf16.msra.mxu0 %v2061
    %2081 = vmatprep.subr.bf16.mxu0 0
    %2082 = vmatpush1.bf16.msra.mxu0 %v2062
    %2083 = vmatprep.subr.bf16.mxu0 0
    %2084 = vmatpush1.bf16.msra.mxu0 %v2063
    %2085 = vmatprep.subr.bf16.mxu0 0
    %2086 = vmatpush1.bf16.msra.mxu0 %v2064
    %2087 = vmatprep.subr.bf16.mxu0 0
    %2088 = vmatpush1.bf16.msra.mxu0 %v2065
    %2089 = vmatprep.subr.bf16.mxu0 0
    %2090 = vmatpush1.bf16.msra.mxu0 %v2066
    %2091 = vmatprep.subr.bf16.mxu0 0
    %2092 = vmatpush1.bf16.msra.mxu0 0
    %2093 = vmatprep.subr.bf16.mxu0 0
    %2094 = vmatpush1.bf16.msra.mxu0 0
    %2095 = vmatprep.subr.bf16.mxu0 0
    %2096 = vmatpush1.bf16.msra.mxu0 0
    %2097 = vmatprep.subr.bf16.mxu0 0
    %2098 = vmatpush1.bf16.msra.mxu0 0
    %2099 = vmatprep.subr.bf16.mxu0 0
    %2100 = vmatpush1.bf16.msra.mxu0 0
    %2101 = vmatprep.subr.bf16.mxu0 0
    %2102 = vmatpush1.bf16.msra.mxu0 0
    %2103 = vmatprep.subr.bf16.mxu0 0
    %2104 = vmatpush1.bf16.msra.mxu0 0
    %2105 = vmatprep.subr.bf16.mxu0 0
    %2106 = vmatpush1.bf16.msra.mxu0 0
    %2107 = vmatprep.mubr.bf16.mxu0 0
    %2108 = vmatmul.mubr.bf16.gmra.mrb[0].mxu0 %v2020
    %v2109 = vpop.f32.mrb[0].mxu0
    %v2110 = vadd.f32 %v2025, %v2109
    %v2111 = vpop.f32.mrb[0].mxu0
    %v2112 = vpop.f32.mrb[0].mxu0
    %v2113 = vpop.f32.mrb[0].mxu0
    %2114 = vdwg.mxu0
    %vm2115 = vcmask 130048
    %v2116 = vsel %vm2115, %v2110, -inf
    %2117 = vmax.xlane.f32.xlu0 %v2116
    %v2118 = vpop.xlane.xlu0 %2117
    %v2119 = vsub.f32 %v2110, %v2118
    %v2120 = vmul.f32 %v2119, 1.442695
    %v2121 = vpow.pop %v2120
    %v2122 = vsel %vm2115, %v2121, 0.0
    %2123 = vadd.xlane.f32.xlu0 %v2122
    %v2124 = vpop.xlane.xlu0 %2123
    %v2125 = vrcp.pop %v2124
    %v2126 = vmul.f32 %v2121, %v2125
    %v2127 = vpack.c.bf16 %v2126, %v2126
    %v2130 = vunpack.c.l.b16 %v2017
    %v2131 = vunpack.c.l.b16 %v2018
    %v2132 = vpack.c.b16 %v2131, %v2130
    %v2135 = vsel %vm2115, %v2127, 0
    %2137 = vmatprep.subr.bf16.mxu0 0
    %2138 = vmatpush1.bf16.msra.mxu0 %v2132
    %2139 = vmatprep.subr.bf16.mxu0 0
    %2140 = vmatpush1.bf16.msra.mxu0 0
    %2141 = vmatprep.subr.bf16.mxu0 0
    %2142 = vmatpush1.bf16.msra.mxu0 0
    %2143 = vmatprep.subr.bf16.mxu0 0
    %2144 = vmatpush1.bf16.msra.mxu0 0
    %2145 = vmatprep.subr.bf16.mxu0 0
    %2146 = vmatpush1.bf16.msra.mxu0 0
    %2147 = vmatprep.subr.bf16.mxu0 0
    %2148 = vmatpush1.bf16.msra.mxu0 0
    %2149 = vmatprep.subr.bf16.mxu0 0
    %2150 = vmatpush1.bf16.msra.mxu0 0
    %2151 = vmatprep.subr.bf16.mxu0 0
    %2152 = vmatpush1.bf16.msra.mxu0 0
    %2153 = vmatprep.subr.bf16.mxu0 0
    %2154 = vmatpush1.bf16.msra.mxu0 0
    %2155 = vmatprep.subr.bf16.mxu0 0
    %2156 = vmatpush1.bf16.msra.mxu0 0
    %2157 = vmatprep.subr.bf16.mxu0 0
    %2158 = vmatpush1.bf16.msra.mxu0 0
    %2159 = vmatprep.subr.bf16.mxu0 0
    %2160 = vmatpush1.bf16.msra.mxu0 0
    %2161 = vmatprep.subr.bf16.mxu0 0
    %2162 = vmatpush1.bf16.msra.mxu0 0
    %2163 = vmatprep.subr.bf16.mxu0 0
    %2164 = vmatpush1.bf16.msra.mxu0 0
    %2165 = vmatprep.subr.bf16.mxu0 0
    %2166 = vmatpush1.bf16.msra.mxu0 0
    %2167 = vmatprep.subr.bf16.mxu0 0
    %2168 = vmatpush1.bf16.msra.mxu0 0
    %2169 = vmatprep.mubr.bf16.mxu0 0
    %2170 = vmatmul.mubr.bf16.gmra.mrb[0].mxu0 %v2135
    %v2171 = vpop.f32.mrb[0].mxu0
    %v2172 = vadd.f32 0.0, %v2171
    %v2173 = vpop.f32.mrb[0].mxu0
    %v2174 = vpop.f32.mrb[0].mxu0
    %v2175 = vpop.f32.mrb[0].mxu0
    %2176 = vdwg.mxu0
    %v2177 = vpack.c.bf16 %v1982, %v1982
    %v2194 = vunpack.c.l.b16 %v2001
    %v2195 = vunpack.c.l.b16 %v2002
    %v2196 = vunpack.c.l.b16 %v2003
    %v2197 = vunpack.c.l.b16 %v2004
    %v2198 = vunpack.c.l.b16 %v2005
    %v2199 = vunpack.c.l.b16 %v2006
    %v2200 = vunpack.c.l.b16 %v2007
    %v2201 = vunpack.c.l.b16 %v2008
    %v2202 = vunpack.c.l.b16 %v2009
    %v2203 = vunpack.c.l.b16 %v2010
    %v2204 = vunpack.c.l.b16 %v2011
    %v2205 = vunpack.c.l.b16 %v2012
    %v2206 = vunpack.c.l.b16 %v2013
    %v2207 = vunpack.c.l.b16 %v2014
    %v2208 = vunpack.c.l.b16 %v2015
    %v2209 = vunpack.c.l.b16 %v2016
    %v2210 = vpack.c.b16 %v2195, %v2194
    %v2211 = vpack.c.b16 %v2197, %v2196
    %v2212 = vpack.c.b16 %v2199, %v2198
    %v2213 = vpack.c.b16 %v2201, %v2200
    %v2214 = vpack.c.b16 %v2203, %v2202
    %v2215 = vpack.c.b16 %v2205, %v2204
    %v2216 = vpack.c.b16 %v2207, %v2206
    %v2217 = vpack.c.b16 %v2209, %v2208
    %2226 = vmatprep.subr.bf16.mxu0 0
    %2227 = vmatpush1.bf16.msra.mxu0 %v2210
    %2228 = vmatprep.subr.bf16.mxu0 0
    %2229 = vmatpush1.bf16.msra.mxu0 %v2211
    %2230 = vmatprep.subr.bf16.mxu0 0
    %2231 = vmatpush1.bf16.msra.mxu0 %v2212
    %2232 = vmatprep.subr.bf16.mxu0 0
    %2233 = vmatpush1.bf16.msra.mxu0 %v2213
    %2234 = vmatprep.subr.bf16.mxu0 0
    %2235 = vmatpush1.bf16.msra.mxu0 %v2214
    %2236 = vmatprep.subr.bf16.mxu0 0
    %2237 = vmatpush1.bf16.msra.mxu0 %v2215
    %2238 = vmatprep.subr.bf16.mxu0 0
    %2239 = vmatpush1.bf16.msra.mxu0 %v2216
    %2240 = vmatprep.subr.bf16.mxu0 0
    %2241 = vmatpush1.bf16.msra.mxu0 %v2217
    %2242 = vmatprep.subr.bf16.mxu0 0
    %2243 = vmatpush1.bf16.msra.mxu0 0
    %2244 = vmatprep.subr.bf16.mxu0 0
    %2245 = vmatpush1.bf16.msra.mxu0 0
    %2246 = vmatprep.subr.bf16.mxu0 0
    %2247 = vmatpush1.bf16.msra.mxu0 0
    %2248 = vmatprep.subr.bf16.mxu0 0
    %2249 = vmatpush1.bf16.msra.mxu0 0
    %2250 = vmatprep.subr.bf16.mxu0 0
    %2251 = vmatpush1.bf16.msra.mxu0 0
    %2252 = vmatprep.subr.bf16.mxu0 0
    %2253 = vmatpush1.bf16.msra.mxu0 0
    %2254 = vmatprep.subr.bf16.mxu0 0
    %2255 = vmatpush1.bf16.msra.mxu0 0
    %2256 = vmatprep.subr.bf16.mxu0 0
    %2257 = vmatpush1.bf16.msra.mxu0 0
    %2258 = vmatprep.mubr.bf16.mxu0 0
    %2259 = vmatmul.mubr.bf16.gmra.mrb[0].mxu0 %v2177
    %v2260 = vpop.f32.mrb[0].mxu0
    %v2261 = vadd.f32 %v2025, %v2260
    %v2262 = vpop.f32.mrb[0].mxu0
    %v2263 = vpop.f32.mrb[0].mxu0
    %v2264 = vpop.f32.mrb[0].mxu0
    %2265 = vdwg.mxu0
    %v2266 = vsel %vm2115, %v2261, -inf
    %2267 = vmax.xlane.f32.xlu0 %v2266
    %v2268 = vpop.xlane.xlu0 %2267
    %v2269 = vsub.f32 %v2261, %v2268
    %v2270 = vmul.f32 %v2269, 1.442695
    %v2271 = vpow.pop %v2270
    %v2272 = vsel %vm2115, %v2271, 0.0
    %2273 = vadd.xlane.f32.xlu0 %v2272
    %v2274 = vpop.xlane.xlu0 %2273
    %v2275 = vrcp.pop %v2274
    %v2276 = vmul.f32 %v2271, %v2275
    %v2277 = vpack.c.bf16 %v2276, %v2276
    %v2278 = vunpack.c.h.b16 %v2017
    %v2279 = vunpack.c.h.b16 %v2018
    %v2280 = vpack.c.b16 %v2279, %v2278
    %v2283 = vsel %vm2115, %v2277, 0
    %2285 = vmatprep.subr.bf16.mxu0 0
    %2286 = vmatpush1.bf16.msra.mxu0 %v2280
    %2287 = vmatprep.subr.bf16.mxu0 0
    %2288 = vmatpush1.bf16.msra.mxu0 0
    %2289 = vmatprep.subr.bf16.mxu0 0
    %2290 = vmatpush1.bf16.msra.mxu0 0
    %2291 = vmatprep.subr.bf16.mxu0 0
    %2292 = vmatpush1.bf16.msra.mxu0 0
    %2293 = vmatprep.subr.bf16.mxu0 0
    %2294 = vmatpush1.bf16.msra.mxu0 0
    %2295 = vmatprep.subr.bf16.mxu0 0
    %2296 = vmatpush1.bf16.msra.mxu0 0
    %2297 = vmatprep.subr.bf16.mxu0 0
    %2298 = vmatpush1.bf16.msra.mxu0 0
    %2299 = vmatprep.subr.bf16.mxu0 0
    %2300 = vmatpush1.bf16.msra.mxu0 0
    %2301 = vmatprep.subr.bf16.mxu0 0
    %2302 = vmatpush1.bf16.msra.mxu0 0
    %2303 = vmatprep.subr.bf16.mxu0 0
    %2304 = vmatpush1.bf16.msra.mxu0 0
    %2305 = vmatprep.subr.bf16.mxu0 0
    %2306 = vmatpush1.bf16.msra.mxu0 0
    %2307 = vmatprep.subr.bf16.mxu0 0
    %2308 = vmatpush1.bf16.msra.mxu0 0
    %2309 = vmatprep.subr.bf16.mxu0 0
    %2310 = vmatpush1.bf16.msra.mxu0 0
    %2311 = vmatprep.subr.bf16.mxu0 0
    %2312 = vmatpush1.bf16.msra.mxu0 0
    %2313 = vmatprep.subr.bf16.mxu0 0
    %2314 = vmatpush1.bf16.msra.mxu0 0
    %2315 = vmatprep.subr.bf16.mxu0 0
    %2316 = vmatpush1.bf16.msra.mxu0 0
    %2317 = vmatprep.mubr.bf16.mxu0 0
    %2318 = vmatmul.mubr.bf16.gmra.mrb[0].mxu0 %v2283
    %v2319 = vpop.f32.mrb[0].mxu0
    %v2320 = vadd.f32 0.0, %v2319
    %v2321 = vpop.f32.mrb[0].mxu0
    %v2322 = vpop.f32.mrb[0].mxu0
    %v2323 = vpop.f32.mrb[0].mxu0
    %2324 = vdwg.mxu0
    %2325 = vst [vmem:[#allocation3] sm:$0xff] %v2172
    %2326 = vst [vmem:[#allocation3 + $0x8] sm:$0xff] %v2320
    %s2327 = scalar_lea.vmem %s4, 128
    %v2328 = vld [vmem:[%s2327] sm:$0xf]
    %v2329 = vld [vmem:[%s2327 + $0x4] sm:$0xf]
    %v2330 = vld [vmem:[%s2327 + $0x8] sm:$0xf]
    %v2331 = vld [vmem:[%s2327 + $0xc] sm:$0xf]
    %v2332 = vld [vmem:[%s2327 + $0x10] sm:$0xf]
    %v2333 = vld [vmem:[%s2327 + $0x14] sm:$0xf]
    %v2334 = vld [vmem:[%s2327 + $0x18] sm:$0xf]
    %v2335 = vld [vmem:[%s2327 + $0x1c] sm:$0xf]
    %v2336 = vld [vmem:[%s2327 + $0x20] sm:$0xf]
    %v2337 = vld [vmem:[%s2327 + $0x24] sm:$0xf]
    %v2338 = vld [vmem:[%s2327 + $0x28] sm:$0xf]
    %v2339 = vld [vmem:[%s2327 + $0x2c] sm:$0xf]
    %v2340 = vld [vmem:[%s2327 + $0x30] sm:$0xf]
    %v2341 = vld [vmem:[%s2327 + $0x34] sm:$0xf]
    %v2342 = vld [vmem:[%s2327 + $0x38] sm:$0xf]
    %v2343 = vld [vmem:[%s2327 + $0x3c] sm:$0xf]
    %v2344 = vld [vmem:[%s2327 + $0x40] sm:$0xf]
    %v2345 = vld [vmem:[%s2327 + $0x44] sm:$0xf]
    %v2346 = vld [vmem:[%s2327 + $0x48] sm:$0xf]
    %v2347 = vld [vmem:[%s2327 + $0x4c] sm:$0xf]
    %v2348 = vld [vmem:[%s2327 + $0x50] sm:$0xf]
    %v2349 = vld [vmem:[%s2327 + $0x54] sm:$0xf]
    %v2350 = vld [vmem:[%s2327 + $0x58] sm:$0xf]
    %v2351 = vld [vmem:[%s2327 + $0x5c] sm:$0xf]
    %v2352 = vld [vmem:[%s2327 + $0x60] sm:$0xf]
    %v2353 = vld [vmem:[%s2327 + $0x64] sm:$0xf]
    %v2354 = vld [vmem:[%s2327 + $0x68] sm:$0xf]
    %v2355 = vld [vmem:[%s2327 + $0x6c] sm:$0xf]
    %v2356 = vld [vmem:[%s2327 + $0x70] sm:$0xf]
    %v2357 = vld [vmem:[%s2327 + $0x74] sm:$0xf]
    %v2358 = vld [vmem:[%s2327 + $0x78] sm:$0xf]
    %v2359 = vld [vmem:[%s2327 + $0x7c] sm:$0xf]
    %s2360 = scalar_lea.vmem %s5, 16
    %v2361 = vld [vmem:[%s2360] sm:$0xff]
    %v2362 = vld [vmem:[%s2360 + $0x8] sm:$0xff]
    %s2363 = scalar_lea.vmem %s3, 1
    %v2364 = vld [vmem:[%s2363] sm:$0x1]
    %v2365 = vpack.c.bf16 %v1983, %v1983
    %v2367 = vlaneseq
    %v2368 = vshrl.u32 %v2367, 7
    %v2369 = vsub.s32 0, %v2368
    %v2370 = vrot.slane %v2364, %v2369
    %v2388 = vunpack.c.l.b16 %v2328
    %v2389 = vunpack.c.l.b16 %v2329
    %v2390 = vunpack.c.l.b16 %v2330
    %v2391 = vunpack.c.l.b16 %v2331
    %v2392 = vunpack.c.l.b16 %v2332
    %v2393 = vunpack.c.l.b16 %v2333
    %v2394 = vunpack.c.l.b16 %v2334
    %v2395 = vunpack.c.l.b16 %v2335
    %v2396 = vunpack.c.l.b16 %v2336
    %v2397 = vunpack.c.l.b16 %v2337
    %v2398 = vunpack.c.l.b16 %v2338
    %v2399 = vunpack.c.l.b16 %v2339
    %v2400 = vunpack.c.l.b16 %v2340
    %v2401 = vunpack.c.l.b16 %v2341
    %v2402 = vunpack.c.l.b16 %v2342
    %v2403 = vunpack.c.l.b16 %v2343
    %v2404 = vpack.c.b16 %v2389, %v2388
    %v2405 = vpack.c.b16 %v2391, %v2390
    %v2406 = vpack.c.b16 %v2393, %v2392
    %v2407 = vpack.c.b16 %v2395, %v2394
    %v2408 = vpack.c.b16 %v2397, %v2396
    %v2409 = vpack.c.b16 %v2399, %v2398
    %v2410 = vpack.c.b16 %v2401, %v2400
    %v2411 = vpack.c.b16 %v2403, %v2402
    %2420 = vmatprep.subr.bf16.mxu0 0
    %2421 = vmatpush1.bf16.msra.mxu0 %v2404
    %2422 = vmatprep.subr.bf16.mxu0 0
    %2423 = vmatpush1.bf16.msra.mxu0 %v2405
    %2424 = vmatprep.subr.bf16.mxu0 0
    %2425 = vmatpush1.bf16.msra.mxu0 %v2406
    %2426 = vmatprep.subr.bf16.mxu0 0
    %2427 = vmatpush1.bf16.msra.mxu0 %v2407
    %2428 = vmatprep.subr.bf16.mxu0 0
    %2429 = vmatpush1.bf16.msra.mxu0 %v2408
    %2430 = vmatprep.subr.bf16.mxu0 0
    %2431 = vmatpush1.bf16.msra.mxu0 %v2409
    %2432 = vmatprep.subr.bf16.mxu0 0
    %2433 = vmatpush1.bf16.msra.mxu0 %v2410
    %2434 = vmatprep.subr.bf16.mxu0 0
    %2435 = vmatpush1.bf16.msra.mxu0 %v2411
    %2436 = vmatprep.subr.bf16.mxu0 0
    %2437 = vmatpush1.bf16.msra.mxu0 0
    %2438 = vmatprep.subr.bf16.mxu0 0
    %2439 = vmatpush1.bf16.msra.mxu0 0
    %2440 = vmatprep.subr.bf16.mxu0 0
    %2441 = vmatpush1.bf16.msra.mxu0 0
    %2442 = vmatprep.subr.bf16.mxu0 0
    %2443 = vmatpush1.bf16.msra.mxu0 0
    %2444 = vmatprep.subr.bf16.mxu0 0
    %2445 = vmatpush1.bf16.msra.mxu0 0
    %2446 = vmatprep.subr.bf16.mxu0 0
    %2447 = vmatpush1.bf16.msra.mxu0 0
    %2448 = vmatprep.subr.bf16.mxu0 0
    %2449 = vmatpush1.bf16.msra.mxu0 0
    %2450 = vmatprep.subr.bf16.mxu0 0
    %2451 = vmatpush1.bf16.msra.mxu0 0
    %2452 = vmatprep.mubr.bf16.mxu0 0
    %2453 = vmatmul.mubr.bf16.gmra.mrb[0].mxu0 %v2365
    %v2454 = vpop.f32.mrb[0].mxu0
    %v2455 = vadd.f32 %v2370, %v2454
    %v2456 = vpop.f32.mrb[0].mxu0
    %v2457 = vpop.f32.mrb[0].mxu0
    %v2458 = vpop.f32.mrb[0].mxu0
    %2459 = vdwg.mxu0
    %v2460 = vsel %vm2115, %v2455, -inf
    %2461 = vmax.xlane.f32.xlu0 %v2460
    %v2462 = vpop.xlane.xlu0 %2461
    %v2463 = vsub.f32 %v2455, %v2462
    %v2464 = vmul.f32 %v2463, 1.442695
    %v2465 = vpow.pop %v2464
    %v2466 = vsel %vm2115, %v2465, 0.0
    %2467 = vadd.xlane.f32.xlu0 %v2466
    %v2468 = vpop.xlane.xlu0 %2467
    %v2469 = vrcp.pop %v2468
    %v2470 = vmul.f32 %v2465, %v2469
    %v2471 = vpack.c.bf16 %v2470, %v2470
    %v2474 = vunpack.c.l.b16 %v2361
    %v2475 = vunpack.c.l.b16 %v2362
    %v2476 = vpack.c.b16 %v2475, %v2474
    %v2479 = vsel %vm2115, %v2471, 0
    %2481 = vmatprep.subr.bf16.mxu0 0
    %2482 = vmatpush1.bf16.msra.mxu0 %v2476
    %2483 = vmatprep.subr.bf16.mxu0 0
    %2484 = vmatpush1.bf16.msra.mxu0 0
    %2485 = vmatprep.subr.bf16.mxu0 0
    %2486 = vmatpush1.bf16.msra.mxu0 0
    %2487 = vmatprep.subr.bf16.mxu0 0
    %2488 = vmatpush1.bf16.msra.mxu0 0
    %2489 = vmatprep.subr.bf16.mxu0 0
    %2490 = vmatpush1.bf16.msra.mxu0 0
    %2491 = vmatprep.subr.bf16.mxu0 0
    %2492 = vmatpush1.bf16.msra.mxu0 0
    %2493 = vmatprep.subr.bf16.mxu0 0
    %2494 = vmatpush1.bf16.msra.mxu0 0
    %2495 = vmatprep.subr.bf16.mxu0 0
    %2496 = vmatpush1.bf16.msra.mxu0 0
    %2497 = vmatprep.subr.bf16.mxu0 0
    %2498 = vmatpush1.bf16.msra.mxu0 0
    %2499 = vmatprep.subr.bf16.mxu0 0
    %2500 = vmatpush1.bf16.msra.mxu0 0
    %2501 = vmatprep.subr.bf16.mxu0 0
    %2502 = vmatpush1.bf16.msra.mxu0 0
    %2503 = vmatprep.subr.bf16.mxu0 0
    %2504 = vmatpush1.bf16.msra.mxu0 0
    %2505 = vmatprep.subr.bf16.mxu0 0
    %2506 = vmatpush1.bf16.msra.mxu0 0
    %2507 = vmatprep.subr.bf16.mxu0 0
    %2508 = vmatpush1.bf16.msra.mxu0 0
    %2509 = vmatprep.subr.bf16.mxu0 0
    %2510 = vmatpush1.bf16.msra.mxu0 0
    %2511 = vmatprep.subr.bf16.mxu0 0
    %2512 = vmatpush1.bf16.msra.mxu0 0
    %2513 = vmatprep.mubr.bf16.mxu0 0
    %2514 = vmatmul.mubr.bf16.gmra.mrb[0].mxu0 %v2479
    %v2515 = vpop.f32.mrb[0].mxu0
    %v2516 = vadd.f32 0.0, %v2515
    %v2517 = vpop.f32.mrb[0].mxu0
    %v2518 = vpop.f32.mrb[0].mxu0
    %v2519 = vpop.f32.mrb[0].mxu0
    %2520 = vdwg.mxu0
    %v2521 = vpack.c.bf16 %v1984, %v1984
    %v2538 = vunpack.c.l.b16 %v2344
    %v2539 = vunpack.c.l.b16 %v2345
    %v2540 = vunpack.c.l.b16 %v2346
    %v2541 = vunpack.c.l.b16 %v2347
    %v2542 = vunpack.c.l.b16 %v2348
    %v2543 = vunpack.c.l.b16 %v2349
    %v2544 = vunpack.c.l.b16 %v2350
    %v2545 = vunpack.c.l.b16 %v2351
    %v2546 = vunpack.c.l.b16 %v2352
    %v2547 = vunpack.c.l.b16 %v2353
    %v2548 = vunpack.c.l.b16 %v2354
    %v2549 = vunpack.c.l.b16 %v2355
    %v2550 = vunpack.c.l.b16 %v2356
    %v2551 = vunpack.c.l.b16 %v2357
    %v2552 = vunpack.c.l.b16 %v2358
    %v2553 = vunpack.c.l.b16 %v2359
    %v2554 = vpack.c.b16 %v2539, %v2538
    %v2555 = vpack.c.b16 %v2541, %v2540
    %v2556 = vpack.c.b16 %v2543, %v2542
    %v2557 = vpack.c.b16 %v2545, %v2544
    %v2558 = vpack.c.b16 %v2547, %v2546
    %v2559 = vpack.c.b16 %v2549, %v2548
    %v2560 = vpack.c.b16 %v2551, %v2550
    %v2561 = vpack.c.b16 %v2553, %v2552
    %2570 = vmatprep.subr.bf16.mxu0 0
    %2571 = vmatpush1.bf16.msra.mxu0 %v2554
    %2572 = vmatprep.subr.bf16.mxu0 0
    %2573 = vmatpush1.bf16.msra.mxu0 %v2555
    %2574 = vmatprep.subr.bf16.mxu0 0
    %2575 = vmatpush1.bf16.msra.mxu0 %v2556
    %2576 = vmatprep.subr.bf16.mxu0 0
    %2577 = vmatpush1.bf16.msra.mxu0 %v2557
    %2578 = vmatprep.subr.bf16.mxu0 0
    %2579 = vmatpush1.bf16.msra.mxu0 %v2558
    %2580 = vmatprep.subr.bf16.mxu0 0
    %2581 = vmatpush1.bf16.msra.mxu0 %v2559
    %2582 = vmatprep.subr.bf16.mxu0 0
    %2583 = vmatpush1.bf16.msra.mxu0 %v2560
    %2584 = vmatprep.subr.bf16.mxu0 0
    %2585 = vmatpush1.bf16.msra.mxu0 %v2561
    %2586 = vmatprep.subr.bf16.mxu0 0
    %2587 = vmatpush1.bf16.msra.mxu0 0
    %2588 = vmatprep.subr.bf16.mxu0 0
    %2589 = vmatpush1.bf16.msra.mxu0 0
    %2590 = vmatprep.subr.bf16.mxu0 0
    %2591 = vmatpush1.bf16.msra.mxu0 0
    %2592 = vmatprep.subr.bf16.mxu0 0
    %2593 = vmatpush1.bf16.msra.mxu0 0
    %2594 = vmatprep.subr.bf16.mxu0 0
    %2595 = vmatpush1.bf16.msra.mxu0 0
    %2596 = vmatprep.subr.bf16.mxu0 0
    %2597 = vmatpush1.bf16.msra.mxu0 0
    %2598 = vmatprep.subr.bf16.mxu0 0
    %2599 = vmatpush1.bf16.msra.mxu0 0
    %2600 = vmatprep.subr.bf16.mxu0 0
    %2601 = vmatpush1.bf16.msra.mxu0 0
    %2602 = vmatprep.mubr.bf16.mxu0 0
    %2603 = vmatmul.mubr.bf16.gmra.mrb[0].mxu0 %v2521
    %v2604 = vpop.f32.mrb[0].mxu0
    %v2605 = vadd.f32 %v2370, %v2604
    %v2606 = vpop.f32.mrb[0].mxu0
    %v2607 = vpop.f32.mrb[0].mxu0
    %v2608 = vpop.f32.mrb[0].mxu0
    %2609 = vdwg.mxu0
    %v2610 = vsel %vm2115, %v2605, -inf
    %2611 = vmax.xlane.f32.xlu0 %v2610
    %v2612 = vpop.xlane.xlu0 %2611
    %v2613 = vsub.f32 %v2605, %v2612
    %v2614 = vmul.f32 %v2613, 1.442695
    %v2615 = vpow.pop %v2614
    %v2616 = vsel %vm2115, %v2615, 0.0
    %2617 = vadd.xlane.f32.xlu0 %v2616
    %v2618 = vpop.xlane.xlu0 %2617
    %v2619 = vrcp.pop %v2618
    %v2620 = vmul.f32 %v2615, %v2619
    %v2621 = vpack.c.bf16 %v2620, %v2620
    %v2622 = vunpack.c.h.b16 %v2361
    %v2623 = vunpack.c.h.b16 %v2362
    %v2624 = vpack.c.b16 %v2623, %v2622
    %v2627 = vsel %vm2115, %v2621, 0
    %2629 = vmatprep.subr.bf16.mxu0 0
    %2630 = vmatpush1.bf16.msra.mxu0 %v2624
    %2631 = vmatprep.subr.bf16.mxu0 0
    %2632 = vmatpush1.bf16.msra.mxu0 0
    %2633 = vmatprep.subr.bf16.mxu0 0
    %2634 = vmatpush1.bf16.msra.mxu0 0
    %2635 = vmatprep.subr.bf16.mxu0 0
    %2636 = vmatpush1.bf16.msra.mxu0 0
    %2637 = vmatprep.subr.bf16.mxu0 0
    %2638 = vmatpush1.bf16.msra.mxu0 0
    %2639 = vmatprep.subr.bf16.mxu0 0
    %2640 = vmatpush1.bf16.msra.mxu0 0
    %2641 = vmatprep.subr.bf16.mxu0 0
    %2642 = vmatpush1.bf16.msra.mxu0 0
    %2643 = vmatprep.subr.bf16.mxu0 0
    %2644 = vmatpush1.bf16.msra.mxu0 0
    %2645 = vmatprep.subr.bf16.mxu0 0
    %2646 = vmatpush1.bf16.msra.mxu0 0
    %2647 = vmatprep.subr.bf16.mxu0 0
    %2648 = vmatpush1.bf16.msra.mxu0 0
    %2649 = vmatprep.subr.bf16.mxu0 0
    %2650 = vmatpush1.bf16.msra.mxu0 0
    %2651 = vmatprep.subr.bf16.mxu0 0
    %2652 = vmatpush1.bf16.msra.mxu0 0
    %2653 = vmatprep.subr.bf16.mxu0 0
    %2654 = vmatpush1.bf16.msra.mxu0 0
    %2655 = vmatprep.subr.bf16.mxu0 0
    %2656 = vmatpush1.bf16.msra.mxu0 0
    %2657 = vmatprep.subr.bf16.mxu0 0
    %2658 = vmatpush1.bf16.msra.mxu0 0
    %2659 = vmatprep.subr.bf16.mxu0 0
    %2660 = vmatpush1.bf16.msra.mxu0 0
    %2661 = vmatprep.mubr.bf16.mxu0 0
    %2662 = vmatmul.mubr.bf16.gmra.mrb[0].mxu0 %v2627
    %v2663 = vpop.f32.mrb[0].mxu0
    %v2664 = vadd.f32 0.0, %v2663
    %v2665 = vpop.f32.mrb[0].mxu0
    %v2666 = vpop.f32.mrb[0].mxu0
    %v2667 = vpop.f32.mrb[0].mxu0
    %2668 = vdwg.mxu0
    %2669 = vst [vmem:[#allocation3 + $0x10] sm:$0xff] %v2516
    %2670 = vst [vmem:[#allocation3 + $0x18] sm:$0xff] %v2664
    %v2671 = vld [vmem:[#allocation3] sm:$0xff]
    %v2672 = vld [vmem:[#allocation3 + $0x8] sm:$0xff]
    %v2673 = vld [vmem:[#allocation3 + $0x10] sm:$0xff]
    %v2674 = vld [vmem:[#allocation3 + $0x18] sm:$0xff]
    %v2675 = vpack.c.bf16 %v2673, %v2671
    %v2676 = vpack.c.bf16 %v2674, %v2672
    %v2678 = vlaneseq
    %v2679 = vshrl.u32 %v2678, 7
    %v2680 = vsub.s32 0, %v2679
    %v2681 = vrot.slane %v1702, %v2680
    %v2682 = vlaneseq
    %v2683 = vshrl.u32 %v2682, 7
    %v2684 = vsub.s32 1, %v2683
    %v2685 = vrot.slane %v1702, %v2684
    %v2720 = vunpack.c.l.b16 %v1670
    %v2721 = vunpack.c.h.b16 %v1670
    %v2722 = vunpack.c.l.b16 %v1671
    %v2723 = vunpack.c.h.b16 %v1671
    %v2724 = vunpack.c.l.b16 %v1672
    %v2725 = vunpack.c.h.b16 %v1672
    %v2726 = vunpack.c.l.b16 %v1673
    %v2727 = vunpack.c.h.b16 %v1673
    %v2728 = vunpack.c.l.b16 %v1674
    %v2729 = vunpack.c.h.b16 %v1674
    %v2730 = vunpack.c.l.b16 %v1675
    %v2731 = vunpack.c.h.b16 %v1675
    %v2732 = vunpack.c.l.b16 %v1676
    %v2733 = vunpack.c.h.b16 %v1676
    %v2734 = vunpack.c.l.b16 %v1677
    %v2735 = vunpack.c.h.b16 %v1677
    %v2736 = vunpack.c.l.b16 %v1678
    %v2737 = vunpack.c.h.b16 %v1678
    %v2738 = vunpack.c.l.b16 %v1679
    %v2739 = vunpack.c.h.b16 %v1679
    %v2740 = vunpack.c.l.b16 %v1680
    %v2741 = vunpack.c.h.b16 %v1680
    %v2742 = vunpack.c.l.b16 %v1681
    %v2743 = vunpack.c.h.b16 %v1681
    %v2744 = vunpack.c.l.b16 %v1682
    %v2745 = vunpack.c.h.b16 %v1682
    %v2746 = vunpack.c.l.b16 %v1683
    %v2747 = vunpack.c.h.b16 %v1683
    %v2748 = vunpack.c.l.b16 %v1684
    %v2749 = vunpack.c.h.b16 %v1684
    %v2750 = vunpack.c.l.b16 %v1685
    %v2751 = vunpack.c.h.b16 %v1685
    %v2752 = vunpack.c.l.b16 %v1686
    %v2753 = vunpack.c.h.b16 %v1686
    %v2754 = vunpack.c.l.b16 %v1687
    %v2755 = vunpack.c.h.b16 %v1687
    %v2756 = vunpack.c.l.b16 %v1688
    %v2757 = vunpack.c.h.b16 %v1688
    %v2758 = vunpack.c.l.b16 %v1689
    %v2759 = vunpack.c.h.b16 %v1689
    %v2760 = vunpack.c.l.b16 %v1690
    %v2761 = vunpack.c.h.b16 %v1690
    %v2762 = vunpack.c.l.b16 %v1691
    %v2763 = vunpack.c.h.b16 %v1691
    %v2764 = vunpack.c.l.b16 %v1692
    %v2765 = vunpack.c.h.b16 %v1692
    %v2766 = vunpack.c.l.b16 %v1693
    %v2767 = vunpack.c.h.b16 %v1693
    %v2768 = vunpack.c.l.b16 %v1694
    %v2769 = vunpack.c.h.b16 %v1694
    %v2770 = vunpack.c.l.b16 %v1695
    %v2771 = vunpack.c.h.b16 %v1695
    %v2772 = vunpack.c.l.b16 %v1696
    %v2773 = vunpack.c.h.b16 %v1696
    %v2774 = vunpack.c.l.b16 %v1697
    %v2775 = vunpack.c.h.b16 %v1697
    %v2776 = vunpack.c.l.b16 %v1698
    %v2777 = vunpack.c.h.b16 %v1698
    %v2778 = vunpack.c.l.b16 %v1699
    %v2779 = vunpack.c.h.b16 %v1699
    %v2780 = vunpack.c.l.b16 %v1700
    %v2781 = vunpack.c.h.b16 %v1700
    %v2782 = vunpack.c.l.b16 %v1701
    %v2783 = vunpack.c.h.b16 %v1701
    %v2784 = vpack.c.b16 %v2722, %v2720
    %v2785 = vpack.c.b16 %v2723, %v2721
    %v2786 = vpack.c.b16 %v2726, %v2724
    %v2787 = vpack.c.b16 %v2727, %v2725
    %v2788 = vpack.c.b16 %v2730, %v2728
    %v2789 = vpack.c.b16 %v2731, %v2729
    %v2790 = vpack.c.b16 %v2734, %v2732
    %v2791 = vpack.c.b16 %v2735, %v2733
    %v2792 = vpack.c.b16 %v2738, %v2736
    %v2793 = vpack.c.b16 %v2739, %v2737
    %v2794 = vpack.c.b16 %v2742, %v2740
    %v2795 = vpack.c.b16 %v2743, %v2741
    %v2796 = vpack.c.b16 %v2746, %v2744
    %v2797 = vpack.c.b16 %v2747, %v2745
    %v2798 = vpack.c.b16 %v2750, %v2748
    %v2799 = vpack.c.b16 %v2751, %v2749
    %v2800 = vpack.c.b16 %v2754, %v2752
    %v2801 = vpack.c.b16 %v2755, %v2753
    %v2802 = vpack.c.b16 %v2758, %v2756
    %v2803 = vpack.c.b16 %v2759, %v2757
    %v2804 = vpack.c.b16 %v2762, %v2760
    %v2805 = vpack.c.b16 %v2763, %v2761
    %v2806 = vpack.c.b16 %v2766, %v2764
    %v2807 = vpack.c.b16 %v2767, %v2765
    %v2808 = vpack.c.b16 %v2770, %v2768
    %v2809 = vpack.c.b16 %v2771, %v2769
    %v2810 = vpack.c.b16 %v2774, %v2772
    %v2811 = vpack.c.b16 %v2775, %v2773
    %v2812 = vpack.c.b16 %v2778, %v2776
    %v2813 = vpack.c.b16 %v2779, %v2777
    %v2814 = vpack.c.b16 %v2782, %v2780
    %v2815 = vpack.c.b16 %v2783, %v2781
    %2848 = vmatprep.subr.bf16.mxu0 %v2785
    %2849 = vmatpush1.bf16.msra.mxu0 %v2784
    %2850 = vmatprep.subr.bf16.mxu0 %v2787
    %2851 = vmatpush1.bf16.msra.mxu0 %v2786
    %2852 = vmatprep.subr.bf16.mxu0 %v2789
    %2853 = vmatpush1.bf16.msra.mxu0 %v2788
    %2854 = vmatprep.subr.bf16.mxu0 %v2791
    %2855 = vmatpush1.bf16.msra.mxu0 %v2790
    %2856 = vmatprep.subr.bf16.mxu0 %v2793
    %2857 = vmatpush1.bf16.msra.mxu0 %v2792
    %2858 = vmatprep.subr.bf16.mxu0 %v2795
    %2859 = vmatpush1.bf16.msra.mxu0 %v2794
    %2860 = vmatprep.subr.bf16.mxu0 %v2797
    %2861 = vmatpush1.bf16.msra.mxu0 %v2796
    %2862 = vmatprep.subr.bf16.mxu0 %v2799
    %2863 = vmatpush1.bf16.msra.mxu0 %v2798
    %2864 = vmatprep.subr.bf16.mxu0 %v2801
    %2865 = vmatpush1.bf16.msra.mxu0 %v2800
    %2866 = vmatprep.subr.bf16.mxu0 %v2803
    %2867 = vmatpush1.bf16.msra.mxu0 %v2802
    %2868 = vmatprep.subr.bf16.mxu0 %v2805
    %2869 = vmatpush1.bf16.msra.mxu0 %v2804
    %2870 = vmatprep.subr.bf16.mxu0 %v2807
    %2871 = vmatpush1.bf16.msra.mxu0 %v2806
    %2872 = vmatprep.subr.bf16.mxu0 %v2809
    %2873 = vmatpush1.bf16.msra.mxu0 %v2808
    %2874 = vmatprep.subr.bf16.mxu0 %v2811
    %2875 = vmatpush1.bf16.msra.mxu0 %v2810
    %2876 = vmatprep.subr.bf16.mxu0 %v2813
    %2877 = vmatpush1.bf16.msra.mxu0 %v2812
    %2878 = vmatprep.subr.bf16.mxu0 %v2815
    %2879 = vmatpush1.bf16.msra.mxu0 %v2814
    %2880 = vmatprep.mubr.bf16.mxu0 %v2676
    %2881 = vmatmul.mubr.bf16.gmra.mrb[0].mxu0 %v2675
    %v2882 = vpop.f32.mrb[0].mxu0
    %v2883 = vadd.f32 %v2681, %v2882
    %v2884 = vpop.f32.mrb[0].mxu0
    %v2885 = vadd.f32 %v2685, %v2884
    %v2886 = vpop.f32.mrb[0].mxu0
    %v2887 = vadd.f32 %v2681, %v2886
    %v2888 = vpop.f32.mrb[0].mxu0
    %v2889 = vadd.f32 %v2685, %v2888
    %2890 = vdwg.mxu0
    %v2891 = vadd.f32 %v1631, %v2883
    %v2892 = vadd.f32 %v1632, %v2885
    %v2893 = vadd.f32 %v1633, %v2887
    %v2894 = vadd.f32 %v1634, %v2889
    %2895 = vst [vmem:[%s22] sm:$0xff] %v2891
    %2896 = vst [vmem:[%s22 + $0x8] sm:$0xff] %v2892
    %2897 = vst [vmem:[%s22 + $0x10] sm:$0xff] %v2893
    %2898 = vst [vmem:[%s22 + $0x18] sm:$0xff] %v2894
    // Predicated region
    $region98: #{decoder_forward.6} parent=1 // pred_check
      _
    $region99: #{decoder_forward.6} parent=1 // pred_check_branch
      %2900 = sbr.rel (0) target = $region101
    $region100: #{decoder_forward.6} parent=1 // pred_region
      _
    $region101: #{decoder_forward.6} parent=1 // pred_fallthru
      _
    // Predicated region
    $region102: #{decoder_forward.6} parent=1 // pred_check
      _
    $region103: #{decoder_forward.6} parent=1 // pred_check_branch
      %2902 = sbr.rel (0) target = $region105
    $region104: #{decoder_forward.6} parent=1 // pred_region
      %s2904 = ssub.s32 256, 256
      %2905 = vsyncadd [#allocation6], %s2904
      %s2906 = sshll.u32 [#allocation9], 4
      %s2907 = int_to_ptr.vmem [resolvable:$true] %s2906
      %2912 = dma.vmem_to_hbm [thread:$0]  %s2907, 256, %s23, [#allocation6], 128, 128, 8
    $region105: #{decoder_forward.6} parent=1 // pred_fallthru
      _
    // Predicated region
    $region106: #{decoder_forward.6} parent=1 // pred_check
      _
    $region107: #{decoder_forward.6} parent=1 // pred_check_branch
      %2914 = sbr.rel (0) target = $region109
    $region108: #{decoder_forward.6} parent=1 // pred_region
      _
    $region109: #{decoder_forward.6} parent=1 // pred_fallthru
      _
    // Predicated region
    $region110: #{decoder_forward.6} parent=1 // pred_check
      _
    $region111: #{decoder_forward.6} parent=1 // pred_check_branch
      %2916 = sbr.rel (0) target = $region113
    $region112: #{decoder_forward.6} parent=1 // pred_region
      %2917 = dma.done [#allocation6], 256
    $region113: #{decoder_forward.6} parent=1 // pred_fallthru
      _
    %2918 = vsyncpa [#allocation5], 1
    %2919 = vsyncpa [#allocation8], 1
    %2920 = vsyncpa [#allocation6], 1

</llo_original>
